<compile_context>
chip_gen: v6e
topology: v6e:2x2x1
jax: 0.10.0
libtpu: 0.0.40
codegen_flags: <defaults>
</compile_context>

<pallas_src>
import functools

import jax
import jax.numpy as jnp
from jax import lax
from jax.experimental import pallas as pl
from jax.experimental.pallas import tpu as pltpu


def _conv_out_size(size, k, s):
    return (size - k) // s + 1


# ----------------------------------------------------------------------------
# In-kernel conv layer: dst = relu(conv_valid(src, w, stride) + b), all VMEM.
# ----------------------------------------------------------------------------
def _conv_layer(src_ref, w_ref, b_ref, dst_ref, *, ksize, stride):
    """src_ref: (IH, IW, Cin) f32     w_ref: (K, K, Cout, Cin) bf16
    b_ref:   (1, Cout) f32            dst_ref: (OH, OW, Cout) f32 VMEM scratch
    """
    oh, ow, cout = dst_ref.shape
    bias = jnp.broadcast_to(b_ref[...], (ow, cout))          # hoisted once

    def row_step(r, carry):
        acc = bias                                           # (OW, Cout) f32
        for kw in range(ksize):                              # static unroll
            # (K, OW, Cin): the K contiguous input rows feeding output row r,
            # columns kw, kw+stride, ... (strided VMEM load, no HBM im2col).
            sl = src_ref[pl.ds(stride * r, ksize),
                         pl.ds(kw, ow, stride), :]
            # Batched over the K kernel rows; bf16 MXU operands, f32 accum.
            acc = acc + jnp.einsum(
                "kwc,kdc->kwd",
                sl.astype(jnp.bfloat16), w_ref[:, kw],
                preferred_element_type=jnp.float32).sum(axis=0)
        dst_ref[r] = jnp.maximum(acc, 0.0)                   # fused ReLU
        return carry

    lax.fori_loop(0, oh, row_step, 0)


# ----------------------------------------------------------------------------
# Fused encoder kernel (runs once per image; weights stay resident in VMEM).
# ----------------------------------------------------------------------------
def _encoder_kernel(x_ref, w1_ref, b1_ref, w2_ref, b2_ref, w3_ref, b3_ref,
                    w4_ref, b4_ref, wl_ref, bl_ref, o_ref,
                    a1_ref, a2_ref, a3_ref, a4_ref, *, conv_cfg):
    srcs = (x_ref, a1_ref, a2_ref, a3_ref)
    dsts = (a1_ref, a2_ref, a3_ref, a4_ref)
    wrefs = (w1_ref, w2_ref, w3_ref, w4_ref)
    brefs = (b1_ref, b2_ref, b3_ref, b4_ref)
    for (k, s), src, w, b, dst in zip(conv_cfg, srcs, wrefs, brefs, dsts):
        _conv_layer(src, w, b, dst, ksize=k, stride=s)

    # Flatten (PyTorch (C, H, W) order is absorbed into wl's layout) + Linear.
    h4, w4, _ = a4_ref.shape
    a4 = a4_ref[...]                                         # (H4, W4, C) f32
    y = bl_ref[...]                                          # (1, latent) f32
    for hh in range(h4):
        for ww in range(w4):
            y = y + jnp.dot(a4[hh, ww:ww + 1, :].astype(jnp.bfloat16),
                            wl_ref[hh, ww],
                            preferred_element_type=jnp.float32)
    o_ref[...] = y[None]                                     # (1, 1, latent)


def _build_encoder_call(n_img, img_size, c_in, num_channels, latent_dim,
                        conv_cfg):
    sizes = [img_size]
    for k, s in conv_cfg:
        sizes.append(_conv_out_size(sizes[-1], k, s))
    h4 = sizes[-1]

    in_specs = [pl.BlockSpec((None, img_size, img_size, c_in),
                             lambda i: (i, 0, 0, 0))]
    cin = c_in
    for k, s in conv_cfg:
        in_specs.append(pl.BlockSpec((k, k, num_channels, cin),
                                     lambda i: (0, 0, 0, 0)))
        in_specs.append(pl.BlockSpec((1, num_channels), lambda i: (0, 0)))
        cin = num_channels
    in_specs.append(pl.BlockSpec((h4, h4, num_channels, latent_dim),
                                 lambda i: (0, 0, 0, 0)))
    in_specs.append(pl.BlockSpec((1, latent_dim), lambda i: (0, 0)))

    scratch_shapes = [pltpu.VMEM((sizes[i + 1], sizes[i + 1], num_channels),
                                 jnp.float32) for i in range(len(conv_cfg))]

    return pl.pallas_call(
        functools.partial(_encoder_kernel, conv_cfg=tuple(conv_cfg)),
        out_shape=jax.ShapeDtypeStruct((n_img, 1, latent_dim), jnp.float32),
        grid=(n_img,),
        in_specs=in_specs,
        out_specs=pl.BlockSpec((1, 1, latent_dim), lambda i: (i, 0, 0)),
        scratch_shapes=scratch_shapes,
        compiler_params=pltpu.CompilerParams(
            dimension_semantics=("parallel",)),
    )


# ----------------------------------------------------------------------------
# Parameters (PyTorch-layout init) and one-time kernel-layout preparation.
# ----------------------------------------------------------------------------
def init_params(key, c_in, num_channels, latent_dim, img_size):
    conv_specs = [
        (num_channels, c_in, 7, 2),
        (num_channels, num_channels, 5, 2),
        (num_channels, num_channels, 3, 2),
        (num_channels, num_channels, 3, 2),
    ]
    keys = jax.random.split(key, 2 * len(conv_specs) + 2)
    conv_w, conv_b = [], []
    s_hw = img_size
    for i, (co, ci, k, st) in enumerate(conv_specs):
        fan_in = ci * k * k
        bound = 1.0 / jnp.sqrt(fan_in)
        conv_w.append(jax.random.uniform(
            keys[2 * i], (co, ci, k, k), jnp.float32, -bound, bound))
        conv_b.append(jax.random.uniform(
            keys[2 * i + 1], (co,), jnp.float32, -bound, bound))
        s_hw = _conv_out_size(s_hw, k, st)
    feat = num_channels * s_hw * s_hw
    bound = 1.0 / jnp.sqrt(feat)
    lin_w = jax.random.uniform(keys[-2], (latent_dim, feat), jnp.float32,
                               -bound, bound)
    lin_b = jax.random.uniform(keys[-1], (latent_dim,), jnp.float32,
                               -bound, bound)
    return {"conv_w": conv_w, "conv_b": conv_b,
            "conv_strides": [s[3] for s in conv_specs],
            "lin_w": lin_w, "lin_b": lin_b}


def prepare_pallas_params(params, img_size):
    """Done once: fold NormalizeImg into conv1, fold the PyTorch flatten order
    into the linear weight, and lay weights out as bf16 MXU operands."""
    conv_w, conv_b, conv_cfg = [], [], []
    size = img_size
    for li, (w, b, s) in enumerate(zip(params["conv_w"], params["conv_b"],
                                       params["conv_strides"])):
        k = int(w.shape[-1])
        conv_cfg.append((k, int(s)))
        wt = jnp.transpose(w, (2, 3, 0, 1)).astype(jnp.float32)  # (K,K,Co,Ci)
        if li == 0:
            wt = wt / 255.0                      # fused 1/255 normalization
        conv_w.append(wt.astype(jnp.bfloat16))
        conv_b.append(b.astype(jnp.float32).reshape(1, -1))
        size = _conv_out_size(size, k, s)
    num_channels = int(params["conv_w"][0].shape[0])
    latent_dim = int(params["lin_w"].shape[0])
    lw = params["lin_w"].reshape(latent_dim, num_channels, size, size)
    lw = jnp.transpose(lw, (2, 3, 1, 0)).astype(jnp.bfloat16)    # (H,W,C,L)
    return {"conv_w": conv_w, "conv_b": conv_b, "conv_cfg": conv_cfg,
            "lin_w": lw,
            "lin_b": params["lin_b"].astype(jnp.float32).reshape(1, -1),
            "num_channels": num_channels, "latent_dim": latent_dim}


# ----------------------------------------------------------------------------
# Forward pass (== ImageEncoder.forward)
# ----------------------------------------------------------------------------
def image_encoder_forward(pallas_params, x):
    """x: (N, C, H, W) or (T, B, C, H, W), pixel values in [0, 255)."""
    horizon = None
    if x.ndim == 5:
        horizon, bsz = x.shape[0], x.shape[1]
        x = x.reshape(horizon * bsz, *x.shape[2:])
    n, c_in, img_size, _ = x.shape
    x_nhwc = jnp.transpose(x.astype(jnp.float32), (0, 2, 3, 1))
    p = pallas_params
    call = _build_encoder_call(n, img_size, c_in, p["num_channels"],
                               p["latent_dim"], p["conv_cfg"])
    args = [x_nhwc]
    for w, b in zip(p["conv_w"], p["conv_b"]):
        args.extend([w, b])
    args.extend([p["lin_w"], p["lin_b"]])
    y = call(*args).reshape(n, p["latent_dim"])
    if horizon is not None:
        y = y.reshape(horizon, bsz, -1)
    return y


# ----------------------------------------------------------------------------
# Pure-JAX reference (correctness check only)
# ----------------------------------------------------------------------------
def reference_forward(params, x):
    horizon = None
    if x.ndim == 5:
        horizon, bsz = x.shape[0], x.shape[1]
        x = x.reshape(horizon * bsz, *x.shape[2:])
    h = jnp.transpose(x.astype(jnp.float32) / 255.0, (0, 2, 3, 1))
    for w, b, s in zip(params["conv_w"], params["conv_b"],
                       params["conv_strides"]):
        h = lax.conv_general_dilated(
            h, jnp.transpose(w, (2, 3, 1, 0)), (s, s), "VALID",
            dimension_numbers=("NHWC", "HWIO", "NHWC"))
        h = jnp.maximum(h + b, 0.0)
    h = jnp.transpose(h, (0, 3, 1, 2)).reshape(h.shape[0], -1)
    y = h @ params["lin_w"].T + params["lin_b"]
    if horizon is not None:
        y = y.reshape(horizon, bsz, -1)
    return y


if __name__ == "__main__":
    # cfg: frame_stack=1 -> C=3, img_size=64, num_channels=8, latent_dim=32
    frame_stack, img_size, num_channels, latent_dim, batch = 1, 64, 8, 32, 2
    c_in = 3 * frame_stack

    key = jax.random.PRNGKey(0)
    pkey, xkey = jax.random.split(key)
    params = init_params(pkey, c_in, num_channels, latent_dim, img_size)
    pallas_params = prepare_pallas_params(params, img_size)

    # Pixel observations in [0, 255).
    x = jax.random.uniform(xkey, (batch, c_in, img_size, img_size),
                           jnp.float32, 0.0, 255.0)

    out = jax.block_until_ready(image_encoder_forward(pallas_params, x))
    assert out.shape == (batch, latent_dim), out.shape

    ref = jax.block_until_ready(reference_forward(params, x))
    err = float(jnp.max(jnp.abs(out - ref)))
    # bf16 MXU operands with f32 accumulation -> small tolerance vs f32 ref.
    assert err < 2e-2, f"mismatch vs reference: {err}"

    print("KERNEL_OK")
</pallas_src>

<mosaic_0001>
module attributes {stable_mosaic.version = 11 : i64} {
  func.func @_encoder_kernel(%arg0: i32, %arg1: memref<1x64x64x3xf32, #tpu.memory_space<vmem>>, %arg2: memref<7x7x8x3xbf16, #tpu.memory_space<vmem>>, %arg3: memref<1x8xf32, #tpu.memory_space<vmem>>, %arg4: memref<5x5x8x8xbf16, #tpu.memory_space<vmem>>, %arg5: memref<1x8xf32, #tpu.memory_space<vmem>>, %arg6: memref<3x3x8x8xbf16, #tpu.memory_space<vmem>>, %arg7: memref<1x8xf32, #tpu.memory_space<vmem>>, %arg8: memref<3x3x8x8xbf16, #tpu.memory_space<vmem>>, %arg9: memref<1x8xf32, #tpu.memory_space<vmem>>, %arg10: memref<2x2x8x32xbf16, #tpu.memory_space<vmem>>, %arg11: memref<1x32xf32, #tpu.memory_space<vmem>>, %arg12: memref<1x1x32xf32, #tpu.memory_space<vmem>>, %arg13: memref<29x29x8xf32, #tpu.memory_space<vmem>>, %arg14: memref<13x13x8xf32, #tpu.memory_space<vmem>>, %arg15: memref<6x6x8xf32, #tpu.memory_space<vmem>>, %arg16: memref<2x2x8xf32, #tpu.memory_space<vmem>>) attributes {dimension_semantics = [#tpu.dimension_semantics<parallel>], iteration_bounds = array<i64: 2>, scalar_prefetch = 0 : i64, scratch_operands = 4 : i64, tpu.core_type = #tpu.core_type<tc>, window_params = [{transform_indices = @transform_0, window_bounds = array<i64: 1, 64, 64, 3>}, {pipeline_mode = #tpu.pipeline_mode<synchronous>, transform_indices = @transform_1, window_bounds = array<i64: 7, 7, 8, 3>}, {pipeline_mode = #tpu.pipeline_mode<synchronous>, transform_indices = @transform_2, window_bounds = array<i64: 1, 8>}, {pipeline_mode = #tpu.pipeline_mode<synchronous>, transform_indices = @transform_3, window_bounds = array<i64: 5, 5, 8, 8>}, {pipeline_mode = #tpu.pipeline_mode<synchronous>, transform_indices = @transform_4, window_bounds = array<i64: 1, 8>}, {pipeline_mode = #tpu.pipeline_mode<synchronous>, transform_indices = @transform_5, window_bounds = array<i64: 3, 3, 8, 8>}, {pipeline_mode = #tpu.pipeline_mode<synchronous>, transform_indices = @transform_6, window_bounds = array<i64: 1, 8>}, {pipeline_mode = #tpu.pipeline_mode<synchronous>, transform_indices = @transform_7, window_bounds = array<i64: 3, 3, 8, 8>}, {pipeline_mode = #tpu.pipeline_mode<synchronous>, transform_indices = @transform_8, window_bounds = array<i64: 1, 8>}, {pipeline_mode = #tpu.pipeline_mode<synchronous>, transform_indices = @transform_9, window_bounds = array<i64: 2, 2, 8, 32>}, {pipeline_mode = #tpu.pipeline_mode<synchronous>, transform_indices = @transform_10, window_bounds = array<i64: 1, 32>}, {transform_indices = @transform_11, window_bounds = array<i64: 1, 1, 32>}]} {
    %c0 = arith.constant 0 : index
    %c0_0 = arith.constant 0 : index
    %0 = vector.load %arg3[%c0, %c0_0] : memref<1x8xf32, #tpu.memory_space<vmem>>, vector<1x8xf32>
    %1 = vector.shape_cast %0 : vector<1x8xf32> to vector<1x8xf32>
    %2 = vector.broadcast %1 : vector<1x8xf32> to vector<29x8xf32>
    %c0_i32 = arith.constant 0 : i32
    %c29_i32 = arith.constant 29 : i32
    %3 = arith.addi %c0_i32, %c29_i32 : i32
    %c1_i32 = arith.constant 1 : i32
    scf.for %arg17 = %c0_i32 to %3 step %c1_i32  : i32 {
      %c2_i32_43 = arith.constant 2 : i32
      %48 = arith.muli %c2_i32_43, %arg17 : i32
      %c0_44 = arith.constant 0 : index
      %49 = arith.index_cast %48 : i32 to index
      %c0_45 = arith.constant 0 : index
      %c0_46 = arith.constant 0 : index
      %50 = tpu.strided_load %arg1[%c0_44, %49, %c0_45, %c0_46] {strides = array<i32: 1, 1, 2, 1>} : memref<1x64x64x3xf32, #tpu.memory_space<vmem>>, vector<1x7x29x3xf32>
      %51 = vector.shape_cast %50 : vector<1x7x29x3xf32> to vector<7x29x3xf32>
      %52 = arith.truncf %51 : vector<7x29x3xf32> to vector<7x29x3xbf16>
      %c0_47 = arith.constant 0 : index
      %c0_48 = arith.constant 0 : index
      %c0_49 = arith.constant 0 : index
      %c0_50 = arith.constant 0 : index
      %53 = vector.load %arg2[%c0_47, %c0_48, %c0_49, %c0_50] : memref<7x7x8x3xbf16, #tpu.memory_space<vmem>>, vector<7x1x8x3xbf16>
      %54 = vector.shape_cast %53 : vector<7x1x8x3xbf16> to vector<7x8x3xbf16>
      "tpu.trace_start"() <{level = 10 : i32, message = "kwc,kdc->kwd"}> : () -> ()
      %cst_51 = arith.constant dense<0.000000e+00> : vector<7x29x8xf32>
      %55 = tpu.matmul %52, %54, %cst_51 {dimension_numbers = #tpu.dot_dimension_numbers<[2], [2], [1], [1], [0, 0, 0, 1, 1, 1], [0], [0]>} : vector<7x29x3xbf16>, vector<7x8x3xbf16>, vector<7x29x8xf32> -> vector<7x29x8xf32>
      "tpu.trace_stop"() : () -> ()
      %cst_52 = arith.constant dense<0.000000e+00> : vector<29x8xf32>
      %56 = vector.multi_reduction <add>, %55, %cst_52 [0] : vector<7x29x8xf32> to vector<29x8xf32>
      %57 = arith.addf %2, %56 : vector<29x8xf32>
      %c2_i32_53 = arith.constant 2 : i32
      %58 = arith.muli %c2_i32_53, %arg17 : i32
      %c0_54 = arith.constant 0 : index
      %59 = arith.index_cast %58 : i32 to index
      %c1_55 = arith.constant 1 : index
      %c0_56 = arith.constant 0 : index
      %60 = tpu.strided_load %arg1[%c0_54, %59, %c1_55, %c0_56] {strides = array<i32: 1, 1, 2, 1>} : memref<1x64x64x3xf32, #tpu.memory_space<vmem>>, vector<1x7x29x3xf32>
      %61 = vector.shape_cast %60 : vector<1x7x29x3xf32> to vector<7x29x3xf32>
      %62 = arith.truncf %61 : vector<7x29x3xf32> to vector<7x29x3xbf16>
      %c0_57 = arith.constant 0 : index
      %c1_58 = arith.constant 1 : index
      %c0_59 = arith.constant 0 : index
      %c0_60 = arith.constant 0 : index
      %63 = vector.load %arg2[%c0_57, %c1_58, %c0_59, %c0_60] : memref<7x7x8x3xbf16, #tpu.memory_space<vmem>>, vector<7x1x8x3xbf16>
      %64 = vector.shape_cast %63 : vector<7x1x8x3xbf16> to vector<7x8x3xbf16>
      "tpu.trace_start"() <{level = 10 : i32, message = "kwc,kdc->kwd"}> : () -> ()
      %cst_61 = arith.constant dense<0.000000e+00> : vector<7x29x8xf32>
      %65 = tpu.matmul %62, %64, %cst_61 {dimension_numbers = #tpu.dot_dimension_numbers<[2], [2], [1], [1], [0, 0, 0, 1, 1, 1], [0], [0]>} : vector<7x29x3xbf16>, vector<7x8x3xbf16>, vector<7x29x8xf32> -> vector<7x29x8xf32>
      "tpu.trace_stop"() : () -> ()
      %cst_62 = arith.constant dense<0.000000e+00> : vector<29x8xf32>
      %66 = vector.multi_reduction <add>, %65, %cst_62 [0] : vector<7x29x8xf32> to vector<29x8xf32>
      %67 = arith.addf %57, %66 : vector<29x8xf32>
      %c2_i32_63 = arith.constant 2 : i32
      %68 = arith.muli %c2_i32_63, %arg17 : i32
      %c0_64 = arith.constant 0 : index
      %69 = arith.index_cast %68 : i32 to index
      %c2 = arith.constant 2 : index
      %c0_65 = arith.constant 0 : index
      %70 = tpu.strided_load %arg1[%c0_64, %69, %c2, %c0_65] {strides = array<i32: 1, 1, 2, 1>} : memref<1x64x64x3xf32, #tpu.memory_space<vmem>>, vector<1x7x29x3xf32>
      %71 = vector.shape_cast %70 : vector<1x7x29x3xf32> to vector<7x29x3xf32>
      %72 = arith.truncf %71 : vector<7x29x3xf32> to vector<7x29x3xbf16>
      %c0_66 = arith.constant 0 : index
      %c2_67 = arith.constant 2 : index
      %c0_68 = arith.constant 0 : index
      %c0_69 = arith.constant 0 : index
      %73 = vector.load %arg2[%c0_66, %c2_67, %c0_68, %c0_69] : memref<7x7x8x3xbf16, #tpu.memory_space<vmem>>, vector<7x1x8x3xbf16>
      %74 = vector.shape_cast %73 : vector<7x1x8x3xbf16> to vector<7x8x3xbf16>
      "tpu.trace_start"() <{level = 10 : i32, message = "kwc,kdc->kwd"}> : () -> ()
      %cst_70 = arith.constant dense<0.000000e+00> : vector<7x29x8xf32>
      %75 = tpu.matmul %72, %74, %cst_70 {dimension_numbers = #tpu.dot_dimension_numbers<[2], [2], [1], [1], [0, 0, 0, 1, 1, 1], [0], [0]>} : vector<7x29x3xbf16>, vector<7x8x3xbf16>, vector<7x29x8xf32> -> vector<7x29x8xf32>
      "tpu.trace_stop"() : () -> ()
      %cst_71 = arith.constant dense<0.000000e+00> : vector<29x8xf32>
      %76 = vector.multi_reduction <add>, %75, %cst_71 [0] : vector<7x29x8xf32> to vector<29x8xf32>
      %77 = arith.addf %67, %76 : vector<29x8xf32>
      %c2_i32_72 = arith.constant 2 : i32
      %78 = arith.muli %c2_i32_72, %arg17 : i32
      %c0_73 = arith.constant 0 : index
      %79 = arith.index_cast %78 : i32 to index
      %c3 = arith.constant 3 : index
      %c0_74 = arith.constant 0 : index
      %80 = tpu.strided_load %arg1[%c0_73, %79, %c3, %c0_74] {strides = array<i32: 1, 1, 2, 1>} : memref<1x64x64x3xf32, #tpu.memory_space<vmem>>, vector<1x7x29x3xf32>
      %81 = vector.shape_cast %80 : vector<1x7x29x3xf32> to vector<7x29x3xf32>
      %82 = arith.truncf %81 : vector<7x29x3xf32> to vector<7x29x3xbf16>
      %c0_75 = arith.constant 0 : index
      %c3_76 = arith.constant 3 : index
      %c0_77 = arith.constant 0 : index
      %c0_78 = arith.constant 0 : index
      %83 = vector.load %arg2[%c0_75, %c3_76, %c0_77, %c0_78] : memref<7x7x8x3xbf16, #tpu.memory_space<vmem>>, vector<7x1x8x3xbf16>
      %84 = vector.shape_cast %83 : vector<7x1x8x3xbf16> to vector<7x8x3xbf16>
      "tpu.trace_start"() <{level = 10 : i32, message = "kwc,kdc->kwd"}> : () -> ()
      %cst_79 = arith.constant dense<0.000000e+00> : vector<7x29x8xf32>
      %85 = tpu.matmul %82, %84, %cst_79 {dimension_numbers = #tpu.dot_dimension_numbers<[2], [2], [1], [1], [0, 0, 0, 1, 1, 1], [0], [0]>} : vector<7x29x3xbf16>, vector<7x8x3xbf16>, vector<7x29x8xf32> -> vector<7x29x8xf32>
      "tpu.trace_stop"() : () -> ()
      %cst_80 = arith.constant dense<0.000000e+00> : vector<29x8xf32>
      %86 = vector.multi_reduction <add>, %85, %cst_80 [0] : vector<7x29x8xf32> to vector<29x8xf32>
      %87 = arith.addf %77, %86 : vector<29x8xf32>
      %c2_i32_81 = arith.constant 2 : i32
      %88 = arith.muli %c2_i32_81, %arg17 : i32
      %c0_82 = arith.constant 0 : index
      %89 = arith.index_cast %88 : i32 to index
      %c4 = arith.constant 4 : index
      %c0_83 = arith.constant 0 : index
      %90 = tpu.strided_load %arg1[%c0_82, %89, %c4, %c0_83] {strides = array<i32: 1, 1, 2, 1>} : memref<1x64x64x3xf32, #tpu.memory_space<vmem>>, vector<1x7x29x3xf32>
      %91 = vector.shape_cast %90 : vector<1x7x29x3xf32> to vector<7x29x3xf32>
      %92 = arith.truncf %91 : vector<7x29x3xf32> to vector<7x29x3xbf16>
      %c0_84 = arith.constant 0 : index
      %c4_85 = arith.constant 4 : index
      %c0_86 = arith.constant 0 : index
      %c0_87 = arith.constant 0 : index
      %93 = vector.load %arg2[%c0_84, %c4_85, %c0_86, %c0_87] : memref<7x7x8x3xbf16, #tpu.memory_space<vmem>>, vector<7x1x8x3xbf16>
      %94 = vector.shape_cast %93 : vector<7x1x8x3xbf16> to vector<7x8x3xbf16>
      "tpu.trace_start"() <{level = 10 : i32, message = "kwc,kdc->kwd"}> : () -> ()
      %cst_88 = arith.constant dense<0.000000e+00> : vector<7x29x8xf32>
      %95 = tpu.matmul %92, %94, %cst_88 {dimension_numbers = #tpu.dot_dimension_numbers<[2], [2], [1], [1], [0, 0, 0, 1, 1, 1], [0], [0]>} : vector<7x29x3xbf16>, vector<7x8x3xbf16>, vector<7x29x8xf32> -> vector<7x29x8xf32>
      "tpu.trace_stop"() : () -> ()
      %cst_89 = arith.constant dense<0.000000e+00> : vector<29x8xf32>
      %96 = vector.multi_reduction <add>, %95, %cst_89 [0] : vector<7x29x8xf32> to vector<29x8xf32>
      %97 = arith.addf %87, %96 : vector<29x8xf32>
      %c2_i32_90 = arith.constant 2 : i32
      %98 = arith.muli %c2_i32_90, %arg17 : i32
      %c0_91 = arith.constant 0 : index
      %99 = arith.index_cast %98 : i32 to index
      %c5 = arith.constant 5 : index
      %c0_92 = arith.constant 0 : index
      %100 = tpu.strided_load %arg1[%c0_91, %99, %c5, %c0_92] {strides = array<i32: 1, 1, 2, 1>} : memref<1x64x64x3xf32, #tpu.memory_space<vmem>>, vector<1x7x29x3xf32>
      %101 = vector.shape_cast %100 : vector<1x7x29x3xf32> to vector<7x29x3xf32>
      %102 = arith.truncf %101 : vector<7x29x3xf32> to vector<7x29x3xbf16>
      %c0_93 = arith.constant 0 : index
      %c5_94 = arith.constant 5 : index
      %c0_95 = arith.constant 0 : index
      %c0_96 = arith.constant 0 : index
      %103 = vector.load %arg2[%c0_93, %c5_94, %c0_95, %c0_96] : memref<7x7x8x3xbf16, #tpu.memory_space<vmem>>, vector<7x1x8x3xbf16>
      %104 = vector.shape_cast %103 : vector<7x1x8x3xbf16> to vector<7x8x3xbf16>
      "tpu.trace_start"() <{level = 10 : i32, message = "kwc,kdc->kwd"}> : () -> ()
      %cst_97 = arith.constant dense<0.000000e+00> : vector<7x29x8xf32>
      %105 = tpu.matmul %102, %104, %cst_97 {dimension_numbers = #tpu.dot_dimension_numbers<[2], [2], [1], [1], [0, 0, 0, 1, 1, 1], [0], [0]>} : vector<7x29x3xbf16>, vector<7x8x3xbf16>, vector<7x29x8xf32> -> vector<7x29x8xf32>
      "tpu.trace_stop"() : () -> ()
      %cst_98 = arith.constant dense<0.000000e+00> : vector<29x8xf32>
      %106 = vector.multi_reduction <add>, %105, %cst_98 [0] : vector<7x29x8xf32> to vector<29x8xf32>
      %107 = arith.addf %97, %106 : vector<29x8xf32>
      %c2_i32_99 = arith.constant 2 : i32
      %108 = arith.muli %c2_i32_99, %arg17 : i32
      %c0_100 = arith.constant 0 : index
      %109 = arith.index_cast %108 : i32 to index
      %c6 = arith.constant 6 : index
      %c0_101 = arith.constant 0 : index
      %110 = tpu.strided_load %arg1[%c0_100, %109, %c6, %c0_101] {strides = array<i32: 1, 1, 2, 1>} : memref<1x64x64x3xf32, #tpu.memory_space<vmem>>, vector<1x7x29x3xf32>
      %111 = vector.shape_cast %110 : vector<1x7x29x3xf32> to vector<7x29x3xf32>
      %112 = arith.truncf %111 : vector<7x29x3xf32> to vector<7x29x3xbf16>
      %c0_102 = arith.constant 0 : index
      %c6_103 = arith.constant 6 : index
      %c0_104 = arith.constant 0 : index
      %c0_105 = arith.constant 0 : index
      %113 = vector.load %arg2[%c0_102, %c6_103, %c0_104, %c0_105] : memref<7x7x8x3xbf16, #tpu.memory_space<vmem>>, vector<7x1x8x3xbf16>
      %114 = vector.shape_cast %113 : vector<7x1x8x3xbf16> to vector<7x8x3xbf16>
      "tpu.trace_start"() <{level = 10 : i32, message = "kwc,kdc->kwd"}> : () -> ()
      %cst_106 = arith.constant dense<0.000000e+00> : vector<7x29x8xf32>
      %115 = tpu.matmul %112, %114, %cst_106 {dimension_numbers = #tpu.dot_dimension_numbers<[2], [2], [1], [1], [0, 0, 0, 1, 1, 1], [0], [0]>} : vector<7x29x3xbf16>, vector<7x8x3xbf16>, vector<7x29x8xf32> -> vector<7x29x8xf32>
      "tpu.trace_stop"() : () -> ()
      %cst_107 = arith.constant dense<0.000000e+00> : vector<29x8xf32>
      %116 = vector.multi_reduction <add>, %115, %cst_107 [0] : vector<7x29x8xf32> to vector<29x8xf32>
      %117 = arith.addf %107, %116 : vector<29x8xf32>
      %cst_108 = arith.constant 0.000000e+00 : f32
      %118 = vector.broadcast %cst_108 : f32 to vector<29x8xf32>
      %119 = arith.maximumf %117, %118 : vector<29x8xf32>
      %120 = arith.index_cast %arg17 : i32 to index
      %c0_109 = arith.constant 0 : index
      %c0_110 = arith.constant 0 : index
      %121 = vector.load %arg13[%120, %c0_109, %c0_110] : memref<29x29x8xf32, #tpu.memory_space<vmem>>, vector<1x29x8xf32>
      %122 = vector.shape_cast %121 : vector<1x29x8xf32> to vector<29x8xf32>
      %123 = vector.shape_cast %119 : vector<29x8xf32> to vector<1x29x8xf32>
      tpu.vector_store %arg13[%120, %c0_109, %c0_110], %123 {strides = array<i32>} : memref<29x29x8xf32, #tpu.memory_space<vmem>>, vector<1x29x8xf32>,
    }
    %c29_i32_1 = arith.constant 29 : i32
    %c0_2 = arith.constant 0 : index
    %c0_3 = arith.constant 0 : index
    %4 = vector.load %arg5[%c0_2, %c0_3] : memref<1x8xf32, #tpu.memory_space<vmem>>, vector<1x8xf32>
    %5 = vector.shape_cast %4 : vector<1x8xf32> to vector<1x8xf32>
    %6 = vector.broadcast %5 : vector<1x8xf32> to vector<13x8xf32>
    %c0_i32_4 = arith.constant 0 : i32
    %c13_i32 = arith.constant 13 : i32
    %7 = arith.addi %c0_i32_4, %c13_i32 : i32
    %c1_i32_5 = arith.constant 1 : i32
    scf.for %arg17 = %c0_i32_4 to %7 step %c1_i32_5  : i32 {
      %c2_i32_43 = arith.constant 2 : i32
      %48 = arith.muli %c2_i32_43, %arg17 : i32
      %49 = arith.index_cast %48 : i32 to index
      %c0_44 = arith.constant 0 : index
      %c0_45 = arith.constant 0 : index
      %50 = tpu.strided_load %arg13[%49, %c0_44, %c0_45] {strides = array<i32: 1, 2, 1>} : memref<29x29x8xf32, #tpu.memory_space<vmem>>, vector<5x13x8xf32>
      %51 = arith.truncf %50 : vector<5x13x8xf32> to vector<5x13x8xbf16>
      %c0_46 = arith.constant 0 : index
      %c0_47 = arith.constant 0 : index
      %c0_48 = arith.constant 0 : index
      %c0_49 = arith.constant 0 : index
      %52 = vector.load %arg4[%c0_46, %c0_47, %c0_48, %c0_49] : memref<5x5x8x8xbf16, #tpu.memory_space<vmem>>, vector<5x1x8x8xbf16>
      %53 = vector.shape_cast %52 : vector<5x1x8x8xbf16> to vector<5x8x8xbf16>
      "tpu.trace_start"() <{level = 10 : i32, message = "kwc,kdc->kwd"}> : () -> ()
      %cst_50 = arith.constant dense<0.000000e+00> : vector<5x13x8xf32>
      %54 = tpu.matmul %51, %53, %cst_50 {dimension_numbers = #tpu.dot_dimension_numbers<[2], [2], [1], [1], [0, 0, 0, 1, 1, 1], [0], [0]>} : vector<5x13x8xbf16>, vector<5x8x8xbf16>, vector<5x13x8xf32> -> vector<5x13x8xf32>
      "tpu.trace_stop"() : () -> ()
      %cst_51 = arith.constant dense<0.000000e+00> : vector<13x8xf32>
      %55 = vector.multi_reduction <add>, %54, %cst_51 [0] : vector<5x13x8xf32> to vector<13x8xf32>
      %56 = arith.addf %6, %55 : vector<13x8xf32>
      %c2_i32_52 = arith.constant 2 : i32
      %57 = arith.muli %c2_i32_52, %arg17 : i32
      %58 = arith.index_cast %57 : i32 to index
      %c1_53 = arith.constant 1 : index
      %c0_54 = arith.constant 0 : index
      %59 = tpu.strided_load %arg13[%58, %c1_53, %c0_54] {strides = array<i32: 1, 2, 1>} : memref<29x29x8xf32, #tpu.memory_space<vmem>>, vector<5x13x8xf32>
      %60 = arith.truncf %59 : vector<5x13x8xf32> to vector<5x13x8xbf16>
      %c0_55 = arith.constant 0 : index
      %c1_56 = arith.constant 1 : index
      %c0_57 = arith.constant 0 : index
      %c0_58 = arith.constant 0 : index
      %61 = vector.load %arg4[%c0_55, %c1_56, %c0_57, %c0_58] : memref<5x5x8x8xbf16, #tpu.memory_space<vmem>>, vector<5x1x8x8xbf16>
      %62 = vector.shape_cast %61 : vector<5x1x8x8xbf16> to vector<5x8x8xbf16>
      "tpu.trace_start"() <{level = 10 : i32, message = "kwc,kdc->kwd"}> : () -> ()
      %cst_59 = arith.constant dense<0.000000e+00> : vector<5x13x8xf32>
      %63 = tpu.matmul %60, %62, %cst_59 {dimension_numbers = #tpu.dot_dimension_numbers<[2], [2], [1], [1], [0, 0, 0, 1, 1, 1], [0], [0]>} : vector<5x13x8xbf16>, vector<5x8x8xbf16>, vector<5x13x8xf32> -> vector<5x13x8xf32>
      "tpu.trace_stop"() : () -> ()
      %cst_60 = arith.constant dense<0.000000e+00> : vector<13x8xf32>
      %64 = vector.multi_reduction <add>, %63, %cst_60 [0] : vector<5x13x8xf32> to vector<13x8xf32>
      %65 = arith.addf %56, %64 : vector<13x8xf32>
      %c2_i32_61 = arith.constant 2 : i32
      %66 = arith.muli %c2_i32_61, %arg17 : i32
      %67 = arith.index_cast %66 : i32 to index
      %c2 = arith.constant 2 : index
      %c0_62 = arith.constant 0 : index
      %68 = tpu.strided_load %arg13[%67, %c2, %c0_62] {strides = array<i32: 1, 2, 1>} : memref<29x29x8xf32, #tpu.memory_space<vmem>>, vector<5x13x8xf32>
      %69 = arith.truncf %68 : vector<5x13x8xf32> to vector<5x13x8xbf16>
      %c0_63 = arith.constant 0 : index
      %c2_64 = arith.constant 2 : index
      %c0_65 = arith.constant 0 : index
      %c0_66 = arith.constant 0 : index
      %70 = vector.load %arg4[%c0_63, %c2_64, %c0_65, %c0_66] : memref<5x5x8x8xbf16, #tpu.memory_space<vmem>>, vector<5x1x8x8xbf16>
      %71 = vector.shape_cast %70 : vector<5x1x8x8xbf16> to vector<5x8x8xbf16>
      "tpu.trace_start"() <{level = 10 : i32, message = "kwc,kdc->kwd"}> : () -> ()
      %cst_67 = arith.constant dense<0.000000e+00> : vector<5x13x8xf32>
      %72 = tpu.matmul %69, %71, %cst_67 {dimension_numbers = #tpu.dot_dimension_numbers<[2], [2], [1], [1], [0, 0, 0, 1, 1, 1], [0], [0]>} : vector<5x13x8xbf16>, vector<5x8x8xbf16>, vector<5x13x8xf32> -> vector<5x13x8xf32>
      "tpu.trace_stop"() : () -> ()
      %cst_68 = arith.constant dense<0.000000e+00> : vector<13x8xf32>
      %73 = vector.multi_reduction <add>, %72, %cst_68 [0] : vector<5x13x8xf32> to vector<13x8xf32>
      %74 = arith.addf %65, %73 : vector<13x8xf32>
      %c2_i32_69 = arith.constant 2 : i32
      %75 = arith.muli %c2_i32_69, %arg17 : i32
      %76 = arith.index_cast %75 : i32 to index
      %c3 = arith.constant 3 : index
      %c0_70 = arith.constant 0 : index
      %77 = tpu.strided_load %arg13[%76, %c3, %c0_70] {strides = array<i32: 1, 2, 1>} : memref<29x29x8xf32, #tpu.memory_space<vmem>>, vector<5x13x8xf32>
      %78 = arith.truncf %77 : vector<5x13x8xf32> to vector<5x13x8xbf16>
      %c0_71 = arith.constant 0 : index
      %c3_72 = arith.constant 3 : index
      %c0_73 = arith.constant 0 : index
      %c0_74 = arith.constant 0 : index
      %79 = vector.load %arg4[%c0_71, %c3_72, %c0_73, %c0_74] : memref<5x5x8x8xbf16, #tpu.memory_space<vmem>>, vector<5x1x8x8xbf16>
      %80 = vector.shape_cast %79 : vector<5x1x8x8xbf16> to vector<5x8x8xbf16>
      "tpu.trace_start"() <{level = 10 : i32, message = "kwc,kdc->kwd"}> : () -> ()
      %cst_75 = arith.constant dense<0.000000e+00> : vector<5x13x8xf32>
      %81 = tpu.matmul %78, %80, %cst_75 {dimension_numbers = #tpu.dot_dimension_numbers<[2], [2], [1], [1], [0, 0, 0, 1, 1, 1], [0], [0]>} : vector<5x13x8xbf16>, vector<5x8x8xbf16>, vector<5x13x8xf32> -> vector<5x13x8xf32>
      "tpu.trace_stop"() : () -> ()
      %cst_76 = arith.constant dense<0.000000e+00> : vector<13x8xf32>
      %82 = vector.multi_reduction <add>, %81, %cst_76 [0] : vector<5x13x8xf32> to vector<13x8xf32>
      %83 = arith.addf %74, %82 : vector<13x8xf32>
      %c2_i32_77 = arith.constant 2 : i32
      %84 = arith.muli %c2_i32_77, %arg17 : i32
      %85 = arith.index_cast %84 : i32 to index
      %c4 = arith.constant 4 : index
      %c0_78 = arith.constant 0 : index
      %86 = tpu.strided_load %arg13[%85, %c4, %c0_78] {strides = array<i32: 1, 2, 1>} : memref<29x29x8xf32, #tpu.memory_space<vmem>>, vector<5x13x8xf32>
      %87 = arith.truncf %86 : vector<5x13x8xf32> to vector<5x13x8xbf16>
      %c0_79 = arith.constant 0 : index
      %c4_80 = arith.constant 4 : index
      %c0_81 = arith.constant 0 : index
      %c0_82 = arith.constant 0 : index
      %88 = vector.load %arg4[%c0_79, %c4_80, %c0_81, %c0_82] : memref<5x5x8x8xbf16, #tpu.memory_space<vmem>>, vector<5x1x8x8xbf16>
      %89 = vector.shape_cast %88 : vector<5x1x8x8xbf16> to vector<5x8x8xbf16>
      "tpu.trace_start"() <{level = 10 : i32, message = "kwc,kdc->kwd"}> : () -> ()
      %cst_83 = arith.constant dense<0.000000e+00> : vector<5x13x8xf32>
      %90 = tpu.matmul %87, %89, %cst_83 {dimension_numbers = #tpu.dot_dimension_numbers<[2], [2], [1], [1], [0, 0, 0, 1, 1, 1], [0], [0]>} : vector<5x13x8xbf16>, vector<5x8x8xbf16>, vector<5x13x8xf32> -> vector<5x13x8xf32>
      "tpu.trace_stop"() : () -> ()
      %cst_84 = arith.constant dense<0.000000e+00> : vector<13x8xf32>
      %91 = vector.multi_reduction <add>, %90, %cst_84 [0] : vector<5x13x8xf32> to vector<13x8xf32>
      %92 = arith.addf %83, %91 : vector<13x8xf32>
      %cst_85 = arith.constant 0.000000e+00 : f32
      %93 = vector.broadcast %cst_85 : f32 to vector<13x8xf32>
      %94 = arith.maximumf %92, %93 : vector<13x8xf32>
      %95 = arith.index_cast %arg17 : i32 to index
      %c0_86 = arith.constant 0 : index
      %c0_87 = arith.constant 0 : index
      %96 = vector.load %arg14[%95, %c0_86, %c0_87] : memref<13x13x8xf32, #tpu.memory_space<vmem>>, vector<1x13x8xf32>
      %97 = vector.shape_cast %96 : vector<1x13x8xf32> to vector<13x8xf32>
      %98 = vector.shape_cast %94 : vector<13x8xf32> to vector<1x13x8xf32>
      tpu.vector_store %arg14[%95, %c0_86, %c0_87], %98 {strides = array<i32>} : memref<13x13x8xf32, #tpu.memory_space<vmem>>, vector<1x13x8xf32>,
    }
    %c13_i32_6 = arith.constant 13 : i32
    %c0_7 = arith.constant 0 : index
    %c0_8 = arith.constant 0 : index
    %8 = vector.load %arg7[%c0_7, %c0_8] : memref<1x8xf32, #tpu.memory_space<vmem>>, vector<1x8xf32>
    %9 = vector.shape_cast %8 : vector<1x8xf32> to vector<1x8xf32>
    %10 = vector.broadcast %9 : vector<1x8xf32> to vector<6x8xf32>
    %c0_i32_9 = arith.constant 0 : i32
    %c6_i32 = arith.constant 6 : i32
    %11 = arith.addi %c0_i32_9, %c6_i32 : i32
    %c1_i32_10 = arith.constant 1 : i32
    scf.for %arg17 = %c0_i32_9 to %11 step %c1_i32_10  : i32 {
      %c2_i32_43 = arith.constant 2 : i32
      %48 = arith.muli %c2_i32_43, %arg17 : i32
      %49 = arith.index_cast %48 : i32 to index
      %c0_44 = arith.constant 0 : index
      %c0_45 = arith.constant 0 : index
      %50 = tpu.strided_load %arg14[%49, %c0_44, %c0_45] {strides = array<i32: 1, 2, 1>} : memref<13x13x8xf32, #tpu.memory_space<vmem>>, vector<3x6x8xf32>
      %51 = arith.truncf %50 : vector<3x6x8xf32> to vector<3x6x8xbf16>
      %c0_46 = arith.constant 0 : index
      %c0_47 = arith.constant 0 : index
      %c0_48 = arith.constant 0 : index
      %c0_49 = arith.constant 0 : index
      %52 = vector.load %arg6[%c0_46, %c0_47, %c0_48, %c0_49] : memref<3x3x8x8xbf16, #tpu.memory_space<vmem>>, vector<3x1x8x8xbf16>
      %53 = vector.shape_cast %52 : vector<3x1x8x8xbf16> to vector<3x8x8xbf16>
      "tpu.trace_start"() <{level = 10 : i32, message = "kwc,kdc->kwd"}> : () -> ()
      %cst_50 = arith.constant dense<0.000000e+00> : vector<3x6x8xf32>
      %54 = tpu.matmul %51, %53, %cst_50 {dimension_numbers = #tpu.dot_dimension_numbers<[2], [2], [1], [1], [0, 0, 0, 1, 1, 1], [0], [0]>} : vector<3x6x8xbf16>, vector<3x8x8xbf16>, vector<3x6x8xf32> -> vector<3x6x8xf32>
      "tpu.trace_stop"() : () -> ()
      %cst_51 = arith.constant dense<0.000000e+00> : vector<6x8xf32>
      %55 = vector.multi_reduction <add>, %54, %cst_51 [0] : vector<3x6x8xf32> to vector<6x8xf32>
      %56 = arith.addf %10, %55 : vector<6x8xf32>
      %c2_i32_52 = arith.constant 2 : i32
      %57 = arith.muli %c2_i32_52, %arg17 : i32
      %58 = arith.index_cast %57 : i32 to index
      %c1_53 = arith.constant 1 : index
      %c0_54 = arith.constant 0 : index
      %59 = tpu.strided_load %arg14[%58, %c1_53, %c0_54] {strides = array<i32: 1, 2, 1>} : memref<13x13x8xf32, #tpu.memory_space<vmem>>, vector<3x6x8xf32>
      %60 = arith.truncf %59 : vector<3x6x8xf32> to vector<3x6x8xbf16>
      %c0_55 = arith.constant 0 : index
      %c1_56 = arith.constant 1 : index
      %c0_57 = arith.constant 0 : index
      %c0_58 = arith.constant 0 : index
      %61 = vector.load %arg6[%c0_55, %c1_56, %c0_57, %c0_58] : memref<3x3x8x8xbf16, #tpu.memory_space<vmem>>, vector<3x1x8x8xbf16>
      %62 = vector.shape_cast %61 : vector<3x1x8x8xbf16> to vector<3x8x8xbf16>
      "tpu.trace_start"() <{level = 10 : i32, message = "kwc,kdc->kwd"}> : () -> ()
      %cst_59 = arith.constant dense<0.000000e+00> : vector<3x6x8xf32>
      %63 = tpu.matmul %60, %62, %cst_59 {dimension_numbers = #tpu.dot_dimension_numbers<[2], [2], [1], [1], [0, 0, 0, 1, 1, 1], [0], [0]>} : vector<3x6x8xbf16>, vector<3x8x8xbf16>, vector<3x6x8xf32> -> vector<3x6x8xf32>
      "tpu.trace_stop"() : () -> ()
      %cst_60 = arith.constant dense<0.000000e+00> : vector<6x8xf32>
      %64 = vector.multi_reduction <add>, %63, %cst_60 [0] : vector<3x6x8xf32> to vector<6x8xf32>
      %65 = arith.addf %56, %64 : vector<6x8xf32>
      %c2_i32_61 = arith.constant 2 : i32
      %66 = arith.muli %c2_i32_61, %arg17 : i32
      %67 = arith.index_cast %66 : i32 to index
      %c2 = arith.constant 2 : index
      %c0_62 = arith.constant 0 : index
      %68 = tpu.strided_load %arg14[%67, %c2, %c0_62] {strides = array<i32: 1, 2, 1>} : memref<13x13x8xf32, #tpu.memory_space<vmem>>, vector<3x6x8xf32>
      %69 = arith.truncf %68 : vector<3x6x8xf32> to vector<3x6x8xbf16>
      %c0_63 = arith.constant 0 : index
      %c2_64 = arith.constant 2 : index
      %c0_65 = arith.constant 0 : index
      %c0_66 = arith.constant 0 : index
      %70 = vector.load %arg6[%c0_63, %c2_64, %c0_65, %c0_66] : memref<3x3x8x8xbf16, #tpu.memory_space<vmem>>, vector<3x1x8x8xbf16>
      %71 = vector.shape_cast %70 : vector<3x1x8x8xbf16> to vector<3x8x8xbf16>
      "tpu.trace_start"() <{level = 10 : i32, message = "kwc,kdc->kwd"}> : () -> ()
      %cst_67 = arith.constant dense<0.000000e+00> : vector<3x6x8xf32>
      %72 = tpu.matmul %69, %71, %cst_67 {dimension_numbers = #tpu.dot_dimension_numbers<[2], [2], [1], [1], [0, 0, 0, 1, 1, 1], [0], [0]>} : vector<3x6x8xbf16>, vector<3x8x8xbf16>, vector<3x6x8xf32> -> vector<3x6x8xf32>
      "tpu.trace_stop"() : () -> ()
      %cst_68 = arith.constant dense<0.000000e+00> : vector<6x8xf32>
      %73 = vector.multi_reduction <add>, %72, %cst_68 [0] : vector<3x6x8xf32> to vector<6x8xf32>
      %74 = arith.addf %65, %73 : vector<6x8xf32>
      %cst_69 = arith.constant 0.000000e+00 : f32
      %75 = vector.broadcast %cst_69 : f32 to vector<6x8xf32>
      %76 = arith.maximumf %74, %75 : vector<6x8xf32>
      %77 = arith.index_cast %arg17 : i32 to index
      %c0_70 = arith.constant 0 : index
      %c0_71 = arith.constant 0 : index
      %78 = vector.load %arg15[%77, %c0_70, %c0_71] : memref<6x6x8xf32, #tpu.memory_space<vmem>>, vector<1x6x8xf32>
      %79 = vector.shape_cast %78 : vector<1x6x8xf32> to vector<6x8xf32>
      %80 = vector.shape_cast %76 : vector<6x8xf32> to vector<1x6x8xf32>
      tpu.vector_store %arg15[%77, %c0_70, %c0_71], %80 {strides = array<i32>} : memref<6x6x8xf32, #tpu.memory_space<vmem>>, vector<1x6x8xf32>,
    }
    %c6_i32_11 = arith.constant 6 : i32
    %c0_12 = arith.constant 0 : index
    %c0_13 = arith.constant 0 : index
    %12 = vector.load %arg9[%c0_12, %c0_13] : memref<1x8xf32, #tpu.memory_space<vmem>>, vector<1x8xf32>
    %13 = vector.shape_cast %12 : vector<1x8xf32> to vector<1x8xf32>
    %14 = vector.broadcast %13 : vector<1x8xf32> to vector<2x8xf32>
    %c0_i32_14 = arith.constant 0 : i32
    %c2_i32 = arith.constant 2 : i32
    %15 = arith.addi %c0_i32_14, %c2_i32 : i32
    %c1_i32_15 = arith.constant 1 : i32
    scf.for %arg17 = %c0_i32_14 to %15 step %c1_i32_15  : i32 {
      %c2_i32_43 = arith.constant 2 : i32
      %48 = arith.muli %c2_i32_43, %arg17 : i32
      %49 = arith.index_cast %48 : i32 to index
      %c0_44 = arith.constant 0 : index
      %c0_45 = arith.constant 0 : index
      %50 = tpu.strided_load %arg15[%49, %c0_44, %c0_45] {strides = array<i32: 1, 2, 1>} : memref<6x6x8xf32, #tpu.memory_space<vmem>>, vector<3x2x8xf32>
      %51 = arith.truncf %50 : vector<3x2x8xf32> to vector<3x2x8xbf16>
      %c0_46 = arith.constant 0 : index
      %c0_47 = arith.constant 0 : index
      %c0_48 = arith.constant 0 : index
      %c0_49 = arith.constant 0 : index
      %52 = vector.load %arg8[%c0_46, %c0_47, %c0_48, %c0_49] : memref<3x3x8x8xbf16, #tpu.memory_space<vmem>>, vector<3x1x8x8xbf16>
      %53 = vector.shape_cast %52 : vector<3x1x8x8xbf16> to vector<3x8x8xbf16>
      "tpu.trace_start"() <{level = 10 : i32, message = "kwc,kdc->kwd"}> : () -> ()
      %cst_50 = arith.constant dense<0.000000e+00> : vector<3x2x8xf32>
      %54 = tpu.matmul %51, %53, %cst_50 {dimension_numbers = #tpu.dot_dimension_numbers<[2], [2], [1], [1], [0, 0, 0, 1, 1, 1], [0], [0]>} : vector<3x2x8xbf16>, vector<3x8x8xbf16>, vector<3x2x8xf32> -> vector<3x2x8xf32>
      "tpu.trace_stop"() : () -> ()
      %cst_51 = arith.constant dense<0.000000e+00> : vector<2x8xf32>
      %55 = vector.multi_reduction <add>, %54, %cst_51 [0] : vector<3x2x8xf32> to vector<2x8xf32>
      %56 = arith.addf %14, %55 : vector<2x8xf32>
      %c2_i32_52 = arith.constant 2 : i32
      %57 = arith.muli %c2_i32_52, %arg17 : i32
      %58 = arith.index_cast %57 : i32 to index
      %c1_53 = arith.constant 1 : index
      %c0_54 = arith.constant 0 : index
      %59 = tpu.strided_load %arg15[%58, %c1_53, %c0_54] {strides = array<i32: 1, 2, 1>} : memref<6x6x8xf32, #tpu.memory_space<vmem>>, vector<3x2x8xf32>
      %60 = arith.truncf %59 : vector<3x2x8xf32> to vector<3x2x8xbf16>
      %c0_55 = arith.constant 0 : index
      %c1_56 = arith.constant 1 : index
      %c0_57 = arith.constant 0 : index
      %c0_58 = arith.constant 0 : index
      %61 = vector.load %arg8[%c0_55, %c1_56, %c0_57, %c0_58] : memref<3x3x8x8xbf16, #tpu.memory_space<vmem>>, vector<3x1x8x8xbf16>
      %62 = vector.shape_cast %61 : vector<3x1x8x8xbf16> to vector<3x8x8xbf16>
      "tpu.trace_start"() <{level = 10 : i32, message = "kwc,kdc->kwd"}> : () -> ()
      %cst_59 = arith.constant dense<0.000000e+00> : vector<3x2x8xf32>
      %63 = tpu.matmul %60, %62, %cst_59 {dimension_numbers = #tpu.dot_dimension_numbers<[2], [2], [1], [1], [0, 0, 0, 1, 1, 1], [0], [0]>} : vector<3x2x8xbf16>, vector<3x8x8xbf16>, vector<3x2x8xf32> -> vector<3x2x8xf32>
      "tpu.trace_stop"() : () -> ()
      %cst_60 = arith.constant dense<0.000000e+00> : vector<2x8xf32>
      %64 = vector.multi_reduction <add>, %63, %cst_60 [0] : vector<3x2x8xf32> to vector<2x8xf32>
      %65 = arith.addf %56, %64 : vector<2x8xf32>
      %c2_i32_61 = arith.constant 2 : i32
      %66 = arith.muli %c2_i32_61, %arg17 : i32
      %67 = arith.index_cast %66 : i32 to index
      %c2 = arith.constant 2 : index
      %c0_62 = arith.constant 0 : index
      %68 = tpu.strided_load %arg15[%67, %c2, %c0_62] {strides = array<i32: 1, 2, 1>} : memref<6x6x8xf32, #tpu.memory_space<vmem>>, vector<3x2x8xf32>
      %69 = arith.truncf %68 : vector<3x2x8xf32> to vector<3x2x8xbf16>
      %c0_63 = arith.constant 0 : index
      %c2_64 = arith.constant 2 : index
      %c0_65 = arith.constant 0 : index
      %c0_66 = arith.constant 0 : index
      %70 = vector.load %arg8[%c0_63, %c2_64, %c0_65, %c0_66] : memref<3x3x8x8xbf16, #tpu.memory_space<vmem>>, vector<3x1x8x8xbf16>
      %71 = vector.shape_cast %70 : vector<3x1x8x8xbf16> to vector<3x8x8xbf16>
      "tpu.trace_start"() <{level = 10 : i32, message = "kwc,kdc->kwd"}> : () -> ()
      %cst_67 = arith.constant dense<0.000000e+00> : vector<3x2x8xf32>
      %72 = tpu.matmul %69, %71, %cst_67 {dimension_numbers = #tpu.dot_dimension_numbers<[2], [2], [1], [1], [0, 0, 0, 1, 1, 1], [0], [0]>} : vector<3x2x8xbf16>, vector<3x8x8xbf16>, vector<3x2x8xf32> -> vector<3x2x8xf32>
      "tpu.trace_stop"() : () -> ()
      %cst_68 = arith.constant dense<0.000000e+00> : vector<2x8xf32>
      %73 = vector.multi_reduction <add>, %72, %cst_68 [0] : vector<3x2x8xf32> to vector<2x8xf32>
      %74 = arith.addf %65, %73 : vector<2x8xf32>
      %cst_69 = arith.constant 0.000000e+00 : f32
      %75 = vector.broadcast %cst_69 : f32 to vector<2x8xf32>
      %76 = arith.maximumf %74, %75 : vector<2x8xf32>
      %77 = arith.index_cast %arg17 : i32 to index
      %c0_70 = arith.constant 0 : index
      %c0_71 = arith.constant 0 : index
      %78 = vector.load %arg16[%77, %c0_70, %c0_71] : memref<2x2x8xf32, #tpu.memory_space<vmem>>, vector<1x2x8xf32>
      %79 = vector.shape_cast %78 : vector<1x2x8xf32> to vector<2x8xf32>
      %80 = vector.shape_cast %76 : vector<2x8xf32> to vector<1x2x8xf32>
      tpu.vector_store %arg16[%77, %c0_70, %c0_71], %80 {strides = array<i32>} : memref<2x2x8xf32, #tpu.memory_space<vmem>>, vector<1x2x8xf32>,
    }
    %c2_i32_16 = arith.constant 2 : i32
    %c0_17 = arith.constant 0 : index
    %c0_18 = arith.constant 0 : index
    %c0_19 = arith.constant 0 : index
    %16 = vector.load %arg16[%c0_17, %c0_18, %c0_19] : memref<2x2x8xf32, #tpu.memory_space<vmem>>, vector<2x2x8xf32>
    %c0_20 = arith.constant 0 : index
    %c0_21 = arith.constant 0 : index
    %17 = vector.load %arg11[%c0_20, %c0_21] : memref<1x32xf32, #tpu.memory_space<vmem>>, vector<1x32xf32>
    %18 = vector.extract_strided_slice %16 {offsets = [0, 0, 0], sizes = [1, 1, 8], strides = [1, 1, 1]} : vector<2x2x8xf32> to vector<1x1x8xf32>
    %19 = vector.shape_cast %18 : vector<1x1x8xf32> to vector<1x8xf32>
    %20 = arith.truncf %19 : vector<1x8xf32> to vector<1x8xbf16>
    %c0_22 = arith.constant 0 : index
    %c0_23 = arith.constant 0 : index
    %c0_24 = arith.constant 0 : index
    %c0_25 = arith.constant 0 : index
    %21 = vector.load %arg10[%c0_22, %c0_23, %c0_24, %c0_25] : memref<2x2x8x32xbf16, #tpu.memory_space<vmem>>, vector<1x1x8x32xbf16>
    %22 = vector.shape_cast %21 : vector<1x1x8x32xbf16> to vector<8x32xbf16>
    %cst = arith.constant dense<0.000000e+00> : vector<1x32xf32>
    %23 = tpu.matmul %20, %22, %cst {dimension_numbers = #tpu.dot_dimension_numbers<[1], [0], [0], [1], [0, 0, 1, 1], [], []>} : vector<1x8xbf16>, vector<8x32xbf16>, vector<1x32xf32> -> vector<1x32xf32>
    %24 = arith.addf %17, %23 : vector<1x32xf32>
    %25 = vector.extract_strided_slice %16 {offsets = [0, 1, 0], sizes = [1, 1, 8], strides = [1, 1, 1]} : vector<2x2x8xf32> to vector<1x1x8xf32>
    %26 = vector.shape_cast %25 : vector<1x1x8xf32> to vector<1x8xf32>
    %27 = arith.truncf %26 : vector<1x8xf32> to vector<1x8xbf16>
    %c0_26 = arith.constant 0 : index
    %c1 = arith.constant 1 : index
    %c0_27 = arith.constant 0 : index
    %c0_28 = arith.constant 0 : index
    %28 = vector.load %arg10[%c0_26, %c1, %c0_27, %c0_28] : memref<2x2x8x32xbf16, #tpu.memory_space<vmem>>, vector<1x1x8x32xbf16>
    %29 = vector.shape_cast %28 : vector<1x1x8x32xbf16> to vector<8x32xbf16>
    %cst_29 = arith.constant dense<0.000000e+00> : vector<1x32xf32>
    %30 = tpu.matmul %27, %29, %cst_29 {dimension_numbers = #tpu.dot_dimension_numbers<[1], [0], [0], [1], [0, 0, 1, 1], [], []>} : vector<1x8xbf16>, vector<8x32xbf16>, vector<1x32xf32> -> vector<1x32xf32>
    %31 = arith.addf %24, %30 : vector<1x32xf32>
    %32 = vector.extract_strided_slice %16 {offsets = [1, 0, 0], sizes = [1, 1, 8], strides = [1, 1, 1]} : vector<2x2x8xf32> to vector<1x1x8xf32>
    %33 = vector.shape_cast %32 : vector<1x1x8xf32> to vector<1x8xf32>
    %34 = arith.truncf %33 : vector<1x8xf32> to vector<1x8xbf16>
    %c1_30 = arith.constant 1 : index
    %c0_31 = arith.constant 0 : index
    %c0_32 = arith.constant 0 : index
    %c0_33 = arith.constant 0 : index
    %35 = vector.load %arg10[%c1_30, %c0_31, %c0_32, %c0_33] : memref<2x2x8x32xbf16, #tpu.memory_space<vmem>>, vector<1x1x8x32xbf16>
    %36 = vector.shape_cast %35 : vector<1x1x8x32xbf16> to vector<8x32xbf16>
    %cst_34 = arith.constant dense<0.000000e+00> : vector<1x32xf32>
    %37 = tpu.matmul %34, %36, %cst_34 {dimension_numbers = #tpu.dot_dimension_numbers<[1], [0], [0], [1], [0, 0, 1, 1], [], []>} : vector<1x8xbf16>, vector<8x32xbf16>, vector<1x32xf32> -> vector<1x32xf32>
    %38 = arith.addf %31, %37 : vector<1x32xf32>
    %39 = vector.extract_strided_slice %16 {offsets = [1, 1, 0], sizes = [1, 1, 8], strides = [1, 1, 1]} : vector<2x2x8xf32> to vector<1x1x8xf32>
    %40 = vector.shape_cast %39 : vector<1x1x8xf32> to vector<1x8xf32>
    %41 = arith.truncf %40 : vector<1x8xf32> to vector<1x8xbf16>
    %c1_35 = arith.constant 1 : index
    %c1_36 = arith.constant 1 : index
    %c0_37 = arith.constant 0 : index
    %c0_38 = arith.constant 0 : index
    %42 = vector.load %arg10[%c1_35, %c1_36, %c0_37, %c0_38] : memref<2x2x8x32xbf16, #tpu.memory_space<vmem>>, vector<1x1x8x32xbf16>
    %43 = vector.shape_cast %42 : vector<1x1x8x32xbf16> to vector<8x32xbf16>
    %cst_39 = arith.constant dense<0.000000e+00> : vector<1x32xf32>
    %44 = tpu.matmul %41, %43, %cst_39 {dimension_numbers = #tpu.dot_dimension_numbers<[1], [0], [0], [1], [0, 0, 1, 1], [], []>} : vector<1x8xbf16>, vector<8x32xbf16>, vector<1x32xf32> -> vector<1x32xf32>
    %45 = arith.addf %38, %44 : vector<1x32xf32>
    %46 = vector.shape_cast %45 : vector<1x32xf32> to vector<1x1x32xf32>
    %c0_40 = arith.constant 0 : index
    %c0_41 = arith.constant 0 : index
    %c0_42 = arith.constant 0 : index
    %47 = vector.load %arg12[%c0_40, %c0_41, %c0_42] : memref<1x1x32xf32, #tpu.memory_space<vmem>>, vector<1x1x32xf32>
    tpu.vector_store %arg12[%c0_40, %c0_41, %c0_42], %46 {strides = array<i32>} : memref<1x1x32xf32, #tpu.memory_space<vmem>>, vector<1x1x32xf32>,
    return
  }
  func.func @transform_0(%arg0: i32) -> (i32, i32, i32, i32) {
    %c0_i32 = arith.constant 0 : i32
    %c0_i32_0 = arith.constant 0 : i32
    %c0_i32_1 = arith.constant 0 : i32
    %c0_i32_2 = arith.constant 0 : i32
    return %arg0, %c0_i32, %c0_i32_0, %c0_i32_1 : i32, i32, i32, i32
  }
  func.func @transform_1(%arg0: i32) -> (i32, i32, i32, i32) {
    %c0_i32 = arith.constant 0 : i32
    %c0_i32_0 = arith.constant 0 : i32
    %c0_i32_1 = arith.constant 0 : i32
    %c0_i32_2 = arith.constant 0 : i32
    %c0_i32_3 = arith.constant 0 : i32
    return %c0_i32, %c0_i32_0, %c0_i32_1, %c0_i32_2 : i32, i32, i32, i32
  }
  func.func @transform_2(%arg0: i32) -> (i32, i32) {
    %c0_i32 = arith.constant 0 : i32
    %c0_i32_0 = arith.constant 0 : i32
    %c0_i32_1 = arith.constant 0 : i32
    return %c0_i32, %c0_i32_0 : i32, i32
  }
  func.func @transform_3(%arg0: i32) -> (i32, i32, i32, i32) {
    %c0_i32 = arith.constant 0 : i32
    %c0_i32_0 = arith.constant 0 : i32
    %c0_i32_1 = arith.constant 0 : i32
    %c0_i32_2 = arith.constant 0 : i32
    %c0_i32_3 = arith.constant 0 : i32
    return %c0_i32, %c0_i32_0, %c0_i32_1, %c0_i32_2 : i32, i32, i32, i32
  }
  func.func @transform_4(%arg0: i32) -> (i32, i32) {
    %c0_i32 = arith.constant 0 : i32
    %c0_i32_0 = arith.constant 0 : i32
    %c0_i32_1 = arith.constant 0 : i32
    return %c0_i32, %c0_i32_0 : i32, i32
  }
  func.func @transform_5(%arg0: i32) -> (i32, i32, i32, i32) {
    %c0_i32 = arith.constant 0 : i32
    %c0_i32_0 = arith.constant 0 : i32
    %c0_i32_1 = arith.constant 0 : i32
    %c0_i32_2 = arith.constant 0 : i32
    %c0_i32_3 = arith.constant 0 : i32
    return %c0_i32, %c0_i32_0, %c0_i32_1, %c0_i32_2 : i32, i32, i32, i32
  }
  func.func @transform_6(%arg0: i32) -> (i32, i32) {
    %c0_i32 = arith.constant 0 : i32
    %c0_i32_0 = arith.constant 0 : i32
    %c0_i32_1 = arith.constant 0 : i32
    return %c0_i32, %c0_i32_0 : i32, i32
  }
  func.func @transform_7(%arg0: i32) -> (i32, i32, i32, i32) {
    %c0_i32 = arith.constant 0 : i32
    %c0_i32_0 = arith.constant 0 : i32
    %c0_i32_1 = arith.constant 0 : i32
    %c0_i32_2 = arith.constant 0 : i32
    %c0_i32_3 = arith.constant 0 : i32
    return %c0_i32, %c0_i32_0, %c0_i32_1, %c0_i32_2 : i32, i32, i32, i32
  }
  func.func @transform_8(%arg0: i32) -> (i32, i32) {
    %c0_i32 = arith.constant 0 : i32
    %c0_i32_0 = arith.constant 0 : i32
    %c0_i32_1 = arith.constant 0 : i32
    return %c0_i32, %c0_i32_0 : i32, i32
  }
  func.func @transform_9(%arg0: i32) -> (i32, i32, i32, i32) {
    %c0_i32 = arith.constant 0 : i32
    %c0_i32_0 = arith.constant 0 : i32
    %c0_i32_1 = arith.constant 0 : i32
    %c0_i32_2 = arith.constant 0 : i32
    %c0_i32_3 = arith.constant 0 : i32
    return %c0_i32, %c0_i32_0, %c0_i32_1, %c0_i32_2 : i32, i32, i32, i32
  }
  func.func @transform_10(%arg0: i32) -> (i32, i32) {
    %c0_i32 = arith.constant 0 : i32
    %c0_i32_0 = arith.constant 0 : i32
    %c0_i32_1 = arith.constant 0 : i32
    return %c0_i32, %c0_i32_0 : i32, i32
  }
  func.func @transform_11(%arg0: i32) -> (i32, i32, i32) {
    %c0_i32 = arith.constant 0 : i32
    %c0_i32_0 = arith.constant 0 : i32
    %c0_i32_1 = arith.constant 0 : i32
    return %arg0, %c0_i32, %c0_i32_0 : i32, i32, i32
  }
}

</mosaic_0001>

<llo_original>
// kernel: tpu_custom_call.1
$region0: #{tpu_custom_call.1}
  #allocation0 [shape = 'u32[]', space=smem, size = 0x4, offset = 0x4, fixed_abs, tag = 'smem constant byte address 0x4 - core index']
  #allocation1 [shape = 'u32[144,128]{1,0:T(1,128)}', space=vmem, size = 0x12000, scoped, tag = 'internal scratch']
  #allocation2 [shape = 'f32[29,29,8]{2,1,0:T(8,128)}', space=vmem, size = 0x74000, scoped, tag = 'scratch operand']
  #allocation3 [shape = 'f32[13,13,8]{2,1,0:T(8,128)}', space=vmem, size = 0x1a000, scoped, tag = 'scratch operand']
  #allocation4 [shape = 'f32[6,6,8]{2,1,0:T(8,128)}', space=vmem, size = 0x6000, scoped, tag = 'scratch operand']
  #allocation5 [shape = 'f32[2,2,8]{2,1,0:T(2,128)}', space=vmem, size = 0x800, scoped, tag = 'scratch operand']
  %s0 = inlined_call_operand.vmem [shape: f32[2,64,64,3], index: 0, kind: input, shape index: {}]
  %s1 = inlined_call_operand.vmem [shape: bf16[7,7,8,3], index: 1, kind: input, shape index: {}]
  %s2 = inlined_call_operand.vmem [shape: f32[1,8], index: 2, kind: input, shape index: {}]
  %s3 = inlined_call_operand.vmem [shape: bf16[5,5,8,8], index: 3, kind: input, shape index: {}]
  %s4 = inlined_call_operand.vmem [shape: f32[1,8], index: 4, kind: input, shape index: {}]
  %s5 = inlined_call_operand.vmem [shape: bf16[3,3,8,8], index: 5, kind: input, shape index: {}]
  %s6 = inlined_call_operand.vmem [shape: f32[1,8], index: 6, kind: input, shape index: {}]
  %s7 = inlined_call_operand.vmem [shape: bf16[3,3,8,8], index: 7, kind: input, shape index: {}]
  %s8 = inlined_call_operand.vmem [shape: f32[1,8], index: 8, kind: input, shape index: {}]
  %s9 = inlined_call_operand.vmem [shape: bf16[2,2,8,32], index: 9, kind: input, shape index: {}]
  %s10 = inlined_call_operand.vmem [shape: f32[1,32], index: 10, kind: input, shape index: {}]
  %s11 = inlined_call_operand.hbm [shape: f32[2,1,32], index: 11, kind: output, shape index: {}]
  %s12 = sld [smem:[#allocation0]]
  $region105: #{tpu_custom_call.1} parent=0
    _
  %s14 = ssub.s32 1, %s12
  %s15 = scalar_select 0, %s14, %s12
  $region1: #{tpu_custom_call.1} parent=0
    #allocation6 [shape = 'u8[1024]{0}', space=vmem, size = 0x400, scoped, tag = 'output window, operand 0']
    #allocation7 [shape = 's32[2]{0}', space=sflag, size = 0x8, scoped, tag = 'scoped memory for tpu_custom_call.1']
    %16 = vsyncpa [#allocation7], 0
    %s17 = scalar_lea.sflag [#allocation7], 1
    %18 = vsyncpa %s17, 0
    loop: start=0, step=1, limit=4
    $region2: #{tpu_custom_call.1} parent=1 // loop_pre_header
      _
    $region3: #{tpu_custom_call.1} parent=1 // loop_header
      %s20 = sphi 0, %s24
      %p21 = scmp.ge.s32.totalorder %s20, 4
      %s30 = sphi 0, %s32
      %s33 = sphi 0, %s30
      %s34 = sphi 0, %s33
      %s50 = sphi 0, %s34
      %s54 = sphi 0, %s54
      %s56 = sphi 0, %s54
      %s57 = sphi 0, %s56
      %s71 = sphi 0, %s57
      %s75 = sphi 0, %s75
      %s77 = sphi 0, %s75
      %s78 = sphi 0, %s77
      %s92 = sphi 0, %s78
      %s96 = sphi 0, %s96
      %s98 = sphi 0, %s96
      %s99 = sphi 0, %s98
      %s113 = sphi 0, %s99
      %s117 = sphi 0, %s117
      %s119 = sphi 0, %s117
      %s120 = sphi 0, %s119
      %s134 = sphi 0, %s120
      %s138 = sphi 0, %s138
      %s140 = sphi 0, %s138
      %s141 = sphi 0, %s140
      %s155 = sphi 0, %s141
      %s159 = sphi 0, %s159
      %s161 = sphi 0, %s159
      %s162 = sphi 0, %s161
      %s176 = sphi 0, %s162
      %s180 = sphi 0, %s180
      %s182 = sphi 0, %s180
      %s183 = sphi 0, %s182
      %s197 = sphi 0, %s183
      %s201 = sphi 0, %s201
      %s203 = sphi 0, %s201
      %s204 = sphi 0, %s203
      %s218 = sphi 0, %s204
      %s222 = sphi 0, %s222
      %s224 = sphi 0, %s222
      %s225 = sphi 0, %s224
      %s239 = sphi 0, %s225
      %s243 = sphi 0, %s243
      %s245 = sphi 0, %s243
      %s246 = sphi 0, %s245
      %s260 = sphi 0, %s246
      %s266 = sphi 0, %s268
      %s269 = sphi 0, %s266
      %s270 = sphi 0, %s269
      %s286 = sphi 0, %s270
    $region4: #{tpu_custom_call.1} parent=1 // loop_header_branch
      %23 = sbr.rel (%p21) target = $region8
    $region5: #{tpu_custom_call.1} parent=1 // loop_body
      %s25 = ssub.s32 %s20, 1
      %s26 = ssub.s32 %s20, 2
      %s27 = sadd.s32 %s20, 1
      %s28 = ssub.s32 %s20, %s27
      %p29 = scmp.eq.s32.totalorder %s28, 0
      %s31 = sadd.s32 %s30, 1
      %s32 = scalar_select %p29, %s30, %s31
      %p35 = pneg %p29
      %p36 = scmp.eq.s32.totalorder %s20, 1
      %p37 = por %p35, %p36
      %p38 = scmp.ne.s32.totalorder %s30, %s33
      %p39 = scmp.eq.s32.totalorder %s20, 0
      %p40 = por %p38, %p39
      %p41 = scmp.ne.s32.totalorder %s30, %s33
      %p42 = scmp.eq.s32.totalorder %s25, 1
      %p43 = por %p41, %p42
      %p44 = scmp.ne.s32.totalorder %s33, %s34
      %p45 = scmp.eq.s32.totalorder %s25, 0
      %p46 = por %p44, %p45
      %p47 = scmp.ne.s32.totalorder %s33, %s34
      %p48 = scmp.eq.s32.totalorder %s26, 1
      %p49 = por %p47, %p48
      %p51 = scmp.ne.s32.totalorder %s34, %s50
      %p52 = scmp.eq.s32.totalorder %s26, 0
      %p53 = por %p51, %p52
      %s55 = sadd.s32 %s54, 1
      %p58 = scmp.eq.s32.totalorder %s20, 1
      %p59 = scmp.ne.s32.totalorder %s54, %s56
      %p60 = scmp.eq.s32.totalorder %s20, 0
      %p61 = por %p59, %p60
      %p62 = scmp.ne.s32.totalorder %s54, %s56
      %p63 = scmp.eq.s32.totalorder %s25, 1
      %p64 = por %p62, %p63
      %p65 = scmp.ne.s32.totalorder %s56, %s57
      %p66 = scmp.eq.s32.totalorder %s25, 0
      %p67 = por %p65, %p66
      %p68 = scmp.ne.s32.totalorder %s56, %s57
      %p69 = scmp.eq.s32.totalorder %s26, 1
      %p70 = por %p68, %p69
      %p72 = scmp.ne.s32.totalorder %s57, %s71
      %p73 = scmp.eq.s32.totalorder %s26, 0
      %p74 = por %p72, %p73
      %s76 = sadd.s32 %s75, 1
      %p79 = scmp.eq.s32.totalorder %s20, 1
      %p80 = scmp.ne.s32.totalorder %s75, %s77
      %p81 = scmp.eq.s32.totalorder %s20, 0
      %p82 = por %p80, %p81
      %p83 = scmp.ne.s32.totalorder %s75, %s77
      %p84 = scmp.eq.s32.totalorder %s25, 1
      %p85 = por %p83, %p84
      %p86 = scmp.ne.s32.totalorder %s77, %s78
      %p87 = scmp.eq.s32.totalorder %s25, 0
      %p88 = por %p86, %p87
      %p89 = scmp.ne.s32.totalorder %s77, %s78
      %p90 = scmp.eq.s32.totalorder %s26, 1
      %p91 = por %p89, %p90
      %p93 = scmp.ne.s32.totalorder %s78, %s92
      %p94 = scmp.eq.s32.totalorder %s26, 0
      %p95 = por %p93, %p94
      %s97 = sadd.s32 %s96, 1
      %p100 = scmp.eq.s32.totalorder %s20, 1
      %p101 = scmp.ne.s32.totalorder %s96, %s98
      %p102 = scmp.eq.s32.totalorder %s20, 0
      %p103 = por %p101, %p102
      %p104 = scmp.ne.s32.totalorder %s96, %s98
      %p105 = scmp.eq.s32.totalorder %s25, 1
      %p106 = por %p104, %p105
      %p107 = scmp.ne.s32.totalorder %s98, %s99
      %p108 = scmp.eq.s32.totalorder %s25, 0
      %p109 = por %p107, %p108
      %p110 = scmp.ne.s32.totalorder %s98, %s99
      %p111 = scmp.eq.s32.totalorder %s26, 1
      %p112 = por %p110, %p111
      %p114 = scmp.ne.s32.totalorder %s99, %s113
      %p115 = scmp.eq.s32.totalorder %s26, 0
      %p116 = por %p114, %p115
      %s118 = sadd.s32 %s117, 1
      %p121 = scmp.eq.s32.totalorder %s20, 1
      %p122 = scmp.ne.s32.totalorder %s117, %s119
      %p123 = scmp.eq.s32.totalorder %s20, 0
      %p124 = por %p122, %p123
      %p125 = scmp.ne.s32.totalorder %s117, %s119
      %p126 = scmp.eq.s32.totalorder %s25, 1
      %p127 = por %p125, %p126
      %p128 = scmp.ne.s32.totalorder %s119, %s120
      %p129 = scmp.eq.s32.totalorder %s25, 0
      %p130 = por %p128, %p129
      %p131 = scmp.ne.s32.totalorder %s119, %s120
      %p132 = scmp.eq.s32.totalorder %s26, 1
      %p133 = por %p131, %p132
      %p135 = scmp.ne.s32.totalorder %s120, %s134
      %p136 = scmp.eq.s32.totalorder %s26, 0
      %p137 = por %p135, %p136
      %s139 = sadd.s32 %s138, 1
      %p142 = scmp.eq.s32.totalorder %s20, 1
      %p143 = scmp.ne.s32.totalorder %s138, %s140
      %p144 = scmp.eq.s32.totalorder %s20, 0
      %p145 = por %p143, %p144
      %p146 = scmp.ne.s32.totalorder %s138, %s140
      %p147 = scmp.eq.s32.totalorder %s25, 1
      %p148 = por %p146, %p147
      %p149 = scmp.ne.s32.totalorder %s140, %s141
      %p150 = scmp.eq.s32.totalorder %s25, 0
      %p151 = por %p149, %p150
      %p152 = scmp.ne.s32.totalorder %s140, %s141
      %p153 = scmp.eq.s32.totalorder %s26, 1
      %p154 = por %p152, %p153
      %p156 = scmp.ne.s32.totalorder %s141, %s155
      %p157 = scmp.eq.s32.totalorder %s26, 0
      %p158 = por %p156, %p157
      %s160 = sadd.s32 %s159, 1
      %p163 = scmp.eq.s32.totalorder %s20, 1
      %p164 = scmp.ne.s32.totalorder %s159, %s161
      %p165 = scmp.eq.s32.totalorder %s20, 0
      %p166 = por %p164, %p165
      %p167 = scmp.ne.s32.totalorder %s159, %s161
      %p168 = scmp.eq.s32.totalorder %s25, 1
      %p169 = por %p167, %p168
      %p170 = scmp.ne.s32.totalorder %s161, %s162
      %p171 = scmp.eq.s32.totalorder %s25, 0
      %p172 = por %p170, %p171
      %p173 = scmp.ne.s32.totalorder %s161, %s162
      %p174 = scmp.eq.s32.totalorder %s26, 1
      %p175 = por %p173, %p174
      %p177 = scmp.ne.s32.totalorder %s162, %s176
      %p178 = scmp.eq.s32.totalorder %s26, 0
      %p179 = por %p177, %p178
      %s181 = sadd.s32 %s180, 1
      %p184 = scmp.eq.s32.totalorder %s20, 1
      %p185 = scmp.ne.s32.totalorder %s180, %s182
      %p186 = scmp.eq.s32.totalorder %s20, 0
      %p187 = por %p185, %p186
      %p188 = scmp.ne.s32.totalorder %s180, %s182
      %p189 = scmp.eq.s32.totalorder %s25, 1
      %p190 = por %p188, %p189
      %p191 = scmp.ne.s32.totalorder %s182, %s183
      %p192 = scmp.eq.s32.totalorder %s25, 0
      %p193 = por %p191, %p192
      %p194 = scmp.ne.s32.totalorder %s182, %s183
      %p195 = scmp.eq.s32.totalorder %s26, 1
      %p196 = por %p194, %p195
      %p198 = scmp.ne.s32.totalorder %s183, %s197
      %p199 = scmp.eq.s32.totalorder %s26, 0
      %p200 = por %p198, %p199
      %s202 = sadd.s32 %s201, 1
      %p205 = scmp.eq.s32.totalorder %s20, 1
      %p206 = scmp.ne.s32.totalorder %s201, %s203
      %p207 = scmp.eq.s32.totalorder %s20, 0
      %p208 = por %p206, %p207
      %p209 = scmp.ne.s32.totalorder %s201, %s203
      %p210 = scmp.eq.s32.totalorder %s25, 1
      %p211 = por %p209, %p210
      %p212 = scmp.ne.s32.totalorder %s203, %s204
      %p213 = scmp.eq.s32.totalorder %s25, 0
      %p214 = por %p212, %p213
      %p215 = scmp.ne.s32.totalorder %s203, %s204
      %p216 = scmp.eq.s32.totalorder %s26, 1
      %p217 = por %p215, %p216
      %p219 = scmp.ne.s32.totalorder %s204, %s218
      %p220 = scmp.eq.s32.totalorder %s26, 0
      %p221 = por %p219, %p220
      %s223 = sadd.s32 %s222, 1
      %p226 = scmp.eq.s32.totalorder %s20, 1
      %p227 = scmp.ne.s32.totalorder %s222, %s224
      %p228 = scmp.eq.s32.totalorder %s20, 0
      %p229 = por %p227, %p228
      %p230 = scmp.ne.s32.totalorder %s222, %s224
      %p231 = scmp.eq.s32.totalorder %s25, 1
      %p232 = por %p230, %p231
      %p233 = scmp.ne.s32.totalorder %s224, %s225
      %p234 = scmp.eq.s32.totalorder %s25, 0
      %p235 = por %p233, %p234
      %p236 = scmp.ne.s32.totalorder %s224, %s225
      %p237 = scmp.eq.s32.totalorder %s26, 1
      %p238 = por %p236, %p237
      %p240 = scmp.ne.s32.totalorder %s225, %s239
      %p241 = scmp.eq.s32.totalorder %s26, 0
      %p242 = por %p240, %p241
      %s244 = sadd.s32 %s243, 1
      %p247 = scmp.eq.s32.totalorder %s20, 1
      %p248 = scmp.ne.s32.totalorder %s243, %s245
      %p249 = scmp.eq.s32.totalorder %s20, 0
      %p250 = por %p248, %p249
      %p251 = scmp.ne.s32.totalorder %s243, %s245
      %p252 = scmp.eq.s32.totalorder %s25, 1
      %p253 = por %p251, %p252
      %p254 = scmp.ne.s32.totalorder %s245, %s246
      %p255 = scmp.eq.s32.totalorder %s25, 0
      %p256 = por %p254, %p255
      %p257 = scmp.ne.s32.totalorder %s245, %s246
      %p258 = scmp.eq.s32.totalorder %s26, 1
      %p259 = por %p257, %p258
      %p261 = scmp.ne.s32.totalorder %s246, %s260
      %p262 = scmp.eq.s32.totalorder %s26, 0
      %p263 = por %p261, %p262
      %s264 = ssub.s32 %s20, %s27
      %p265 = scmp.eq.s32.totalorder %s264, 0
      %s267 = sadd.s32 %s266, 1
      %s268 = scalar_select %p265, %s266, %s267
      %p271 = pneg %p265
      %p272 = scmp.eq.s32.totalorder %s20, 1
      %p273 = por %p271, %p272
      %p274 = scmp.ne.s32.totalorder %s266, %s269
      %p275 = scmp.eq.s32.totalorder %s20, 0
      %p276 = por %p274, %p275
      %p277 = scmp.ne.s32.totalorder %s266, %s269
      %p278 = scmp.eq.s32.totalorder %s25, 1
      %p279 = por %p277, %p278
      %p280 = scmp.ne.s32.totalorder %s269, %s270
      %p281 = scmp.eq.s32.totalorder %s25, 0
      %p282 = por %p280, %p281
      %p283 = scmp.ne.s32.totalorder %s269, %s270
      %p284 = scmp.eq.s32.totalorder %s26, 1
      %p285 = por %p283, %p284
      %p287 = scmp.ne.s32.totalorder %s270, %s286
      %p288 = scmp.eq.s32.totalorder %s26, 0
      %p289 = por %p287, %p288
      %p290 = scmp.le.s32.totalorder 1, %s20
      %p291 = scmp.lt.s32.totalorder %s20, 3
      %p292 = pnand %p290, %p291
      %p293 = pneg %p292
      // Predicated region
      $region9: #{tpu_custom_call.1} parent=5 // pred_check
        _
      $region10: #{tpu_custom_call.1} parent=5 // pred_check_branch
        %295 = sbr.rel (%p292) target = $region12
      $region11: #{tpu_custom_call.1} parent=5 // pred_region
        %s296 = ssub.s32 %s20, 1
        // Predicated region
        $region13: #{tpu_custom_call.1} parent=11 // pred_check
          %p297 = pneg %p67
        $region14: #{tpu_custom_call.1} parent=11 // pred_check_branch
          %299 = sbr.rel (%p297) target = $region16
        $region15: #{tpu_custom_call.1} parent=11 // pred_region
          _
        $region16: #{tpu_custom_call.1} parent=11 // pred_fallthru
          _
        // Predicated region
        $region17: #{tpu_custom_call.1} parent=11 // pred_check
          %p300 = pneg %p88
        $region18: #{tpu_custom_call.1} parent=11 // pred_check_branch
          %302 = sbr.rel (%p300) target = $region20
        $region19: #{tpu_custom_call.1} parent=11 // pred_region
          _
        $region20: #{tpu_custom_call.1} parent=11 // pred_fallthru
          _
        // Predicated region
        $region21: #{tpu_custom_call.1} parent=11 // pred_check
          %p303 = pneg %p109
        $region22: #{tpu_custom_call.1} parent=11 // pred_check_branch
          %305 = sbr.rel (%p303) target = $region24
        $region23: #{tpu_custom_call.1} parent=11 // pred_region
          _
        $region24: #{tpu_custom_call.1} parent=11 // pred_fallthru
          _
        // Predicated region
        $region25: #{tpu_custom_call.1} parent=11 // pred_check
          %p306 = pneg %p130
        $region26: #{tpu_custom_call.1} parent=11 // pred_check_branch
          %308 = sbr.rel (%p306) target = $region28
        $region27: #{tpu_custom_call.1} parent=11 // pred_region
          _
        $region28: #{tpu_custom_call.1} parent=11 // pred_fallthru
          _
        // Predicated region
        $region29: #{tpu_custom_call.1} parent=11 // pred_check
          %p309 = pneg %p151
        $region30: #{tpu_custom_call.1} parent=11 // pred_check_branch
          %311 = sbr.rel (%p309) target = $region32
        $region31: #{tpu_custom_call.1} parent=11 // pred_region
          _
        $region32: #{tpu_custom_call.1} parent=11 // pred_fallthru
          _
        // Predicated region
        $region33: #{tpu_custom_call.1} parent=11 // pred_check
          %p312 = pneg %p172
        $region34: #{tpu_custom_call.1} parent=11 // pred_check_branch
          %314 = sbr.rel (%p312) target = $region36
        $region35: #{tpu_custom_call.1} parent=11 // pred_region
          _
        $region36: #{tpu_custom_call.1} parent=11 // pred_fallthru
          _
        // Predicated region
        $region37: #{tpu_custom_call.1} parent=11 // pred_check
          %p315 = pneg %p193
        $region38: #{tpu_custom_call.1} parent=11 // pred_check_branch
          %317 = sbr.rel (%p315) target = $region40
        $region39: #{tpu_custom_call.1} parent=11 // pred_region
          _
        $region40: #{tpu_custom_call.1} parent=11 // pred_fallthru
          _
        // Predicated region
        $region41: #{tpu_custom_call.1} parent=11 // pred_check
          %p318 = pneg %p214
        $region42: #{tpu_custom_call.1} parent=11 // pred_check_branch
          %320 = sbr.rel (%p318) target = $region44
        $region43: #{tpu_custom_call.1} parent=11 // pred_region
          _
        $region44: #{tpu_custom_call.1} parent=11 // pred_fallthru
          _
        // Predicated region
        $region45: #{tpu_custom_call.1} parent=11 // pred_check
          %p321 = pneg %p235
        $region46: #{tpu_custom_call.1} parent=11 // pred_check_branch
          %323 = sbr.rel (%p321) target = $region48
        $region47: #{tpu_custom_call.1} parent=11 // pred_region
          _
        $region48: #{tpu_custom_call.1} parent=11 // pred_fallthru
          _
        // Predicated region
        $region49: #{tpu_custom_call.1} parent=11 // pred_check
          %p324 = pneg %p256
        $region50: #{tpu_custom_call.1} parent=11 // pred_check_branch
          %326 = sbr.rel (%p324) target = $region52
        $region51: #{tpu_custom_call.1} parent=11 // pred_region
          _
        $region52: #{tpu_custom_call.1} parent=11 // pred_fallthru
          _
      $region12: #{tpu_custom_call.1} parent=5 // pred_fallthru
        _
      %p327 = scmp.lt.s32.totalorder %s20, 2
      // Predicated region
      $region53: #{tpu_custom_call.1} parent=5 // pred_check
        %p328 = pneg %p327
      $region54: #{tpu_custom_call.1} parent=5 // pred_check_branch
        %330 = sbr.rel (%p328) target = $region56
      $region55: #{tpu_custom_call.1} parent=5 // pred_region
        // Predicated region
        $region57: #{tpu_custom_call.1} parent=55 // pred_check
          %p331 = pneg %p40
        $region58: #{tpu_custom_call.1} parent=55 // pred_check_branch
          %333 = sbr.rel (%p331) target = $region60
        $region59: #{tpu_custom_call.1} parent=55 // pred_region
          %p334 = scmp.lt.s32.totalorder %s20, 1
          %s335 = scalar_select %p334, %s20, 1
          %s336 = smul.addr %s335, 512
          %s337 = smul.addr %s336, 8
          %s338 = scalar_lea.vmem %s0, %s337
        $region60: #{tpu_custom_call.1} parent=55 // pred_fallthru
          _
      $region56: #{tpu_custom_call.1} parent=5 // pred_fallthru
        _
      %p339 = scmp.le.s32.totalorder 1, %s20
      %p340 = scmp.lt.s32.totalorder %s20, 3
      %p341 = pnand %p339, %p340
      %p342 = pneg %p341
      // Predicated region
      $region61: #{tpu_custom_call.1} parent=5 // pred_check
        _
      $region62: #{tpu_custom_call.1} parent=5 // pred_check_branch
        %344 = sbr.rel (%p341) target = $region64
      $region63: #{tpu_custom_call.1} parent=5 // pred_region
        %s345 = ssub.s32 %s20, 1
        %p346 = scmp.lt.s32.totalorder %s25, 1
        %s347 = scalar_select %p346, %s25, 1
        %s348 = smul.addr %s347, 512
        %s349 = smul.addr %s348, 8
        %s350 = scalar_lea.vmem %s0, %s349
        %p351 = pneg %p46
        %p352 = pneg %p43
        %p353 = pneg %p67
        %p354 = pneg %p64
        %p355 = pneg %p88
        %p356 = pneg %p85
        %p357 = pneg %p109
        %p358 = pneg %p106
        %p359 = pneg %p130
        %p360 = pneg %p127
        %p361 = pneg %p151
        %p362 = pneg %p148
        %p363 = pneg %p172
        %p364 = pneg %p169
        %p365 = pneg %p193
        %p366 = pneg %p190
        %p367 = pneg %p214
        %p368 = pneg %p211
        %p369 = pneg %p235
        %p370 = pneg %p232
        %p371 = pneg %p256
        %p372 = pneg %p253
        %p373 = pneg %p282
        %p374 = pneg %p279
        %s375 = sand.u32 %s269, 1
        %s376 = scalar_lea.sflag [#allocation7], %s375
        %s377 = sand.u32 %s269, 1
        %s378 = scalar_lea.vmem [#allocation6], %s377
        %p379 = scmp.lt.s32.totalorder %s25, 1
        %s380 = scalar_select %p379, %s25, 1
        %s381 = smul.addr %s380, 512
        %s382 = smul.addr %s381, 8
        %s383 = scalar_lea.vmem %s0, %s382
        %v385 = vld [vmem:[%s2] sm:$0x1]
        %v387 = vlaneseq
        %v388 = vshrl.u32 %v387, 7
        %v389 = vsub.s32 0, %v388
        %v390 = vrot.slane %v385, %v389
        loop: start=0, step=1, limit=29
        $region65: #{tpu_custom_call.1} parent=63 // loop_pre_header
          _
        $region66: #{tpu_custom_call.1} parent=63 // loop_header
          %s393 = sphi 0, %s397
          %p394 = scmp.ge.s32.totalorder %s393, 29
        $region67: #{tpu_custom_call.1} parent=63 // loop_header_branch
          %396 = sbr.rel (%p394) target = $region71
        $region68: #{tpu_custom_call.1} parent=63 // loop_body
          %s398 = smul.u32 %s393, 2
          %s399 = smul.u32 %s398, 64
          %s400 = scalar_lea.vmem %s383, %s399
          %v401 = vld [vmem:[%s400] ss:$2 sm:$0xff]
          %s402 = scalar_lea.vmem %s400, 16
          %v403 = vld [vmem:[%s402] ss:$2 sm:$0xff]
          %s404 = scalar_lea.vmem %s400, 32
          %v405 = vld [vmem:[%s404] ss:$2 sm:$0xff]
          %s406 = scalar_lea.vmem %s400, 48
          %v407 = vld [vmem:[%s406] ss:$2 sm:$0x1f]
          %s408 = scalar_lea.vmem %s400, 64
          %v409 = vld [vmem:[%s408] ss:$2 sm:$0xff]
          %s410 = scalar_lea.vmem %s400, 80
          %v411 = vld [vmem:[%s410] ss:$2 sm:$0xff]
          %s412 = scalar_lea.vmem %s400, 96
          %v413 = vld [vmem:[%s412] ss:$2 sm:$0xff]
          %s414 = scalar_lea.vmem %s400, 112
          %v415 = vld [vmem:[%s414] ss:$2 sm:$0x1f]
          %s416 = scalar_lea.vmem %s400, 128
          %v417 = vld [vmem:[%s416] ss:$2 sm:$0xff]
          %s418 = scalar_lea.vmem %s400, 144
          %v419 = vld [vmem:[%s418] ss:$2 sm:$0xff]
          %s420 = scalar_lea.vmem %s400, 160
          %v421 = vld [vmem:[%s420] ss:$2 sm:$0xff]
          %s422 = scalar_lea.vmem %s400, 176
          %v423 = vld [vmem:[%s422] ss:$2 sm:$0x1f]
          %s424 = scalar_lea.vmem %s400, 192
          %v425 = vld [vmem:[%s424] ss:$2 sm:$0xff]
          %s426 = scalar_lea.vmem %s400, 208
          %v427 = vld [vmem:[%s426] ss:$2 sm:$0xff]
          %s428 = scalar_lea.vmem %s400, 224
          %v429 = vld [vmem:[%s428] ss:$2 sm:$0xff]
          %s430 = scalar_lea.vmem %s400, 240
          %v431 = vld [vmem:[%s430] ss:$2 sm:$0x1f]
          %s432 = scalar_lea.vmem %s400, 256
          %v433 = vld [vmem:[%s432] ss:$2 sm:$0xff]
          %s434 = scalar_lea.vmem %s400, 272
          %v435 = vld [vmem:[%s434] ss:$2 sm:$0xff]
          %s436 = scalar_lea.vmem %s400, 288
          %v437 = vld [vmem:[%s436] ss:$2 sm:$0xff]
          %s438 = scalar_lea.vmem %s400, 304
          %v439 = vld [vmem:[%s438] ss:$2 sm:$0x1f]
          %s440 = scalar_lea.vmem %s400, 320
          %v441 = vld [vmem:[%s440] ss:$2 sm:$0xff]
          %s442 = scalar_lea.vmem %s400, 336
          %v443 = vld [vmem:[%s442] ss:$2 sm:$0xff]
          %s444 = scalar_lea.vmem %s400, 352
          %v445 = vld [vmem:[%s444] ss:$2 sm:$0xff]
          %s446 = scalar_lea.vmem %s400, 368
          %v447 = vld [vmem:[%s446] ss:$2 sm:$0x1f]
          %s448 = scalar_lea.vmem %s400, 384
          %v449 = vld [vmem:[%s448] ss:$2 sm:$0xff]
          %s450 = scalar_lea.vmem %s400, 400
          %v451 = vld [vmem:[%s450] ss:$2 sm:$0xff]
          %s452 = scalar_lea.vmem %s400, 416
          %v453 = vld [vmem:[%s452] ss:$2 sm:$0xff]
          %s454 = scalar_lea.vmem %s400, 432
          %v455 = vld [vmem:[%s454] ss:$2 sm:$0x1f]
          %v456 = vpack.c.bf16 %v403, %v401
          %v457 = vpack.c.bf16 %v407, %v405
          %v458 = vpack.c.bf16 %v411, %v409
          %v459 = vpack.c.bf16 %v415, %v413
          %v460 = vpack.c.bf16 %v419, %v417
          %v461 = vpack.c.bf16 %v423, %v421
          %v462 = vpack.c.bf16 %v427, %v425
          %v463 = vpack.c.bf16 %v431, %v429
          %v464 = vpack.c.bf16 %v435, %v433
          %v465 = vpack.c.bf16 %v439, %v437
          %v466 = vpack.c.bf16 %v443, %v441
          %v467 = vpack.c.bf16 %v447, %v445
          %v468 = vpack.c.bf16 %v451, %v449
          %v469 = vpack.c.bf16 %v455, %v453
          %v470 = vld [vmem:[%s1] sm:$0xf]
          %v471 = vld [vmem:[%s1 + $0x1c] sm:$0xf]
          %v472 = vld [vmem:[%s1 + $0x38] sm:$0xf]
          %v473 = vld [vmem:[%s1 + $0x54] sm:$0xf]
          %v474 = vld [vmem:[%s1 + $0x70] sm:$0xf]
          %v475 = vld [vmem:[%s1 + $0x8c] sm:$0xf]
          %v476 = vld [vmem:[%s1 + $0xa8] sm:$0xf]
          %vm477 = vcmask 23552
          %v479 = vsel %vm477, %v456, 0
          %v482 = vsel %vm477, %v457, 0
          %v485 = vsel %vm477, %v470, 0
          %487 = vmatprep.subr.bf16.mxu0 0
          %488 = vmatpush1.bf16.xpose.msra.mxu0 0
          %489 = vmatprep.subr.bf16.mxu0 0
          %490 = vmatpush1.bf16.xpose.msra.mxu0 0
          %491 = vmatprep.subr.bf16.mxu0 0
          %492 = vmatpush1.bf16.xpose.msra.mxu0 0
          %493 = vmatprep.subr.bf16.mxu0 0
          %494 = vmatpush1.bf16.xpose.msra.mxu0 0
          %495 = vmatprep.subr.bf16.mxu0 0
          %496 = vmatpush1.bf16.xpose.msra.mxu0 0
          %497 = vmatprep.subr.bf16.mxu0 0
          %498 = vmatpush1.bf16.xpose.msra.mxu0 0
          %499 = vmatprep.subr.bf16.mxu0 0
          %500 = vmatpush1.bf16.xpose.msra.mxu0 0
          %501 = vmatprep.subr.bf16.mxu0 0
          %502 = vmatpush1.bf16.xpose.msra.mxu0 %v485
          %503 = vmatprep.subr.bf16.mxu0 0
          %504 = vmatpush2.bf16.xpose.msra.mxu0 0
          %505 = vmatprep.subr.bf16.mxu0 0
          %506 = vmatpush2.bf16.xpose.msra.mxu0 0
          %507 = vmatprep.subr.bf16.mxu0 0
          %508 = vmatpush2.bf16.xpose.msra.mxu0 0
          %509 = vmatprep.subr.bf16.mxu0 0
          %510 = vmatpush2.bf16.xpose.msra.mxu0 0
          %511 = vmatprep.subr.bf16.mxu0 0
          %512 = vmatpush2.bf16.xpose.msra.mxu0 0
          %513 = vmatprep.subr.bf16.mxu0 0
          %514 = vmatpush2.bf16.xpose.msra.mxu0 0
          %515 = vmatprep.subr.bf16.mxu0 0
          %516 = vmatpush2.bf16.xpose.msra.mxu0 0
          %517 = vmatprep.subr.bf16.mxu0 0
          %518 = vmatpush2.bf16.xpose.msra.mxu0 0
          %519 = vmatprep.mubr.bf16.mxu0 0
          %520 = vmatmul.mubr.bf16.gmra.mxu0 %v479
          %v521 = vpop.f32.mrf.mxu0
          %v522 = vadd.f32 0.0, %v521
          %v523 = vpop.f32.mrf.mxu0
          %v524 = vpop.f32.mrf.mxu0
          %v525 = vadd.f32 0.0, %v524
          %v526 = vpop.f32.mrf.mxu0
          %527 = vmatprep.mubr.bf16.mxu0 0
          %528 = vmatmul.mubr.bf16.gmra.mxu0 %v482
          %v529 = vpop.f32.mrf.mxu0
          %v530 = vadd.f32 0.0, %v529
          %v531 = vpop.f32.mrf.mxu0
          %v532 = vpop.f32.mrf.mxu0
          %v533 = vadd.f32 0.0, %v532
          %v534 = vpop.f32.mrf.mxu0
          %535 = vdwg.mxu0
          %v537 = vsel %vm477, %v458, 0
          %v540 = vsel %vm477, %v459, 0
          %v543 = vsel %vm477, %v471, 0
          %545 = vmatprep.subr.bf16.mxu0 0
          %546 = vmatpush1.bf16.xpose.msra.mxu0 0
          %547 = vmatprep.subr.bf16.mxu0 0
          %548 = vmatpush1.bf16.xpose.msra.mxu0 0
          %549 = vmatprep.subr.bf16.mxu0 0
          %550 = vmatpush1.bf16.xpose.msra.mxu0 0
          %551 = vmatprep.subr.bf16.mxu0 0
          %552 = vmatpush1.bf16.xpose.msra.mxu0 0
          %553 = vmatprep.subr.bf16.mxu0 0
          %554 = vmatpush1.bf16.xpose.msra.mxu0 0
          %555 = vmatprep.subr.bf16.mxu0 0
          %556 = vmatpush1.bf16.xpose.msra.mxu0 0
          %557 = vmatprep.subr.bf16.mxu0 0
          %558 = vmatpush1.bf16.xpose.msra.mxu0 0
          %559 = vmatprep.subr.bf16.mxu0 0
          %560 = vmatpush1.bf16.xpose.msra.mxu0 %v543
          %561 = vmatprep.subr.bf16.mxu0 0
          %562 = vmatpush2.bf16.xpose.msra.mxu0 0
          %563 = vmatprep.subr.bf16.mxu0 0
          %564 = vmatpush2.bf16.xpose.msra.mxu0 0
          %565 = vmatprep.subr.bf16.mxu0 0
          %566 = vmatpush2.bf16.xpose.msra.mxu0 0
          %567 = vmatprep.subr.bf16.mxu0 0
          %568 = vmatpush2.bf16.xpose.msra.mxu0 0
          %569 = vmatprep.subr.bf16.mxu0 0
          %570 = vmatpush2.bf16.xpose.msra.mxu0 0
          %571 = vmatprep.subr.bf16.mxu0 0
          %572 = vmatpush2.bf16.xpose.msra.mxu0 0
          %573 = vmatprep.subr.bf16.mxu0 0
          %574 = vmatpush2.bf16.xpose.msra.mxu0 0
          %575 = vmatprep.subr.bf16.mxu0 0
          %576 = vmatpush2.bf16.xpose.msra.mxu0 0
          %577 = vmatprep.mubr.bf16.mxu0 0
          %578 = vmatmul.mubr.bf16.gmra.mxu0 %v537
          %v579 = vpop.f32.mrf.mxu0
          %v580 = vadd.f32 0.0, %v579
          %v581 = vpop.f32.mrf.mxu0
          %v582 = vpop.f32.mrf.mxu0
          %v583 = vadd.f32 0.0, %v582
          %v584 = vpop.f32.mrf.mxu0
          %585 = vmatprep.mubr.bf16.mxu0 0
          %586 = vmatmul.mubr.bf16.gmra.mxu0 %v540
          %v587 = vpop.f32.mrf.mxu0
          %v588 = vadd.f32 0.0, %v587
          %v589 = vpop.f32.mrf.mxu0
          %v590 = vpop.f32.mrf.mxu0
          %v591 = vadd.f32 0.0, %v590
          %v592 = vpop.f32.mrf.mxu0
          %593 = vdwg.mxu0
          %v595 = vsel %vm477, %v460, 0
          %v598 = vsel %vm477, %v461, 0
          %v601 = vsel %vm477, %v472, 0
          %603 = vmatprep.subr.bf16.mxu0 0
          %604 = vmatpush1.bf16.xpose.msra.mxu0 0
          %605 = vmatprep.subr.bf16.mxu0 0
          %606 = vmatpush1.bf16.xpose.msra.mxu0 0
          %607 = vmatprep.subr.bf16.mxu0 0
          %608 = vmatpush1.bf16.xpose.msra.mxu0 0
          %609 = vmatprep.subr.bf16.mxu0 0
          %610 = vmatpush1.bf16.xpose.msra.mxu0 0
          %611 = vmatprep.subr.bf16.mxu0 0
          %612 = vmatpush1.bf16.xpose.msra.mxu0 0
          %613 = vmatprep.subr.bf16.mxu0 0
          %614 = vmatpush1.bf16.xpose.msra.mxu0 0
          %615 = vmatprep.subr.bf16.mxu0 0
          %616 = vmatpush1.bf16.xpose.msra.mxu0 0
          %617 = vmatprep.subr.bf16.mxu0 0
          %618 = vmatpush1.bf16.xpose.msra.mxu0 %v601
          %619 = vmatprep.subr.bf16.mxu0 0
          %620 = vmatpush2.bf16.xpose.msra.mxu0 0
          %621 = vmatprep.subr.bf16.mxu0 0
          %622 = vmatpush2.bf16.xpose.msra.mxu0 0
          %623 = vmatprep.subr.bf16.mxu0 0
          %624 = vmatpush2.bf16.xpose.msra.mxu0 0
          %625 = vmatprep.subr.bf16.mxu0 0
          %626 = vmatpush2.bf16.xpose.msra.mxu0 0
          %627 = vmatprep.subr.bf16.mxu0 0
          %628 = vmatpush2.bf16.xpose.msra.mxu0 0
          %629 = vmatprep.subr.bf16.mxu0 0
          %630 = vmatpush2.bf16.xpose.msra.mxu0 0
          %631 = vmatprep.subr.bf16.mxu0 0
          %632 = vmatpush2.bf16.xpose.msra.mxu0 0
          %633 = vmatprep.subr.bf16.mxu0 0
          %634 = vmatpush2.bf16.xpose.msra.mxu0 0
          %635 = vmatprep.mubr.bf16.mxu0 0
          %636 = vmatmul.mubr.bf16.gmra.mxu0 %v595
          %v637 = vpop.f32.mrf.mxu0
          %v638 = vadd.f32 0.0, %v637
          %v639 = vpop.f32.mrf.mxu0
          %v640 = vpop.f32.mrf.mxu0
          %v641 = vadd.f32 0.0, %v640
          %v642 = vpop.f32.mrf.mxu0
          %643 = vmatprep.mubr.bf16.mxu0 0
          %644 = vmatmul.mubr.bf16.gmra.mxu0 %v598
          %v645 = vpop.f32.mrf.mxu0
          %v646 = vadd.f32 0.0, %v645
          %v647 = vpop.f32.mrf.mxu0
          %v648 = vpop.f32.mrf.mxu0
          %v649 = vadd.f32 0.0, %v648
          %v650 = vpop.f32.mrf.mxu0
          %651 = vdwg.mxu0
          %v653 = vsel %vm477, %v462, 0
          %v656 = vsel %vm477, %v463, 0
          %v659 = vsel %vm477, %v473, 0
          %661 = vmatprep.subr.bf16.mxu0 0
          %662 = vmatpush1.bf16.xpose.msra.mxu0 0
          %663 = vmatprep.subr.bf16.mxu0 0
          %664 = vmatpush1.bf16.xpose.msra.mxu0 0
          %665 = vmatprep.subr.bf16.mxu0 0
          %666 = vmatpush1.bf16.xpose.msra.mxu0 0
          %667 = vmatprep.subr.bf16.mxu0 0
          %668 = vmatpush1.bf16.xpose.msra.mxu0 0
          %669 = vmatprep.subr.bf16.mxu0 0
          %670 = vmatpush1.bf16.xpose.msra.mxu0 0
          %671 = vmatprep.subr.bf16.mxu0 0
          %672 = vmatpush1.bf16.xpose.msra.mxu0 0
          %673 = vmatprep.subr.bf16.mxu0 0
          %674 = vmatpush1.bf16.xpose.msra.mxu0 0
          %675 = vmatprep.subr.bf16.mxu0 0
          %676 = vmatpush1.bf16.xpose.msra.mxu0 %v659
          %677 = vmatprep.subr.bf16.mxu0 0
          %678 = vmatpush2.bf16.xpose.msra.mxu0 0
          %679 = vmatprep.subr.bf16.mxu0 0
          %680 = vmatpush2.bf16.xpose.msra.mxu0 0
          %681 = vmatprep.subr.bf16.mxu0 0
          %682 = vmatpush2.bf16.xpose.msra.mxu0 0
          %683 = vmatprep.subr.bf16.mxu0 0
          %684 = vmatpush2.bf16.xpose.msra.mxu0 0
          %685 = vmatprep.subr.bf16.mxu0 0
          %686 = vmatpush2.bf16.xpose.msra.mxu0 0
          %687 = vmatprep.subr.bf16.mxu0 0
          %688 = vmatpush2.bf16.xpose.msra.mxu0 0
          %689 = vmatprep.subr.bf16.mxu0 0
          %690 = vmatpush2.bf16.xpose.msra.mxu0 0
          %691 = vmatprep.subr.bf16.mxu0 0
          %692 = vmatpush2.bf16.xpose.msra.mxu0 0
          %693 = vmatprep.mubr.bf16.mxu0 0
          %694 = vmatmul.mubr.bf16.gmra.mxu0 %v653
          %v695 = vpop.f32.mrf.mxu0
          %v696 = vadd.f32 0.0, %v695
          %v697 = vpop.f32.mrf.mxu0
          %v698 = vpop.f32.mrf.mxu0
          %v699 = vadd.f32 0.0, %v698
          %v700 = vpop.f32.mrf.mxu0
          %701 = vmatprep.mubr.bf16.mxu0 0
          %702 = vmatmul.mubr.bf16.gmra.mxu0 %v656
          %v703 = vpop.f32.mrf.mxu0
          %v704 = vadd.f32 0.0, %v703
          %v705 = vpop.f32.mrf.mxu0
          %v706 = vpop.f32.mrf.mxu0
          %v707 = vadd.f32 0.0, %v706
          %v708 = vpop.f32.mrf.mxu0
          %709 = vdwg.mxu0
          %v711 = vsel %vm477, %v464, 0
          %v714 = vsel %vm477, %v465, 0
          %v717 = vsel %vm477, %v474, 0
          %719 = vmatprep.subr.bf16.mxu0 0
          %720 = vmatpush1.bf16.xpose.msra.mxu0 0
          %721 = vmatprep.subr.bf16.mxu0 0
          %722 = vmatpush1.bf16.xpose.msra.mxu0 0
          %723 = vmatprep.subr.bf16.mxu0 0
          %724 = vmatpush1.bf16.xpose.msra.mxu0 0
          %725 = vmatprep.subr.bf16.mxu0 0
          %726 = vmatpush1.bf16.xpose.msra.mxu0 0
          %727 = vmatprep.subr.bf16.mxu0 0
          %728 = vmatpush1.bf16.xpose.msra.mxu0 0
          %729 = vmatprep.subr.bf16.mxu0 0
          %730 = vmatpush1.bf16.xpose.msra.mxu0 0
          %731 = vmatprep.subr.bf16.mxu0 0
          %732 = vmatpush1.bf16.xpose.msra.mxu0 0
          %733 = vmatprep.subr.bf16.mxu0 0
          %734 = vmatpush1.bf16.xpose.msra.mxu0 %v717
          %735 = vmatprep.subr.bf16.mxu0 0
          %736 = vmatpush2.bf16.xpose.msra.mxu0 0
          %737 = vmatprep.subr.bf16.mxu0 0
          %738 = vmatpush2.bf16.xpose.msra.mxu0 0
          %739 = vmatprep.subr.bf16.mxu0 0
          %740 = vmatpush2.bf16.xpose.msra.mxu0 0
          %741 = vmatprep.subr.bf16.mxu0 0
          %742 = vmatpush2.bf16.xpose.msra.mxu0 0
          %743 = vmatprep.subr.bf16.mxu0 0
          %744 = vmatpush2.bf16.xpose.msra.mxu0 0
          %745 = vmatprep.subr.bf16.mxu0 0
          %746 = vmatpush2.bf16.xpose.msra.mxu0 0
          %747 = vmatprep.subr.bf16.mxu0 0
          %748 = vmatpush2.bf16.xpose.msra.mxu0 0
          %749 = vmatprep.subr.bf16.mxu0 0
          %750 = vmatpush2.bf16.xpose.msra.mxu0 0
          %751 = vmatprep.mubr.bf16.mxu0 0
          %752 = vmatmul.mubr.bf16.gmra.mxu0 %v711
          %v753 = vpop.f32.mrf.mxu0
          %v754 = vadd.f32 0.0, %v753
          %v755 = vpop.f32.mrf.mxu0
          %v756 = vpop.f32.mrf.mxu0
          %v757 = vadd.f32 0.0, %v756
          %v758 = vpop.f32.mrf.mxu0
          %759 = vmatprep.mubr.bf16.mxu0 0
          %760 = vmatmul.mubr.bf16.gmra.mxu0 %v714
          %v761 = vpop.f32.mrf.mxu0
          %v762 = vadd.f32 0.0, %v761
          %v763 = vpop.f32.mrf.mxu0
          %v764 = vpop.f32.mrf.mxu0
          %v765 = vadd.f32 0.0, %v764
          %v766 = vpop.f32.mrf.mxu0
          %767 = vdwg.mxu0
          %v769 = vsel %vm477, %v466, 0
          %v772 = vsel %vm477, %v467, 0
          %v775 = vsel %vm477, %v475, 0
          %777 = vmatprep.subr.bf16.mxu0 0
          %778 = vmatpush1.bf16.xpose.msra.mxu0 0
          %779 = vmatprep.subr.bf16.mxu0 0
          %780 = vmatpush1.bf16.xpose.msra.mxu0 0
          %781 = vmatprep.subr.bf16.mxu0 0
          %782 = vmatpush1.bf16.xpose.msra.mxu0 0
          %783 = vmatprep.subr.bf16.mxu0 0
          %784 = vmatpush1.bf16.xpose.msra.mxu0 0
          %785 = vmatprep.subr.bf16.mxu0 0
          %786 = vmatpush1.bf16.xpose.msra.mxu0 0
          %787 = vmatprep.subr.bf16.mxu0 0
          %788 = vmatpush1.bf16.xpose.msra.mxu0 0
          %789 = vmatprep.subr.bf16.mxu0 0
          %790 = vmatpush1.bf16.xpose.msra.mxu0 0
          %791 = vmatprep.subr.bf16.mxu0 0
          %792 = vmatpush1.bf16.xpose.msra.mxu0 %v775
          %793 = vmatprep.subr.bf16.mxu0 0
          %794 = vmatpush2.bf16.xpose.msra.mxu0 0
          %795 = vmatprep.subr.bf16.mxu0 0
          %796 = vmatpush2.bf16.xpose.msra.mxu0 0
          %797 = vmatprep.subr.bf16.mxu0 0
          %798 = vmatpush2.bf16.xpose.msra.mxu0 0
          %799 = vmatprep.subr.bf16.mxu0 0
          %800 = vmatpush2.bf16.xpose.msra.mxu0 0
          %801 = vmatprep.subr.bf16.mxu0 0
          %802 = vmatpush2.bf16.xpose.msra.mxu0 0
          %803 = vmatprep.subr.bf16.mxu0 0
          %804 = vmatpush2.bf16.xpose.msra.mxu0 0
          %805 = vmatprep.subr.bf16.mxu0 0
          %806 = vmatpush2.bf16.xpose.msra.mxu0 0
          %807 = vmatprep.subr.bf16.mxu0 0
          %808 = vmatpush2.bf16.xpose.msra.mxu0 0
          %809 = vmatprep.mubr.bf16.mxu0 0
          %810 = vmatmul.mubr.bf16.gmra.mxu0 %v769
          %v811 = vpop.f32.mrf.mxu0
          %v812 = vadd.f32 0.0, %v811
          %v813 = vpop.f32.mrf.mxu0
          %v814 = vpop.f32.mrf.mxu0
          %v815 = vadd.f32 0.0, %v814
          %v816 = vpop.f32.mrf.mxu0
          %817 = vmatprep.mubr.bf16.mxu0 0
          %818 = vmatmul.mubr.bf16.gmra.mxu0 %v772
          %v819 = vpop.f32.mrf.mxu0
          %v820 = vadd.f32 0.0, %v819
          %v821 = vpop.f32.mrf.mxu0
          %v822 = vpop.f32.mrf.mxu0
          %v823 = vadd.f32 0.0, %v822
          %v824 = vpop.f32.mrf.mxu0
          %825 = vdwg.mxu0
          %v827 = vsel %vm477, %v468, 0
          %v830 = vsel %vm477, %v469, 0
          %v833 = vsel %vm477, %v476, 0
          %835 = vmatprep.subr.bf16.mxu0 0
          %836 = vmatpush1.bf16.xpose.msra.mxu0 0
          %837 = vmatprep.subr.bf16.mxu0 0
          %838 = vmatpush1.bf16.xpose.msra.mxu0 0
          %839 = vmatprep.subr.bf16.mxu0 0
          %840 = vmatpush1.bf16.xpose.msra.mxu0 0
          %841 = vmatprep.subr.bf16.mxu0 0
          %842 = vmatpush1.bf16.xpose.msra.mxu0 0
          %843 = vmatprep.subr.bf16.mxu0 0
          %844 = vmatpush1.bf16.xpose.msra.mxu0 0
          %845 = vmatprep.subr.bf16.mxu0 0
          %846 = vmatpush1.bf16.xpose.msra.mxu0 0
          %847 = vmatprep.subr.bf16.mxu0 0
          %848 = vmatpush1.bf16.xpose.msra.mxu0 0
          %849 = vmatprep.subr.bf16.mxu0 0
          %850 = vmatpush1.bf16.xpose.msra.mxu0 %v833
          %851 = vmatprep.subr.bf16.mxu0 0
          %852 = vmatpush2.bf16.xpose.msra.mxu0 0
          %853 = vmatprep.subr.bf16.mxu0 0
          %854 = vmatpush2.bf16.xpose.msra.mxu0 0
          %855 = vmatprep.subr.bf16.mxu0 0
          %856 = vmatpush2.bf16.xpose.msra.mxu0 0
          %857 = vmatprep.subr.bf16.mxu0 0
          %858 = vmatpush2.bf16.xpose.msra.mxu0 0
          %859 = vmatprep.subr.bf16.mxu0 0
          %860 = vmatpush2.bf16.xpose.msra.mxu0 0
          %861 = vmatprep.subr.bf16.mxu0 0
          %862 = vmatpush2.bf16.xpose.msra.mxu0 0
          %863 = vmatprep.subr.bf16.mxu0 0
          %864 = vmatpush2.bf16.xpose.msra.mxu0 0
          %865 = vmatprep.subr.bf16.mxu0 0
          %866 = vmatpush2.bf16.xpose.msra.mxu0 0
          %867 = vmatprep.mubr.bf16.mxu0 0
          %868 = vmatmul.mubr.bf16.gmra.mxu0 %v827
          %v869 = vpop.f32.mrf.mxu0
          %v870 = vadd.f32 0.0, %v869
          %v871 = vpop.f32.mrf.mxu0
          %v872 = vpop.f32.mrf.mxu0
          %v873 = vadd.f32 0.0, %v872
          %v874 = vpop.f32.mrf.mxu0
          %875 = vmatprep.mubr.bf16.mxu0 0
          %876 = vmatmul.mubr.bf16.gmra.mxu0 %v830
          %v877 = vpop.f32.mrf.mxu0
          %v878 = vadd.f32 0.0, %v877
          %v879 = vpop.f32.mrf.mxu0
          %v880 = vpop.f32.mrf.mxu0
          %v881 = vadd.f32 0.0, %v880
          %v882 = vpop.f32.mrf.mxu0
          %883 = vdwg.mxu0
          %vm884 = vcmask 64512
          %v885 = vsel %vm884, %v522, 0.0
          %v886 = vsel %vm884, %v580, 0.0
          %v887 = vadd.f32 %v885, %v886
          %v888 = vsel %vm884, %v638, 0.0
          %v889 = vadd.f32 %v887, %v888
          %v890 = vsel %vm884, %v696, 0.0
          %v891 = vadd.f32 %v889, %v890
          %v892 = vsel %vm884, %v754, 0.0
          %v893 = vadd.f32 %v891, %v892
          %v894 = vsel %vm884, %v812, 0.0
          %v895 = vadd.f32 %v893, %v894
          %v896 = vsel %vm884, %v870, 0.0
          %v897 = vadd.f32 %v895, %v896
          %v898 = vsel %vm884, %v525, 0.0
          %v899 = vsel %vm884, %v583, 0.0
          %v900 = vadd.f32 %v898, %v899
          %v901 = vsel %vm884, %v641, 0.0
          %v902 = vadd.f32 %v900, %v901
          %v903 = vsel %vm884, %v699, 0.0
          %v904 = vadd.f32 %v902, %v903
          %v905 = vsel %vm884, %v757, 0.0
          %v906 = vadd.f32 %v904, %v905
          %v907 = vsel %vm884, %v815, 0.0
          %v908 = vadd.f32 %v906, %v907
          %v909 = vsel %vm884, %v873, 0.0
          %v910 = vadd.f32 %v908, %v909
          %v911 = vsel %vm884, %v530, 0.0
          %v912 = vsel %vm884, %v588, 0.0
          %v913 = vadd.f32 %v911, %v912
          %v914 = vsel %vm884, %v646, 0.0
          %v915 = vadd.f32 %v913, %v914
          %v916 = vsel %vm884, %v704, 0.0
          %v917 = vadd.f32 %v915, %v916
          %v918 = vsel %vm884, %v762, 0.0
          %v919 = vadd.f32 %v917, %v918
          %v920 = vsel %vm884, %v820, 0.0
          %v921 = vadd.f32 %v919, %v920
          %v922 = vsel %vm884, %v878, 0.0
          %v923 = vadd.f32 %v921, %v922
          %vm924 = vcmask 61440
          %v925 = vsel %vm924, %v533, 0.0
          %v926 = vsel %vm924, %v591, 0.0
          %v927 = vadd.f32 %v925, %v926
          %v928 = vsel %vm924, %v649, 0.0
          %v929 = vadd.f32 %v927, %v928
          %v930 = vsel %vm924, %v707, 0.0
          %v931 = vadd.f32 %v929, %v930
          %v932 = vsel %vm924, %v765, 0.0
          %v933 = vadd.f32 %v931, %v932
          %v934 = vsel %vm924, %v823, 0.0
          %v935 = vadd.f32 %v933, %v934
          %v936 = vsel %vm924, %v881, 0.0
          %v937 = vadd.f32 %v935, %v936
          %v938 = vadd.f32 %v390, %v897
          %v939 = vadd.f32 %v390, %v910
          %v940 = vadd.f32 %v390, %v923
          %v941 = vadd.f32 %v390, %v937
          %s942 = scalar_lea.vmem %s400, 1
          %v943 = vld [vmem:[%s942] ss:$2 sm:$0xff]
          %s944 = scalar_lea.vmem %s400, 17
          %v945 = vld [vmem:[%s944] ss:$2 sm:$0xff]
          %s946 = scalar_lea.vmem %s400, 33
          %v947 = vld [vmem:[%s946] ss:$2 sm:$0xff]
          %s948 = scalar_lea.vmem %s400, 49
          %v949 = vld [vmem:[%s948] ss:$2 sm:$0x1f]
          %s950 = scalar_lea.vmem %s400, 65
          %v951 = vld [vmem:[%s950] ss:$2 sm:$0xff]
          %s952 = scalar_lea.vmem %s400, 81
          %v953 = vld [vmem:[%s952] ss:$2 sm:$0xff]
          %s954 = scalar_lea.vmem %s400, 97
          %v955 = vld [vmem:[%s954] ss:$2 sm:$0xff]
          %s956 = scalar_lea.vmem %s400, 113
          %v957 = vld [vmem:[%s956] ss:$2 sm:$0x1f]
          %s958 = scalar_lea.vmem %s400, 129
          %v959 = vld [vmem:[%s958] ss:$2 sm:$0xff]
          %s960 = scalar_lea.vmem %s400, 145
          %v961 = vld [vmem:[%s960] ss:$2 sm:$0xff]
          %s962 = scalar_lea.vmem %s400, 161
          %v963 = vld [vmem:[%s962] ss:$2 sm:$0xff]
          %s964 = scalar_lea.vmem %s400, 177
          %v965 = vld [vmem:[%s964] ss:$2 sm:$0x1f]
          %s966 = scalar_lea.vmem %s400, 193
          %v967 = vld [vmem:[%s966] ss:$2 sm:$0xff]
          %s968 = scalar_lea.vmem %s400, 209
          %v969 = vld [vmem:[%s968] ss:$2 sm:$0xff]
          %s970 = scalar_lea.vmem %s400, 225
          %v971 = vld [vmem:[%s970] ss:$2 sm:$0xff]
          %s972 = scalar_lea.vmem %s400, 241
          %v973 = vld [vmem:[%s972] ss:$2 sm:$0x1f]
          %s974 = scalar_lea.vmem %s400, 257
          %v975 = vld [vmem:[%s974] ss:$2 sm:$0xff]
          %s976 = scalar_lea.vmem %s400, 273
          %v977 = vld [vmem:[%s976] ss:$2 sm:$0xff]
          %s978 = scalar_lea.vmem %s400, 289
          %v979 = vld [vmem:[%s978] ss:$2 sm:$0xff]
          %s980 = scalar_lea.vmem %s400, 305
          %v981 = vld [vmem:[%s980] ss:$2 sm:$0x1f]
          %s982 = scalar_lea.vmem %s400, 321
          %v983 = vld [vmem:[%s982] ss:$2 sm:$0xff]
          %s984 = scalar_lea.vmem %s400, 337
          %v985 = vld [vmem:[%s984] ss:$2 sm:$0xff]
          %s986 = scalar_lea.vmem %s400, 353
          %v987 = vld [vmem:[%s986] ss:$2 sm:$0xff]
          %s988 = scalar_lea.vmem %s400, 369
          %v989 = vld [vmem:[%s988] ss:$2 sm:$0x1f]
          %s990 = scalar_lea.vmem %s400, 385
          %v991 = vld [vmem:[%s990] ss:$2 sm:$0xff]
          %s992 = scalar_lea.vmem %s400, 401
          %v993 = vld [vmem:[%s992] ss:$2 sm:$0xff]
          %s994 = scalar_lea.vmem %s400, 417
          %v995 = vld [vmem:[%s994] ss:$2 sm:$0xff]
          %s996 = scalar_lea.vmem %s400, 433
          %v997 = vld [vmem:[%s996] ss:$2 sm:$0x1f]
          %v998 = vpack.c.bf16 %v945, %v943
          %v999 = vpack.c.bf16 %v949, %v947
          %v1000 = vpack.c.bf16 %v953, %v951
          %v1001 = vpack.c.bf16 %v957, %v955
          %v1002 = vpack.c.bf16 %v961, %v959
          %v1003 = vpack.c.bf16 %v965, %v963
          %v1004 = vpack.c.bf16 %v969, %v967
          %v1005 = vpack.c.bf16 %v973, %v971
          %v1006 = vpack.c.bf16 %v977, %v975
          %v1007 = vpack.c.bf16 %v981, %v979
          %v1008 = vpack.c.bf16 %v985, %v983
          %v1009 = vpack.c.bf16 %v989, %v987
          %v1010 = vpack.c.bf16 %v993, %v991
          %v1011 = vpack.c.bf16 %v997, %v995
          %s1012 = scalar_lea.vmem %s1, 4
          %v1013 = vld [vmem:[%s1012] sm:$0xf]
          %v1014 = vld [vmem:[%s1012 + $0x1c] sm:$0xf]
          %v1015 = vld [vmem:[%s1012 + $0x38] sm:$0xf]
          %v1016 = vld [vmem:[%s1012 + $0x54] sm:$0xf]
          %v1017 = vld [vmem:[%s1012 + $0x70] sm:$0xf]
          %v1018 = vld [vmem:[%s1012 + $0x8c] sm:$0xf]
          %v1019 = vld [vmem:[%s1012 + $0xa8] sm:$0xf]
          %v1021 = vsel %vm477, %v998, 0
          %v1024 = vsel %vm477, %v999, 0
          %v1027 = vsel %vm477, %v1013, 0
          %1029 = vmatprep.subr.bf16.mxu0 0
          %1030 = vmatpush1.bf16.xpose.msra.mxu0 0
          %1031 = vmatprep.subr.bf16.mxu0 0
          %1032 = vmatpush1.bf16.xpose.msra.mxu0 0
          %1033 = vmatprep.subr.bf16.mxu0 0
          %1034 = vmatpush1.bf16.xpose.msra.mxu0 0
          %1035 = vmatprep.subr.bf16.mxu0 0
          %1036 = vmatpush1.bf16.xpose.msra.mxu0 0
          %1037 = vmatprep.subr.bf16.mxu0 0
          %1038 = vmatpush1.bf16.xpose.msra.mxu0 0
          %1039 = vmatprep.subr.bf16.mxu0 0
          %1040 = vmatpush1.bf16.xpose.msra.mxu0 0
          %1041 = vmatprep.subr.bf16.mxu0 0
          %1042 = vmatpush1.bf16.xpose.msra.mxu0 0
          %1043 = vmatprep.subr.bf16.mxu0 0
          %1044 = vmatpush1.bf16.xpose.msra.mxu0 %v1027
          %1045 = vmatprep.subr.bf16.mxu0 0
          %1046 = vmatpush2.bf16.xpose.msra.mxu0 0
          %1047 = vmatprep.subr.bf16.mxu0 0
          %1048 = vmatpush2.bf16.xpose.msra.mxu0 0
          %1049 = vmatprep.subr.bf16.mxu0 0
          %1050 = vmatpush2.bf16.xpose.msra.mxu0 0
          %1051 = vmatprep.subr.bf16.mxu0 0
          %1052 = vmatpush2.bf16.xpose.msra.mxu0 0
          %1053 = vmatprep.subr.bf16.mxu0 0
          %1054 = vmatpush2.bf16.xpose.msra.mxu0 0
          %1055 = vmatprep.subr.bf16.mxu0 0
          %1056 = vmatpush2.bf16.xpose.msra.mxu0 0
          %1057 = vmatprep.subr.bf16.mxu0 0
          %1058 = vmatpush2.bf16.xpose.msra.mxu0 0
          %1059 = vmatprep.subr.bf16.mxu0 0
          %1060 = vmatpush2.bf16.xpose.msra.mxu0 0
          %1061 = vmatprep.mubr.bf16.mxu0 0
          %1062 = vmatmul.mubr.bf16.gmra.mxu0 %v1021
          %v1063 = vpop.f32.mrf.mxu0
          %v1064 = vadd.f32 0.0, %v1063
          %v1065 = vpop.f32.mrf.mxu0
          %v1066 = vpop.f32.mrf.mxu0
          %v1067 = vadd.f32 0.0, %v1066
          %v1068 = vpop.f32.mrf.mxu0
          %1069 = vmatprep.mubr.bf16.mxu0 0
          %1070 = vmatmul.mubr.bf16.gmra.mxu0 %v1024
          %v1071 = vpop.f32.mrf.mxu0
          %v1072 = vadd.f32 0.0, %v1071
          %v1073 = vpop.f32.mrf.mxu0
          %v1074 = vpop.f32.mrf.mxu0
          %v1075 = vadd.f32 0.0, %v1074
          %v1076 = vpop.f32.mrf.mxu0
          %1077 = vdwg.mxu0
          %v1079 = vsel %vm477, %v1000, 0
          %v1082 = vsel %vm477, %v1001, 0
          %v1085 = vsel %vm477, %v1014, 0
          %1087 = vmatprep.subr.bf16.mxu0 0
          %1088 = vmatpush1.bf16.xpose.msra.mxu0 0
          %1089 = vmatprep.subr.bf16.mxu0 0
          %1090 = vmatpush1.bf16.xpose.msra.mxu0 0
          %1091 = vmatprep.subr.bf16.mxu0 0
          %1092 = vmatpush1.bf16.xpose.msra.mxu0 0
          %1093 = vmatprep.subr.bf16.mxu0 0
          %1094 = vmatpush1.bf16.xpose.msra.mxu0 0
          %1095 = vmatprep.subr.bf16.mxu0 0
          %1096 = vmatpush1.bf16.xpose.msra.mxu0 0
          %1097 = vmatprep.subr.bf16.mxu0 0
          %1098 = vmatpush1.bf16.xpose.msra.mxu0 0
          %1099 = vmatprep.subr.bf16.mxu0 0
          %1100 = vmatpush1.bf16.xpose.msra.mxu0 0
          %1101 = vmatprep.subr.bf16.mxu0 0
          %1102 = vmatpush1.bf16.xpose.msra.mxu0 %v1085
          %1103 = vmatprep.subr.bf16.mxu0 0
          %1104 = vmatpush2.bf16.xpose.msra.mxu0 0
          %1105 = vmatprep.subr.bf16.mxu0 0
          %1106 = vmatpush2.bf16.xpose.msra.mxu0 0
          %1107 = vmatprep.subr.bf16.mxu0 0
          %1108 = vmatpush2.bf16.xpose.msra.mxu0 0
          %1109 = vmatprep.subr.bf16.mxu0 0
          %1110 = vmatpush2.bf16.xpose.msra.mxu0 0
          %1111 = vmatprep.subr.bf16.mxu0 0
          %1112 = vmatpush2.bf16.xpose.msra.mxu0 0
          %1113 = vmatprep.subr.bf16.mxu0 0
          %1114 = vmatpush2.bf16.xpose.msra.mxu0 0
          %1115 = vmatprep.subr.bf16.mxu0 0
          %1116 = vmatpush2.bf16.xpose.msra.mxu0 0
          %1117 = vmatprep.subr.bf16.mxu0 0
          %1118 = vmatpush2.bf16.xpose.msra.mxu0 0
          %1119 = vmatprep.mubr.bf16.mxu0 0
          %1120 = vmatmul.mubr.bf16.gmra.mxu0 %v1079
          %v1121 = vpop.f32.mrf.mxu0
          %v1122 = vadd.f32 0.0, %v1121
          %v1123 = vpop.f32.mrf.mxu0
          %v1124 = vpop.f32.mrf.mxu0
          %v1125 = vadd.f32 0.0, %v1124
          %v1126 = vpop.f32.mrf.mxu0
          %1127 = vmatprep.mubr.bf16.mxu0 0
          %1128 = vmatmul.mubr.bf16.gmra.mxu0 %v1082
          %v1129 = vpop.f32.mrf.mxu0
          %v1130 = vadd.f32 0.0, %v1129
          %v1131 = vpop.f32.mrf.mxu0
          %v1132 = vpop.f32.mrf.mxu0
          %v1133 = vadd.f32 0.0, %v1132
          %v1134 = vpop.f32.mrf.mxu0
          %1135 = vdwg.mxu0
          %v1137 = vsel %vm477, %v1002, 0
          %v1140 = vsel %vm477, %v1003, 0
          %v1143 = vsel %vm477, %v1015, 0
          %1145 = vmatprep.subr.bf16.mxu0 0
          %1146 = vmatpush1.bf16.xpose.msra.mxu0 0
          %1147 = vmatprep.subr.bf16.mxu0 0
          %1148 = vmatpush1.bf16.xpose.msra.mxu0 0
          %1149 = vmatprep.subr.bf16.mxu0 0
          %1150 = vmatpush1.bf16.xpose.msra.mxu0 0
          %1151 = vmatprep.subr.bf16.mxu0 0
          %1152 = vmatpush1.bf16.xpose.msra.mxu0 0
          %1153 = vmatprep.subr.bf16.mxu0 0
          %1154 = vmatpush1.bf16.xpose.msra.mxu0 0
          %1155 = vmatprep.subr.bf16.mxu0 0
          %1156 = vmatpush1.bf16.xpose.msra.mxu0 0
          %1157 = vmatprep.subr.bf16.mxu0 0
          %1158 = vmatpush1.bf16.xpose.msra.mxu0 0
          %1159 = vmatprep.subr.bf16.mxu0 0
          %1160 = vmatpush1.bf16.xpose.msra.mxu0 %v1143
          %1161 = vmatprep.subr.bf16.mxu0 0
          %1162 = vmatpush2.bf16.xpose.msra.mxu0 0
          %1163 = vmatprep.subr.bf16.mxu0 0
          %1164 = vmatpush2.bf16.xpose.msra.mxu0 0
          %1165 = vmatprep.subr.bf16.mxu0 0
          %1166 = vmatpush2.bf16.xpose.msra.mxu0 0
          %1167 = vmatprep.subr.bf16.mxu0 0
          %1168 = vmatpush2.bf16.xpose.msra.mxu0 0
          %1169 = vmatprep.subr.bf16.mxu0 0
          %1170 = vmatpush2.bf16.xpose.msra.mxu0 0
          %1171 = vmatprep.subr.bf16.mxu0 0
          %1172 = vmatpush2.bf16.xpose.msra.mxu0 0
          %1173 = vmatprep.subr.bf16.mxu0 0
          %1174 = vmatpush2.bf16.xpose.msra.mxu0 0
          %1175 = vmatprep.subr.bf16.mxu0 0
          %1176 = vmatpush2.bf16.xpose.msra.mxu0 0
          %1177 = vmatprep.mubr.bf16.mxu0 0
          %1178 = vmatmul.mubr.bf16.gmra.mxu0 %v1137
          %v1179 = vpop.f32.mrf.mxu0
          %v1180 = vadd.f32 0.0, %v1179
          %v1181 = vpop.f32.mrf.mxu0
          %v1182 = vpop.f32.mrf.mxu0
          %v1183 = vadd.f32 0.0, %v1182
          %v1184 = vpop.f32.mrf.mxu0
          %1185 = vmatprep.mubr.bf16.mxu0 0
          %1186 = vmatmul.mubr.bf16.gmra.mxu0 %v1140
          %v1187 = vpop.f32.mrf.mxu0
          %v1188 = vadd.f32 0.0, %v1187
          %v1189 = vpop.f32.mrf.mxu0
          %v1190 = vpop.f32.mrf.mxu0
          %v1191 = vadd.f32 0.0, %v1190
          %v1192 = vpop.f32.mrf.mxu0
          %1193 = vdwg.mxu0
          %v1195 = vsel %vm477, %v1004, 0
          %v1198 = vsel %vm477, %v1005, 0
          %v1201 = vsel %vm477, %v1016, 0
          %1203 = vmatprep.subr.bf16.mxu0 0
          %1204 = vmatpush1.bf16.xpose.msra.mxu0 0
          %1205 = vmatprep.subr.bf16.mxu0 0
          %1206 = vmatpush1.bf16.xpose.msra.mxu0 0
          %1207 = vmatprep.subr.bf16.mxu0 0
          %1208 = vmatpush1.bf16.xpose.msra.mxu0 0
          %1209 = vmatprep.subr.bf16.mxu0 0
          %1210 = vmatpush1.bf16.xpose.msra.mxu0 0
          %1211 = vmatprep.subr.bf16.mxu0 0
          %1212 = vmatpush1.bf16.xpose.msra.mxu0 0
          %1213 = vmatprep.subr.bf16.mxu0 0
          %1214 = vmatpush1.bf16.xpose.msra.mxu0 0
          %1215 = vmatprep.subr.bf16.mxu0 0
          %1216 = vmatpush1.bf16.xpose.msra.mxu0 0
          %1217 = vmatprep.subr.bf16.mxu0 0
          %1218 = vmatpush1.bf16.xpose.msra.mxu0 %v1201
          %1219 = vmatprep.subr.bf16.mxu0 0
          %1220 = vmatpush2.bf16.xpose.msra.mxu0 0
          %1221 = vmatprep.subr.bf16.mxu0 0
          %1222 = vmatpush2.bf16.xpose.msra.mxu0 0
          %1223 = vmatprep.subr.bf16.mxu0 0
          %1224 = vmatpush2.bf16.xpose.msra.mxu0 0
          %1225 = vmatprep.subr.bf16.mxu0 0
          %1226 = vmatpush2.bf16.xpose.msra.mxu0 0
          %1227 = vmatprep.subr.bf16.mxu0 0
          %1228 = vmatpush2.bf16.xpose.msra.mxu0 0
          %1229 = vmatprep.subr.bf16.mxu0 0
          %1230 = vmatpush2.bf16.xpose.msra.mxu0 0
          %1231 = vmatprep.subr.bf16.mxu0 0
          %1232 = vmatpush2.bf16.xpose.msra.mxu0 0
          %1233 = vmatprep.subr.bf16.mxu0 0
          %1234 = vmatpush2.bf16.xpose.msra.mxu0 0
          %1235 = vmatprep.mubr.bf16.mxu0 0
          %1236 = vmatmul.mubr.bf16.gmra.mxu0 %v1195
          %v1237 = vpop.f32.mrf.mxu0
          %v1238 = vadd.f32 0.0, %v1237
          %v1239 = vpop.f32.mrf.mxu0
          %v1240 = vpop.f32.mrf.mxu0
          %v1241 = vadd.f32 0.0, %v1240
          %v1242 = vpop.f32.mrf.mxu0
          %1243 = vmatprep.mubr.bf16.mxu0 0
          %1244 = vmatmul.mubr.bf16.gmra.mxu0 %v1198
          %v1245 = vpop.f32.mrf.mxu0
          %v1246 = vadd.f32 0.0, %v1245
          %v1247 = vpop.f32.mrf.mxu0
          %v1248 = vpop.f32.mrf.mxu0
          %v1249 = vadd.f32 0.0, %v1248
          %v1250 = vpop.f32.mrf.mxu0
          %1251 = vdwg.mxu0
          %v1253 = vsel %vm477, %v1006, 0
          %v1256 = vsel %vm477, %v1007, 0
          %v1259 = vsel %vm477, %v1017, 0
          %1261 = vmatprep.subr.bf16.mxu0 0
          %1262 = vmatpush1.bf16.xpose.msra.mxu0 0
          %1263 = vmatprep.subr.bf16.mxu0 0
          %1264 = vmatpush1.bf16.xpose.msra.mxu0 0
          %1265 = vmatprep.subr.bf16.mxu0 0
          %1266 = vmatpush1.bf16.xpose.msra.mxu0 0
          %1267 = vmatprep.subr.bf16.mxu0 0
          %1268 = vmatpush1.bf16.xpose.msra.mxu0 0
          %1269 = vmatprep.subr.bf16.mxu0 0
          %1270 = vmatpush1.bf16.xpose.msra.mxu0 0
          %1271 = vmatprep.subr.bf16.mxu0 0
          %1272 = vmatpush1.bf16.xpose.msra.mxu0 0
          %1273 = vmatprep.subr.bf16.mxu0 0
          %1274 = vmatpush1.bf16.xpose.msra.mxu0 0
          %1275 = vmatprep.subr.bf16.mxu0 0
          %1276 = vmatpush1.bf16.xpose.msra.mxu0 %v1259
          %1277 = vmatprep.subr.bf16.mxu0 0
          %1278 = vmatpush2.bf16.xpose.msra.mxu0 0
          %1279 = vmatprep.subr.bf16.mxu0 0
          %1280 = vmatpush2.bf16.xpose.msra.mxu0 0
          %1281 = vmatprep.subr.bf16.mxu0 0
          %1282 = vmatpush2.bf16.xpose.msra.mxu0 0
          %1283 = vmatprep.subr.bf16.mxu0 0
          %1284 = vmatpush2.bf16.xpose.msra.mxu0 0
          %1285 = vmatprep.subr.bf16.mxu0 0
          %1286 = vmatpush2.bf16.xpose.msra.mxu0 0
          %1287 = vmatprep.subr.bf16.mxu0 0
          %1288 = vmatpush2.bf16.xpose.msra.mxu0 0
          %1289 = vmatprep.subr.bf16.mxu0 0
          %1290 = vmatpush2.bf16.xpose.msra.mxu0 0
          %1291 = vmatprep.subr.bf16.mxu0 0
          %1292 = vmatpush2.bf16.xpose.msra.mxu0 0
          %1293 = vmatprep.mubr.bf16.mxu0 0
          %1294 = vmatmul.mubr.bf16.gmra.mxu0 %v1253
          %v1295 = vpop.f32.mrf.mxu0
          %v1296 = vadd.f32 0.0, %v1295
          %v1297 = vpop.f32.mrf.mxu0
          %v1298 = vpop.f32.mrf.mxu0
          %v1299 = vadd.f32 0.0, %v1298
          %v1300 = vpop.f32.mrf.mxu0
          %1301 = vmatprep.mubr.bf16.mxu0 0
          %1302 = vmatmul.mubr.bf16.gmra.mxu0 %v1256
          %v1303 = vpop.f32.mrf.mxu0
          %v1304 = vadd.f32 0.0, %v1303
          %v1305 = vpop.f32.mrf.mxu0
          %v1306 = vpop.f32.mrf.mxu0
          %v1307 = vadd.f32 0.0, %v1306
          %v1308 = vpop.f32.mrf.mxu0
          %1309 = vdwg.mxu0
          %v1311 = vsel %vm477, %v1008, 0
          %v1314 = vsel %vm477, %v1009, 0
          %v1317 = vsel %vm477, %v1018, 0
          %1319 = vmatprep.subr.bf16.mxu0 0
          %1320 = vmatpush1.bf16.xpose.msra.mxu0 0
          %1321 = vmatprep.subr.bf16.mxu0 0
          %1322 = vmatpush1.bf16.xpose.msra.mxu0 0
          %1323 = vmatprep.subr.bf16.mxu0 0
          %1324 = vmatpush1.bf16.xpose.msra.mxu0 0
          %1325 = vmatprep.subr.bf16.mxu0 0
          %1326 = vmatpush1.bf16.xpose.msra.mxu0 0
          %1327 = vmatprep.subr.bf16.mxu0 0
          %1328 = vmatpush1.bf16.xpose.msra.mxu0 0
          %1329 = vmatprep.subr.bf16.mxu0 0
          %1330 = vmatpush1.bf16.xpose.msra.mxu0 0
          %1331 = vmatprep.subr.bf16.mxu0 0
          %1332 = vmatpush1.bf16.xpose.msra.mxu0 0
          %1333 = vmatprep.subr.bf16.mxu0 0
          %1334 = vmatpush1.bf16.xpose.msra.mxu0 %v1317
          %1335 = vmatprep.subr.bf16.mxu0 0
          %1336 = vmatpush2.bf16.xpose.msra.mxu0 0
          %1337 = vmatprep.subr.bf16.mxu0 0
          %1338 = vmatpush2.bf16.xpose.msra.mxu0 0
          %1339 = vmatprep.subr.bf16.mxu0 0
          %1340 = vmatpush2.bf16.xpose.msra.mxu0 0
          %1341 = vmatprep.subr.bf16.mxu0 0
          %1342 = vmatpush2.bf16.xpose.msra.mxu0 0
          %1343 = vmatprep.subr.bf16.mxu0 0
          %1344 = vmatpush2.bf16.xpose.msra.mxu0 0
          %1345 = vmatprep.subr.bf16.mxu0 0
          %1346 = vmatpush2.bf16.xpose.msra.mxu0 0
          %1347 = vmatprep.subr.bf16.mxu0 0
          %1348 = vmatpush2.bf16.xpose.msra.mxu0 0
          %1349 = vmatprep.subr.bf16.mxu0 0
          %1350 = vmatpush2.bf16.xpose.msra.mxu0 0
          %1351 = vmatprep.mubr.bf16.mxu0 0
          %1352 = vmatmul.mubr.bf16.gmra.mxu0 %v1311
          %v1353 = vpop.f32.mrf.mxu0
          %v1354 = vadd.f32 0.0, %v1353
          %v1355 = vpop.f32.mrf.mxu0
          %v1356 = vpop.f32.mrf.mxu0
          %v1357 = vadd.f32 0.0, %v1356
          %v1358 = vpop.f32.mrf.mxu0
          %1359 = vmatprep.mubr.bf16.mxu0 0
          %1360 = vmatmul.mubr.bf16.gmra.mxu0 %v1314
          %v1361 = vpop.f32.mrf.mxu0
          %v1362 = vadd.f32 0.0, %v1361
          %v1363 = vpop.f32.mrf.mxu0
          %v1364 = vpop.f32.mrf.mxu0
          %v1365 = vadd.f32 0.0, %v1364
          %v1366 = vpop.f32.mrf.mxu0
          %1367 = vdwg.mxu0
          %v1369 = vsel %vm477, %v1010, 0
          %v1372 = vsel %vm477, %v1011, 0
          %v1375 = vsel %vm477, %v1019, 0
          %1377 = vmatprep.subr.bf16.mxu0 0
          %1378 = vmatpush1.bf16.xpose.msra.mxu0 0
          %1379 = vmatprep.subr.bf16.mxu0 0
          %1380 = vmatpush1.bf16.xpose.msra.mxu0 0
          %1381 = vmatprep.subr.bf16.mxu0 0
          %1382 = vmatpush1.bf16.xpose.msra.mxu0 0
          %1383 = vmatprep.subr.bf16.mxu0 0
          %1384 = vmatpush1.bf16.xpose.msra.mxu0 0
          %1385 = vmatprep.subr.bf16.mxu0 0
          %1386 = vmatpush1.bf16.xpose.msra.mxu0 0
          %1387 = vmatprep.subr.bf16.mxu0 0
          %1388 = vmatpush1.bf16.xpose.msra.mxu0 0
          %1389 = vmatprep.subr.bf16.mxu0 0
          %1390 = vmatpush1.bf16.xpose.msra.mxu0 0
          %1391 = vmatprep.subr.bf16.mxu0 0
          %1392 = vmatpush1.bf16.xpose.msra.mxu0 %v1375
          %1393 = vmatprep.subr.bf16.mxu0 0
          %1394 = vmatpush2.bf16.xpose.msra.mxu0 0
          %1395 = vmatprep.subr.bf16.mxu0 0
          %1396 = vmatpush2.bf16.xpose.msra.mxu0 0
          %1397 = vmatprep.subr.bf16.mxu0 0
          %1398 = vmatpush2.bf16.xpose.msra.mxu0 0
          %1399 = vmatprep.subr.bf16.mxu0 0
          %1400 = vmatpush2.bf16.xpose.msra.mxu0 0
          %1401 = vmatprep.subr.bf16.mxu0 0
          %1402 = vmatpush2.bf16.xpose.msra.mxu0 0
          %1403 = vmatprep.subr.bf16.mxu0 0
          %1404 = vmatpush2.bf16.xpose.msra.mxu0 0
          %1405 = vmatprep.subr.bf16.mxu0 0
          %1406 = vmatpush2.bf16.xpose.msra.mxu0 0
          %1407 = vmatprep.subr.bf16.mxu0 0
          %1408 = vmatpush2.bf16.xpose.msra.mxu0 0
          %1409 = vmatprep.mubr.bf16.mxu0 0
          %1410 = vmatmul.mubr.bf16.gmra.mxu0 %v1369
          %v1411 = vpop.f32.mrf.mxu0
          %v1412 = vadd.f32 0.0, %v1411
          %v1413 = vpop.f32.mrf.mxu0
          %v1414 = vpop.f32.mrf.mxu0
          %v1415 = vadd.f32 0.0, %v1414
          %v1416 = vpop.f32.mrf.mxu0
          %1417 = vmatprep.mubr.bf16.mxu0 0
          %1418 = vmatmul.mubr.bf16.gmra.mxu0 %v1372
          %v1419 = vpop.f32.mrf.mxu0
          %v1420 = vadd.f32 0.0, %v1419
          %v1421 = vpop.f32.mrf.mxu0
          %v1422 = vpop.f32.mrf.mxu0
          %v1423 = vadd.f32 0.0, %v1422
          %v1424 = vpop.f32.mrf.mxu0
          %1425 = vdwg.mxu0
          %v1426 = vsel %vm884, %v1064, 0.0
          %v1427 = vsel %vm884, %v1122, 0.0
          %v1428 = vadd.f32 %v1426, %v1427
          %v1429 = vsel %vm884, %v1180, 0.0
          %v1430 = vadd.f32 %v1428, %v1429
          %v1431 = vsel %vm884, %v1238, 0.0
          %v1432 = vadd.f32 %v1430, %v1431
          %v1433 = vsel %vm884, %v1296, 0.0
          %v1434 = vadd.f32 %v1432, %v1433
          %v1435 = vsel %vm884, %v1354, 0.0
          %v1436 = vadd.f32 %v1434, %v1435
          %v1437 = vsel %vm884, %v1412, 0.0
          %v1438 = vadd.f32 %v1436, %v1437
          %v1439 = vsel %vm884, %v1067, 0.0
          %v1440 = vsel %vm884, %v1125, 0.0
          %v1441 = vadd.f32 %v1439, %v1440
          %v1442 = vsel %vm884, %v1183, 0.0
          %v1443 = vadd.f32 %v1441, %v1442
          %v1444 = vsel %vm884, %v1241, 0.0
          %v1445 = vadd.f32 %v1443, %v1444
          %v1446 = vsel %vm884, %v1299, 0.0
          %v1447 = vadd.f32 %v1445, %v1446
          %v1448 = vsel %vm884, %v1357, 0.0
          %v1449 = vadd.f32 %v1447, %v1448
          %v1450 = vsel %vm884, %v1415, 0.0
          %v1451 = vadd.f32 %v1449, %v1450
          %v1452 = vsel %vm884, %v1072, 0.0
          %v1453 = vsel %vm884, %v1130, 0.0
          %v1454 = vadd.f32 %v1452, %v1453
          %v1455 = vsel %vm884, %v1188, 0.0
          %v1456 = vadd.f32 %v1454, %v1455
          %v1457 = vsel %vm884, %v1246, 0.0
          %v1458 = vadd.f32 %v1456, %v1457
          %v1459 = vsel %vm884, %v1304, 0.0
          %v1460 = vadd.f32 %v1458, %v1459
          %v1461 = vsel %vm884, %v1362, 0.0
          %v1462 = vadd.f32 %v1460, %v1461
          %v1463 = vsel %vm884, %v1420, 0.0
          %v1464 = vadd.f32 %v1462, %v1463
          %v1465 = vsel %vm924, %v1075, 0.0
          %v1466 = vsel %vm924, %v1133, 0.0
          %v1467 = vadd.f32 %v1465, %v1466
          %v1468 = vsel %vm924, %v1191, 0.0
          %v1469 = vadd.f32 %v1467, %v1468
          %v1470 = vsel %vm924, %v1249, 0.0
          %v1471 = vadd.f32 %v1469, %v1470
          %v1472 = vsel %vm924, %v1307, 0.0
          %v1473 = vadd.f32 %v1471, %v1472
          %v1474 = vsel %vm924, %v1365, 0.0
          %v1475 = vadd.f32 %v1473, %v1474
          %v1476 = vsel %vm924, %v1423, 0.0
          %v1477 = vadd.f32 %v1475, %v1476
          %v1478 = vadd.f32 %v938, %v1438
          %v1479 = vadd.f32 %v939, %v1451
          %v1480 = vadd.f32 %v940, %v1464
          %v1481 = vadd.f32 %v941, %v1477
          %s1482 = scalar_lea.vmem %s400, 2
          %v1483 = vld [vmem:[%s1482] ss:$2 sm:$0xff]
          %s1484 = scalar_lea.vmem %s400, 18
          %v1485 = vld [vmem:[%s1484] ss:$2 sm:$0xff]
          %s1486 = scalar_lea.vmem %s400, 34
          %v1487 = vld [vmem:[%s1486] ss:$2 sm:$0xff]
          %s1488 = scalar_lea.vmem %s400, 50
          %v1489 = vld [vmem:[%s1488] ss:$2 sm:$0x1f]
          %s1490 = scalar_lea.vmem %s400, 66
          %v1491 = vld [vmem:[%s1490] ss:$2 sm:$0xff]
          %s1492 = scalar_lea.vmem %s400, 82
          %v1493 = vld [vmem:[%s1492] ss:$2 sm:$0xff]
          %s1494 = scalar_lea.vmem %s400, 98
          %v1495 = vld [vmem:[%s1494] ss:$2 sm:$0xff]
          %s1496 = scalar_lea.vmem %s400, 114
          %v1497 = vld [vmem:[%s1496] ss:$2 sm:$0x1f]
          %s1498 = scalar_lea.vmem %s400, 130
          %v1499 = vld [vmem:[%s1498] ss:$2 sm:$0xff]
          %s1500 = scalar_lea.vmem %s400, 146
          %v1501 = vld [vmem:[%s1500] ss:$2 sm:$0xff]
          %s1502 = scalar_lea.vmem %s400, 162
          %v1503 = vld [vmem:[%s1502] ss:$2 sm:$0xff]
          %s1504 = scalar_lea.vmem %s400, 178
          %v1505 = vld [vmem:[%s1504] ss:$2 sm:$0x1f]
          %s1506 = scalar_lea.vmem %s400, 194
          %v1507 = vld [vmem:[%s1506] ss:$2 sm:$0xff]
          %s1508 = scalar_lea.vmem %s400, 210
          %v1509 = vld [vmem:[%s1508] ss:$2 sm:$0xff]
          %s1510 = scalar_lea.vmem %s400, 226
          %v1511 = vld [vmem:[%s1510] ss:$2 sm:$0xff]
          %s1512 = scalar_lea.vmem %s400, 242
          %v1513 = vld [vmem:[%s1512] ss:$2 sm:$0x1f]
          %s1514 = scalar_lea.vmem %s400, 258
          %v1515 = vld [vmem:[%s1514] ss:$2 sm:$0xff]
          %s1516 = scalar_lea.vmem %s400, 274
          %v1517 = vld [vmem:[%s1516] ss:$2 sm:$0xff]
          %s1518 = scalar_lea.vmem %s400, 290
          %v1519 = vld [vmem:[%s1518] ss:$2 sm:$0xff]
          %s1520 = scalar_lea.vmem %s400, 306
          %v1521 = vld [vmem:[%s1520] ss:$2 sm:$0x1f]
          %s1522 = scalar_lea.vmem %s400, 322
          %v1523 = vld [vmem:[%s1522] ss:$2 sm:$0xff]
          %s1524 = scalar_lea.vmem %s400, 338
          %v1525 = vld [vmem:[%s1524] ss:$2 sm:$0xff]
          %s1526 = scalar_lea.vmem %s400, 354
          %v1527 = vld [vmem:[%s1526] ss:$2 sm:$0xff]
          %s1528 = scalar_lea.vmem %s400, 370
          %v1529 = vld [vmem:[%s1528] ss:$2 sm:$0x1f]
          %s1530 = scalar_lea.vmem %s400, 386
          %v1531 = vld [vmem:[%s1530] ss:$2 sm:$0xff]
          %s1532 = scalar_lea.vmem %s400, 402
          %v1533 = vld [vmem:[%s1532] ss:$2 sm:$0xff]
          %s1534 = scalar_lea.vmem %s400, 418
          %v1535 = vld [vmem:[%s1534] ss:$2 sm:$0xff]
          %s1536 = scalar_lea.vmem %s400, 434
          %v1537 = vld [vmem:[%s1536] ss:$2 sm:$0x1f]
          %v1538 = vpack.c.bf16 %v1485, %v1483
          %v1539 = vpack.c.bf16 %v1489, %v1487
          %v1540 = vpack.c.bf16 %v1493, %v1491
          %v1541 = vpack.c.bf16 %v1497, %v1495
          %v1542 = vpack.c.bf16 %v1501, %v1499
          %v1543 = vpack.c.bf16 %v1505, %v1503
          %v1544 = vpack.c.bf16 %v1509, %v1507
          %v1545 = vpack.c.bf16 %v1513, %v1511
          %v1546 = vpack.c.bf16 %v1517, %v1515
          %v1547 = vpack.c.bf16 %v1521, %v1519
          %v1548 = vpack.c.bf16 %v1525, %v1523
          %v1549 = vpack.c.bf16 %v1529, %v1527
          %v1550 = vpack.c.bf16 %v1533, %v1531
          %v1551 = vpack.c.bf16 %v1537, %v1535
          %s1552 = scalar_lea.vmem %s1, 8
          %v1553 = vld [vmem:[%s1552] sm:$0xf]
          %v1554 = vld [vmem:[%s1552 + $0x1c] sm:$0xf]
          %v1555 = vld [vmem:[%s1552 + $0x38] sm:$0xf]
          %v1556 = vld [vmem:[%s1552 + $0x54] sm:$0xf]
          %v1557 = vld [vmem:[%s1552 + $0x70] sm:$0xf]
          %v1558 = vld [vmem:[%s1552 + $0x8c] sm:$0xf]
          %v1559 = vld [vmem:[%s1552 + $0xa8] sm:$0xf]
          %v1561 = vsel %vm477, %v1538, 0
          %v1564 = vsel %vm477, %v1539, 0
          %v1567 = vsel %vm477, %v1553, 0
          %1569 = vmatprep.subr.bf16.mxu0 0
          %1570 = vmatpush1.bf16.xpose.msra.mxu0 0
          %1571 = vmatprep.subr.bf16.mxu0 0
          %1572 = vmatpush1.bf16.xpose.msra.mxu0 0
          %1573 = vmatprep.subr.bf16.mxu0 0
          %1574 = vmatpush1.bf16.xpose.msra.mxu0 0
          %1575 = vmatprep.subr.bf16.mxu0 0
          %1576 = vmatpush1.bf16.xpose.msra.mxu0 0
          %1577 = vmatprep.subr.bf16.mxu0 0
          %1578 = vmatpush1.bf16.xpose.msra.mxu0 0
          %1579 = vmatprep.subr.bf16.mxu0 0
          %1580 = vmatpush1.bf16.xpose.msra.mxu0 0
          %1581 = vmatprep.subr.bf16.mxu0 0
          %1582 = vmatpush1.bf16.xpose.msra.mxu0 0
          %1583 = vmatprep.subr.bf16.mxu0 0
          %1584 = vmatpush1.bf16.xpose.msra.mxu0 %v1567
          %1585 = vmatprep.subr.bf16.mxu0 0
          %1586 = vmatpush2.bf16.xpose.msra.mxu0 0
          %1587 = vmatprep.subr.bf16.mxu0 0
          %1588 = vmatpush2.bf16.xpose.msra.mxu0 0
          %1589 = vmatprep.subr.bf16.mxu0 0
          %1590 = vmatpush2.bf16.xpose.msra.mxu0 0
          %1591 = vmatprep.subr.bf16.mxu0 0
          %1592 = vmatpush2.bf16.xpose.msra.mxu0 0
          %1593 = vmatprep.subr.bf16.mxu0 0
          %1594 = vmatpush2.bf16.xpose.msra.mxu0 0
          %1595 = vmatprep.subr.bf16.mxu0 0
          %1596 = vmatpush2.bf16.xpose.msra.mxu0 0
          %1597 = vmatprep.subr.bf16.mxu0 0
          %1598 = vmatpush2.bf16.xpose.msra.mxu0 0
          %1599 = vmatprep.subr.bf16.mxu0 0
          %1600 = vmatpush2.bf16.xpose.msra.mxu0 0
          %1601 = vmatprep.mubr.bf16.mxu0 0
          %1602 = vmatmul.mubr.bf16.gmra.mxu0 %v1561
          %v1603 = vpop.f32.mrf.mxu0
          %v1604 = vadd.f32 0.0, %v1603
          %v1605 = vpop.f32.mrf.mxu0
          %v1606 = vpop.f32.mrf.mxu0
          %v1607 = vadd.f32 0.0, %v1606
          %v1608 = vpop.f32.mrf.mxu0
          %1609 = vmatprep.mubr.bf16.mxu0 0
          %1610 = vmatmul.mubr.bf16.gmra.mxu0 %v1564
          %v1611 = vpop.f32.mrf.mxu0
          %v1612 = vadd.f32 0.0, %v1611
          %v1613 = vpop.f32.mrf.mxu0
          %v1614 = vpop.f32.mrf.mxu0
          %v1615 = vadd.f32 0.0, %v1614
          %v1616 = vpop.f32.mrf.mxu0
          %1617 = vdwg.mxu0
          %v1619 = vsel %vm477, %v1540, 0
          %v1622 = vsel %vm477, %v1541, 0
          %v1625 = vsel %vm477, %v1554, 0
          %1627 = vmatprep.subr.bf16.mxu0 0
          %1628 = vmatpush1.bf16.xpose.msra.mxu0 0
          %1629 = vmatprep.subr.bf16.mxu0 0
          %1630 = vmatpush1.bf16.xpose.msra.mxu0 0
          %1631 = vmatprep.subr.bf16.mxu0 0
          %1632 = vmatpush1.bf16.xpose.msra.mxu0 0
          %1633 = vmatprep.subr.bf16.mxu0 0
          %1634 = vmatpush1.bf16.xpose.msra.mxu0 0
          %1635 = vmatprep.subr.bf16.mxu0 0
          %1636 = vmatpush1.bf16.xpose.msra.mxu0 0
          %1637 = vmatprep.subr.bf16.mxu0 0
          %1638 = vmatpush1.bf16.xpose.msra.mxu0 0
          %1639 = vmatprep.subr.bf16.mxu0 0
          %1640 = vmatpush1.bf16.xpose.msra.mxu0 0
          %1641 = vmatprep.subr.bf16.mxu0 0
          %1642 = vmatpush1.bf16.xpose.msra.mxu0 %v1625
          %1643 = vmatprep.subr.bf16.mxu0 0
          %1644 = vmatpush2.bf16.xpose.msra.mxu0 0
          %1645 = vmatprep.subr.bf16.mxu0 0
          %1646 = vmatpush2.bf16.xpose.msra.mxu0 0
          %1647 = vmatprep.subr.bf16.mxu0 0
          %1648 = vmatpush2.bf16.xpose.msra.mxu0 0
          %1649 = vmatprep.subr.bf16.mxu0 0
          %1650 = vmatpush2.bf16.xpose.msra.mxu0 0
          %1651 = vmatprep.subr.bf16.mxu0 0
          %1652 = vmatpush2.bf16.xpose.msra.mxu0 0
          %1653 = vmatprep.subr.bf16.mxu0 0
          %1654 = vmatpush2.bf16.xpose.msra.mxu0 0
          %1655 = vmatprep.subr.bf16.mxu0 0
          %1656 = vmatpush2.bf16.xpose.msra.mxu0 0
          %1657 = vmatprep.subr.bf16.mxu0 0
          %1658 = vmatpush2.bf16.xpose.msra.mxu0 0
          %1659 = vmatprep.mubr.bf16.mxu0 0
          %1660 = vmatmul.mubr.bf16.gmra.mxu0 %v1619
          %v1661 = vpop.f32.mrf.mxu0
          %v1662 = vadd.f32 0.0, %v1661
          %v1663 = vpop.f32.mrf.mxu0
          %v1664 = vpop.f32.mrf.mxu0
          %v1665 = vadd.f32 0.0, %v1664
          %v1666 = vpop.f32.mrf.mxu0
          %1667 = vmatprep.mubr.bf16.mxu0 0
          %1668 = vmatmul.mubr.bf16.gmra.mxu0 %v1622
          %v1669 = vpop.f32.mrf.mxu0
          %v1670 = vadd.f32 0.0, %v1669
          %v1671 = vpop.f32.mrf.mxu0
          %v1672 = vpop.f32.mrf.mxu0
          %v1673 = vadd.f32 0.0, %v1672
          %v1674 = vpop.f32.mrf.mxu0
          %1675 = vdwg.mxu0
          %v1677 = vsel %vm477, %v1542, 0
          %v1680 = vsel %vm477, %v1543, 0
          %v1683 = vsel %vm477, %v1555, 0
          %1685 = vmatprep.subr.bf16.mxu0 0
          %1686 = vmatpush1.bf16.xpose.msra.mxu0 0
          %1687 = vmatprep.subr.bf16.mxu0 0
          %1688 = vmatpush1.bf16.xpose.msra.mxu0 0
          %1689 = vmatprep.subr.bf16.mxu0 0
          %1690 = vmatpush1.bf16.xpose.msra.mxu0 0
          %1691 = vmatprep.subr.bf16.mxu0 0
          %1692 = vmatpush1.bf16.xpose.msra.mxu0 0
          %1693 = vmatprep.subr.bf16.mxu0 0
          %1694 = vmatpush1.bf16.xpose.msra.mxu0 0
          %1695 = vmatprep.subr.bf16.mxu0 0
          %1696 = vmatpush1.bf16.xpose.msra.mxu0 0
          %1697 = vmatprep.subr.bf16.mxu0 0
          %1698 = vmatpush1.bf16.xpose.msra.mxu0 0
          %1699 = vmatprep.subr.bf16.mxu0 0
          %1700 = vmatpush1.bf16.xpose.msra.mxu0 %v1683
          %1701 = vmatprep.subr.bf16.mxu0 0
          %1702 = vmatpush2.bf16.xpose.msra.mxu0 0
          %1703 = vmatprep.subr.bf16.mxu0 0
          %1704 = vmatpush2.bf16.xpose.msra.mxu0 0
          %1705 = vmatprep.subr.bf16.mxu0 0
          %1706 = vmatpush2.bf16.xpose.msra.mxu0 0
          %1707 = vmatprep.subr.bf16.mxu0 0
          %1708 = vmatpush2.bf16.xpose.msra.mxu0 0
          %1709 = vmatprep.subr.bf16.mxu0 0
          %1710 = vmatpush2.bf16.xpose.msra.mxu0 0
          %1711 = vmatprep.subr.bf16.mxu0 0
          %1712 = vmatpush2.bf16.xpose.msra.mxu0 0
          %1713 = vmatprep.subr.bf16.mxu0 0
          %1714 = vmatpush2.bf16.xpose.msra.mxu0 0
          %1715 = vmatprep.subr.bf16.mxu0 0
          %1716 = vmatpush2.bf16.xpose.msra.mxu0 0
          %1717 = vmatprep.mubr.bf16.mxu0 0
          %1718 = vmatmul.mubr.bf16.gmra.mxu0 %v1677
          %v1719 = vpop.f32.mrf.mxu0
          %v1720 = vadd.f32 0.0, %v1719
          %v1721 = vpop.f32.mrf.mxu0
          %v1722 = vpop.f32.mrf.mxu0
          %v1723 = vadd.f32 0.0, %v1722
          %v1724 = vpop.f32.mrf.mxu0
          %1725 = vmatprep.mubr.bf16.mxu0 0
          %1726 = vmatmul.mubr.bf16.gmra.mxu0 %v1680
          %v1727 = vpop.f32.mrf.mxu0
          %v1728 = vadd.f32 0.0, %v1727
          %v1729 = vpop.f32.mrf.mxu0
          %v1730 = vpop.f32.mrf.mxu0
          %v1731 = vadd.f32 0.0, %v1730
          %v1732 = vpop.f32.mrf.mxu0
          %1733 = vdwg.mxu0
          %v1735 = vsel %vm477, %v1544, 0
          %v1738 = vsel %vm477, %v1545, 0
          %v1741 = vsel %vm477, %v1556, 0
          %1743 = vmatprep.subr.bf16.mxu0 0
          %1744 = vmatpush1.bf16.xpose.msra.mxu0 0
          %1745 = vmatprep.subr.bf16.mxu0 0
          %1746 = vmatpush1.bf16.xpose.msra.mxu0 0
          %1747 = vmatprep.subr.bf16.mxu0 0
          %1748 = vmatpush1.bf16.xpose.msra.mxu0 0
          %1749 = vmatprep.subr.bf16.mxu0 0
          %1750 = vmatpush1.bf16.xpose.msra.mxu0 0
          %1751 = vmatprep.subr.bf16.mxu0 0
          %1752 = vmatpush1.bf16.xpose.msra.mxu0 0
          %1753 = vmatprep.subr.bf16.mxu0 0
          %1754 = vmatpush1.bf16.xpose.msra.mxu0 0
          %1755 = vmatprep.subr.bf16.mxu0 0
          %1756 = vmatpush1.bf16.xpose.msra.mxu0 0
          %1757 = vmatprep.subr.bf16.mxu0 0
          %1758 = vmatpush1.bf16.xpose.msra.mxu0 %v1741
          %1759 = vmatprep.subr.bf16.mxu0 0
          %1760 = vmatpush2.bf16.xpose.msra.mxu0 0
          %1761 = vmatprep.subr.bf16.mxu0 0
          %1762 = vmatpush2.bf16.xpose.msra.mxu0 0
          %1763 = vmatprep.subr.bf16.mxu0 0
          %1764 = vmatpush2.bf16.xpose.msra.mxu0 0
          %1765 = vmatprep.subr.bf16.mxu0 0
          %1766 = vmatpush2.bf16.xpose.msra.mxu0 0
          %1767 = vmatprep.subr.bf16.mxu0 0
          %1768 = vmatpush2.bf16.xpose.msra.mxu0 0
          %1769 = vmatprep.subr.bf16.mxu0 0
          %1770 = vmatpush2.bf16.xpose.msra.mxu0 0
          %1771 = vmatprep.subr.bf16.mxu0 0
          %1772 = vmatpush2.bf16.xpose.msra.mxu0 0
          %1773 = vmatprep.subr.bf16.mxu0 0
          %1774 = vmatpush2.bf16.xpose.msra.mxu0 0
          %1775 = vmatprep.mubr.bf16.mxu0 0
          %1776 = vmatmul.mubr.bf16.gmra.mxu0 %v1735
          %v1777 = vpop.f32.mrf.mxu0
          %v1778 = vadd.f32 0.0, %v1777
          %v1779 = vpop.f32.mrf.mxu0
          %v1780 = vpop.f32.mrf.mxu0
          %v1781 = vadd.f32 0.0, %v1780
          %v1782 = vpop.f32.mrf.mxu0
          %1783 = vmatprep.mubr.bf16.mxu0 0
          %1784 = vmatmul.mubr.bf16.gmra.mxu0 %v1738
          %v1785 = vpop.f32.mrf.mxu0
          %v1786 = vadd.f32 0.0, %v1785
          %v1787 = vpop.f32.mrf.mxu0
          %v1788 = vpop.f32.mrf.mxu0
          %v1789 = vadd.f32 0.0, %v1788
          %v1790 = vpop.f32.mrf.mxu0
          %1791 = vdwg.mxu0
          %v1793 = vsel %vm477, %v1546, 0
          %v1796 = vsel %vm477, %v1547, 0
          %v1799 = vsel %vm477, %v1557, 0
          %1801 = vmatprep.subr.bf16.mxu0 0
          %1802 = vmatpush1.bf16.xpose.msra.mxu0 0
          %1803 = vmatprep.subr.bf16.mxu0 0
          %1804 = vmatpush1.bf16.xpose.msra.mxu0 0
          %1805 = vmatprep.subr.bf16.mxu0 0
          %1806 = vmatpush1.bf16.xpose.msra.mxu0 0
          %1807 = vmatprep.subr.bf16.mxu0 0
          %1808 = vmatpush1.bf16.xpose.msra.mxu0 0
          %1809 = vmatprep.subr.bf16.mxu0 0
          %1810 = vmatpush1.bf16.xpose.msra.mxu0 0
          %1811 = vmatprep.subr.bf16.mxu0 0
          %1812 = vmatpush1.bf16.xpose.msra.mxu0 0
          %1813 = vmatprep.subr.bf16.mxu0 0
          %1814 = vmatpush1.bf16.xpose.msra.mxu0 0
          %1815 = vmatprep.subr.bf16.mxu0 0
          %1816 = vmatpush1.bf16.xpose.msra.mxu0 %v1799
          %1817 = vmatprep.subr.bf16.mxu0 0
          %1818 = vmatpush2.bf16.xpose.msra.mxu0 0
          %1819 = vmatprep.subr.bf16.mxu0 0
          %1820 = vmatpush2.bf16.xpose.msra.mxu0 0
          %1821 = vmatprep.subr.bf16.mxu0 0
          %1822 = vmatpush2.bf16.xpose.msra.mxu0 0
          %1823 = vmatprep.subr.bf16.mxu0 0
          %1824 = vmatpush2.bf16.xpose.msra.mxu0 0
          %1825 = vmatprep.subr.bf16.mxu0 0
          %1826 = vmatpush2.bf16.xpose.msra.mxu0 0
          %1827 = vmatprep.subr.bf16.mxu0 0
          %1828 = vmatpush2.bf16.xpose.msra.mxu0 0
          %1829 = vmatprep.subr.bf16.mxu0 0
          %1830 = vmatpush2.bf16.xpose.msra.mxu0 0
          %1831 = vmatprep.subr.bf16.mxu0 0
          %1832 = vmatpush2.bf16.xpose.msra.mxu0 0
          %1833 = vmatprep.mubr.bf16.mxu0 0
          %1834 = vmatmul.mubr.bf16.gmra.mxu0 %v1793
          %v1835 = vpop.f32.mrf.mxu0
          %v1836 = vadd.f32 0.0, %v1835
          %v1837 = vpop.f32.mrf.mxu0
          %v1838 = vpop.f32.mrf.mxu0
          %v1839 = vadd.f32 0.0, %v1838
          %v1840 = vpop.f32.mrf.mxu0
          %1841 = vmatprep.mubr.bf16.mxu0 0
          %1842 = vmatmul.mubr.bf16.gmra.mxu0 %v1796
          %v1843 = vpop.f32.mrf.mxu0
          %v1844 = vadd.f32 0.0, %v1843
          %v1845 = vpop.f32.mrf.mxu0
          %v1846 = vpop.f32.mrf.mxu0
          %v1847 = vadd.f32 0.0, %v1846
          %v1848 = vpop.f32.mrf.mxu0
          %1849 = vdwg.mxu0
          %v1851 = vsel %vm477, %v1548, 0
          %v1854 = vsel %vm477, %v1549, 0
          %v1857 = vsel %vm477, %v1558, 0
          %1859 = vmatprep.subr.bf16.mxu0 0
          %1860 = vmatpush1.bf16.xpose.msra.mxu0 0
          %1861 = vmatprep.subr.bf16.mxu0 0
          %1862 = vmatpush1.bf16.xpose.msra.mxu0 0
          %1863 = vmatprep.subr.bf16.mxu0 0
          %1864 = vmatpush1.bf16.xpose.msra.mxu0 0
          %1865 = vmatprep.subr.bf16.mxu0 0
          %1866 = vmatpush1.bf16.xpose.msra.mxu0 0
          %1867 = vmatprep.subr.bf16.mxu0 0
          %1868 = vmatpush1.bf16.xpose.msra.mxu0 0
          %1869 = vmatprep.subr.bf16.mxu0 0
          %1870 = vmatpush1.bf16.xpose.msra.mxu0 0
          %1871 = vmatprep.subr.bf16.mxu0 0
          %1872 = vmatpush1.bf16.xpose.msra.mxu0 0
          %1873 = vmatprep.subr.bf16.mxu0 0
          %1874 = vmatpush1.bf16.xpose.msra.mxu0 %v1857
          %1875 = vmatprep.subr.bf16.mxu0 0
          %1876 = vmatpush2.bf16.xpose.msra.mxu0 0
          %1877 = vmatprep.subr.bf16.mxu0 0
          %1878 = vmatpush2.bf16.xpose.msra.mxu0 0
          %1879 = vmatprep.subr.bf16.mxu0 0
          %1880 = vmatpush2.bf16.xpose.msra.mxu0 0
          %1881 = vmatprep.subr.bf16.mxu0 0
          %1882 = vmatpush2.bf16.xpose.msra.mxu0 0
          %1883 = vmatprep.subr.bf16.mxu0 0
          %1884 = vmatpush2.bf16.xpose.msra.mxu0 0
          %1885 = vmatprep.subr.bf16.mxu0 0
          %1886 = vmatpush2.bf16.xpose.msra.mxu0 0
          %1887 = vmatprep.subr.bf16.mxu0 0
          %1888 = vmatpush2.bf16.xpose.msra.mxu0 0
          %1889 = vmatprep.subr.bf16.mxu0 0
          %1890 = vmatpush2.bf16.xpose.msra.mxu0 0
          %1891 = vmatprep.mubr.bf16.mxu0 0
          %1892 = vmatmul.mubr.bf16.gmra.mxu0 %v1851
          %v1893 = vpop.f32.mrf.mxu0
          %v1894 = vadd.f32 0.0, %v1893
          %v1895 = vpop.f32.mrf.mxu0
          %v1896 = vpop.f32.mrf.mxu0
          %v1897 = vadd.f32 0.0, %v1896
          %v1898 = vpop.f32.mrf.mxu0
          %1899 = vmatprep.mubr.bf16.mxu0 0
          %1900 = vmatmul.mubr.bf16.gmra.mxu0 %v1854
          %v1901 = vpop.f32.mrf.mxu0
          %v1902 = vadd.f32 0.0, %v1901
          %v1903 = vpop.f32.mrf.mxu0
          %v1904 = vpop.f32.mrf.mxu0
          %v1905 = vadd.f32 0.0, %v1904
          %v1906 = vpop.f32.mrf.mxu0
          %1907 = vdwg.mxu0
          %v1909 = vsel %vm477, %v1550, 0
          %v1912 = vsel %vm477, %v1551, 0
          %v1915 = vsel %vm477, %v1559, 0
          %1917 = vmatprep.subr.bf16.mxu0 0
          %1918 = vmatpush1.bf16.xpose.msra.mxu0 0
          %1919 = vmatprep.subr.bf16.mxu0 0
          %1920 = vmatpush1.bf16.xpose.msra.mxu0 0
          %1921 = vmatprep.subr.bf16.mxu0 0
          %1922 = vmatpush1.bf16.xpose.msra.mxu0 0
          %1923 = vmatprep.subr.bf16.mxu0 0
          %1924 = vmatpush1.bf16.xpose.msra.mxu0 0
          %1925 = vmatprep.subr.bf16.mxu0 0
          %1926 = vmatpush1.bf16.xpose.msra.mxu0 0
          %1927 = vmatprep.subr.bf16.mxu0 0
          %1928 = vmatpush1.bf16.xpose.msra.mxu0 0
          %1929 = vmatprep.subr.bf16.mxu0 0
          %1930 = vmatpush1.bf16.xpose.msra.mxu0 0
          %1931 = vmatprep.subr.bf16.mxu0 0
          %1932 = vmatpush1.bf16.xpose.msra.mxu0 %v1915
          %1933 = vmatprep.subr.bf16.mxu0 0
          %1934 = vmatpush2.bf16.xpose.msra.mxu0 0
          %1935 = vmatprep.subr.bf16.mxu0 0
          %1936 = vmatpush2.bf16.xpose.msra.mxu0 0
          %1937 = vmatprep.subr.bf16.mxu0 0
          %1938 = vmatpush2.bf16.xpose.msra.mxu0 0
          %1939 = vmatprep.subr.bf16.mxu0 0
          %1940 = vmatpush2.bf16.xpose.msra.mxu0 0
          %1941 = vmatprep.subr.bf16.mxu0 0
          %1942 = vmatpush2.bf16.xpose.msra.mxu0 0
          %1943 = vmatprep.subr.bf16.mxu0 0
          %1944 = vmatpush2.bf16.xpose.msra.mxu0 0
          %1945 = vmatprep.subr.bf16.mxu0 0
          %1946 = vmatpush2.bf16.xpose.msra.mxu0 0
          %1947 = vmatprep.subr.bf16.mxu0 0
          %1948 = vmatpush2.bf16.xpose.msra.mxu0 0
          %1949 = vmatprep.mubr.bf16.mxu0 0
          %1950 = vmatmul.mubr.bf16.gmra.mxu0 %v1909
          %v1951 = vpop.f32.mrf.mxu0
          %v1952 = vadd.f32 0.0, %v1951
          %v1953 = vpop.f32.mrf.mxu0
          %v1954 = vpop.f32.mrf.mxu0
          %v1955 = vadd.f32 0.0, %v1954
          %v1956 = vpop.f32.mrf.mxu0
          %1957 = vmatprep.mubr.bf16.mxu0 0
          %1958 = vmatmul.mubr.bf16.gmra.mxu0 %v1912
          %v1959 = vpop.f32.mrf.mxu0
          %v1960 = vadd.f32 0.0, %v1959
          %v1961 = vpop.f32.mrf.mxu0
          %v1962 = vpop.f32.mrf.mxu0
          %v1963 = vadd.f32 0.0, %v1962
          %v1964 = vpop.f32.mrf.mxu0
          %1965 = vdwg.mxu0
          %v1966 = vsel %vm884, %v1604, 0.0
          %v1967 = vsel %vm884, %v1662, 0.0
          %v1968 = vadd.f32 %v1966, %v1967
          %v1969 = vsel %vm884, %v1720, 0.0
          %v1970 = vadd.f32 %v1968, %v1969
          %v1971 = vsel %vm884, %v1778, 0.0
          %v1972 = vadd.f32 %v1970, %v1971
          %v1973 = vsel %vm884, %v1836, 0.0
          %v1974 = vadd.f32 %v1972, %v1973
          %v1975 = vsel %vm884, %v1894, 0.0
          %v1976 = vadd.f32 %v1974, %v1975
          %v1977 = vsel %vm884, %v1952, 0.0
          %v1978 = vadd.f32 %v1976, %v1977
          %v1979 = vsel %vm884, %v1607, 0.0
          %v1980 = vsel %vm884, %v1665, 0.0
          %v1981 = vadd.f32 %v1979, %v1980
          %v1982 = vsel %vm884, %v1723, 0.0
          %v1983 = vadd.f32 %v1981, %v1982
          %v1984 = vsel %vm884, %v1781, 0.0
          %v1985 = vadd.f32 %v1983, %v1984
          %v1986 = vsel %vm884, %v1839, 0.0
          %v1987 = vadd.f32 %v1985, %v1986
          %v1988 = vsel %vm884, %v1897, 0.0
          %v1989 = vadd.f32 %v1987, %v1988
          %v1990 = vsel %vm884, %v1955, 0.0
          %v1991 = vadd.f32 %v1989, %v1990
          %v1992 = vsel %vm884, %v1612, 0.0
          %v1993 = vsel %vm884, %v1670, 0.0
          %v1994 = vadd.f32 %v1992, %v1993
          %v1995 = vsel %vm884, %v1728, 0.0
          %v1996 = vadd.f32 %v1994, %v1995
          %v1997 = vsel %vm884, %v1786, 0.0
          %v1998 = vadd.f32 %v1996, %v1997
          %v1999 = vsel %vm884, %v1844, 0.0
          %v2000 = vadd.f32 %v1998, %v1999
          %v2001 = vsel %vm884, %v1902, 0.0
          %v2002 = vadd.f32 %v2000, %v2001
          %v2003 = vsel %vm884, %v1960, 0.0
          %v2004 = vadd.f32 %v2002, %v2003
          %v2005 = vsel %vm924, %v1615, 0.0
          %v2006 = vsel %vm924, %v1673, 0.0
          %v2007 = vadd.f32 %v2005, %v2006
          %v2008 = vsel %vm924, %v1731, 0.0
          %v2009 = vadd.f32 %v2007, %v2008
          %v2010 = vsel %vm924, %v1789, 0.0
          %v2011 = vadd.f32 %v2009, %v2010
          %v2012 = vsel %vm924, %v1847, 0.0
          %v2013 = vadd.f32 %v2011, %v2012
          %v2014 = vsel %vm924, %v1905, 0.0
          %v2015 = vadd.f32 %v2013, %v2014
          %v2016 = vsel %vm924, %v1963, 0.0
          %v2017 = vadd.f32 %v2015, %v2016
          %v2018 = vadd.f32 %v1478, %v1978
          %v2019 = vadd.f32 %v1479, %v1991
          %v2020 = vadd.f32 %v1480, %v2004
          %v2021 = vadd.f32 %v1481, %v2017
          %s2022 = scalar_lea.vmem %s400, 3
          %v2023 = vld [vmem:[%s2022] ss:$2 sm:$0xff]
          %s2024 = scalar_lea.vmem %s400, 19
          %v2025 = vld [vmem:[%s2024] ss:$2 sm:$0xff]
          %s2026 = scalar_lea.vmem %s400, 35
          %v2027 = vld [vmem:[%s2026] ss:$2 sm:$0xff]
          %s2028 = scalar_lea.vmem %s400, 51
          %v2029 = vld [vmem:[%s2028] ss:$2 sm:$0x1f]
          %s2030 = scalar_lea.vmem %s400, 67
          %v2031 = vld [vmem:[%s2030] ss:$2 sm:$0xff]
          %s2032 = scalar_lea.vmem %s400, 83
          %v2033 = vld [vmem:[%s2032] ss:$2 sm:$0xff]
          %s2034 = scalar_lea.vmem %s400, 99
          %v2035 = vld [vmem:[%s2034] ss:$2 sm:$0xff]
          %s2036 = scalar_lea.vmem %s400, 115
          %v2037 = vld [vmem:[%s2036] ss:$2 sm:$0x1f]
          %s2038 = scalar_lea.vmem %s400, 131
          %v2039 = vld [vmem:[%s2038] ss:$2 sm:$0xff]
          %s2040 = scalar_lea.vmem %s400, 147
          %v2041 = vld [vmem:[%s2040] ss:$2 sm:$0xff]
          %s2042 = scalar_lea.vmem %s400, 163
          %v2043 = vld [vmem:[%s2042] ss:$2 sm:$0xff]
          %s2044 = scalar_lea.vmem %s400, 179
          %v2045 = vld [vmem:[%s2044] ss:$2 sm:$0x1f]
          %s2046 = scalar_lea.vmem %s400, 195
          %v2047 = vld [vmem:[%s2046] ss:$2 sm:$0xff]
          %s2048 = scalar_lea.vmem %s400, 211
          %v2049 = vld [vmem:[%s2048] ss:$2 sm:$0xff]
          %s2050 = scalar_lea.vmem %s400, 227
          %v2051 = vld [vmem:[%s2050] ss:$2 sm:$0xff]
          %s2052 = scalar_lea.vmem %s400, 243
          %v2053 = vld [vmem:[%s2052] ss:$2 sm:$0x1f]
          %s2054 = scalar_lea.vmem %s400, 259
          %v2055 = vld [vmem:[%s2054] ss:$2 sm:$0xff]
          %s2056 = scalar_lea.vmem %s400, 275
          %v2057 = vld [vmem:[%s2056] ss:$2 sm:$0xff]
          %s2058 = scalar_lea.vmem %s400, 291
          %v2059 = vld [vmem:[%s2058] ss:$2 sm:$0xff]
          %s2060 = scalar_lea.vmem %s400, 307
          %v2061 = vld [vmem:[%s2060] ss:$2 sm:$0x1f]
          %s2062 = scalar_lea.vmem %s400, 323
          %v2063 = vld [vmem:[%s2062] ss:$2 sm:$0xff]
          %s2064 = scalar_lea.vmem %s400, 339
          %v2065 = vld [vmem:[%s2064] ss:$2 sm:$0xff]
          %s2066 = scalar_lea.vmem %s400, 355
          %v2067 = vld [vmem:[%s2066] ss:$2 sm:$0xff]
          %s2068 = scalar_lea.vmem %s400, 371
          %v2069 = vld [vmem:[%s2068] ss:$2 sm:$0x1f]
          %s2070 = scalar_lea.vmem %s400, 387
          %v2071 = vld [vmem:[%s2070] ss:$2 sm:$0xff]
          %s2072 = scalar_lea.vmem %s400, 403
          %v2073 = vld [vmem:[%s2072] ss:$2 sm:$0xff]
          %s2074 = scalar_lea.vmem %s400, 419
          %v2075 = vld [vmem:[%s2074] ss:$2 sm:$0xff]
          %s2076 = scalar_lea.vmem %s400, 435
          %v2077 = vld [vmem:[%s2076] ss:$2 sm:$0x1f]
          %v2078 = vpack.c.bf16 %v2025, %v2023
          %v2079 = vpack.c.bf16 %v2029, %v2027
          %v2080 = vpack.c.bf16 %v2033, %v2031
          %v2081 = vpack.c.bf16 %v2037, %v2035
          %v2082 = vpack.c.bf16 %v2041, %v2039
          %v2083 = vpack.c.bf16 %v2045, %v2043
          %v2084 = vpack.c.bf16 %v2049, %v2047
          %v2085 = vpack.c.bf16 %v2053, %v2051
          %v2086 = vpack.c.bf16 %v2057, %v2055
          %v2087 = vpack.c.bf16 %v2061, %v2059
          %v2088 = vpack.c.bf16 %v2065, %v2063
          %v2089 = vpack.c.bf16 %v2069, %v2067
          %v2090 = vpack.c.bf16 %v2073, %v2071
          %v2091 = vpack.c.bf16 %v2077, %v2075
          %s2092 = scalar_lea.vmem %s1, 12
          %v2093 = vld [vmem:[%s2092] sm:$0xf]
          %v2094 = vld [vmem:[%s2092 + $0x1c] sm:$0xf]
          %v2095 = vld [vmem:[%s2092 + $0x38] sm:$0xf]
          %v2096 = vld [vmem:[%s2092 + $0x54] sm:$0xf]
          %v2097 = vld [vmem:[%s2092 + $0x70] sm:$0xf]
          %v2098 = vld [vmem:[%s2092 + $0x8c] sm:$0xf]
          %v2099 = vld [vmem:[%s2092 + $0xa8] sm:$0xf]
          %v2101 = vsel %vm477, %v2078, 0
          %v2104 = vsel %vm477, %v2079, 0
          %v2107 = vsel %vm477, %v2093, 0
          %2109 = vmatprep.subr.bf16.mxu0 0
          %2110 = vmatpush1.bf16.xpose.msra.mxu0 0
          %2111 = vmatprep.subr.bf16.mxu0 0
          %2112 = vmatpush1.bf16.xpose.msra.mxu0 0
          %2113 = vmatprep.subr.bf16.mxu0 0
          %2114 = vmatpush1.bf16.xpose.msra.mxu0 0
          %2115 = vmatprep.subr.bf16.mxu0 0
          %2116 = vmatpush1.bf16.xpose.msra.mxu0 0
          %2117 = vmatprep.subr.bf16.mxu0 0
          %2118 = vmatpush1.bf16.xpose.msra.mxu0 0
          %2119 = vmatprep.subr.bf16.mxu0 0
          %2120 = vmatpush1.bf16.xpose.msra.mxu0 0
          %2121 = vmatprep.subr.bf16.mxu0 0
          %2122 = vmatpush1.bf16.xpose.msra.mxu0 0
          %2123 = vmatprep.subr.bf16.mxu0 0
          %2124 = vmatpush1.bf16.xpose.msra.mxu0 %v2107
          %2125 = vmatprep.subr.bf16.mxu0 0
          %2126 = vmatpush2.bf16.xpose.msra.mxu0 0
          %2127 = vmatprep.subr.bf16.mxu0 0
          %2128 = vmatpush2.bf16.xpose.msra.mxu0 0
          %2129 = vmatprep.subr.bf16.mxu0 0
          %2130 = vmatpush2.bf16.xpose.msra.mxu0 0
          %2131 = vmatprep.subr.bf16.mxu0 0
          %2132 = vmatpush2.bf16.xpose.msra.mxu0 0
          %2133 = vmatprep.subr.bf16.mxu0 0
          %2134 = vmatpush2.bf16.xpose.msra.mxu0 0
          %2135 = vmatprep.subr.bf16.mxu0 0
          %2136 = vmatpush2.bf16.xpose.msra.mxu0 0
          %2137 = vmatprep.subr.bf16.mxu0 0
          %2138 = vmatpush2.bf16.xpose.msra.mxu0 0
          %2139 = vmatprep.subr.bf16.mxu0 0
          %2140 = vmatpush2.bf16.xpose.msra.mxu0 0
          %2141 = vmatprep.mubr.bf16.mxu0 0
          %2142 = vmatmul.mubr.bf16.gmra.mxu0 %v2101
          %v2143 = vpop.f32.mrf.mxu0
          %v2144 = vadd.f32 0.0, %v2143
          %v2145 = vpop.f32.mrf.mxu0
          %v2146 = vpop.f32.mrf.mxu0
          %v2147 = vadd.f32 0.0, %v2146
          %v2148 = vpop.f32.mrf.mxu0
          %2149 = vmatprep.mubr.bf16.mxu0 0
          %2150 = vmatmul.mubr.bf16.gmra.mxu0 %v2104
          %v2151 = vpop.f32.mrf.mxu0
          %v2152 = vadd.f32 0.0, %v2151
          %v2153 = vpop.f32.mrf.mxu0
          %v2154 = vpop.f32.mrf.mxu0
          %v2155 = vadd.f32 0.0, %v2154
          %v2156 = vpop.f32.mrf.mxu0
          %2157 = vdwg.mxu0
          %v2159 = vsel %vm477, %v2080, 0
          %v2162 = vsel %vm477, %v2081, 0
          %v2165 = vsel %vm477, %v2094, 0
          %2167 = vmatprep.subr.bf16.mxu0 0
          %2168 = vmatpush1.bf16.xpose.msra.mxu0 0
          %2169 = vmatprep.subr.bf16.mxu0 0
          %2170 = vmatpush1.bf16.xpose.msra.mxu0 0
          %2171 = vmatprep.subr.bf16.mxu0 0
          %2172 = vmatpush1.bf16.xpose.msra.mxu0 0
          %2173 = vmatprep.subr.bf16.mxu0 0
          %2174 = vmatpush1.bf16.xpose.msra.mxu0 0
          %2175 = vmatprep.subr.bf16.mxu0 0
          %2176 = vmatpush1.bf16.xpose.msra.mxu0 0
          %2177 = vmatprep.subr.bf16.mxu0 0
          %2178 = vmatpush1.bf16.xpose.msra.mxu0 0
          %2179 = vmatprep.subr.bf16.mxu0 0
          %2180 = vmatpush1.bf16.xpose.msra.mxu0 0
          %2181 = vmatprep.subr.bf16.mxu0 0
          %2182 = vmatpush1.bf16.xpose.msra.mxu0 %v2165
          %2183 = vmatprep.subr.bf16.mxu0 0
          %2184 = vmatpush2.bf16.xpose.msra.mxu0 0
          %2185 = vmatprep.subr.bf16.mxu0 0
          %2186 = vmatpush2.bf16.xpose.msra.mxu0 0
          %2187 = vmatprep.subr.bf16.mxu0 0
          %2188 = vmatpush2.bf16.xpose.msra.mxu0 0
          %2189 = vmatprep.subr.bf16.mxu0 0
          %2190 = vmatpush2.bf16.xpose.msra.mxu0 0
          %2191 = vmatprep.subr.bf16.mxu0 0
          %2192 = vmatpush2.bf16.xpose.msra.mxu0 0
          %2193 = vmatprep.subr.bf16.mxu0 0
          %2194 = vmatpush2.bf16.xpose.msra.mxu0 0
          %2195 = vmatprep.subr.bf16.mxu0 0
          %2196 = vmatpush2.bf16.xpose.msra.mxu0 0
          %2197 = vmatprep.subr.bf16.mxu0 0
          %2198 = vmatpush2.bf16.xpose.msra.mxu0 0
          %2199 = vmatprep.mubr.bf16.mxu0 0
          %2200 = vmatmul.mubr.bf16.gmra.mxu0 %v2159
          %v2201 = vpop.f32.mrf.mxu0
          %v2202 = vadd.f32 0.0, %v2201
          %v2203 = vpop.f32.mrf.mxu0
          %v2204 = vpop.f32.mrf.mxu0
          %v2205 = vadd.f32 0.0, %v2204
          %v2206 = vpop.f32.mrf.mxu0
          %2207 = vmatprep.mubr.bf16.mxu0 0
          %2208 = vmatmul.mubr.bf16.gmra.mxu0 %v2162
          %v2209 = vpop.f32.mrf.mxu0
          %v2210 = vadd.f32 0.0, %v2209
          %v2211 = vpop.f32.mrf.mxu0
          %v2212 = vpop.f32.mrf.mxu0
          %v2213 = vadd.f32 0.0, %v2212
          %v2214 = vpop.f32.mrf.mxu0
          %2215 = vdwg.mxu0
          %v2217 = vsel %vm477, %v2082, 0
          %v2220 = vsel %vm477, %v2083, 0
          %v2223 = vsel %vm477, %v2095, 0
          %2225 = vmatprep.subr.bf16.mxu0 0
          %2226 = vmatpush1.bf16.xpose.msra.mxu0 0
          %2227 = vmatprep.subr.bf16.mxu0 0
          %2228 = vmatpush1.bf16.xpose.msra.mxu0 0
          %2229 = vmatprep.subr.bf16.mxu0 0
          %2230 = vmatpush1.bf16.xpose.msra.mxu0 0
          %2231 = vmatprep.subr.bf16.mxu0 0
          %2232 = vmatpush1.bf16.xpose.msra.mxu0 0
          %2233 = vmatprep.subr.bf16.mxu0 0
          %2234 = vmatpush1.bf16.xpose.msra.mxu0 0
          %2235 = vmatprep.subr.bf16.mxu0 0
          %2236 = vmatpush1.bf16.xpose.msra.mxu0 0
          %2237 = vmatprep.subr.bf16.mxu0 0
          %2238 = vmatpush1.bf16.xpose.msra.mxu0 0
          %2239 = vmatprep.subr.bf16.mxu0 0
          %2240 = vmatpush1.bf16.xpose.msra.mxu0 %v2223
          %2241 = vmatprep.subr.bf16.mxu0 0
          %2242 = vmatpush2.bf16.xpose.msra.mxu0 0
          %2243 = vmatprep.subr.bf16.mxu0 0
          %2244 = vmatpush2.bf16.xpose.msra.mxu0 0
          %2245 = vmatprep.subr.bf16.mxu0 0
          %2246 = vmatpush2.bf16.xpose.msra.mxu0 0
          %2247 = vmatprep.subr.bf16.mxu0 0
          %2248 = vmatpush2.bf16.xpose.msra.mxu0 0
          %2249 = vmatprep.subr.bf16.mxu0 0
          %2250 = vmatpush2.bf16.xpose.msra.mxu0 0
          %2251 = vmatprep.subr.bf16.mxu0 0
          %2252 = vmatpush2.bf16.xpose.msra.mxu0 0
          %2253 = vmatprep.subr.bf16.mxu0 0
          %2254 = vmatpush2.bf16.xpose.msra.mxu0 0
          %2255 = vmatprep.subr.bf16.mxu0 0
          %2256 = vmatpush2.bf16.xpose.msra.mxu0 0
          %2257 = vmatprep.mubr.bf16.mxu0 0
          %2258 = vmatmul.mubr.bf16.gmra.mxu0 %v2217
          %v2259 = vpop.f32.mrf.mxu0
          %v2260 = vadd.f32 0.0, %v2259
          %v2261 = vpop.f32.mrf.mxu0
          %v2262 = vpop.f32.mrf.mxu0
          %v2263 = vadd.f32 0.0, %v2262
          %v2264 = vpop.f32.mrf.mxu0
          %2265 = vmatprep.mubr.bf16.mxu0 0
          %2266 = vmatmul.mubr.bf16.gmra.mxu0 %v2220
          %v2267 = vpop.f32.mrf.mxu0
          %v2268 = vadd.f32 0.0, %v2267
          %v2269 = vpop.f32.mrf.mxu0
          %v2270 = vpop.f32.mrf.mxu0
          %v2271 = vadd.f32 0.0, %v2270
          %v2272 = vpop.f32.mrf.mxu0
          %2273 = vdwg.mxu0
          %v2275 = vsel %vm477, %v2084, 0
          %v2278 = vsel %vm477, %v2085, 0
          %v2281 = vsel %vm477, %v2096, 0
          %2283 = vmatprep.subr.bf16.mxu0 0
          %2284 = vmatpush1.bf16.xpose.msra.mxu0 0
          %2285 = vmatprep.subr.bf16.mxu0 0
          %2286 = vmatpush1.bf16.xpose.msra.mxu0 0
          %2287 = vmatprep.subr.bf16.mxu0 0
          %2288 = vmatpush1.bf16.xpose.msra.mxu0 0
          %2289 = vmatprep.subr.bf16.mxu0 0
          %2290 = vmatpush1.bf16.xpose.msra.mxu0 0
          %2291 = vmatprep.subr.bf16.mxu0 0
          %2292 = vmatpush1.bf16.xpose.msra.mxu0 0
          %2293 = vmatprep.subr.bf16.mxu0 0
          %2294 = vmatpush1.bf16.xpose.msra.mxu0 0
          %2295 = vmatprep.subr.bf16.mxu0 0
          %2296 = vmatpush1.bf16.xpose.msra.mxu0 0
          %2297 = vmatprep.subr.bf16.mxu0 0
          %2298 = vmatpush1.bf16.xpose.msra.mxu0 %v2281
          %2299 = vmatprep.subr.bf16.mxu0 0
          %2300 = vmatpush2.bf16.xpose.msra.mxu0 0
          %2301 = vmatprep.subr.bf16.mxu0 0
          %2302 = vmatpush2.bf16.xpose.msra.mxu0 0
          %2303 = vmatprep.subr.bf16.mxu0 0
          %2304 = vmatpush2.bf16.xpose.msra.mxu0 0
          %2305 = vmatprep.subr.bf16.mxu0 0
          %2306 = vmatpush2.bf16.xpose.msra.mxu0 0
          %2307 = vmatprep.subr.bf16.mxu0 0
          %2308 = vmatpush2.bf16.xpose.msra.mxu0 0
          %2309 = vmatprep.subr.bf16.mxu0 0
          %2310 = vmatpush2.bf16.xpose.msra.mxu0 0
          %2311 = vmatprep.subr.bf16.mxu0 0
          %2312 = vmatpush2.bf16.xpose.msra.mxu0 0
          %2313 = vmatprep.subr.bf16.mxu0 0
          %2314 = vmatpush2.bf16.xpose.msra.mxu0 0
          %2315 = vmatprep.mubr.bf16.mxu0 0
          %2316 = vmatmul.mubr.bf16.gmra.mxu0 %v2275
          %v2317 = vpop.f32.mrf.mxu0
          %v2318 = vadd.f32 0.0, %v2317
          %v2319 = vpop.f32.mrf.mxu0
          %v2320 = vpop.f32.mrf.mxu0
          %v2321 = vadd.f32 0.0, %v2320
          %v2322 = vpop.f32.mrf.mxu0
          %2323 = vmatprep.mubr.bf16.mxu0 0
          %2324 = vmatmul.mubr.bf16.gmra.mxu0 %v2278
          %v2325 = vpop.f32.mrf.mxu0
          %v2326 = vadd.f32 0.0, %v2325
          %v2327 = vpop.f32.mrf.mxu0
          %v2328 = vpop.f32.mrf.mxu0
          %v2329 = vadd.f32 0.0, %v2328
          %v2330 = vpop.f32.mrf.mxu0
          %2331 = vdwg.mxu0
          %v2333 = vsel %vm477, %v2086, 0
          %v2336 = vsel %vm477, %v2087, 0
          %v2339 = vsel %vm477, %v2097, 0
          %2341 = vmatprep.subr.bf16.mxu0 0
          %2342 = vmatpush1.bf16.xpose.msra.mxu0 0
          %2343 = vmatprep.subr.bf16.mxu0 0
          %2344 = vmatpush1.bf16.xpose.msra.mxu0 0
          %2345 = vmatprep.subr.bf16.mxu0 0
          %2346 = vmatpush1.bf16.xpose.msra.mxu0 0
          %2347 = vmatprep.subr.bf16.mxu0 0
          %2348 = vmatpush1.bf16.xpose.msra.mxu0 0
          %2349 = vmatprep.subr.bf16.mxu0 0
          %2350 = vmatpush1.bf16.xpose.msra.mxu0 0
          %2351 = vmatprep.subr.bf16.mxu0 0
          %2352 = vmatpush1.bf16.xpose.msra.mxu0 0
          %2353 = vmatprep.subr.bf16.mxu0 0
          %2354 = vmatpush1.bf16.xpose.msra.mxu0 0
          %2355 = vmatprep.subr.bf16.mxu0 0
          %2356 = vmatpush1.bf16.xpose.msra.mxu0 %v2339
          %2357 = vmatprep.subr.bf16.mxu0 0
          %2358 = vmatpush2.bf16.xpose.msra.mxu0 0
          %2359 = vmatprep.subr.bf16.mxu0 0
          %2360 = vmatpush2.bf16.xpose.msra.mxu0 0
          %2361 = vmatprep.subr.bf16.mxu0 0
          %2362 = vmatpush2.bf16.xpose.msra.mxu0 0
          %2363 = vmatprep.subr.bf16.mxu0 0
          %2364 = vmatpush2.bf16.xpose.msra.mxu0 0
          %2365 = vmatprep.subr.bf16.mxu0 0
          %2366 = vmatpush2.bf16.xpose.msra.mxu0 0
          %2367 = vmatprep.subr.bf16.mxu0 0
          %2368 = vmatpush2.bf16.xpose.msra.mxu0 0
          %2369 = vmatprep.subr.bf16.mxu0 0
          %2370 = vmatpush2.bf16.xpose.msra.mxu0 0
          %2371 = vmatprep.subr.bf16.mxu0 0
          %2372 = vmatpush2.bf16.xpose.msra.mxu0 0
          %2373 = vmatprep.mubr.bf16.mxu0 0
          %2374 = vmatmul.mubr.bf16.gmra.mxu0 %v2333
          %v2375 = vpop.f32.mrf.mxu0
          %v2376 = vadd.f32 0.0, %v2375
          %v2377 = vpop.f32.mrf.mxu0
          %v2378 = vpop.f32.mrf.mxu0
          %v2379 = vadd.f32 0.0, %v2378
          %v2380 = vpop.f32.mrf.mxu0
          %2381 = vmatprep.mubr.bf16.mxu0 0
          %2382 = vmatmul.mubr.bf16.gmra.mxu0 %v2336
          %v2383 = vpop.f32.mrf.mxu0
          %v2384 = vadd.f32 0.0, %v2383
          %v2385 = vpop.f32.mrf.mxu0
          %v2386 = vpop.f32.mrf.mxu0
          %v2387 = vadd.f32 0.0, %v2386
          %v2388 = vpop.f32.mrf.mxu0
          %2389 = vdwg.mxu0
          %v2391 = vsel %vm477, %v2088, 0
          %v2394 = vsel %vm477, %v2089, 0
          %v2397 = vsel %vm477, %v2098, 0
          %2399 = vmatprep.subr.bf16.mxu0 0
          %2400 = vmatpush1.bf16.xpose.msra.mxu0 0
          %2401 = vmatprep.subr.bf16.mxu0 0
          %2402 = vmatpush1.bf16.xpose.msra.mxu0 0
          %2403 = vmatprep.subr.bf16.mxu0 0
          %2404 = vmatpush1.bf16.xpose.msra.mxu0 0
          %2405 = vmatprep.subr.bf16.mxu0 0
          %2406 = vmatpush1.bf16.xpose.msra.mxu0 0
          %2407 = vmatprep.subr.bf16.mxu0 0
          %2408 = vmatpush1.bf16.xpose.msra.mxu0 0
          %2409 = vmatprep.subr.bf16.mxu0 0
          %2410 = vmatpush1.bf16.xpose.msra.mxu0 0
          %2411 = vmatprep.subr.bf16.mxu0 0
          %2412 = vmatpush1.bf16.xpose.msra.mxu0 0
          %2413 = vmatprep.subr.bf16.mxu0 0
          %2414 = vmatpush1.bf16.xpose.msra.mxu0 %v2397
          %2415 = vmatprep.subr.bf16.mxu0 0
          %2416 = vmatpush2.bf16.xpose.msra.mxu0 0
          %2417 = vmatprep.subr.bf16.mxu0 0
          %2418 = vmatpush2.bf16.xpose.msra.mxu0 0
          %2419 = vmatprep.subr.bf16.mxu0 0
          %2420 = vmatpush2.bf16.xpose.msra.mxu0 0
          %2421 = vmatprep.subr.bf16.mxu0 0
          %2422 = vmatpush2.bf16.xpose.msra.mxu0 0
          %2423 = vmatprep.subr.bf16.mxu0 0
          %2424 = vmatpush2.bf16.xpose.msra.mxu0 0
          %2425 = vmatprep.subr.bf16.mxu0 0
          %2426 = vmatpush2.bf16.xpose.msra.mxu0 0
          %2427 = vmatprep.subr.bf16.mxu0 0
          %2428 = vmatpush2.bf16.xpose.msra.mxu0 0
          %2429 = vmatprep.subr.bf16.mxu0 0
          %2430 = vmatpush2.bf16.xpose.msra.mxu0 0
          %2431 = vmatprep.mubr.bf16.mxu0 0
          %2432 = vmatmul.mubr.bf16.gmra.mxu0 %v2391
          %v2433 = vpop.f32.mrf.mxu0
          %v2434 = vadd.f32 0.0, %v2433
          %v2435 = vpop.f32.mrf.mxu0
          %v2436 = vpop.f32.mrf.mxu0
          %v2437 = vadd.f32 0.0, %v2436
          %v2438 = vpop.f32.mrf.mxu0
          %2439 = vmatprep.mubr.bf16.mxu0 0
          %2440 = vmatmul.mubr.bf16.gmra.mxu0 %v2394
          %v2441 = vpop.f32.mrf.mxu0
          %v2442 = vadd.f32 0.0, %v2441
          %v2443 = vpop.f32.mrf.mxu0
          %v2444 = vpop.f32.mrf.mxu0
          %v2445 = vadd.f32 0.0, %v2444
          %v2446 = vpop.f32.mrf.mxu0
          %2447 = vdwg.mxu0
          %v2449 = vsel %vm477, %v2090, 0
          %v2452 = vsel %vm477, %v2091, 0
          %v2455 = vsel %vm477, %v2099, 0
          %2457 = vmatprep.subr.bf16.mxu0 0
          %2458 = vmatpush1.bf16.xpose.msra.mxu0 0
          %2459 = vmatprep.subr.bf16.mxu0 0
          %2460 = vmatpush1.bf16.xpose.msra.mxu0 0
          %2461 = vmatprep.subr.bf16.mxu0 0
          %2462 = vmatpush1.bf16.xpose.msra.mxu0 0
          %2463 = vmatprep.subr.bf16.mxu0 0
          %2464 = vmatpush1.bf16.xpose.msra.mxu0 0
          %2465 = vmatprep.subr.bf16.mxu0 0
          %2466 = vmatpush1.bf16.xpose.msra.mxu0 0
          %2467 = vmatprep.subr.bf16.mxu0 0
          %2468 = vmatpush1.bf16.xpose.msra.mxu0 0
          %2469 = vmatprep.subr.bf16.mxu0 0
          %2470 = vmatpush1.bf16.xpose.msra.mxu0 0
          %2471 = vmatprep.subr.bf16.mxu0 0
          %2472 = vmatpush1.bf16.xpose.msra.mxu0 %v2455
          %2473 = vmatprep.subr.bf16.mxu0 0
          %2474 = vmatpush2.bf16.xpose.msra.mxu0 0
          %2475 = vmatprep.subr.bf16.mxu0 0
          %2476 = vmatpush2.bf16.xpose.msra.mxu0 0
          %2477 = vmatprep.subr.bf16.mxu0 0
          %2478 = vmatpush2.bf16.xpose.msra.mxu0 0
          %2479 = vmatprep.subr.bf16.mxu0 0
          %2480 = vmatpush2.bf16.xpose.msra.mxu0 0
          %2481 = vmatprep.subr.bf16.mxu0 0
          %2482 = vmatpush2.bf16.xpose.msra.mxu0 0
          %2483 = vmatprep.subr.bf16.mxu0 0
          %2484 = vmatpush2.bf16.xpose.msra.mxu0 0
          %2485 = vmatprep.subr.bf16.mxu0 0
          %2486 = vmatpush2.bf16.xpose.msra.mxu0 0
          %2487 = vmatprep.subr.bf16.mxu0 0
          %2488 = vmatpush2.bf16.xpose.msra.mxu0 0
          %2489 = vmatprep.mubr.bf16.mxu0 0
          %2490 = vmatmul.mubr.bf16.gmra.mxu0 %v2449
          %v2491 = vpop.f32.mrf.mxu0
          %v2492 = vadd.f32 0.0, %v2491
          %v2493 = vpop.f32.mrf.mxu0
          %v2494 = vpop.f32.mrf.mxu0
          %v2495 = vadd.f32 0.0, %v2494
          %v2496 = vpop.f32.mrf.mxu0
          %2497 = vmatprep.mubr.bf16.mxu0 0
          %2498 = vmatmul.mubr.bf16.gmra.mxu0 %v2452
          %v2499 = vpop.f32.mrf.mxu0
          %v2500 = vadd.f32 0.0, %v2499
          %v2501 = vpop.f32.mrf.mxu0
          %v2502 = vpop.f32.mrf.mxu0
          %v2503 = vadd.f32 0.0, %v2502
          %v2504 = vpop.f32.mrf.mxu0
          %2505 = vdwg.mxu0
          %v2506 = vsel %vm884, %v2144, 0.0
          %v2507 = vsel %vm884, %v2202, 0.0
          %v2508 = vadd.f32 %v2506, %v2507
          %v2509 = vsel %vm884, %v2260, 0.0
          %v2510 = vadd.f32 %v2508, %v2509
          %v2511 = vsel %vm884, %v2318, 0.0
          %v2512 = vadd.f32 %v2510, %v2511
          %v2513 = vsel %vm884, %v2376, 0.0
          %v2514 = vadd.f32 %v2512, %v2513
          %v2515 = vsel %vm884, %v2434, 0.0
          %v2516 = vadd.f32 %v2514, %v2515
          %v2517 = vsel %vm884, %v2492, 0.0
          %v2518 = vadd.f32 %v2516, %v2517
          %v2519 = vsel %vm884, %v2147, 0.0
          %v2520 = vsel %vm884, %v2205, 0.0
          %v2521 = vadd.f32 %v2519, %v2520
          %v2522 = vsel %vm884, %v2263, 0.0
          %v2523 = vadd.f32 %v2521, %v2522
          %v2524 = vsel %vm884, %v2321, 0.0
          %v2525 = vadd.f32 %v2523, %v2524
          %v2526 = vsel %vm884, %v2379, 0.0
          %v2527 = vadd.f32 %v2525, %v2526
          %v2528 = vsel %vm884, %v2437, 0.0
          %v2529 = vadd.f32 %v2527, %v2528
          %v2530 = vsel %vm884, %v2495, 0.0
          %v2531 = vadd.f32 %v2529, %v2530
          %v2532 = vsel %vm884, %v2152, 0.0
          %v2533 = vsel %vm884, %v2210, 0.0
          %v2534 = vadd.f32 %v2532, %v2533
          %v2535 = vsel %vm884, %v2268, 0.0
          %v2536 = vadd.f32 %v2534, %v2535
          %v2537 = vsel %vm884, %v2326, 0.0
          %v2538 = vadd.f32 %v2536, %v2537
          %v2539 = vsel %vm884, %v2384, 0.0
          %v2540 = vadd.f32 %v2538, %v2539
          %v2541 = vsel %vm884, %v2442, 0.0
          %v2542 = vadd.f32 %v2540, %v2541
          %v2543 = vsel %vm884, %v2500, 0.0
          %v2544 = vadd.f32 %v2542, %v2543
          %v2545 = vsel %vm924, %v2155, 0.0
          %v2546 = vsel %vm924, %v2213, 0.0
          %v2547 = vadd.f32 %v2545, %v2546
          %v2548 = vsel %vm924, %v2271, 0.0
          %v2549 = vadd.f32 %v2547, %v2548
          %v2550 = vsel %vm924, %v2329, 0.0
          %v2551 = vadd.f32 %v2549, %v2550
          %v2552 = vsel %vm924, %v2387, 0.0
          %v2553 = vadd.f32 %v2551, %v2552
          %v2554 = vsel %vm924, %v2445, 0.0
          %v2555 = vadd.f32 %v2553, %v2554
          %v2556 = vsel %vm924, %v2503, 0.0
          %v2557 = vadd.f32 %v2555, %v2556
          %v2558 = vadd.f32 %v2018, %v2518
          %v2559 = vadd.f32 %v2019, %v2531
          %v2560 = vadd.f32 %v2020, %v2544
          %v2561 = vadd.f32 %v2021, %v2557
          %s2562 = scalar_lea.vmem %s400, 4
          %v2563 = vld [vmem:[%s2562] ss:$2 sm:$0xff]
          %s2564 = scalar_lea.vmem %s400, 20
          %v2565 = vld [vmem:[%s2564] ss:$2 sm:$0xff]
          %s2566 = scalar_lea.vmem %s400, 36
          %v2567 = vld [vmem:[%s2566] ss:$2 sm:$0xff]
          %s2568 = scalar_lea.vmem %s400, 52
          %v2569 = vld [vmem:[%s2568] ss:$2 sm:$0x1f]
          %s2570 = scalar_lea.vmem %s400, 68
          %v2571 = vld [vmem:[%s2570] ss:$2 sm:$0xff]
          %s2572 = scalar_lea.vmem %s400, 84
          %v2573 = vld [vmem:[%s2572] ss:$2 sm:$0xff]
          %s2574 = scalar_lea.vmem %s400, 100
          %v2575 = vld [vmem:[%s2574] ss:$2 sm:$0xff]
          %s2576 = scalar_lea.vmem %s400, 116
          %v2577 = vld [vmem:[%s2576] ss:$2 sm:$0x1f]
          %s2578 = scalar_lea.vmem %s400, 132
          %v2579 = vld [vmem:[%s2578] ss:$2 sm:$0xff]
          %s2580 = scalar_lea.vmem %s400, 148
          %v2581 = vld [vmem:[%s2580] ss:$2 sm:$0xff]
          %s2582 = scalar_lea.vmem %s400, 164
          %v2583 = vld [vmem:[%s2582] ss:$2 sm:$0xff]
          %s2584 = scalar_lea.vmem %s400, 180
          %v2585 = vld [vmem:[%s2584] ss:$2 sm:$0x1f]
          %s2586 = scalar_lea.vmem %s400, 196
          %v2587 = vld [vmem:[%s2586] ss:$2 sm:$0xff]
          %s2588 = scalar_lea.vmem %s400, 212
          %v2589 = vld [vmem:[%s2588] ss:$2 sm:$0xff]
          %s2590 = scalar_lea.vmem %s400, 228
          %v2591 = vld [vmem:[%s2590] ss:$2 sm:$0xff]
          %s2592 = scalar_lea.vmem %s400, 244
          %v2593 = vld [vmem:[%s2592] ss:$2 sm:$0x1f]
          %s2594 = scalar_lea.vmem %s400, 260
          %v2595 = vld [vmem:[%s2594] ss:$2 sm:$0xff]
          %s2596 = scalar_lea.vmem %s400, 276
          %v2597 = vld [vmem:[%s2596] ss:$2 sm:$0xff]
          %s2598 = scalar_lea.vmem %s400, 292
          %v2599 = vld [vmem:[%s2598] ss:$2 sm:$0xff]
          %s2600 = scalar_lea.vmem %s400, 308
          %v2601 = vld [vmem:[%s2600] ss:$2 sm:$0x1f]
          %s2602 = scalar_lea.vmem %s400, 324
          %v2603 = vld [vmem:[%s2602] ss:$2 sm:$0xff]
          %s2604 = scalar_lea.vmem %s400, 340
          %v2605 = vld [vmem:[%s2604] ss:$2 sm:$0xff]
          %s2606 = scalar_lea.vmem %s400, 356
          %v2607 = vld [vmem:[%s2606] ss:$2 sm:$0xff]
          %s2608 = scalar_lea.vmem %s400, 372
          %v2609 = vld [vmem:[%s2608] ss:$2 sm:$0x1f]
          %s2610 = scalar_lea.vmem %s400, 388
          %v2611 = vld [vmem:[%s2610] ss:$2 sm:$0xff]
          %s2612 = scalar_lea.vmem %s400, 404
          %v2613 = vld [vmem:[%s2612] ss:$2 sm:$0xff]
          %s2614 = scalar_lea.vmem %s400, 420
          %v2615 = vld [vmem:[%s2614] ss:$2 sm:$0xff]
          %s2616 = scalar_lea.vmem %s400, 436
          %v2617 = vld [vmem:[%s2616] ss:$2 sm:$0x1f]
          %v2618 = vpack.c.bf16 %v2565, %v2563
          %v2619 = vpack.c.bf16 %v2569, %v2567
          %v2620 = vpack.c.bf16 %v2573, %v2571
          %v2621 = vpack.c.bf16 %v2577, %v2575
          %v2622 = vpack.c.bf16 %v2581, %v2579
          %v2623 = vpack.c.bf16 %v2585, %v2583
          %v2624 = vpack.c.bf16 %v2589, %v2587
          %v2625 = vpack.c.bf16 %v2593, %v2591
          %v2626 = vpack.c.bf16 %v2597, %v2595
          %v2627 = vpack.c.bf16 %v2601, %v2599
          %v2628 = vpack.c.bf16 %v2605, %v2603
          %v2629 = vpack.c.bf16 %v2609, %v2607
          %v2630 = vpack.c.bf16 %v2613, %v2611
          %v2631 = vpack.c.bf16 %v2617, %v2615
          %s2632 = scalar_lea.vmem %s1, 16
          %v2633 = vld [vmem:[%s2632] sm:$0xf]
          %v2634 = vld [vmem:[%s2632 + $0x1c] sm:$0xf]
          %v2635 = vld [vmem:[%s2632 + $0x38] sm:$0xf]
          %v2636 = vld [vmem:[%s2632 + $0x54] sm:$0xf]
          %v2637 = vld [vmem:[%s2632 + $0x70] sm:$0xf]
          %v2638 = vld [vmem:[%s2632 + $0x8c] sm:$0xf]
          %v2639 = vld [vmem:[%s2632 + $0xa8] sm:$0xf]
          %v2641 = vsel %vm477, %v2618, 0
          %v2644 = vsel %vm477, %v2619, 0
          %v2647 = vsel %vm477, %v2633, 0
          %2649 = vmatprep.subr.bf16.mxu0 0
          %2650 = vmatpush1.bf16.xpose.msra.mxu0 0
          %2651 = vmatprep.subr.bf16.mxu0 0
          %2652 = vmatpush1.bf16.xpose.msra.mxu0 0
          %2653 = vmatprep.subr.bf16.mxu0 0
          %2654 = vmatpush1.bf16.xpose.msra.mxu0 0
          %2655 = vmatprep.subr.bf16.mxu0 0
          %2656 = vmatpush1.bf16.xpose.msra.mxu0 0
          %2657 = vmatprep.subr.bf16.mxu0 0
          %2658 = vmatpush1.bf16.xpose.msra.mxu0 0
          %2659 = vmatprep.subr.bf16.mxu0 0
          %2660 = vmatpush1.bf16.xpose.msra.mxu0 0
          %2661 = vmatprep.subr.bf16.mxu0 0
          %2662 = vmatpush1.bf16.xpose.msra.mxu0 0
          %2663 = vmatprep.subr.bf16.mxu0 0
          %2664 = vmatpush1.bf16.xpose.msra.mxu0 %v2647
          %2665 = vmatprep.subr.bf16.mxu0 0
          %2666 = vmatpush2.bf16.xpose.msra.mxu0 0
          %2667 = vmatprep.subr.bf16.mxu0 0
          %2668 = vmatpush2.bf16.xpose.msra.mxu0 0
          %2669 = vmatprep.subr.bf16.mxu0 0
          %2670 = vmatpush2.bf16.xpose.msra.mxu0 0
          %2671 = vmatprep.subr.bf16.mxu0 0
          %2672 = vmatpush2.bf16.xpose.msra.mxu0 0
          %2673 = vmatprep.subr.bf16.mxu0 0
          %2674 = vmatpush2.bf16.xpose.msra.mxu0 0
          %2675 = vmatprep.subr.bf16.mxu0 0
          %2676 = vmatpush2.bf16.xpose.msra.mxu0 0
          %2677 = vmatprep.subr.bf16.mxu0 0
          %2678 = vmatpush2.bf16.xpose.msra.mxu0 0
          %2679 = vmatprep.subr.bf16.mxu0 0
          %2680 = vmatpush2.bf16.xpose.msra.mxu0 0
          %2681 = vmatprep.mubr.bf16.mxu0 0
          %2682 = vmatmul.mubr.bf16.gmra.mxu0 %v2641
          %v2683 = vpop.f32.mrf.mxu0
          %v2684 = vadd.f32 0.0, %v2683
          %v2685 = vpop.f32.mrf.mxu0
          %v2686 = vpop.f32.mrf.mxu0
          %v2687 = vadd.f32 0.0, %v2686
          %v2688 = vpop.f32.mrf.mxu0
          %2689 = vmatprep.mubr.bf16.mxu0 0
          %2690 = vmatmul.mubr.bf16.gmra.mxu0 %v2644
          %v2691 = vpop.f32.mrf.mxu0
          %v2692 = vadd.f32 0.0, %v2691
          %v2693 = vpop.f32.mrf.mxu0
          %v2694 = vpop.f32.mrf.mxu0
          %v2695 = vadd.f32 0.0, %v2694
          %v2696 = vpop.f32.mrf.mxu0
          %2697 = vdwg.mxu0
          %v2699 = vsel %vm477, %v2620, 0
          %v2702 = vsel %vm477, %v2621, 0
          %v2705 = vsel %vm477, %v2634, 0
          %2707 = vmatprep.subr.bf16.mxu0 0
          %2708 = vmatpush1.bf16.xpose.msra.mxu0 0
          %2709 = vmatprep.subr.bf16.mxu0 0
          %2710 = vmatpush1.bf16.xpose.msra.mxu0 0
          %2711 = vmatprep.subr.bf16.mxu0 0
          %2712 = vmatpush1.bf16.xpose.msra.mxu0 0
          %2713 = vmatprep.subr.bf16.mxu0 0
          %2714 = vmatpush1.bf16.xpose.msra.mxu0 0
          %2715 = vmatprep.subr.bf16.mxu0 0
          %2716 = vmatpush1.bf16.xpose.msra.mxu0 0
          %2717 = vmatprep.subr.bf16.mxu0 0
          %2718 = vmatpush1.bf16.xpose.msra.mxu0 0
          %2719 = vmatprep.subr.bf16.mxu0 0
          %2720 = vmatpush1.bf16.xpose.msra.mxu0 0
          %2721 = vmatprep.subr.bf16.mxu0 0
          %2722 = vmatpush1.bf16.xpose.msra.mxu0 %v2705
          %2723 = vmatprep.subr.bf16.mxu0 0
          %2724 = vmatpush2.bf16.xpose.msra.mxu0 0
          %2725 = vmatprep.subr.bf16.mxu0 0
          %2726 = vmatpush2.bf16.xpose.msra.mxu0 0
          %2727 = vmatprep.subr.bf16.mxu0 0
          %2728 = vmatpush2.bf16.xpose.msra.mxu0 0
          %2729 = vmatprep.subr.bf16.mxu0 0
          %2730 = vmatpush2.bf16.xpose.msra.mxu0 0
          %2731 = vmatprep.subr.bf16.mxu0 0
          %2732 = vmatpush2.bf16.xpose.msra.mxu0 0
          %2733 = vmatprep.subr.bf16.mxu0 0
          %2734 = vmatpush2.bf16.xpose.msra.mxu0 0
          %2735 = vmatprep.subr.bf16.mxu0 0
          %2736 = vmatpush2.bf16.xpose.msra.mxu0 0
          %2737 = vmatprep.subr.bf16.mxu0 0
          %2738 = vmatpush2.bf16.xpose.msra.mxu0 0
          %2739 = vmatprep.mubr.bf16.mxu0 0
          %2740 = vmatmul.mubr.bf16.gmra.mxu0 %v2699
          %v2741 = vpop.f32.mrf.mxu0
          %v2742 = vadd.f32 0.0, %v2741
          %v2743 = vpop.f32.mrf.mxu0
          %v2744 = vpop.f32.mrf.mxu0
          %v2745 = vadd.f32 0.0, %v2744
          %v2746 = vpop.f32.mrf.mxu0
          %2747 = vmatprep.mubr.bf16.mxu0 0
          %2748 = vmatmul.mubr.bf16.gmra.mxu0 %v2702
          %v2749 = vpop.f32.mrf.mxu0
          %v2750 = vadd.f32 0.0, %v2749
          %v2751 = vpop.f32.mrf.mxu0
          %v2752 = vpop.f32.mrf.mxu0
          %v2753 = vadd.f32 0.0, %v2752
          %v2754 = vpop.f32.mrf.mxu0
          %2755 = vdwg.mxu0
          %v2757 = vsel %vm477, %v2622, 0
          %v2760 = vsel %vm477, %v2623, 0
          %v2763 = vsel %vm477, %v2635, 0
          %2765 = vmatprep.subr.bf16.mxu0 0
          %2766 = vmatpush1.bf16.xpose.msra.mxu0 0
          %2767 = vmatprep.subr.bf16.mxu0 0
          %2768 = vmatpush1.bf16.xpose.msra.mxu0 0
          %2769 = vmatprep.subr.bf16.mxu0 0
          %2770 = vmatpush1.bf16.xpose.msra.mxu0 0
          %2771 = vmatprep.subr.bf16.mxu0 0
          %2772 = vmatpush1.bf16.xpose.msra.mxu0 0
          %2773 = vmatprep.subr.bf16.mxu0 0
          %2774 = vmatpush1.bf16.xpose.msra.mxu0 0
          %2775 = vmatprep.subr.bf16.mxu0 0
          %2776 = vmatpush1.bf16.xpose.msra.mxu0 0
          %2777 = vmatprep.subr.bf16.mxu0 0
          %2778 = vmatpush1.bf16.xpose.msra.mxu0 0
          %2779 = vmatprep.subr.bf16.mxu0 0
          %2780 = vmatpush1.bf16.xpose.msra.mxu0 %v2763
          %2781 = vmatprep.subr.bf16.mxu0 0
          %2782 = vmatpush2.bf16.xpose.msra.mxu0 0
          %2783 = vmatprep.subr.bf16.mxu0 0
          %2784 = vmatpush2.bf16.xpose.msra.mxu0 0
          %2785 = vmatprep.subr.bf16.mxu0 0
          %2786 = vmatpush2.bf16.xpose.msra.mxu0 0
          %2787 = vmatprep.subr.bf16.mxu0 0
          %2788 = vmatpush2.bf16.xpose.msra.mxu0 0
          %2789 = vmatprep.subr.bf16.mxu0 0
          %2790 = vmatpush2.bf16.xpose.msra.mxu0 0
          %2791 = vmatprep.subr.bf16.mxu0 0
          %2792 = vmatpush2.bf16.xpose.msra.mxu0 0
          %2793 = vmatprep.subr.bf16.mxu0 0
          %2794 = vmatpush2.bf16.xpose.msra.mxu0 0
          %2795 = vmatprep.subr.bf16.mxu0 0
          %2796 = vmatpush2.bf16.xpose.msra.mxu0 0
          %2797 = vmatprep.mubr.bf16.mxu0 0
          %2798 = vmatmul.mubr.bf16.gmra.mxu0 %v2757
          %v2799 = vpop.f32.mrf.mxu0
          %v2800 = vadd.f32 0.0, %v2799
          %v2801 = vpop.f32.mrf.mxu0
          %v2802 = vpop.f32.mrf.mxu0
          %v2803 = vadd.f32 0.0, %v2802
          %v2804 = vpop.f32.mrf.mxu0
          %2805 = vmatprep.mubr.bf16.mxu0 0
          %2806 = vmatmul.mubr.bf16.gmra.mxu0 %v2760
          %v2807 = vpop.f32.mrf.mxu0
          %v2808 = vadd.f32 0.0, %v2807
          %v2809 = vpop.f32.mrf.mxu0
          %v2810 = vpop.f32.mrf.mxu0
          %v2811 = vadd.f32 0.0, %v2810
          %v2812 = vpop.f32.mrf.mxu0
          %2813 = vdwg.mxu0
          %v2815 = vsel %vm477, %v2624, 0
          %v2818 = vsel %vm477, %v2625, 0
          %v2821 = vsel %vm477, %v2636, 0
          %2823 = vmatprep.subr.bf16.mxu0 0
          %2824 = vmatpush1.bf16.xpose.msra.mxu0 0
          %2825 = vmatprep.subr.bf16.mxu0 0
          %2826 = vmatpush1.bf16.xpose.msra.mxu0 0
          %2827 = vmatprep.subr.bf16.mxu0 0
          %2828 = vmatpush1.bf16.xpose.msra.mxu0 0
          %2829 = vmatprep.subr.bf16.mxu0 0
          %2830 = vmatpush1.bf16.xpose.msra.mxu0 0
          %2831 = vmatprep.subr.bf16.mxu0 0
          %2832 = vmatpush1.bf16.xpose.msra.mxu0 0
          %2833 = vmatprep.subr.bf16.mxu0 0
          %2834 = vmatpush1.bf16.xpose.msra.mxu0 0
          %2835 = vmatprep.subr.bf16.mxu0 0
          %2836 = vmatpush1.bf16.xpose.msra.mxu0 0
          %2837 = vmatprep.subr.bf16.mxu0 0
          %2838 = vmatpush1.bf16.xpose.msra.mxu0 %v2821
          %2839 = vmatprep.subr.bf16.mxu0 0
          %2840 = vmatpush2.bf16.xpose.msra.mxu0 0
          %2841 = vmatprep.subr.bf16.mxu0 0
          %2842 = vmatpush2.bf16.xpose.msra.mxu0 0
          %2843 = vmatprep.subr.bf16.mxu0 0
          %2844 = vmatpush2.bf16.xpose.msra.mxu0 0
          %2845 = vmatprep.subr.bf16.mxu0 0
          %2846 = vmatpush2.bf16.xpose.msra.mxu0 0
          %2847 = vmatprep.subr.bf16.mxu0 0
          %2848 = vmatpush2.bf16.xpose.msra.mxu0 0
          %2849 = vmatprep.subr.bf16.mxu0 0
          %2850 = vmatpush2.bf16.xpose.msra.mxu0 0
          %2851 = vmatprep.subr.bf16.mxu0 0
          %2852 = vmatpush2.bf16.xpose.msra.mxu0 0
          %2853 = vmatprep.subr.bf16.mxu0 0
          %2854 = vmatpush2.bf16.xpose.msra.mxu0 0
          %2855 = vmatprep.mubr.bf16.mxu0 0
          %2856 = vmatmul.mubr.bf16.gmra.mxu0 %v2815
          %v2857 = vpop.f32.mrf.mxu0
          %v2858 = vadd.f32 0.0, %v2857
          %v2859 = vpop.f32.mrf.mxu0
          %v2860 = vpop.f32.mrf.mxu0
          %v2861 = vadd.f32 0.0, %v2860
          %v2862 = vpop.f32.mrf.mxu0
          %2863 = vmatprep.mubr.bf16.mxu0 0
          %2864 = vmatmul.mubr.bf16.gmra.mxu0 %v2818
          %v2865 = vpop.f32.mrf.mxu0
          %v2866 = vadd.f32 0.0, %v2865
          %v2867 = vpop.f32.mrf.mxu0
          %v2868 = vpop.f32.mrf.mxu0
          %v2869 = vadd.f32 0.0, %v2868
          %v2870 = vpop.f32.mrf.mxu0
          %2871 = vdwg.mxu0
          %v2873 = vsel %vm477, %v2626, 0
          %v2876 = vsel %vm477, %v2627, 0
          %v2879 = vsel %vm477, %v2637, 0
          %2881 = vmatprep.subr.bf16.mxu0 0
          %2882 = vmatpush1.bf16.xpose.msra.mxu0 0
          %2883 = vmatprep.subr.bf16.mxu0 0
          %2884 = vmatpush1.bf16.xpose.msra.mxu0 0
          %2885 = vmatprep.subr.bf16.mxu0 0
          %2886 = vmatpush1.bf16.xpose.msra.mxu0 0
          %2887 = vmatprep.subr.bf16.mxu0 0
          %2888 = vmatpush1.bf16.xpose.msra.mxu0 0
          %2889 = vmatprep.subr.bf16.mxu0 0
          %2890 = vmatpush1.bf16.xpose.msra.mxu0 0
          %2891 = vmatprep.subr.bf16.mxu0 0
          %2892 = vmatpush1.bf16.xpose.msra.mxu0 0
          %2893 = vmatprep.subr.bf16.mxu0 0
          %2894 = vmatpush1.bf16.xpose.msra.mxu0 0
          %2895 = vmatprep.subr.bf16.mxu0 0
          %2896 = vmatpush1.bf16.xpose.msra.mxu0 %v2879
          %2897 = vmatprep.subr.bf16.mxu0 0
          %2898 = vmatpush2.bf16.xpose.msra.mxu0 0
          %2899 = vmatprep.subr.bf16.mxu0 0
          %2900 = vmatpush2.bf16.xpose.msra.mxu0 0
          %2901 = vmatprep.subr.bf16.mxu0 0
          %2902 = vmatpush2.bf16.xpose.msra.mxu0 0
          %2903 = vmatprep.subr.bf16.mxu0 0
          %2904 = vmatpush2.bf16.xpose.msra.mxu0 0
          %2905 = vmatprep.subr.bf16.mxu0 0
          %2906 = vmatpush2.bf16.xpose.msra.mxu0 0
          %2907 = vmatprep.subr.bf16.mxu0 0
          %2908 = vmatpush2.bf16.xpose.msra.mxu0 0
          %2909 = vmatprep.subr.bf16.mxu0 0
          %2910 = vmatpush2.bf16.xpose.msra.mxu0 0
          %2911 = vmatprep.subr.bf16.mxu0 0
          %2912 = vmatpush2.bf16.xpose.msra.mxu0 0
          %2913 = vmatprep.mubr.bf16.mxu0 0
          %2914 = vmatmul.mubr.bf16.gmra.mxu0 %v2873
          %v2915 = vpop.f32.mrf.mxu0
          %v2916 = vadd.f32 0.0, %v2915
          %v2917 = vpop.f32.mrf.mxu0
          %v2918 = vpop.f32.mrf.mxu0
          %v2919 = vadd.f32 0.0, %v2918
          %v2920 = vpop.f32.mrf.mxu0
          %2921 = vmatprep.mubr.bf16.mxu0 0
          %2922 = vmatmul.mubr.bf16.gmra.mxu0 %v2876
          %v2923 = vpop.f32.mrf.mxu0
          %v2924 = vadd.f32 0.0, %v2923
          %v2925 = vpop.f32.mrf.mxu0
          %v2926 = vpop.f32.mrf.mxu0
          %v2927 = vadd.f32 0.0, %v2926
          %v2928 = vpop.f32.mrf.mxu0
          %2929 = vdwg.mxu0
          %v2931 = vsel %vm477, %v2628, 0
          %v2934 = vsel %vm477, %v2629, 0
          %v2937 = vsel %vm477, %v2638, 0
          %2939 = vmatprep.subr.bf16.mxu0 0
          %2940 = vmatpush1.bf16.xpose.msra.mxu0 0
          %2941 = vmatprep.subr.bf16.mxu0 0
          %2942 = vmatpush1.bf16.xpose.msra.mxu0 0
          %2943 = vmatprep.subr.bf16.mxu0 0
          %2944 = vmatpush1.bf16.xpose.msra.mxu0 0
          %2945 = vmatprep.subr.bf16.mxu0 0
          %2946 = vmatpush1.bf16.xpose.msra.mxu0 0
          %2947 = vmatprep.subr.bf16.mxu0 0
          %2948 = vmatpush1.bf16.xpose.msra.mxu0 0
          %2949 = vmatprep.subr.bf16.mxu0 0
          %2950 = vmatpush1.bf16.xpose.msra.mxu0 0
          %2951 = vmatprep.subr.bf16.mxu0 0
          %2952 = vmatpush1.bf16.xpose.msra.mxu0 0
          %2953 = vmatprep.subr.bf16.mxu0 0
          %2954 = vmatpush1.bf16.xpose.msra.mxu0 %v2937
          %2955 = vmatprep.subr.bf16.mxu0 0
          %2956 = vmatpush2.bf16.xpose.msra.mxu0 0
          %2957 = vmatprep.subr.bf16.mxu0 0
          %2958 = vmatpush2.bf16.xpose.msra.mxu0 0
          %2959 = vmatprep.subr.bf16.mxu0 0
          %2960 = vmatpush2.bf16.xpose.msra.mxu0 0
          %2961 = vmatprep.subr.bf16.mxu0 0
          %2962 = vmatpush2.bf16.xpose.msra.mxu0 0
          %2963 = vmatprep.subr.bf16.mxu0 0
          %2964 = vmatpush2.bf16.xpose.msra.mxu0 0
          %2965 = vmatprep.subr.bf16.mxu0 0
          %2966 = vmatpush2.bf16.xpose.msra.mxu0 0
          %2967 = vmatprep.subr.bf16.mxu0 0
          %2968 = vmatpush2.bf16.xpose.msra.mxu0 0
          %2969 = vmatprep.subr.bf16.mxu0 0
          %2970 = vmatpush2.bf16.xpose.msra.mxu0 0
          %2971 = vmatprep.mubr.bf16.mxu0 0
          %2972 = vmatmul.mubr.bf16.gmra.mxu0 %v2931
          %v2973 = vpop.f32.mrf.mxu0
          %v2974 = vadd.f32 0.0, %v2973
          %v2975 = vpop.f32.mrf.mxu0
          %v2976 = vpop.f32.mrf.mxu0
          %v2977 = vadd.f32 0.0, %v2976
          %v2978 = vpop.f32.mrf.mxu0
          %2979 = vmatprep.mubr.bf16.mxu0 0
          %2980 = vmatmul.mubr.bf16.gmra.mxu0 %v2934
          %v2981 = vpop.f32.mrf.mxu0
          %v2982 = vadd.f32 0.0, %v2981
          %v2983 = vpop.f32.mrf.mxu0
          %v2984 = vpop.f32.mrf.mxu0
          %v2985 = vadd.f32 0.0, %v2984
          %v2986 = vpop.f32.mrf.mxu0
          %2987 = vdwg.mxu0
          %v2989 = vsel %vm477, %v2630, 0
          %v2992 = vsel %vm477, %v2631, 0
          %v2995 = vsel %vm477, %v2639, 0
          %2997 = vmatprep.subr.bf16.mxu0 0
          %2998 = vmatpush1.bf16.xpose.msra.mxu0 0
          %2999 = vmatprep.subr.bf16.mxu0 0
          %3000 = vmatpush1.bf16.xpose.msra.mxu0 0
          %3001 = vmatprep.subr.bf16.mxu0 0
          %3002 = vmatpush1.bf16.xpose.msra.mxu0 0
          %3003 = vmatprep.subr.bf16.mxu0 0
          %3004 = vmatpush1.bf16.xpose.msra.mxu0 0
          %3005 = vmatprep.subr.bf16.mxu0 0
          %3006 = vmatpush1.bf16.xpose.msra.mxu0 0
          %3007 = vmatprep.subr.bf16.mxu0 0
          %3008 = vmatpush1.bf16.xpose.msra.mxu0 0
          %3009 = vmatprep.subr.bf16.mxu0 0
          %3010 = vmatpush1.bf16.xpose.msra.mxu0 0
          %3011 = vmatprep.subr.bf16.mxu0 0
          %3012 = vmatpush1.bf16.xpose.msra.mxu0 %v2995
          %3013 = vmatprep.subr.bf16.mxu0 0
          %3014 = vmatpush2.bf16.xpose.msra.mxu0 0
          %3015 = vmatprep.subr.bf16.mxu0 0
          %3016 = vmatpush2.bf16.xpose.msra.mxu0 0
          %3017 = vmatprep.subr.bf16.mxu0 0
          %3018 = vmatpush2.bf16.xpose.msra.mxu0 0
          %3019 = vmatprep.subr.bf16.mxu0 0
          %3020 = vmatpush2.bf16.xpose.msra.mxu0 0
          %3021 = vmatprep.subr.bf16.mxu0 0
          %3022 = vmatpush2.bf16.xpose.msra.mxu0 0
          %3023 = vmatprep.subr.bf16.mxu0 0
          %3024 = vmatpush2.bf16.xpose.msra.mxu0 0
          %3025 = vmatprep.subr.bf16.mxu0 0
          %3026 = vmatpush2.bf16.xpose.msra.mxu0 0
          %3027 = vmatprep.subr.bf16.mxu0 0
          %3028 = vmatpush2.bf16.xpose.msra.mxu0 0
          %3029 = vmatprep.mubr.bf16.mxu0 0
          %3030 = vmatmul.mubr.bf16.gmra.mxu0 %v2989
          %v3031 = vpop.f32.mrf.mxu0
          %v3032 = vadd.f32 0.0, %v3031
          %v3033 = vpop.f32.mrf.mxu0
          %v3034 = vpop.f32.mrf.mxu0
          %v3035 = vadd.f32 0.0, %v3034
          %v3036 = vpop.f32.mrf.mxu0
          %3037 = vmatprep.mubr.bf16.mxu0 0
          %3038 = vmatmul.mubr.bf16.gmra.mxu0 %v2992
          %v3039 = vpop.f32.mrf.mxu0
          %v3040 = vadd.f32 0.0, %v3039
          %v3041 = vpop.f32.mrf.mxu0
          %v3042 = vpop.f32.mrf.mxu0
          %v3043 = vadd.f32 0.0, %v3042
          %v3044 = vpop.f32.mrf.mxu0
          %3045 = vdwg.mxu0
          %v3046 = vsel %vm884, %v2684, 0.0
          %v3047 = vsel %vm884, %v2742, 0.0
          %v3048 = vadd.f32 %v3046, %v3047
          %v3049 = vsel %vm884, %v2800, 0.0
          %v3050 = vadd.f32 %v3048, %v3049
          %v3051 = vsel %vm884, %v2858, 0.0
          %v3052 = vadd.f32 %v3050, %v3051
          %v3053 = vsel %vm884, %v2916, 0.0
          %v3054 = vadd.f32 %v3052, %v3053
          %v3055 = vsel %vm884, %v2974, 0.0
          %v3056 = vadd.f32 %v3054, %v3055
          %v3057 = vsel %vm884, %v3032, 0.0
          %v3058 = vadd.f32 %v3056, %v3057
          %v3059 = vsel %vm884, %v2687, 0.0
          %v3060 = vsel %vm884, %v2745, 0.0
          %v3061 = vadd.f32 %v3059, %v3060
          %v3062 = vsel %vm884, %v2803, 0.0
          %v3063 = vadd.f32 %v3061, %v3062
          %v3064 = vsel %vm884, %v2861, 0.0
          %v3065 = vadd.f32 %v3063, %v3064
          %v3066 = vsel %vm884, %v2919, 0.0
          %v3067 = vadd.f32 %v3065, %v3066
          %v3068 = vsel %vm884, %v2977, 0.0
          %v3069 = vadd.f32 %v3067, %v3068
          %v3070 = vsel %vm884, %v3035, 0.0
          %v3071 = vadd.f32 %v3069, %v3070
          %v3072 = vsel %vm884, %v2692, 0.0
          %v3073 = vsel %vm884, %v2750, 0.0
          %v3074 = vadd.f32 %v3072, %v3073
          %v3075 = vsel %vm884, %v2808, 0.0
          %v3076 = vadd.f32 %v3074, %v3075
          %v3077 = vsel %vm884, %v2866, 0.0
          %v3078 = vadd.f32 %v3076, %v3077
          %v3079 = vsel %vm884, %v2924, 0.0
          %v3080 = vadd.f32 %v3078, %v3079
          %v3081 = vsel %vm884, %v2982, 0.0
          %v3082 = vadd.f32 %v3080, %v3081
          %v3083 = vsel %vm884, %v3040, 0.0
          %v3084 = vadd.f32 %v3082, %v3083
          %v3085 = vsel %vm924, %v2695, 0.0
          %v3086 = vsel %vm924, %v2753, 0.0
          %v3087 = vadd.f32 %v3085, %v3086
          %v3088 = vsel %vm924, %v2811, 0.0
          %v3089 = vadd.f32 %v3087, %v3088
          %v3090 = vsel %vm924, %v2869, 0.0
          %v3091 = vadd.f32 %v3089, %v3090
          %v3092 = vsel %vm924, %v2927, 0.0
          %v3093 = vadd.f32 %v3091, %v3092
          %v3094 = vsel %vm924, %v2985, 0.0
          %v3095 = vadd.f32 %v3093, %v3094
          %v3096 = vsel %vm924, %v3043, 0.0
          %v3097 = vadd.f32 %v3095, %v3096
          %v3098 = vadd.f32 %v2558, %v3058
          %v3099 = vadd.f32 %v2559, %v3071
          %v3100 = vadd.f32 %v2560, %v3084
          %v3101 = vadd.f32 %v2561, %v3097
          %s3102 = scalar_lea.vmem %s400, 5
          %v3103 = vld [vmem:[%s3102] ss:$2 sm:$0xff]
          %s3104 = scalar_lea.vmem %s400, 21
          %v3105 = vld [vmem:[%s3104] ss:$2 sm:$0xff]
          %s3106 = scalar_lea.vmem %s400, 37
          %v3107 = vld [vmem:[%s3106] ss:$2 sm:$0xff]
          %s3108 = scalar_lea.vmem %s400, 53
          %v3109 = vld [vmem:[%s3108] ss:$2 sm:$0x1f]
          %s3110 = scalar_lea.vmem %s400, 69
          %v3111 = vld [vmem:[%s3110] ss:$2 sm:$0xff]
          %s3112 = scalar_lea.vmem %s400, 85
          %v3113 = vld [vmem:[%s3112] ss:$2 sm:$0xff]
          %s3114 = scalar_lea.vmem %s400, 101
          %v3115 = vld [vmem:[%s3114] ss:$2 sm:$0xff]
          %s3116 = scalar_lea.vmem %s400, 117
          %v3117 = vld [vmem:[%s3116] ss:$2 sm:$0x1f]
          %s3118 = scalar_lea.vmem %s400, 133
          %v3119 = vld [vmem:[%s3118] ss:$2 sm:$0xff]
          %s3120 = scalar_lea.vmem %s400, 149
          %v3121 = vld [vmem:[%s3120] ss:$2 sm:$0xff]
          %s3122 = scalar_lea.vmem %s400, 165
          %v3123 = vld [vmem:[%s3122] ss:$2 sm:$0xff]
          %s3124 = scalar_lea.vmem %s400, 181
          %v3125 = vld [vmem:[%s3124] ss:$2 sm:$0x1f]
          %s3126 = scalar_lea.vmem %s400, 197
          %v3127 = vld [vmem:[%s3126] ss:$2 sm:$0xff]
          %s3128 = scalar_lea.vmem %s400, 213
          %v3129 = vld [vmem:[%s3128] ss:$2 sm:$0xff]
          %s3130 = scalar_lea.vmem %s400, 229
          %v3131 = vld [vmem:[%s3130] ss:$2 sm:$0xff]
          %s3132 = scalar_lea.vmem %s400, 245
          %v3133 = vld [vmem:[%s3132] ss:$2 sm:$0x1f]
          %s3134 = scalar_lea.vmem %s400, 261
          %v3135 = vld [vmem:[%s3134] ss:$2 sm:$0xff]
          %s3136 = scalar_lea.vmem %s400, 277
          %v3137 = vld [vmem:[%s3136] ss:$2 sm:$0xff]
          %s3138 = scalar_lea.vmem %s400, 293
          %v3139 = vld [vmem:[%s3138] ss:$2 sm:$0xff]
          %s3140 = scalar_lea.vmem %s400, 309
          %v3141 = vld [vmem:[%s3140] ss:$2 sm:$0x1f]
          %s3142 = scalar_lea.vmem %s400, 325
          %v3143 = vld [vmem:[%s3142] ss:$2 sm:$0xff]
          %s3144 = scalar_lea.vmem %s400, 341
          %v3145 = vld [vmem:[%s3144] ss:$2 sm:$0xff]
          %s3146 = scalar_lea.vmem %s400, 357
          %v3147 = vld [vmem:[%s3146] ss:$2 sm:$0xff]
          %s3148 = scalar_lea.vmem %s400, 373
          %v3149 = vld [vmem:[%s3148] ss:$2 sm:$0x1f]
          %s3150 = scalar_lea.vmem %s400, 389
          %v3151 = vld [vmem:[%s3150] ss:$2 sm:$0xff]
          %s3152 = scalar_lea.vmem %s400, 405
          %v3153 = vld [vmem:[%s3152] ss:$2 sm:$0xff]
          %s3154 = scalar_lea.vmem %s400, 421
          %v3155 = vld [vmem:[%s3154] ss:$2 sm:$0xff]
          %s3156 = scalar_lea.vmem %s400, 437
          %v3157 = vld [vmem:[%s3156] ss:$2 sm:$0x1f]
          %v3158 = vpack.c.bf16 %v3105, %v3103
          %v3159 = vpack.c.bf16 %v3109, %v3107
          %v3160 = vpack.c.bf16 %v3113, %v3111
          %v3161 = vpack.c.bf16 %v3117, %v3115
          %v3162 = vpack.c.bf16 %v3121, %v3119
          %v3163 = vpack.c.bf16 %v3125, %v3123
          %v3164 = vpack.c.bf16 %v3129, %v3127
          %v3165 = vpack.c.bf16 %v3133, %v3131
          %v3166 = vpack.c.bf16 %v3137, %v3135
          %v3167 = vpack.c.bf16 %v3141, %v3139
          %v3168 = vpack.c.bf16 %v3145, %v3143
          %v3169 = vpack.c.bf16 %v3149, %v3147
          %v3170 = vpack.c.bf16 %v3153, %v3151
          %v3171 = vpack.c.bf16 %v3157, %v3155
          %s3172 = scalar_lea.vmem %s1, 20
          %v3173 = vld [vmem:[%s3172] sm:$0xf]
          %v3174 = vld [vmem:[%s3172 + $0x1c] sm:$0xf]
          %v3175 = vld [vmem:[%s3172 + $0x38] sm:$0xf]
          %v3176 = vld [vmem:[%s3172 + $0x54] sm:$0xf]
          %v3177 = vld [vmem:[%s3172 + $0x70] sm:$0xf]
          %v3178 = vld [vmem:[%s3172 + $0x8c] sm:$0xf]
          %v3179 = vld [vmem:[%s3172 + $0xa8] sm:$0xf]
          %v3181 = vsel %vm477, %v3158, 0
          %v3184 = vsel %vm477, %v3159, 0
          %v3187 = vsel %vm477, %v3173, 0
          %3189 = vmatprep.subr.bf16.mxu0 0
          %3190 = vmatpush1.bf16.xpose.msra.mxu0 0
          %3191 = vmatprep.subr.bf16.mxu0 0
          %3192 = vmatpush1.bf16.xpose.msra.mxu0 0
          %3193 = vmatprep.subr.bf16.mxu0 0
          %3194 = vmatpush1.bf16.xpose.msra.mxu0 0
          %3195 = vmatprep.subr.bf16.mxu0 0
          %3196 = vmatpush1.bf16.xpose.msra.mxu0 0
          %3197 = vmatprep.subr.bf16.mxu0 0
          %3198 = vmatpush1.bf16.xpose.msra.mxu0 0
          %3199 = vmatprep.subr.bf16.mxu0 0
          %3200 = vmatpush1.bf16.xpose.msra.mxu0 0
          %3201 = vmatprep.subr.bf16.mxu0 0
          %3202 = vmatpush1.bf16.xpose.msra.mxu0 0
          %3203 = vmatprep.subr.bf16.mxu0 0
          %3204 = vmatpush1.bf16.xpose.msra.mxu0 %v3187
          %3205 = vmatprep.subr.bf16.mxu0 0
          %3206 = vmatpush2.bf16.xpose.msra.mxu0 0
          %3207 = vmatprep.subr.bf16.mxu0 0
          %3208 = vmatpush2.bf16.xpose.msra.mxu0 0
          %3209 = vmatprep.subr.bf16.mxu0 0
          %3210 = vmatpush2.bf16.xpose.msra.mxu0 0
          %3211 = vmatprep.subr.bf16.mxu0 0
          %3212 = vmatpush2.bf16.xpose.msra.mxu0 0
          %3213 = vmatprep.subr.bf16.mxu0 0
          %3214 = vmatpush2.bf16.xpose.msra.mxu0 0
          %3215 = vmatprep.subr.bf16.mxu0 0
          %3216 = vmatpush2.bf16.xpose.msra.mxu0 0
          %3217 = vmatprep.subr.bf16.mxu0 0
          %3218 = vmatpush2.bf16.xpose.msra.mxu0 0
          %3219 = vmatprep.subr.bf16.mxu0 0
          %3220 = vmatpush2.bf16.xpose.msra.mxu0 0
          %3221 = vmatprep.mubr.bf16.mxu0 0
          %3222 = vmatmul.mubr.bf16.gmra.mxu0 %v3181
          %v3223 = vpop.f32.mrf.mxu0
          %v3224 = vadd.f32 0.0, %v3223
          %v3225 = vpop.f32.mrf.mxu0
          %v3226 = vpop.f32.mrf.mxu0
          %v3227 = vadd.f32 0.0, %v3226
          %v3228 = vpop.f32.mrf.mxu0
          %3229 = vmatprep.mubr.bf16.mxu0 0
          %3230 = vmatmul.mubr.bf16.gmra.mxu0 %v3184
          %v3231 = vpop.f32.mrf.mxu0
          %v3232 = vadd.f32 0.0, %v3231
          %v3233 = vpop.f32.mrf.mxu0
          %v3234 = vpop.f32.mrf.mxu0
          %v3235 = vadd.f32 0.0, %v3234
          %v3236 = vpop.f32.mrf.mxu0
          %3237 = vdwg.mxu0
          %v3239 = vsel %vm477, %v3160, 0
          %v3242 = vsel %vm477, %v3161, 0
          %v3245 = vsel %vm477, %v3174, 0
          %3247 = vmatprep.subr.bf16.mxu0 0
          %3248 = vmatpush1.bf16.xpose.msra.mxu0 0
          %3249 = vmatprep.subr.bf16.mxu0 0
          %3250 = vmatpush1.bf16.xpose.msra.mxu0 0
          %3251 = vmatprep.subr.bf16.mxu0 0
          %3252 = vmatpush1.bf16.xpose.msra.mxu0 0
          %3253 = vmatprep.subr.bf16.mxu0 0
          %3254 = vmatpush1.bf16.xpose.msra.mxu0 0
          %3255 = vmatprep.subr.bf16.mxu0 0
          %3256 = vmatpush1.bf16.xpose.msra.mxu0 0
          %3257 = vmatprep.subr.bf16.mxu0 0
          %3258 = vmatpush1.bf16.xpose.msra.mxu0 0
          %3259 = vmatprep.subr.bf16.mxu0 0
          %3260 = vmatpush1.bf16.xpose.msra.mxu0 0
          %3261 = vmatprep.subr.bf16.mxu0 0
          %3262 = vmatpush1.bf16.xpose.msra.mxu0 %v3245
          %3263 = vmatprep.subr.bf16.mxu0 0
          %3264 = vmatpush2.bf16.xpose.msra.mxu0 0
          %3265 = vmatprep.subr.bf16.mxu0 0
          %3266 = vmatpush2.bf16.xpose.msra.mxu0 0
          %3267 = vmatprep.subr.bf16.mxu0 0
          %3268 = vmatpush2.bf16.xpose.msra.mxu0 0
          %3269 = vmatprep.subr.bf16.mxu0 0
          %3270 = vmatpush2.bf16.xpose.msra.mxu0 0
          %3271 = vmatprep.subr.bf16.mxu0 0
          %3272 = vmatpush2.bf16.xpose.msra.mxu0 0
          %3273 = vmatprep.subr.bf16.mxu0 0
          %3274 = vmatpush2.bf16.xpose.msra.mxu0 0
          %3275 = vmatprep.subr.bf16.mxu0 0
          %3276 = vmatpush2.bf16.xpose.msra.mxu0 0
          %3277 = vmatprep.subr.bf16.mxu0 0
          %3278 = vmatpush2.bf16.xpose.msra.mxu0 0
          %3279 = vmatprep.mubr.bf16.mxu0 0
          %3280 = vmatmul.mubr.bf16.gmra.mxu0 %v3239
          %v3281 = vpop.f32.mrf.mxu0
          %v3282 = vadd.f32 0.0, %v3281
          %v3283 = vpop.f32.mrf.mxu0
          %v3284 = vpop.f32.mrf.mxu0
          %v3285 = vadd.f32 0.0, %v3284
          %v3286 = vpop.f32.mrf.mxu0
          %3287 = vmatprep.mubr.bf16.mxu0 0
          %3288 = vmatmul.mubr.bf16.gmra.mxu0 %v3242
          %v3289 = vpop.f32.mrf.mxu0
          %v3290 = vadd.f32 0.0, %v3289
          %v3291 = vpop.f32.mrf.mxu0
          %v3292 = vpop.f32.mrf.mxu0
          %v3293 = vadd.f32 0.0, %v3292
          %v3294 = vpop.f32.mrf.mxu0
          %3295 = vdwg.mxu0
          %v3297 = vsel %vm477, %v3162, 0
          %v3300 = vsel %vm477, %v3163, 0
          %v3303 = vsel %vm477, %v3175, 0
          %3305 = vmatprep.subr.bf16.mxu0 0
          %3306 = vmatpush1.bf16.xpose.msra.mxu0 0
          %3307 = vmatprep.subr.bf16.mxu0 0
          %3308 = vmatpush1.bf16.xpose.msra.mxu0 0
          %3309 = vmatprep.subr.bf16.mxu0 0
          %3310 = vmatpush1.bf16.xpose.msra.mxu0 0
          %3311 = vmatprep.subr.bf16.mxu0 0
          %3312 = vmatpush1.bf16.xpose.msra.mxu0 0
          %3313 = vmatprep.subr.bf16.mxu0 0
          %3314 = vmatpush1.bf16.xpose.msra.mxu0 0
          %3315 = vmatprep.subr.bf16.mxu0 0
          %3316 = vmatpush1.bf16.xpose.msra.mxu0 0
          %3317 = vmatprep.subr.bf16.mxu0 0
          %3318 = vmatpush1.bf16.xpose.msra.mxu0 0
          %3319 = vmatprep.subr.bf16.mxu0 0
          %3320 = vmatpush1.bf16.xpose.msra.mxu0 %v3303
          %3321 = vmatprep.subr.bf16.mxu0 0
          %3322 = vmatpush2.bf16.xpose.msra.mxu0 0
          %3323 = vmatprep.subr.bf16.mxu0 0
          %3324 = vmatpush2.bf16.xpose.msra.mxu0 0
          %3325 = vmatprep.subr.bf16.mxu0 0
          %3326 = vmatpush2.bf16.xpose.msra.mxu0 0
          %3327 = vmatprep.subr.bf16.mxu0 0
          %3328 = vmatpush2.bf16.xpose.msra.mxu0 0
          %3329 = vmatprep.subr.bf16.mxu0 0
          %3330 = vmatpush2.bf16.xpose.msra.mxu0 0
          %3331 = vmatprep.subr.bf16.mxu0 0
          %3332 = vmatpush2.bf16.xpose.msra.mxu0 0
          %3333 = vmatprep.subr.bf16.mxu0 0
          %3334 = vmatpush2.bf16.xpose.msra.mxu0 0
          %3335 = vmatprep.subr.bf16.mxu0 0
          %3336 = vmatpush2.bf16.xpose.msra.mxu0 0
          %3337 = vmatprep.mubr.bf16.mxu0 0
          %3338 = vmatmul.mubr.bf16.gmra.mxu0 %v3297
          %v3339 = vpop.f32.mrf.mxu0
          %v3340 = vadd.f32 0.0, %v3339
          %v3341 = vpop.f32.mrf.mxu0
          %v3342 = vpop.f32.mrf.mxu0
          %v3343 = vadd.f32 0.0, %v3342
          %v3344 = vpop.f32.mrf.mxu0
          %3345 = vmatprep.mubr.bf16.mxu0 0
          %3346 = vmatmul.mubr.bf16.gmra.mxu0 %v3300
          %v3347 = vpop.f32.mrf.mxu0
          %v3348 = vadd.f32 0.0, %v3347
          %v3349 = vpop.f32.mrf.mxu0
          %v3350 = vpop.f32.mrf.mxu0
          %v3351 = vadd.f32 0.0, %v3350
          %v3352 = vpop.f32.mrf.mxu0
          %3353 = vdwg.mxu0
          %v3355 = vsel %vm477, %v3164, 0
          %v3358 = vsel %vm477, %v3165, 0
          %v3361 = vsel %vm477, %v3176, 0
          %3363 = vmatprep.subr.bf16.mxu0 0
          %3364 = vmatpush1.bf16.xpose.msra.mxu0 0
          %3365 = vmatprep.subr.bf16.mxu0 0
          %3366 = vmatpush1.bf16.xpose.msra.mxu0 0
          %3367 = vmatprep.subr.bf16.mxu0 0
          %3368 = vmatpush1.bf16.xpose.msra.mxu0 0
          %3369 = vmatprep.subr.bf16.mxu0 0
          %3370 = vmatpush1.bf16.xpose.msra.mxu0 0
          %3371 = vmatprep.subr.bf16.mxu0 0
          %3372 = vmatpush1.bf16.xpose.msra.mxu0 0
          %3373 = vmatprep.subr.bf16.mxu0 0
          %3374 = vmatpush1.bf16.xpose.msra.mxu0 0
          %3375 = vmatprep.subr.bf16.mxu0 0
          %3376 = vmatpush1.bf16.xpose.msra.mxu0 0
          %3377 = vmatprep.subr.bf16.mxu0 0
          %3378 = vmatpush1.bf16.xpose.msra.mxu0 %v3361
          %3379 = vmatprep.subr.bf16.mxu0 0
          %3380 = vmatpush2.bf16.xpose.msra.mxu0 0
          %3381 = vmatprep.subr.bf16.mxu0 0
          %3382 = vmatpush2.bf16.xpose.msra.mxu0 0
          %3383 = vmatprep.subr.bf16.mxu0 0
          %3384 = vmatpush2.bf16.xpose.msra.mxu0 0
          %3385 = vmatprep.subr.bf16.mxu0 0
          %3386 = vmatpush2.bf16.xpose.msra.mxu0 0
          %3387 = vmatprep.subr.bf16.mxu0 0
          %3388 = vmatpush2.bf16.xpose.msra.mxu0 0
          %3389 = vmatprep.subr.bf16.mxu0 0
          %3390 = vmatpush2.bf16.xpose.msra.mxu0 0
          %3391 = vmatprep.subr.bf16.mxu0 0
          %3392 = vmatpush2.bf16.xpose.msra.mxu0 0
          %3393 = vmatprep.subr.bf16.mxu0 0
          %3394 = vmatpush2.bf16.xpose.msra.mxu0 0
          %3395 = vmatprep.mubr.bf16.mxu0 0
          %3396 = vmatmul.mubr.bf16.gmra.mxu0 %v3355
          %v3397 = vpop.f32.mrf.mxu0
          %v3398 = vadd.f32 0.0, %v3397
          %v3399 = vpop.f32.mrf.mxu0
          %v3400 = vpop.f32.mrf.mxu0
          %v3401 = vadd.f32 0.0, %v3400
          %v3402 = vpop.f32.mrf.mxu0
          %3403 = vmatprep.mubr.bf16.mxu0 0
          %3404 = vmatmul.mubr.bf16.gmra.mxu0 %v3358
          %v3405 = vpop.f32.mrf.mxu0
          %v3406 = vadd.f32 0.0, %v3405
          %v3407 = vpop.f32.mrf.mxu0
          %v3408 = vpop.f32.mrf.mxu0
          %v3409 = vadd.f32 0.0, %v3408
          %v3410 = vpop.f32.mrf.mxu0
          %3411 = vdwg.mxu0
          %v3413 = vsel %vm477, %v3166, 0
          %v3416 = vsel %vm477, %v3167, 0
          %v3419 = vsel %vm477, %v3177, 0
          %3421 = vmatprep.subr.bf16.mxu0 0
          %3422 = vmatpush1.bf16.xpose.msra.mxu0 0
          %3423 = vmatprep.subr.bf16.mxu0 0
          %3424 = vmatpush1.bf16.xpose.msra.mxu0 0
          %3425 = vmatprep.subr.bf16.mxu0 0
          %3426 = vmatpush1.bf16.xpose.msra.mxu0 0
          %3427 = vmatprep.subr.bf16.mxu0 0
          %3428 = vmatpush1.bf16.xpose.msra.mxu0 0
          %3429 = vmatprep.subr.bf16.mxu0 0
          %3430 = vmatpush1.bf16.xpose.msra.mxu0 0
          %3431 = vmatprep.subr.bf16.mxu0 0
          %3432 = vmatpush1.bf16.xpose.msra.mxu0 0
          %3433 = vmatprep.subr.bf16.mxu0 0
          %3434 = vmatpush1.bf16.xpose.msra.mxu0 0
          %3435 = vmatprep.subr.bf16.mxu0 0
          %3436 = vmatpush1.bf16.xpose.msra.mxu0 %v3419
          %3437 = vmatprep.subr.bf16.mxu0 0
          %3438 = vmatpush2.bf16.xpose.msra.mxu0 0
          %3439 = vmatprep.subr.bf16.mxu0 0
          %3440 = vmatpush2.bf16.xpose.msra.mxu0 0
          %3441 = vmatprep.subr.bf16.mxu0 0
          %3442 = vmatpush2.bf16.xpose.msra.mxu0 0
          %3443 = vmatprep.subr.bf16.mxu0 0
          %3444 = vmatpush2.bf16.xpose.msra.mxu0 0
          %3445 = vmatprep.subr.bf16.mxu0 0
          %3446 = vmatpush2.bf16.xpose.msra.mxu0 0
          %3447 = vmatprep.subr.bf16.mxu0 0
          %3448 = vmatpush2.bf16.xpose.msra.mxu0 0
          %3449 = vmatprep.subr.bf16.mxu0 0
          %3450 = vmatpush2.bf16.xpose.msra.mxu0 0
          %3451 = vmatprep.subr.bf16.mxu0 0
          %3452 = vmatpush2.bf16.xpose.msra.mxu0 0
          %3453 = vmatprep.mubr.bf16.mxu0 0
          %3454 = vmatmul.mubr.bf16.gmra.mxu0 %v3413
          %v3455 = vpop.f32.mrf.mxu0
          %v3456 = vadd.f32 0.0, %v3455
          %v3457 = vpop.f32.mrf.mxu0
          %v3458 = vpop.f32.mrf.mxu0
          %v3459 = vadd.f32 0.0, %v3458
          %v3460 = vpop.f32.mrf.mxu0
          %3461 = vmatprep.mubr.bf16.mxu0 0
          %3462 = vmatmul.mubr.bf16.gmra.mxu0 %v3416
          %v3463 = vpop.f32.mrf.mxu0
          %v3464 = vadd.f32 0.0, %v3463
          %v3465 = vpop.f32.mrf.mxu0
          %v3466 = vpop.f32.mrf.mxu0
          %v3467 = vadd.f32 0.0, %v3466
          %v3468 = vpop.f32.mrf.mxu0
          %3469 = vdwg.mxu0
          %v3471 = vsel %vm477, %v3168, 0
          %v3474 = vsel %vm477, %v3169, 0
          %v3477 = vsel %vm477, %v3178, 0
          %3479 = vmatprep.subr.bf16.mxu0 0
          %3480 = vmatpush1.bf16.xpose.msra.mxu0 0
          %3481 = vmatprep.subr.bf16.mxu0 0
          %3482 = vmatpush1.bf16.xpose.msra.mxu0 0
          %3483 = vmatprep.subr.bf16.mxu0 0
          %3484 = vmatpush1.bf16.xpose.msra.mxu0 0
          %3485 = vmatprep.subr.bf16.mxu0 0
          %3486 = vmatpush1.bf16.xpose.msra.mxu0 0
          %3487 = vmatprep.subr.bf16.mxu0 0
          %3488 = vmatpush1.bf16.xpose.msra.mxu0 0
          %3489 = vmatprep.subr.bf16.mxu0 0
          %3490 = vmatpush1.bf16.xpose.msra.mxu0 0
          %3491 = vmatprep.subr.bf16.mxu0 0
          %3492 = vmatpush1.bf16.xpose.msra.mxu0 0
          %3493 = vmatprep.subr.bf16.mxu0 0
          %3494 = vmatpush1.bf16.xpose.msra.mxu0 %v3477
          %3495 = vmatprep.subr.bf16.mxu0 0
          %3496 = vmatpush2.bf16.xpose.msra.mxu0 0
          %3497 = vmatprep.subr.bf16.mxu0 0
          %3498 = vmatpush2.bf16.xpose.msra.mxu0 0
          %3499 = vmatprep.subr.bf16.mxu0 0
          %3500 = vmatpush2.bf16.xpose.msra.mxu0 0
          %3501 = vmatprep.subr.bf16.mxu0 0
          %3502 = vmatpush2.bf16.xpose.msra.mxu0 0
          %3503 = vmatprep.subr.bf16.mxu0 0
          %3504 = vmatpush2.bf16.xpose.msra.mxu0 0
          %3505 = vmatprep.subr.bf16.mxu0 0
          %3506 = vmatpush2.bf16.xpose.msra.mxu0 0
          %3507 = vmatprep.subr.bf16.mxu0 0
          %3508 = vmatpush2.bf16.xpose.msra.mxu0 0
          %3509 = vmatprep.subr.bf16.mxu0 0
          %3510 = vmatpush2.bf16.xpose.msra.mxu0 0
          %3511 = vmatprep.mubr.bf16.mxu0 0
          %3512 = vmatmul.mubr.bf16.gmra.mxu0 %v3471
          %v3513 = vpop.f32.mrf.mxu0
          %v3514 = vadd.f32 0.0, %v3513
          %v3515 = vpop.f32.mrf.mxu0
          %v3516 = vpop.f32.mrf.mxu0
          %v3517 = vadd.f32 0.0, %v3516
          %v3518 = vpop.f32.mrf.mxu0
          %3519 = vmatprep.mubr.bf16.mxu0 0
          %3520 = vmatmul.mubr.bf16.gmra.mxu0 %v3474
          %v3521 = vpop.f32.mrf.mxu0
          %v3522 = vadd.f32 0.0, %v3521
          %v3523 = vpop.f32.mrf.mxu0
          %v3524 = vpop.f32.mrf.mxu0
          %v3525 = vadd.f32 0.0, %v3524
          %v3526 = vpop.f32.mrf.mxu0
          %3527 = vdwg.mxu0
          %v3529 = vsel %vm477, %v3170, 0
          %v3532 = vsel %vm477, %v3171, 0
          %v3535 = vsel %vm477, %v3179, 0
          %3537 = vmatprep.subr.bf16.mxu0 0
          %3538 = vmatpush1.bf16.xpose.msra.mxu0 0
          %3539 = vmatprep.subr.bf16.mxu0 0
          %3540 = vmatpush1.bf16.xpose.msra.mxu0 0
          %3541 = vmatprep.subr.bf16.mxu0 0
          %3542 = vmatpush1.bf16.xpose.msra.mxu0 0
          %3543 = vmatprep.subr.bf16.mxu0 0
          %3544 = vmatpush1.bf16.xpose.msra.mxu0 0
          %3545 = vmatprep.subr.bf16.mxu0 0
          %3546 = vmatpush1.bf16.xpose.msra.mxu0 0
          %3547 = vmatprep.subr.bf16.mxu0 0
          %3548 = vmatpush1.bf16.xpose.msra.mxu0 0
          %3549 = vmatprep.subr.bf16.mxu0 0
          %3550 = vmatpush1.bf16.xpose.msra.mxu0 0
          %3551 = vmatprep.subr.bf16.mxu0 0
          %3552 = vmatpush1.bf16.xpose.msra.mxu0 %v3535
          %3553 = vmatprep.subr.bf16.mxu0 0
          %3554 = vmatpush2.bf16.xpose.msra.mxu0 0
          %3555 = vmatprep.subr.bf16.mxu0 0
          %3556 = vmatpush2.bf16.xpose.msra.mxu0 0
          %3557 = vmatprep.subr.bf16.mxu0 0
          %3558 = vmatpush2.bf16.xpose.msra.mxu0 0
          %3559 = vmatprep.subr.bf16.mxu0 0
          %3560 = vmatpush2.bf16.xpose.msra.mxu0 0
          %3561 = vmatprep.subr.bf16.mxu0 0
          %3562 = vmatpush2.bf16.xpose.msra.mxu0 0
          %3563 = vmatprep.subr.bf16.mxu0 0
          %3564 = vmatpush2.bf16.xpose.msra.mxu0 0
          %3565 = vmatprep.subr.bf16.mxu0 0
          %3566 = vmatpush2.bf16.xpose.msra.mxu0 0
          %3567 = vmatprep.subr.bf16.mxu0 0
          %3568 = vmatpush2.bf16.xpose.msra.mxu0 0
          %3569 = vmatprep.mubr.bf16.mxu0 0
          %3570 = vmatmul.mubr.bf16.gmra.mxu0 %v3529
          %v3571 = vpop.f32.mrf.mxu0
          %v3572 = vadd.f32 0.0, %v3571
          %v3573 = vpop.f32.mrf.mxu0
          %v3574 = vpop.f32.mrf.mxu0
          %v3575 = vadd.f32 0.0, %v3574
          %v3576 = vpop.f32.mrf.mxu0
          %3577 = vmatprep.mubr.bf16.mxu0 0
          %3578 = vmatmul.mubr.bf16.gmra.mxu0 %v3532
          %v3579 = vpop.f32.mrf.mxu0
          %v3580 = vadd.f32 0.0, %v3579
          %v3581 = vpop.f32.mrf.mxu0
          %v3582 = vpop.f32.mrf.mxu0
          %v3583 = vadd.f32 0.0, %v3582
          %v3584 = vpop.f32.mrf.mxu0
          %3585 = vdwg.mxu0
          %v3586 = vsel %vm884, %v3224, 0.0
          %v3587 = vsel %vm884, %v3282, 0.0
          %v3588 = vadd.f32 %v3586, %v3587
          %v3589 = vsel %vm884, %v3340, 0.0
          %v3590 = vadd.f32 %v3588, %v3589
          %v3591 = vsel %vm884, %v3398, 0.0
          %v3592 = vadd.f32 %v3590, %v3591
          %v3593 = vsel %vm884, %v3456, 0.0
          %v3594 = vadd.f32 %v3592, %v3593
          %v3595 = vsel %vm884, %v3514, 0.0
          %v3596 = vadd.f32 %v3594, %v3595
          %v3597 = vsel %vm884, %v3572, 0.0
          %v3598 = vadd.f32 %v3596, %v3597
          %v3599 = vsel %vm884, %v3227, 0.0
          %v3600 = vsel %vm884, %v3285, 0.0
          %v3601 = vadd.f32 %v3599, %v3600
          %v3602 = vsel %vm884, %v3343, 0.0
          %v3603 = vadd.f32 %v3601, %v3602
          %v3604 = vsel %vm884, %v3401, 0.0
          %v3605 = vadd.f32 %v3603, %v3604
          %v3606 = vsel %vm884, %v3459, 0.0
          %v3607 = vadd.f32 %v3605, %v3606
          %v3608 = vsel %vm884, %v3517, 0.0
          %v3609 = vadd.f32 %v3607, %v3608
          %v3610 = vsel %vm884, %v3575, 0.0
          %v3611 = vadd.f32 %v3609, %v3610
          %v3612 = vsel %vm884, %v3232, 0.0
          %v3613 = vsel %vm884, %v3290, 0.0
          %v3614 = vadd.f32 %v3612, %v3613
          %v3615 = vsel %vm884, %v3348, 0.0
          %v3616 = vadd.f32 %v3614, %v3615
          %v3617 = vsel %vm884, %v3406, 0.0
          %v3618 = vadd.f32 %v3616, %v3617
          %v3619 = vsel %vm884, %v3464, 0.0
          %v3620 = vadd.f32 %v3618, %v3619
          %v3621 = vsel %vm884, %v3522, 0.0
          %v3622 = vadd.f32 %v3620, %v3621
          %v3623 = vsel %vm884, %v3580, 0.0
          %v3624 = vadd.f32 %v3622, %v3623
          %v3625 = vsel %vm924, %v3235, 0.0
          %v3626 = vsel %vm924, %v3293, 0.0
          %v3627 = vadd.f32 %v3625, %v3626
          %v3628 = vsel %vm924, %v3351, 0.0
          %v3629 = vadd.f32 %v3627, %v3628
          %v3630 = vsel %vm924, %v3409, 0.0
          %v3631 = vadd.f32 %v3629, %v3630
          %v3632 = vsel %vm924, %v3467, 0.0
          %v3633 = vadd.f32 %v3631, %v3632
          %v3634 = vsel %vm924, %v3525, 0.0
          %v3635 = vadd.f32 %v3633, %v3634
          %v3636 = vsel %vm924, %v3583, 0.0
          %v3637 = vadd.f32 %v3635, %v3636
          %v3638 = vadd.f32 %v3098, %v3598
          %v3639 = vadd.f32 %v3099, %v3611
          %v3640 = vadd.f32 %v3100, %v3624
          %v3641 = vadd.f32 %v3101, %v3637
          %s3642 = scalar_lea.vmem %s400, 6
          %v3643 = vld [vmem:[%s3642] ss:$2 sm:$0xff]
          %s3644 = scalar_lea.vmem %s400, 22
          %v3645 = vld [vmem:[%s3644] ss:$2 sm:$0xff]
          %s3646 = scalar_lea.vmem %s400, 38
          %v3647 = vld [vmem:[%s3646] ss:$2 sm:$0xff]
          %s3648 = scalar_lea.vmem %s400, 54
          %v3649 = vld [vmem:[%s3648] ss:$2 sm:$0x1f]
          %s3650 = scalar_lea.vmem %s400, 70
          %v3651 = vld [vmem:[%s3650] ss:$2 sm:$0xff]
          %s3652 = scalar_lea.vmem %s400, 86
          %v3653 = vld [vmem:[%s3652] ss:$2 sm:$0xff]
          %s3654 = scalar_lea.vmem %s400, 102
          %v3655 = vld [vmem:[%s3654] ss:$2 sm:$0xff]
          %s3656 = scalar_lea.vmem %s400, 118
          %v3657 = vld [vmem:[%s3656] ss:$2 sm:$0x1f]
          %s3658 = scalar_lea.vmem %s400, 134
          %v3659 = vld [vmem:[%s3658] ss:$2 sm:$0xff]
          %s3660 = scalar_lea.vmem %s400, 150
          %v3661 = vld [vmem:[%s3660] ss:$2 sm:$0xff]
          %s3662 = scalar_lea.vmem %s400, 166
          %v3663 = vld [vmem:[%s3662] ss:$2 sm:$0xff]
          %s3664 = scalar_lea.vmem %s400, 182
          %v3665 = vld [vmem:[%s3664] ss:$2 sm:$0x1f]
          %s3666 = scalar_lea.vmem %s400, 198
          %v3667 = vld [vmem:[%s3666] ss:$2 sm:$0xff]
          %s3668 = scalar_lea.vmem %s400, 214
          %v3669 = vld [vmem:[%s3668] ss:$2 sm:$0xff]
          %s3670 = scalar_lea.vmem %s400, 230
          %v3671 = vld [vmem:[%s3670] ss:$2 sm:$0xff]
          %s3672 = scalar_lea.vmem %s400, 246
          %v3673 = vld [vmem:[%s3672] ss:$2 sm:$0x1f]
          %s3674 = scalar_lea.vmem %s400, 262
          %v3675 = vld [vmem:[%s3674] ss:$2 sm:$0xff]
          %s3676 = scalar_lea.vmem %s400, 278
          %v3677 = vld [vmem:[%s3676] ss:$2 sm:$0xff]
          %s3678 = scalar_lea.vmem %s400, 294
          %v3679 = vld [vmem:[%s3678] ss:$2 sm:$0xff]
          %s3680 = scalar_lea.vmem %s400, 310
          %v3681 = vld [vmem:[%s3680] ss:$2 sm:$0x1f]
          %s3682 = scalar_lea.vmem %s400, 326
          %v3683 = vld [vmem:[%s3682] ss:$2 sm:$0xff]
          %s3684 = scalar_lea.vmem %s400, 342
          %v3685 = vld [vmem:[%s3684] ss:$2 sm:$0xff]
          %s3686 = scalar_lea.vmem %s400, 358
          %v3687 = vld [vmem:[%s3686] ss:$2 sm:$0xff]
          %s3688 = scalar_lea.vmem %s400, 374
          %v3689 = vld [vmem:[%s3688] ss:$2 sm:$0x1f]
          %s3690 = scalar_lea.vmem %s400, 390
          %v3691 = vld [vmem:[%s3690] ss:$2 sm:$0xff]
          %s3692 = scalar_lea.vmem %s400, 406
          %v3693 = vld [vmem:[%s3692] ss:$2 sm:$0xff]
          %s3694 = scalar_lea.vmem %s400, 422
          %v3695 = vld [vmem:[%s3694] ss:$2 sm:$0xff]
          %s3696 = scalar_lea.vmem %s400, 438
          %v3697 = vld [vmem:[%s3696] ss:$2 sm:$0x1f]
          %v3698 = vpack.c.bf16 %v3645, %v3643
          %v3699 = vpack.c.bf16 %v3649, %v3647
          %v3700 = vpack.c.bf16 %v3653, %v3651
          %v3701 = vpack.c.bf16 %v3657, %v3655
          %v3702 = vpack.c.bf16 %v3661, %v3659
          %v3703 = vpack.c.bf16 %v3665, %v3663
          %v3704 = vpack.c.bf16 %v3669, %v3667
          %v3705 = vpack.c.bf16 %v3673, %v3671
          %v3706 = vpack.c.bf16 %v3677, %v3675
          %v3707 = vpack.c.bf16 %v3681, %v3679
          %v3708 = vpack.c.bf16 %v3685, %v3683
          %v3709 = vpack.c.bf16 %v3689, %v3687
          %v3710 = vpack.c.bf16 %v3693, %v3691
          %v3711 = vpack.c.bf16 %v3697, %v3695
          %s3712 = scalar_lea.vmem %s1, 24
          %v3713 = vld [vmem:[%s3712] sm:$0xf]
          %v3714 = vld [vmem:[%s3712 + $0x1c] sm:$0xf]
          %v3715 = vld [vmem:[%s3712 + $0x38] sm:$0xf]
          %v3716 = vld [vmem:[%s3712 + $0x54] sm:$0xf]
          %v3717 = vld [vmem:[%s3712 + $0x70] sm:$0xf]
          %v3718 = vld [vmem:[%s3712 + $0x8c] sm:$0xf]
          %v3719 = vld [vmem:[%s3712 + $0xa8] sm:$0xf]
          %v3721 = vsel %vm477, %v3698, 0
          %v3724 = vsel %vm477, %v3699, 0
          %v3727 = vsel %vm477, %v3713, 0
          %3729 = vmatprep.subr.bf16.mxu0 0
          %3730 = vmatpush1.bf16.xpose.msra.mxu0 0
          %3731 = vmatprep.subr.bf16.mxu0 0
          %3732 = vmatpush1.bf16.xpose.msra.mxu0 0
          %3733 = vmatprep.subr.bf16.mxu0 0
          %3734 = vmatpush1.bf16.xpose.msra.mxu0 0
          %3735 = vmatprep.subr.bf16.mxu0 0
          %3736 = vmatpush1.bf16.xpose.msra.mxu0 0
          %3737 = vmatprep.subr.bf16.mxu0 0
          %3738 = vmatpush1.bf16.xpose.msra.mxu0 0
          %3739 = vmatprep.subr.bf16.mxu0 0
          %3740 = vmatpush1.bf16.xpose.msra.mxu0 0
          %3741 = vmatprep.subr.bf16.mxu0 0
          %3742 = vmatpush1.bf16.xpose.msra.mxu0 0
          %3743 = vmatprep.subr.bf16.mxu0 0
          %3744 = vmatpush1.bf16.xpose.msra.mxu0 %v3727
          %3745 = vmatprep.subr.bf16.mxu0 0
          %3746 = vmatpush2.bf16.xpose.msra.mxu0 0
          %3747 = vmatprep.subr.bf16.mxu0 0
          %3748 = vmatpush2.bf16.xpose.msra.mxu0 0
          %3749 = vmatprep.subr.bf16.mxu0 0
          %3750 = vmatpush2.bf16.xpose.msra.mxu0 0
          %3751 = vmatprep.subr.bf16.mxu0 0
          %3752 = vmatpush2.bf16.xpose.msra.mxu0 0
          %3753 = vmatprep.subr.bf16.mxu0 0
          %3754 = vmatpush2.bf16.xpose.msra.mxu0 0
          %3755 = vmatprep.subr.bf16.mxu0 0
          %3756 = vmatpush2.bf16.xpose.msra.mxu0 0
          %3757 = vmatprep.subr.bf16.mxu0 0
          %3758 = vmatpush2.bf16.xpose.msra.mxu0 0
          %3759 = vmatprep.subr.bf16.mxu0 0
          %3760 = vmatpush2.bf16.xpose.msra.mxu0 0
          %3761 = vmatprep.mubr.bf16.mxu0 0
          %3762 = vmatmul.mubr.bf16.gmra.mxu0 %v3721
          %v3763 = vpop.f32.mrf.mxu0
          %v3764 = vadd.f32 0.0, %v3763
          %v3765 = vpop.f32.mrf.mxu0
          %v3766 = vpop.f32.mrf.mxu0
          %v3767 = vadd.f32 0.0, %v3766
          %v3768 = vpop.f32.mrf.mxu0
          %3769 = vmatprep.mubr.bf16.mxu0 0
          %3770 = vmatmul.mubr.bf16.gmra.mxu0 %v3724
          %v3771 = vpop.f32.mrf.mxu0
          %v3772 = vadd.f32 0.0, %v3771
          %v3773 = vpop.f32.mrf.mxu0
          %v3774 = vpop.f32.mrf.mxu0
          %v3775 = vadd.f32 0.0, %v3774
          %v3776 = vpop.f32.mrf.mxu0
          %3777 = vdwg.mxu0
          %v3779 = vsel %vm477, %v3700, 0
          %v3782 = vsel %vm477, %v3701, 0
          %v3785 = vsel %vm477, %v3714, 0
          %3787 = vmatprep.subr.bf16.mxu0 0
          %3788 = vmatpush1.bf16.xpose.msra.mxu0 0
          %3789 = vmatprep.subr.bf16.mxu0 0
          %3790 = vmatpush1.bf16.xpose.msra.mxu0 0
          %3791 = vmatprep.subr.bf16.mxu0 0
          %3792 = vmatpush1.bf16.xpose.msra.mxu0 0
          %3793 = vmatprep.subr.bf16.mxu0 0
          %3794 = vmatpush1.bf16.xpose.msra.mxu0 0
          %3795 = vmatprep.subr.bf16.mxu0 0
          %3796 = vmatpush1.bf16.xpose.msra.mxu0 0
          %3797 = vmatprep.subr.bf16.mxu0 0
          %3798 = vmatpush1.bf16.xpose.msra.mxu0 0
          %3799 = vmatprep.subr.bf16.mxu0 0
          %3800 = vmatpush1.bf16.xpose.msra.mxu0 0
          %3801 = vmatprep.subr.bf16.mxu0 0
          %3802 = vmatpush1.bf16.xpose.msra.mxu0 %v3785
          %3803 = vmatprep.subr.bf16.mxu0 0
          %3804 = vmatpush2.bf16.xpose.msra.mxu0 0
          %3805 = vmatprep.subr.bf16.mxu0 0
          %3806 = vmatpush2.bf16.xpose.msra.mxu0 0
          %3807 = vmatprep.subr.bf16.mxu0 0
          %3808 = vmatpush2.bf16.xpose.msra.mxu0 0
          %3809 = vmatprep.subr.bf16.mxu0 0
          %3810 = vmatpush2.bf16.xpose.msra.mxu0 0
          %3811 = vmatprep.subr.bf16.mxu0 0
          %3812 = vmatpush2.bf16.xpose.msra.mxu0 0
          %3813 = vmatprep.subr.bf16.mxu0 0
          %3814 = vmatpush2.bf16.xpose.msra.mxu0 0
          %3815 = vmatprep.subr.bf16.mxu0 0
          %3816 = vmatpush2.bf16.xpose.msra.mxu0 0
          %3817 = vmatprep.subr.bf16.mxu0 0
          %3818 = vmatpush2.bf16.xpose.msra.mxu0 0
          %3819 = vmatprep.mubr.bf16.mxu0 0
          %3820 = vmatmul.mubr.bf16.gmra.mxu0 %v3779
          %v3821 = vpop.f32.mrf.mxu0
          %v3822 = vadd.f32 0.0, %v3821
          %v3823 = vpop.f32.mrf.mxu0
          %v3824 = vpop.f32.mrf.mxu0
          %v3825 = vadd.f32 0.0, %v3824
          %v3826 = vpop.f32.mrf.mxu0
          %3827 = vmatprep.mubr.bf16.mxu0 0
          %3828 = vmatmul.mubr.bf16.gmra.mxu0 %v3782
          %v3829 = vpop.f32.mrf.mxu0
          %v3830 = vadd.f32 0.0, %v3829
          %v3831 = vpop.f32.mrf.mxu0
          %v3832 = vpop.f32.mrf.mxu0
          %v3833 = vadd.f32 0.0, %v3832
          %v3834 = vpop.f32.mrf.mxu0
          %3835 = vdwg.mxu0
          %v3837 = vsel %vm477, %v3702, 0
          %v3840 = vsel %vm477, %v3703, 0
          %v3843 = vsel %vm477, %v3715, 0
          %3845 = vmatprep.subr.bf16.mxu0 0
          %3846 = vmatpush1.bf16.xpose.msra.mxu0 0
          %3847 = vmatprep.subr.bf16.mxu0 0
          %3848 = vmatpush1.bf16.xpose.msra.mxu0 0
          %3849 = vmatprep.subr.bf16.mxu0 0
          %3850 = vmatpush1.bf16.xpose.msra.mxu0 0
          %3851 = vmatprep.subr.bf16.mxu0 0
          %3852 = vmatpush1.bf16.xpose.msra.mxu0 0
          %3853 = vmatprep.subr.bf16.mxu0 0
          %3854 = vmatpush1.bf16.xpose.msra.mxu0 0
          %3855 = vmatprep.subr.bf16.mxu0 0
          %3856 = vmatpush1.bf16.xpose.msra.mxu0 0
          %3857 = vmatprep.subr.bf16.mxu0 0
          %3858 = vmatpush1.bf16.xpose.msra.mxu0 0
          %3859 = vmatprep.subr.bf16.mxu0 0
          %3860 = vmatpush1.bf16.xpose.msra.mxu0 %v3843
          %3861 = vmatprep.subr.bf16.mxu0 0
          %3862 = vmatpush2.bf16.xpose.msra.mxu0 0
          %3863 = vmatprep.subr.bf16.mxu0 0
          %3864 = vmatpush2.bf16.xpose.msra.mxu0 0
          %3865 = vmatprep.subr.bf16.mxu0 0
          %3866 = vmatpush2.bf16.xpose.msra.mxu0 0
          %3867 = vmatprep.subr.bf16.mxu0 0
          %3868 = vmatpush2.bf16.xpose.msra.mxu0 0
          %3869 = vmatprep.subr.bf16.mxu0 0
          %3870 = vmatpush2.bf16.xpose.msra.mxu0 0
          %3871 = vmatprep.subr.bf16.mxu0 0
          %3872 = vmatpush2.bf16.xpose.msra.mxu0 0
          %3873 = vmatprep.subr.bf16.mxu0 0
          %3874 = vmatpush2.bf16.xpose.msra.mxu0 0
          %3875 = vmatprep.subr.bf16.mxu0 0
          %3876 = vmatpush2.bf16.xpose.msra.mxu0 0
          %3877 = vmatprep.mubr.bf16.mxu0 0
          %3878 = vmatmul.mubr.bf16.gmra.mxu0 %v3837
          %v3879 = vpop.f32.mrf.mxu0
          %v3880 = vadd.f32 0.0, %v3879
          %v3881 = vpop.f32.mrf.mxu0
          %v3882 = vpop.f32.mrf.mxu0
          %v3883 = vadd.f32 0.0, %v3882
          %v3884 = vpop.f32.mrf.mxu0
          %3885 = vmatprep.mubr.bf16.mxu0 0
          %3886 = vmatmul.mubr.bf16.gmra.mxu0 %v3840
          %v3887 = vpop.f32.mrf.mxu0
          %v3888 = vadd.f32 0.0, %v3887
          %v3889 = vpop.f32.mrf.mxu0
          %v3890 = vpop.f32.mrf.mxu0
          %v3891 = vadd.f32 0.0, %v3890
          %v3892 = vpop.f32.mrf.mxu0
          %3893 = vdwg.mxu0
          %v3895 = vsel %vm477, %v3704, 0
          %v3898 = vsel %vm477, %v3705, 0
          %v3901 = vsel %vm477, %v3716, 0
          %3903 = vmatprep.subr.bf16.mxu0 0
          %3904 = vmatpush1.bf16.xpose.msra.mxu0 0
          %3905 = vmatprep.subr.bf16.mxu0 0
          %3906 = vmatpush1.bf16.xpose.msra.mxu0 0
          %3907 = vmatprep.subr.bf16.mxu0 0
          %3908 = vmatpush1.bf16.xpose.msra.mxu0 0
          %3909 = vmatprep.subr.bf16.mxu0 0
          %3910 = vmatpush1.bf16.xpose.msra.mxu0 0
          %3911 = vmatprep.subr.bf16.mxu0 0
          %3912 = vmatpush1.bf16.xpose.msra.mxu0 0
          %3913 = vmatprep.subr.bf16.mxu0 0
          %3914 = vmatpush1.bf16.xpose.msra.mxu0 0
          %3915 = vmatprep.subr.bf16.mxu0 0
          %3916 = vmatpush1.bf16.xpose.msra.mxu0 0
          %3917 = vmatprep.subr.bf16.mxu0 0
          %3918 = vmatpush1.bf16.xpose.msra.mxu0 %v3901
          %3919 = vmatprep.subr.bf16.mxu0 0
          %3920 = vmatpush2.bf16.xpose.msra.mxu0 0
          %3921 = vmatprep.subr.bf16.mxu0 0
          %3922 = vmatpush2.bf16.xpose.msra.mxu0 0
          %3923 = vmatprep.subr.bf16.mxu0 0
          %3924 = vmatpush2.bf16.xpose.msra.mxu0 0
          %3925 = vmatprep.subr.bf16.mxu0 0
          %3926 = vmatpush2.bf16.xpose.msra.mxu0 0
          %3927 = vmatprep.subr.bf16.mxu0 0
          %3928 = vmatpush2.bf16.xpose.msra.mxu0 0
          %3929 = vmatprep.subr.bf16.mxu0 0
          %3930 = vmatpush2.bf16.xpose.msra.mxu0 0
          %3931 = vmatprep.subr.bf16.mxu0 0
          %3932 = vmatpush2.bf16.xpose.msra.mxu0 0
          %3933 = vmatprep.subr.bf16.mxu0 0
          %3934 = vmatpush2.bf16.xpose.msra.mxu0 0
          %3935 = vmatprep.mubr.bf16.mxu0 0
          %3936 = vmatmul.mubr.bf16.gmra.mxu0 %v3895
          %v3937 = vpop.f32.mrf.mxu0
          %v3938 = vadd.f32 0.0, %v3937
          %v3939 = vpop.f32.mrf.mxu0
          %v3940 = vpop.f32.mrf.mxu0
          %v3941 = vadd.f32 0.0, %v3940
          %v3942 = vpop.f32.mrf.mxu0
          %3943 = vmatprep.mubr.bf16.mxu0 0
          %3944 = vmatmul.mubr.bf16.gmra.mxu0 %v3898
          %v3945 = vpop.f32.mrf.mxu0
          %v3946 = vadd.f32 0.0, %v3945
          %v3947 = vpop.f32.mrf.mxu0
          %v3948 = vpop.f32.mrf.mxu0
          %v3949 = vadd.f32 0.0, %v3948
          %v3950 = vpop.f32.mrf.mxu0
          %3951 = vdwg.mxu0
          %v3953 = vsel %vm477, %v3706, 0
          %v3956 = vsel %vm477, %v3707, 0
          %v3959 = vsel %vm477, %v3717, 0
          %3961 = vmatprep.subr.bf16.mxu0 0
          %3962 = vmatpush1.bf16.xpose.msra.mxu0 0
          %3963 = vmatprep.subr.bf16.mxu0 0
          %3964 = vmatpush1.bf16.xpose.msra.mxu0 0
          %3965 = vmatprep.subr.bf16.mxu0 0
          %3966 = vmatpush1.bf16.xpose.msra.mxu0 0
          %3967 = vmatprep.subr.bf16.mxu0 0
          %3968 = vmatpush1.bf16.xpose.msra.mxu0 0
          %3969 = vmatprep.subr.bf16.mxu0 0
          %3970 = vmatpush1.bf16.xpose.msra.mxu0 0
          %3971 = vmatprep.subr.bf16.mxu0 0
          %3972 = vmatpush1.bf16.xpose.msra.mxu0 0
          %3973 = vmatprep.subr.bf16.mxu0 0
          %3974 = vmatpush1.bf16.xpose.msra.mxu0 0
          %3975 = vmatprep.subr.bf16.mxu0 0
          %3976 = vmatpush1.bf16.xpose.msra.mxu0 %v3959
          %3977 = vmatprep.subr.bf16.mxu0 0
          %3978 = vmatpush2.bf16.xpose.msra.mxu0 0
          %3979 = vmatprep.subr.bf16.mxu0 0
          %3980 = vmatpush2.bf16.xpose.msra.mxu0 0
          %3981 = vmatprep.subr.bf16.mxu0 0
          %3982 = vmatpush2.bf16.xpose.msra.mxu0 0
          %3983 = vmatprep.subr.bf16.mxu0 0
          %3984 = vmatpush2.bf16.xpose.msra.mxu0 0
          %3985 = vmatprep.subr.bf16.mxu0 0
          %3986 = vmatpush2.bf16.xpose.msra.mxu0 0
          %3987 = vmatprep.subr.bf16.mxu0 0
          %3988 = vmatpush2.bf16.xpose.msra.mxu0 0
          %3989 = vmatprep.subr.bf16.mxu0 0
          %3990 = vmatpush2.bf16.xpose.msra.mxu0 0
          %3991 = vmatprep.subr.bf16.mxu0 0
          %3992 = vmatpush2.bf16.xpose.msra.mxu0 0
          %3993 = vmatprep.mubr.bf16.mxu0 0
          %3994 = vmatmul.mubr.bf16.gmra.mxu0 %v3953
          %v3995 = vpop.f32.mrf.mxu0
          %v3996 = vadd.f32 0.0, %v3995
          %v3997 = vpop.f32.mrf.mxu0
          %v3998 = vpop.f32.mrf.mxu0
          %v3999 = vadd.f32 0.0, %v3998
          %v4000 = vpop.f32.mrf.mxu0
          %4001 = vmatprep.mubr.bf16.mxu0 0
          %4002 = vmatmul.mubr.bf16.gmra.mxu0 %v3956
          %v4003 = vpop.f32.mrf.mxu0
          %v4004 = vadd.f32 0.0, %v4003
          %v4005 = vpop.f32.mrf.mxu0
          %v4006 = vpop.f32.mrf.mxu0
          %v4007 = vadd.f32 0.0, %v4006
          %v4008 = vpop.f32.mrf.mxu0
          %4009 = vdwg.mxu0
          %v4011 = vsel %vm477, %v3708, 0
          %v4014 = vsel %vm477, %v3709, 0
          %v4017 = vsel %vm477, %v3718, 0
          %4019 = vmatprep.subr.bf16.mxu0 0
          %4020 = vmatpush1.bf16.xpose.msra.mxu0 0
          %4021 = vmatprep.subr.bf16.mxu0 0
          %4022 = vmatpush1.bf16.xpose.msra.mxu0 0
          %4023 = vmatprep.subr.bf16.mxu0 0
          %4024 = vmatpush1.bf16.xpose.msra.mxu0 0
          %4025 = vmatprep.subr.bf16.mxu0 0
          %4026 = vmatpush1.bf16.xpose.msra.mxu0 0
          %4027 = vmatprep.subr.bf16.mxu0 0
          %4028 = vmatpush1.bf16.xpose.msra.mxu0 0
          %4029 = vmatprep.subr.bf16.mxu0 0
          %4030 = vmatpush1.bf16.xpose.msra.mxu0 0
          %4031 = vmatprep.subr.bf16.mxu0 0
          %4032 = vmatpush1.bf16.xpose.msra.mxu0 0
          %4033 = vmatprep.subr.bf16.mxu0 0
          %4034 = vmatpush1.bf16.xpose.msra.mxu0 %v4017
          %4035 = vmatprep.subr.bf16.mxu0 0
          %4036 = vmatpush2.bf16.xpose.msra.mxu0 0
          %4037 = vmatprep.subr.bf16.mxu0 0
          %4038 = vmatpush2.bf16.xpose.msra.mxu0 0
          %4039 = vmatprep.subr.bf16.mxu0 0
          %4040 = vmatpush2.bf16.xpose.msra.mxu0 0
          %4041 = vmatprep.subr.bf16.mxu0 0
          %4042 = vmatpush2.bf16.xpose.msra.mxu0 0
          %4043 = vmatprep.subr.bf16.mxu0 0
          %4044 = vmatpush2.bf16.xpose.msra.mxu0 0
          %4045 = vmatprep.subr.bf16.mxu0 0
          %4046 = vmatpush2.bf16.xpose.msra.mxu0 0
          %4047 = vmatprep.subr.bf16.mxu0 0
          %4048 = vmatpush2.bf16.xpose.msra.mxu0 0
          %4049 = vmatprep.subr.bf16.mxu0 0
          %4050 = vmatpush2.bf16.xpose.msra.mxu0 0
          %4051 = vmatprep.mubr.bf16.mxu0 0
          %4052 = vmatmul.mubr.bf16.gmra.mxu0 %v4011
          %v4053 = vpop.f32.mrf.mxu0
          %v4054 = vadd.f32 0.0, %v4053
          %v4055 = vpop.f32.mrf.mxu0
          %v4056 = vpop.f32.mrf.mxu0
          %v4057 = vadd.f32 0.0, %v4056
          %v4058 = vpop.f32.mrf.mxu0
          %4059 = vmatprep.mubr.bf16.mxu0 0
          %4060 = vmatmul.mubr.bf16.gmra.mxu0 %v4014
          %v4061 = vpop.f32.mrf.mxu0
          %v4062 = vadd.f32 0.0, %v4061
          %v4063 = vpop.f32.mrf.mxu0
          %v4064 = vpop.f32.mrf.mxu0
          %v4065 = vadd.f32 0.0, %v4064
          %v4066 = vpop.f32.mrf.mxu0
          %4067 = vdwg.mxu0
          %v4069 = vsel %vm477, %v3710, 0
          %v4072 = vsel %vm477, %v3711, 0
          %v4075 = vsel %vm477, %v3719, 0
          %4077 = vmatprep.subr.bf16.mxu0 0
          %4078 = vmatpush1.bf16.xpose.msra.mxu0 0
          %4079 = vmatprep.subr.bf16.mxu0 0
          %4080 = vmatpush1.bf16.xpose.msra.mxu0 0
          %4081 = vmatprep.subr.bf16.mxu0 0
          %4082 = vmatpush1.bf16.xpose.msra.mxu0 0
          %4083 = vmatprep.subr.bf16.mxu0 0
          %4084 = vmatpush1.bf16.xpose.msra.mxu0 0
          %4085 = vmatprep.subr.bf16.mxu0 0
          %4086 = vmatpush1.bf16.xpose.msra.mxu0 0
          %4087 = vmatprep.subr.bf16.mxu0 0
          %4088 = vmatpush1.bf16.xpose.msra.mxu0 0
          %4089 = vmatprep.subr.bf16.mxu0 0
          %4090 = vmatpush1.bf16.xpose.msra.mxu0 0
          %4091 = vmatprep.subr.bf16.mxu0 0
          %4092 = vmatpush1.bf16.xpose.msra.mxu0 %v4075
          %4093 = vmatprep.subr.bf16.mxu0 0
          %4094 = vmatpush2.bf16.xpose.msra.mxu0 0
          %4095 = vmatprep.subr.bf16.mxu0 0
          %4096 = vmatpush2.bf16.xpose.msra.mxu0 0
          %4097 = vmatprep.subr.bf16.mxu0 0
          %4098 = vmatpush2.bf16.xpose.msra.mxu0 0
          %4099 = vmatprep.subr.bf16.mxu0 0
          %4100 = vmatpush2.bf16.xpose.msra.mxu0 0
          %4101 = vmatprep.subr.bf16.mxu0 0
          %4102 = vmatpush2.bf16.xpose.msra.mxu0 0
          %4103 = vmatprep.subr.bf16.mxu0 0
          %4104 = vmatpush2.bf16.xpose.msra.mxu0 0
          %4105 = vmatprep.subr.bf16.mxu0 0
          %4106 = vmatpush2.bf16.xpose.msra.mxu0 0
          %4107 = vmatprep.subr.bf16.mxu0 0
          %4108 = vmatpush2.bf16.xpose.msra.mxu0 0
          %4109 = vmatprep.mubr.bf16.mxu0 0
          %4110 = vmatmul.mubr.bf16.gmra.mxu0 %v4069
          %v4111 = vpop.f32.mrf.mxu0
          %v4112 = vadd.f32 0.0, %v4111
          %v4113 = vpop.f32.mrf.mxu0
          %v4114 = vpop.f32.mrf.mxu0
          %v4115 = vadd.f32 0.0, %v4114
          %v4116 = vpop.f32.mrf.mxu0
          %4117 = vmatprep.mubr.bf16.mxu0 0
          %4118 = vmatmul.mubr.bf16.gmra.mxu0 %v4072
          %v4119 = vpop.f32.mrf.mxu0
          %v4120 = vadd.f32 0.0, %v4119
          %v4121 = vpop.f32.mrf.mxu0
          %v4122 = vpop.f32.mrf.mxu0
          %v4123 = vadd.f32 0.0, %v4122
          %v4124 = vpop.f32.mrf.mxu0
          %4125 = vdwg.mxu0
          %v4126 = vsel %vm884, %v3764, 0.0
          %v4127 = vsel %vm884, %v3822, 0.0
          %v4128 = vadd.f32 %v4126, %v4127
          %v4129 = vsel %vm884, %v3880, 0.0
          %v4130 = vadd.f32 %v4128, %v4129
          %v4131 = vsel %vm884, %v3938, 0.0
          %v4132 = vadd.f32 %v4130, %v4131
          %v4133 = vsel %vm884, %v3996, 0.0
          %v4134 = vadd.f32 %v4132, %v4133
          %v4135 = vsel %vm884, %v4054, 0.0
          %v4136 = vadd.f32 %v4134, %v4135
          %v4137 = vsel %vm884, %v4112, 0.0
          %v4138 = vadd.f32 %v4136, %v4137
          %v4139 = vsel %vm884, %v3767, 0.0
          %v4140 = vsel %vm884, %v3825, 0.0
          %v4141 = vadd.f32 %v4139, %v4140
          %v4142 = vsel %vm884, %v3883, 0.0
          %v4143 = vadd.f32 %v4141, %v4142
          %v4144 = vsel %vm884, %v3941, 0.0
          %v4145 = vadd.f32 %v4143, %v4144
          %v4146 = vsel %vm884, %v3999, 0.0
          %v4147 = vadd.f32 %v4145, %v4146
          %v4148 = vsel %vm884, %v4057, 0.0
          %v4149 = vadd.f32 %v4147, %v4148
          %v4150 = vsel %vm884, %v4115, 0.0
          %v4151 = vadd.f32 %v4149, %v4150
          %v4152 = vsel %vm884, %v3772, 0.0
          %v4153 = vsel %vm884, %v3830, 0.0
          %v4154 = vadd.f32 %v4152, %v4153
          %v4155 = vsel %vm884, %v3888, 0.0
          %v4156 = vadd.f32 %v4154, %v4155
          %v4157 = vsel %vm884, %v3946, 0.0
          %v4158 = vadd.f32 %v4156, %v4157
          %v4159 = vsel %vm884, %v4004, 0.0
          %v4160 = vadd.f32 %v4158, %v4159
          %v4161 = vsel %vm884, %v4062, 0.0
          %v4162 = vadd.f32 %v4160, %v4161
          %v4163 = vsel %vm884, %v4120, 0.0
          %v4164 = vadd.f32 %v4162, %v4163
          %v4165 = vsel %vm924, %v3775, 0.0
          %v4166 = vsel %vm924, %v3833, 0.0
          %v4167 = vadd.f32 %v4165, %v4166
          %v4168 = vsel %vm924, %v3891, 0.0
          %v4169 = vadd.f32 %v4167, %v4168
          %v4170 = vsel %vm924, %v3949, 0.0
          %v4171 = vadd.f32 %v4169, %v4170
          %v4172 = vsel %vm924, %v4007, 0.0
          %v4173 = vadd.f32 %v4171, %v4172
          %v4174 = vsel %vm924, %v4065, 0.0
          %v4175 = vadd.f32 %v4173, %v4174
          %v4176 = vsel %vm924, %v4123, 0.0
          %v4177 = vadd.f32 %v4175, %v4176
          %v4178 = vadd.f32 %v3638, %v4138
          %v4179 = vadd.f32 %v3639, %v4151
          %v4180 = vadd.f32 %v3640, %v4164
          %v4181 = vadd.f32 %v3641, %v4177
          %v4182 = vmax.f32 %v4178, 0.0
          %v4183 = vmax.f32 %v4179, 0.0
          %v4184 = vmax.f32 %v4180, 0.0
          %v4185 = vmax.f32 %v4181, 0.0
          %s4186 = smul.u32 %s393, 32
          %s4187 = scalar_lea.vmem [#allocation2], %s4186
          %4188 = vst.msk [vmem:[%s4187] sm:$0xff] %vm884, %v4182
          %4189 = vst.msk [vmem:[%s4187 + $0x8] sm:$0xff] %vm884, %v4183
          %4190 = vst.msk [vmem:[%s4187 + $0x10] sm:$0xff] %vm884, %v4184
          %4191 = vst.msk [vmem:[%s4187 + $0x18] sm:$0x1f] %vm924, %v4185
        $region69: #{tpu_custom_call.1} parent=63 // loop_footer
          %s397 = sadd.s32 1, %s393
        $region70: #{tpu_custom_call.1} parent=63 // loop_footer_branch
          %392 = sbr.rel target = $region66
        $region71: #{tpu_custom_call.1} parent=63 // loop_exit
          _
        %v4192 = vld [vmem:[%s4] sm:$0x1]
        %v4194 = vlaneseq
        %v4195 = vshrl.u32 %v4194, 7
        %v4196 = vsub.s32 0, %v4195
        %v4197 = vrot.slane %v4192, %v4196
        loop: start=0, step=1, limit=13
        $region72: #{tpu_custom_call.1} parent=63 // loop_pre_header
          _
        $region73: #{tpu_custom_call.1} parent=63 // loop_header
          %s4200 = sphi 0, %s4204
          %p4201 = scmp.ge.s32.totalorder %s4200, 13
        $region74: #{tpu_custom_call.1} parent=63 // loop_header_branch
          %4203 = sbr.rel (%p4201) target = $region78
        $region75: #{tpu_custom_call.1} parent=63 // loop_body
          %s4205 = smul.u32 %s4200, 2
          %s4206 = smul.u32 %s4205, 32
          %s4207 = scalar_lea.vmem [#allocation2], %s4206
          %v4208 = vld [vmem:[%s4207] ss:$2 sm:$0xff]
          %s4209 = scalar_lea.vmem %s4207, 16 [#allocation2]
          %v4210 = vld [vmem:[%s4209] ss:$2 sm:$0x1f]
          %s4211 = scalar_lea.vmem %s4207, 32 [#allocation2]
          %v4212 = vld [vmem:[%s4211] ss:$2 sm:$0xff]
          %s4213 = scalar_lea.vmem %s4207, 48 [#allocation2]
          %v4214 = vld [vmem:[%s4213] ss:$2 sm:$0x1f]
          %s4215 = scalar_lea.vmem %s4207, 64 [#allocation2]
          %v4216 = vld [vmem:[%s4215] ss:$2 sm:$0xff]
          %s4217 = scalar_lea.vmem %s4207, 80 [#allocation2]
          %v4218 = vld [vmem:[%s4217] ss:$2 sm:$0x1f]
          %s4219 = scalar_lea.vmem %s4207, 96 [#allocation2]
          %v4220 = vld [vmem:[%s4219] ss:$2 sm:$0xff]
          %s4221 = scalar_lea.vmem %s4207, 112 [#allocation2]
          %v4222 = vld [vmem:[%s4221] ss:$2 sm:$0x1f]
          %s4223 = scalar_lea.vmem %s4207, 128 [#allocation2]
          %v4224 = vld [vmem:[%s4223] ss:$2 sm:$0xff]
          %s4225 = scalar_lea.vmem %s4207, 144 [#allocation2]
          %v4226 = vld [vmem:[%s4225] ss:$2 sm:$0x1f]
          %v4227 = vpack.c.bf16 %v4210, %v4208
          %v4228 = vpack.c.bf16 %v4214, %v4212
          %v4229 = vpack.c.bf16 %v4218, %v4216
          %v4230 = vpack.c.bf16 %v4222, %v4220
          %v4231 = vpack.c.bf16 %v4226, %v4224
          %v4232 = vld [vmem:[%s3] sm:$0xf]
          %v4233 = vld [vmem:[%s3 + $0x14] sm:$0xf]
          %v4234 = vld [vmem:[%s3 + $0x28] sm:$0xf]
          %v4235 = vld [vmem:[%s3 + $0x3c] sm:$0xf]
          %v4236 = vld [vmem:[%s3 + $0x50] sm:$0xf]
          %vm4237 = vcmask 64512
          %v4239 = vsel %vm4237, %v4227, 0
          %v4242 = vsel %vm4237, %v4232, 0
          %4244 = vmatprep.subr.bf16.mxu0 0
          %4245 = vmatpush1.bf16.xpose.msra.mxu0 0
          %4246 = vmatprep.subr.bf16.mxu0 0
          %4247 = vmatpush1.bf16.xpose.msra.mxu0 0
          %4248 = vmatprep.subr.bf16.mxu0 0
          %4249 = vmatpush1.bf16.xpose.msra.mxu0 0
          %4250 = vmatprep.subr.bf16.mxu0 0
          %4251 = vmatpush1.bf16.xpose.msra.mxu0 0
          %4252 = vmatprep.subr.bf16.mxu0 0
          %4253 = vmatpush1.bf16.xpose.msra.mxu0 0
          %4254 = vmatprep.subr.bf16.mxu0 0
          %4255 = vmatpush1.bf16.xpose.msra.mxu0 0
          %4256 = vmatprep.subr.bf16.mxu0 0
          %4257 = vmatpush1.bf16.xpose.msra.mxu0 0
          %4258 = vmatprep.subr.bf16.mxu0 0
          %4259 = vmatpush1.bf16.xpose.msra.mxu0 %v4242
          %4260 = vmatprep.subr.bf16.mxu0 0
          %4261 = vmatpush2.bf16.xpose.msra.mxu0 0
          %4262 = vmatprep.subr.bf16.mxu0 0
          %4263 = vmatpush2.bf16.xpose.msra.mxu0 0
          %4264 = vmatprep.subr.bf16.mxu0 0
          %4265 = vmatpush2.bf16.xpose.msra.mxu0 0
          %4266 = vmatprep.subr.bf16.mxu0 0
          %4267 = vmatpush2.bf16.xpose.msra.mxu0 0
          %4268 = vmatprep.subr.bf16.mxu0 0
          %4269 = vmatpush2.bf16.xpose.msra.mxu0 0
          %4270 = vmatprep.subr.bf16.mxu0 0
          %4271 = vmatpush2.bf16.xpose.msra.mxu0 0
          %4272 = vmatprep.subr.bf16.mxu0 0
          %4273 = vmatpush2.bf16.xpose.msra.mxu0 0
          %4274 = vmatprep.subr.bf16.mxu0 0
          %4275 = vmatpush2.bf16.xpose.msra.mxu0 0
          %4276 = vmatprep.mubr.bf16.mxu0 0
          %4277 = vmatmul.mubr.bf16.gmra.mxu0 %v4239
          %v4278 = vpop.f32.mrf.mxu0
          %v4279 = vadd.f32 0.0, %v4278
          %v4280 = vpop.f32.mrf.mxu0
          %v4281 = vpop.f32.mrf.mxu0
          %v4282 = vadd.f32 0.0, %v4281
          %v4283 = vpop.f32.mrf.mxu0
          %4284 = vdwg.mxu0
          %v4286 = vsel %vm4237, %v4228, 0
          %v4289 = vsel %vm4237, %v4233, 0
          %4291 = vmatprep.subr.bf16.mxu0 0
          %4292 = vmatpush1.bf16.xpose.msra.mxu0 0
          %4293 = vmatprep.subr.bf16.mxu0 0
          %4294 = vmatpush1.bf16.xpose.msra.mxu0 0
          %4295 = vmatprep.subr.bf16.mxu0 0
          %4296 = vmatpush1.bf16.xpose.msra.mxu0 0
          %4297 = vmatprep.subr.bf16.mxu0 0
          %4298 = vmatpush1.bf16.xpose.msra.mxu0 0
          %4299 = vmatprep.subr.bf16.mxu0 0
          %4300 = vmatpush1.bf16.xpose.msra.mxu0 0
          %4301 = vmatprep.subr.bf16.mxu0 0
          %4302 = vmatpush1.bf16.xpose.msra.mxu0 0
          %4303 = vmatprep.subr.bf16.mxu0 0
          %4304 = vmatpush1.bf16.xpose.msra.mxu0 0
          %4305 = vmatprep.subr.bf16.mxu0 0
          %4306 = vmatpush1.bf16.xpose.msra.mxu0 %v4289
          %4307 = vmatprep.subr.bf16.mxu0 0
          %4308 = vmatpush2.bf16.xpose.msra.mxu0 0
          %4309 = vmatprep.subr.bf16.mxu0 0
          %4310 = vmatpush2.bf16.xpose.msra.mxu0 0
          %4311 = vmatprep.subr.bf16.mxu0 0
          %4312 = vmatpush2.bf16.xpose.msra.mxu0 0
          %4313 = vmatprep.subr.bf16.mxu0 0
          %4314 = vmatpush2.bf16.xpose.msra.mxu0 0
          %4315 = vmatprep.subr.bf16.mxu0 0
          %4316 = vmatpush2.bf16.xpose.msra.mxu0 0
          %4317 = vmatprep.subr.bf16.mxu0 0
          %4318 = vmatpush2.bf16.xpose.msra.mxu0 0
          %4319 = vmatprep.subr.bf16.mxu0 0
          %4320 = vmatpush2.bf16.xpose.msra.mxu0 0
          %4321 = vmatprep.subr.bf16.mxu0 0
          %4322 = vmatpush2.bf16.xpose.msra.mxu0 0
          %4323 = vmatprep.mubr.bf16.mxu0 0
          %4324 = vmatmul.mubr.bf16.gmra.mxu0 %v4286
          %v4325 = vpop.f32.mrf.mxu0
          %v4326 = vadd.f32 0.0, %v4325
          %v4327 = vpop.f32.mrf.mxu0
          %v4328 = vpop.f32.mrf.mxu0
          %v4329 = vadd.f32 0.0, %v4328
          %v4330 = vpop.f32.mrf.mxu0
          %4331 = vdwg.mxu0
          %v4333 = vsel %vm4237, %v4229, 0
          %v4336 = vsel %vm4237, %v4234, 0
          %4338 = vmatprep.subr.bf16.mxu0 0
          %4339 = vmatpush1.bf16.xpose.msra.mxu0 0
          %4340 = vmatprep.subr.bf16.mxu0 0
          %4341 = vmatpush1.bf16.xpose.msra.mxu0 0
          %4342 = vmatprep.subr.bf16.mxu0 0
          %4343 = vmatpush1.bf16.xpose.msra.mxu0 0
          %4344 = vmatprep.subr.bf16.mxu0 0
          %4345 = vmatpush1.bf16.xpose.msra.mxu0 0
          %4346 = vmatprep.subr.bf16.mxu0 0
          %4347 = vmatpush1.bf16.xpose.msra.mxu0 0
          %4348 = vmatprep.subr.bf16.mxu0 0
          %4349 = vmatpush1.bf16.xpose.msra.mxu0 0
          %4350 = vmatprep.subr.bf16.mxu0 0
          %4351 = vmatpush1.bf16.xpose.msra.mxu0 0
          %4352 = vmatprep.subr.bf16.mxu0 0
          %4353 = vmatpush1.bf16.xpose.msra.mxu0 %v4336
          %4354 = vmatprep.subr.bf16.mxu0 0
          %4355 = vmatpush2.bf16.xpose.msra.mxu0 0
          %4356 = vmatprep.subr.bf16.mxu0 0
          %4357 = vmatpush2.bf16.xpose.msra.mxu0 0
          %4358 = vmatprep.subr.bf16.mxu0 0
          %4359 = vmatpush2.bf16.xpose.msra.mxu0 0
          %4360 = vmatprep.subr.bf16.mxu0 0
          %4361 = vmatpush2.bf16.xpose.msra.mxu0 0
          %4362 = vmatprep.subr.bf16.mxu0 0
          %4363 = vmatpush2.bf16.xpose.msra.mxu0 0
          %4364 = vmatprep.subr.bf16.mxu0 0
          %4365 = vmatpush2.bf16.xpose.msra.mxu0 0
          %4366 = vmatprep.subr.bf16.mxu0 0
          %4367 = vmatpush2.bf16.xpose.msra.mxu0 0
          %4368 = vmatprep.subr.bf16.mxu0 0
          %4369 = vmatpush2.bf16.xpose.msra.mxu0 0
          %4370 = vmatprep.mubr.bf16.mxu0 0
          %4371 = vmatmul.mubr.bf16.gmra.mxu0 %v4333
          %v4372 = vpop.f32.mrf.mxu0
          %v4373 = vadd.f32 0.0, %v4372
          %v4374 = vpop.f32.mrf.mxu0
          %v4375 = vpop.f32.mrf.mxu0
          %v4376 = vadd.f32 0.0, %v4375
          %v4377 = vpop.f32.mrf.mxu0
          %4378 = vdwg.mxu0
          %v4380 = vsel %vm4237, %v4230, 0
          %v4383 = vsel %vm4237, %v4235, 0
          %4385 = vmatprep.subr.bf16.mxu0 0
          %4386 = vmatpush1.bf16.xpose.msra.mxu0 0
          %4387 = vmatprep.subr.bf16.mxu0 0
          %4388 = vmatpush1.bf16.xpose.msra.mxu0 0
          %4389 = vmatprep.subr.bf16.mxu0 0
          %4390 = vmatpush1.bf16.xpose.msra.mxu0 0
          %4391 = vmatprep.subr.bf16.mxu0 0
          %4392 = vmatpush1.bf16.xpose.msra.mxu0 0
          %4393 = vmatprep.subr.bf16.mxu0 0
          %4394 = vmatpush1.bf16.xpose.msra.mxu0 0
          %4395 = vmatprep.subr.bf16.mxu0 0
          %4396 = vmatpush1.bf16.xpose.msra.mxu0 0
          %4397 = vmatprep.subr.bf16.mxu0 0
          %4398 = vmatpush1.bf16.xpose.msra.mxu0 0
          %4399 = vmatprep.subr.bf16.mxu0 0
          %4400 = vmatpush1.bf16.xpose.msra.mxu0 %v4383
          %4401 = vmatprep.subr.bf16.mxu0 0
          %4402 = vmatpush2.bf16.xpose.msra.mxu0 0
          %4403 = vmatprep.subr.bf16.mxu0 0
          %4404 = vmatpush2.bf16.xpose.msra.mxu0 0
          %4405 = vmatprep.subr.bf16.mxu0 0
          %4406 = vmatpush2.bf16.xpose.msra.mxu0 0
          %4407 = vmatprep.subr.bf16.mxu0 0
          %4408 = vmatpush2.bf16.xpose.msra.mxu0 0
          %4409 = vmatprep.subr.bf16.mxu0 0
          %4410 = vmatpush2.bf16.xpose.msra.mxu0 0
          %4411 = vmatprep.subr.bf16.mxu0 0
          %4412 = vmatpush2.bf16.xpose.msra.mxu0 0
          %4413 = vmatprep.subr.bf16.mxu0 0
          %4414 = vmatpush2.bf16.xpose.msra.mxu0 0
          %4415 = vmatprep.subr.bf16.mxu0 0
          %4416 = vmatpush2.bf16.xpose.msra.mxu0 0
          %4417 = vmatprep.mubr.bf16.mxu0 0
          %4418 = vmatmul.mubr.bf16.gmra.mxu0 %v4380
          %v4419 = vpop.f32.mrf.mxu0
          %v4420 = vadd.f32 0.0, %v4419
          %v4421 = vpop.f32.mrf.mxu0
          %v4422 = vpop.f32.mrf.mxu0
          %v4423 = vadd.f32 0.0, %v4422
          %v4424 = vpop.f32.mrf.mxu0
          %4425 = vdwg.mxu0
          %v4427 = vsel %vm4237, %v4231, 0
          %v4430 = vsel %vm4237, %v4236, 0
          %4432 = vmatprep.subr.bf16.mxu0 0
          %4433 = vmatpush1.bf16.xpose.msra.mxu0 0
          %4434 = vmatprep.subr.bf16.mxu0 0
          %4435 = vmatpush1.bf16.xpose.msra.mxu0 0
          %4436 = vmatprep.subr.bf16.mxu0 0
          %4437 = vmatpush1.bf16.xpose.msra.mxu0 0
          %4438 = vmatprep.subr.bf16.mxu0 0
          %4439 = vmatpush1.bf16.xpose.msra.mxu0 0
          %4440 = vmatprep.subr.bf16.mxu0 0
          %4441 = vmatpush1.bf16.xpose.msra.mxu0 0
          %4442 = vmatprep.subr.bf16.mxu0 0
          %4443 = vmatpush1.bf16.xpose.msra.mxu0 0
          %4444 = vmatprep.subr.bf16.mxu0 0
          %4445 = vmatpush1.bf16.xpose.msra.mxu0 0
          %4446 = vmatprep.subr.bf16.mxu0 0
          %4447 = vmatpush1.bf16.xpose.msra.mxu0 %v4430
          %4448 = vmatprep.subr.bf16.mxu0 0
          %4449 = vmatpush2.bf16.xpose.msra.mxu0 0
          %4450 = vmatprep.subr.bf16.mxu0 0
          %4451 = vmatpush2.bf16.xpose.msra.mxu0 0
          %4452 = vmatprep.subr.bf16.mxu0 0
          %4453 = vmatpush2.bf16.xpose.msra.mxu0 0
          %4454 = vmatprep.subr.bf16.mxu0 0
          %4455 = vmatpush2.bf16.xpose.msra.mxu0 0
          %4456 = vmatprep.subr.bf16.mxu0 0
          %4457 = vmatpush2.bf16.xpose.msra.mxu0 0
          %4458 = vmatprep.subr.bf16.mxu0 0
          %4459 = vmatpush2.bf16.xpose.msra.mxu0 0
          %4460 = vmatprep.subr.bf16.mxu0 0
          %4461 = vmatpush2.bf16.xpose.msra.mxu0 0
          %4462 = vmatprep.subr.bf16.mxu0 0
          %4463 = vmatpush2.bf16.xpose.msra.mxu0 0
          %4464 = vmatprep.mubr.bf16.mxu0 0
          %4465 = vmatmul.mubr.bf16.gmra.mxu0 %v4427
          %v4466 = vpop.f32.mrf.mxu0
          %v4467 = vadd.f32 0.0, %v4466
          %v4468 = vpop.f32.mrf.mxu0
          %v4469 = vpop.f32.mrf.mxu0
          %v4470 = vadd.f32 0.0, %v4469
          %v4471 = vpop.f32.mrf.mxu0
          %4472 = vdwg.mxu0
          %v4473 = vsel %vm4237, %v4279, 0.0
          %v4474 = vsel %vm4237, %v4326, 0.0
          %v4475 = vadd.f32 %v4473, %v4474
          %v4476 = vsel %vm4237, %v4373, 0.0
          %v4477 = vadd.f32 %v4475, %v4476
          %v4478 = vsel %vm4237, %v4420, 0.0
          %v4479 = vadd.f32 %v4477, %v4478
          %v4480 = vsel %vm4237, %v4467, 0.0
          %v4481 = vadd.f32 %v4479, %v4480
          %vm4482 = vcmask 61440
          %v4483 = vsel %vm4482, %v4282, 0.0
          %v4484 = vsel %vm4482, %v4329, 0.0
          %v4485 = vadd.f32 %v4483, %v4484
          %v4486 = vsel %vm4482, %v4376, 0.0
          %v4487 = vadd.f32 %v4485, %v4486
          %v4488 = vsel %vm4482, %v4423, 0.0
          %v4489 = vadd.f32 %v4487, %v4488
          %v4490 = vsel %vm4482, %v4470, 0.0
          %v4491 = vadd.f32 %v4489, %v4490
          %v4492 = vadd.f32 %v4197, %v4481
          %v4493 = vadd.f32 %v4197, %v4491
          %s4494 = scalar_lea.vmem %s4207, 1 [#allocation2]
          %v4495 = vld [vmem:[%s4494] ss:$2 sm:$0xff]
          %s4496 = scalar_lea.vmem %s4207, 17 [#allocation2]
          %v4497 = vld [vmem:[%s4496] ss:$2 sm:$0x1f]
          %s4498 = scalar_lea.vmem %s4207, 33 [#allocation2]
          %v4499 = vld [vmem:[%s4498] ss:$2 sm:$0xff]
          %s4500 = scalar_lea.vmem %s4207, 49 [#allocation2]
          %v4501 = vld [vmem:[%s4500] ss:$2 sm:$0x1f]
          %s4502 = scalar_lea.vmem %s4207, 65 [#allocation2]
          %v4503 = vld [vmem:[%s4502] ss:$2 sm:$0xff]
          %s4504 = scalar_lea.vmem %s4207, 81 [#allocation2]
          %v4505 = vld [vmem:[%s4504] ss:$2 sm:$0x1f]
          %s4506 = scalar_lea.vmem %s4207, 97 [#allocation2]
          %v4507 = vld [vmem:[%s4506] ss:$2 sm:$0xff]
          %s4508 = scalar_lea.vmem %s4207, 113 [#allocation2]
          %v4509 = vld [vmem:[%s4508] ss:$2 sm:$0x1f]
          %s4510 = scalar_lea.vmem %s4207, 129 [#allocation2]
          %v4511 = vld [vmem:[%s4510] ss:$2 sm:$0xff]
          %s4512 = scalar_lea.vmem %s4207, 145 [#allocation2]
          %v4513 = vld [vmem:[%s4512] ss:$2 sm:$0x1f]
          %v4514 = vpack.c.bf16 %v4497, %v4495
          %v4515 = vpack.c.bf16 %v4501, %v4499
          %v4516 = vpack.c.bf16 %v4505, %v4503
          %v4517 = vpack.c.bf16 %v4509, %v4507
          %v4518 = vpack.c.bf16 %v4513, %v4511
          %s4519 = scalar_lea.vmem %s3, 4
          %v4520 = vld [vmem:[%s4519] sm:$0xf]
          %v4521 = vld [vmem:[%s4519 + $0x14] sm:$0xf]
          %v4522 = vld [vmem:[%s4519 + $0x28] sm:$0xf]
          %v4523 = vld [vmem:[%s4519 + $0x3c] sm:$0xf]
          %v4524 = vld [vmem:[%s4519 + $0x50] sm:$0xf]
          %v4526 = vsel %vm4237, %v4514, 0
          %v4529 = vsel %vm4237, %v4520, 0
          %4531 = vmatprep.subr.bf16.mxu0 0
          %4532 = vmatpush1.bf16.xpose.msra.mxu0 0
          %4533 = vmatprep.subr.bf16.mxu0 0
          %4534 = vmatpush1.bf16.xpose.msra.mxu0 0
          %4535 = vmatprep.subr.bf16.mxu0 0
          %4536 = vmatpush1.bf16.xpose.msra.mxu0 0
          %4537 = vmatprep.subr.bf16.mxu0 0
          %4538 = vmatpush1.bf16.xpose.msra.mxu0 0
          %4539 = vmatprep.subr.bf16.mxu0 0
          %4540 = vmatpush1.bf16.xpose.msra.mxu0 0
          %4541 = vmatprep.subr.bf16.mxu0 0
          %4542 = vmatpush1.bf16.xpose.msra.mxu0 0
          %4543 = vmatprep.subr.bf16.mxu0 0
          %4544 = vmatpush1.bf16.xpose.msra.mxu0 0
          %4545 = vmatprep.subr.bf16.mxu0 0
          %4546 = vmatpush1.bf16.xpose.msra.mxu0 %v4529
          %4547 = vmatprep.subr.bf16.mxu0 0
          %4548 = vmatpush2.bf16.xpose.msra.mxu0 0
          %4549 = vmatprep.subr.bf16.mxu0 0
          %4550 = vmatpush2.bf16.xpose.msra.mxu0 0
          %4551 = vmatprep.subr.bf16.mxu0 0
          %4552 = vmatpush2.bf16.xpose.msra.mxu0 0
          %4553 = vmatprep.subr.bf16.mxu0 0
          %4554 = vmatpush2.bf16.xpose.msra.mxu0 0
          %4555 = vmatprep.subr.bf16.mxu0 0
          %4556 = vmatpush2.bf16.xpose.msra.mxu0 0
          %4557 = vmatprep.subr.bf16.mxu0 0
          %4558 = vmatpush2.bf16.xpose.msra.mxu0 0
          %4559 = vmatprep.subr.bf16.mxu0 0
          %4560 = vmatpush2.bf16.xpose.msra.mxu0 0
          %4561 = vmatprep.subr.bf16.mxu0 0
          %4562 = vmatpush2.bf16.xpose.msra.mxu0 0
          %4563 = vmatprep.mubr.bf16.mxu0 0
          %4564 = vmatmul.mubr.bf16.gmra.mxu0 %v4526
          %v4565 = vpop.f32.mrf.mxu0
          %v4566 = vadd.f32 0.0, %v4565
          %v4567 = vpop.f32.mrf.mxu0
          %v4568 = vpop.f32.mrf.mxu0
          %v4569 = vadd.f32 0.0, %v4568
          %v4570 = vpop.f32.mrf.mxu0
          %4571 = vdwg.mxu0
          %v4573 = vsel %vm4237, %v4515, 0
          %v4576 = vsel %vm4237, %v4521, 0
          %4578 = vmatprep.subr.bf16.mxu0 0
          %4579 = vmatpush1.bf16.xpose.msra.mxu0 0
          %4580 = vmatprep.subr.bf16.mxu0 0
          %4581 = vmatpush1.bf16.xpose.msra.mxu0 0
          %4582 = vmatprep.subr.bf16.mxu0 0
          %4583 = vmatpush1.bf16.xpose.msra.mxu0 0
          %4584 = vmatprep.subr.bf16.mxu0 0
          %4585 = vmatpush1.bf16.xpose.msra.mxu0 0
          %4586 = vmatprep.subr.bf16.mxu0 0
          %4587 = vmatpush1.bf16.xpose.msra.mxu0 0
          %4588 = vmatprep.subr.bf16.mxu0 0
          %4589 = vmatpush1.bf16.xpose.msra.mxu0 0
          %4590 = vmatprep.subr.bf16.mxu0 0
          %4591 = vmatpush1.bf16.xpose.msra.mxu0 0
          %4592 = vmatprep.subr.bf16.mxu0 0
          %4593 = vmatpush1.bf16.xpose.msra.mxu0 %v4576
          %4594 = vmatprep.subr.bf16.mxu0 0
          %4595 = vmatpush2.bf16.xpose.msra.mxu0 0
          %4596 = vmatprep.subr.bf16.mxu0 0
          %4597 = vmatpush2.bf16.xpose.msra.mxu0 0
          %4598 = vmatprep.subr.bf16.mxu0 0
          %4599 = vmatpush2.bf16.xpose.msra.mxu0 0
          %4600 = vmatprep.subr.bf16.mxu0 0
          %4601 = vmatpush2.bf16.xpose.msra.mxu0 0
          %4602 = vmatprep.subr.bf16.mxu0 0
          %4603 = vmatpush2.bf16.xpose.msra.mxu0 0
          %4604 = vmatprep.subr.bf16.mxu0 0
          %4605 = vmatpush2.bf16.xpose.msra.mxu0 0
          %4606 = vmatprep.subr.bf16.mxu0 0
          %4607 = vmatpush2.bf16.xpose.msra.mxu0 0
          %4608 = vmatprep.subr.bf16.mxu0 0
          %4609 = vmatpush2.bf16.xpose.msra.mxu0 0
          %4610 = vmatprep.mubr.bf16.mxu0 0
          %4611 = vmatmul.mubr.bf16.gmra.mxu0 %v4573
          %v4612 = vpop.f32.mrf.mxu0
          %v4613 = vadd.f32 0.0, %v4612
          %v4614 = vpop.f32.mrf.mxu0
          %v4615 = vpop.f32.mrf.mxu0
          %v4616 = vadd.f32 0.0, %v4615
          %v4617 = vpop.f32.mrf.mxu0
          %4618 = vdwg.mxu0
          %v4620 = vsel %vm4237, %v4516, 0
          %v4623 = vsel %vm4237, %v4522, 0
          %4625 = vmatprep.subr.bf16.mxu0 0
          %4626 = vmatpush1.bf16.xpose.msra.mxu0 0
          %4627 = vmatprep.subr.bf16.mxu0 0
          %4628 = vmatpush1.bf16.xpose.msra.mxu0 0
          %4629 = vmatprep.subr.bf16.mxu0 0
          %4630 = vmatpush1.bf16.xpose.msra.mxu0 0
          %4631 = vmatprep.subr.bf16.mxu0 0
          %4632 = vmatpush1.bf16.xpose.msra.mxu0 0
          %4633 = vmatprep.subr.bf16.mxu0 0
          %4634 = vmatpush1.bf16.xpose.msra.mxu0 0
          %4635 = vmatprep.subr.bf16.mxu0 0
          %4636 = vmatpush1.bf16.xpose.msra.mxu0 0
          %4637 = vmatprep.subr.bf16.mxu0 0
          %4638 = vmatpush1.bf16.xpose.msra.mxu0 0
          %4639 = vmatprep.subr.bf16.mxu0 0
          %4640 = vmatpush1.bf16.xpose.msra.mxu0 %v4623
          %4641 = vmatprep.subr.bf16.mxu0 0
          %4642 = vmatpush2.bf16.xpose.msra.mxu0 0
          %4643 = vmatprep.subr.bf16.mxu0 0
          %4644 = vmatpush2.bf16.xpose.msra.mxu0 0
          %4645 = vmatprep.subr.bf16.mxu0 0
          %4646 = vmatpush2.bf16.xpose.msra.mxu0 0
          %4647 = vmatprep.subr.bf16.mxu0 0
          %4648 = vmatpush2.bf16.xpose.msra.mxu0 0
          %4649 = vmatprep.subr.bf16.mxu0 0
          %4650 = vmatpush2.bf16.xpose.msra.mxu0 0
          %4651 = vmatprep.subr.bf16.mxu0 0
          %4652 = vmatpush2.bf16.xpose.msra.mxu0 0
          %4653 = vmatprep.subr.bf16.mxu0 0
          %4654 = vmatpush2.bf16.xpose.msra.mxu0 0
          %4655 = vmatprep.subr.bf16.mxu0 0
          %4656 = vmatpush2.bf16.xpose.msra.mxu0 0
          %4657 = vmatprep.mubr.bf16.mxu0 0
          %4658 = vmatmul.mubr.bf16.gmra.mxu0 %v4620
          %v4659 = vpop.f32.mrf.mxu0
          %v4660 = vadd.f32 0.0, %v4659
          %v4661 = vpop.f32.mrf.mxu0
          %v4662 = vpop.f32.mrf.mxu0
          %v4663 = vadd.f32 0.0, %v4662
          %v4664 = vpop.f32.mrf.mxu0
          %4665 = vdwg.mxu0
          %v4667 = vsel %vm4237, %v4517, 0
          %v4670 = vsel %vm4237, %v4523, 0
          %4672 = vmatprep.subr.bf16.mxu0 0
          %4673 = vmatpush1.bf16.xpose.msra.mxu0 0
          %4674 = vmatprep.subr.bf16.mxu0 0
          %4675 = vmatpush1.bf16.xpose.msra.mxu0 0
          %4676 = vmatprep.subr.bf16.mxu0 0
          %4677 = vmatpush1.bf16.xpose.msra.mxu0 0
          %4678 = vmatprep.subr.bf16.mxu0 0
          %4679 = vmatpush1.bf16.xpose.msra.mxu0 0
          %4680 = vmatprep.subr.bf16.mxu0 0
          %4681 = vmatpush1.bf16.xpose.msra.mxu0 0
          %4682 = vmatprep.subr.bf16.mxu0 0
          %4683 = vmatpush1.bf16.xpose.msra.mxu0 0
          %4684 = vmatprep.subr.bf16.mxu0 0
          %4685 = vmatpush1.bf16.xpose.msra.mxu0 0
          %4686 = vmatprep.subr.bf16.mxu0 0
          %4687 = vmatpush1.bf16.xpose.msra.mxu0 %v4670
          %4688 = vmatprep.subr.bf16.mxu0 0
          %4689 = vmatpush2.bf16.xpose.msra.mxu0 0
          %4690 = vmatprep.subr.bf16.mxu0 0
          %4691 = vmatpush2.bf16.xpose.msra.mxu0 0
          %4692 = vmatprep.subr.bf16.mxu0 0
          %4693 = vmatpush2.bf16.xpose.msra.mxu0 0
          %4694 = vmatprep.subr.bf16.mxu0 0
          %4695 = vmatpush2.bf16.xpose.msra.mxu0 0
          %4696 = vmatprep.subr.bf16.mxu0 0
          %4697 = vmatpush2.bf16.xpose.msra.mxu0 0
          %4698 = vmatprep.subr.bf16.mxu0 0
          %4699 = vmatpush2.bf16.xpose.msra.mxu0 0
          %4700 = vmatprep.subr.bf16.mxu0 0
          %4701 = vmatpush2.bf16.xpose.msra.mxu0 0
          %4702 = vmatprep.subr.bf16.mxu0 0
          %4703 = vmatpush2.bf16.xpose.msra.mxu0 0
          %4704 = vmatprep.mubr.bf16.mxu0 0
          %4705 = vmatmul.mubr.bf16.gmra.mxu0 %v4667
          %v4706 = vpop.f32.mrf.mxu0
          %v4707 = vadd.f32 0.0, %v4706
          %v4708 = vpop.f32.mrf.mxu0
          %v4709 = vpop.f32.mrf.mxu0
          %v4710 = vadd.f32 0.0, %v4709
          %v4711 = vpop.f32.mrf.mxu0
          %4712 = vdwg.mxu0
          %v4714 = vsel %vm4237, %v4518, 0
          %v4717 = vsel %vm4237, %v4524, 0
          %4719 = vmatprep.subr.bf16.mxu0 0
          %4720 = vmatpush1.bf16.xpose.msra.mxu0 0
          %4721 = vmatprep.subr.bf16.mxu0 0
          %4722 = vmatpush1.bf16.xpose.msra.mxu0 0
          %4723 = vmatprep.subr.bf16.mxu0 0
          %4724 = vmatpush1.bf16.xpose.msra.mxu0 0
          %4725 = vmatprep.subr.bf16.mxu0 0
          %4726 = vmatpush1.bf16.xpose.msra.mxu0 0
          %4727 = vmatprep.subr.bf16.mxu0 0
          %4728 = vmatpush1.bf16.xpose.msra.mxu0 0
          %4729 = vmatprep.subr.bf16.mxu0 0
          %4730 = vmatpush1.bf16.xpose.msra.mxu0 0
          %4731 = vmatprep.subr.bf16.mxu0 0
          %4732 = vmatpush1.bf16.xpose.msra.mxu0 0
          %4733 = vmatprep.subr.bf16.mxu0 0
          %4734 = vmatpush1.bf16.xpose.msra.mxu0 %v4717
          %4735 = vmatprep.subr.bf16.mxu0 0
          %4736 = vmatpush2.bf16.xpose.msra.mxu0 0
          %4737 = vmatprep.subr.bf16.mxu0 0
          %4738 = vmatpush2.bf16.xpose.msra.mxu0 0
          %4739 = vmatprep.subr.bf16.mxu0 0
          %4740 = vmatpush2.bf16.xpose.msra.mxu0 0
          %4741 = vmatprep.subr.bf16.mxu0 0
          %4742 = vmatpush2.bf16.xpose.msra.mxu0 0
          %4743 = vmatprep.subr.bf16.mxu0 0
          %4744 = vmatpush2.bf16.xpose.msra.mxu0 0
          %4745 = vmatprep.subr.bf16.mxu0 0
          %4746 = vmatpush2.bf16.xpose.msra.mxu0 0
          %4747 = vmatprep.subr.bf16.mxu0 0
          %4748 = vmatpush2.bf16.xpose.msra.mxu0 0
          %4749 = vmatprep.subr.bf16.mxu0 0
          %4750 = vmatpush2.bf16.xpose.msra.mxu0 0
          %4751 = vmatprep.mubr.bf16.mxu0 0
          %4752 = vmatmul.mubr.bf16.gmra.mxu0 %v4714
          %v4753 = vpop.f32.mrf.mxu0
          %v4754 = vadd.f32 0.0, %v4753
          %v4755 = vpop.f32.mrf.mxu0
          %v4756 = vpop.f32.mrf.mxu0
          %v4757 = vadd.f32 0.0, %v4756
          %v4758 = vpop.f32.mrf.mxu0
          %4759 = vdwg.mxu0
          %v4760 = vsel %vm4237, %v4566, 0.0
          %v4761 = vsel %vm4237, %v4613, 0.0
          %v4762 = vadd.f32 %v4760, %v4761
          %v4763 = vsel %vm4237, %v4660, 0.0
          %v4764 = vadd.f32 %v4762, %v4763
          %v4765 = vsel %vm4237, %v4707, 0.0
          %v4766 = vadd.f32 %v4764, %v4765
          %v4767 = vsel %vm4237, %v4754, 0.0
          %v4768 = vadd.f32 %v4766, %v4767
          %v4769 = vsel %vm4482, %v4569, 0.0
          %v4770 = vsel %vm4482, %v4616, 0.0
          %v4771 = vadd.f32 %v4769, %v4770
          %v4772 = vsel %vm4482, %v4663, 0.0
          %v4773 = vadd.f32 %v4771, %v4772
          %v4774 = vsel %vm4482, %v4710, 0.0
          %v4775 = vadd.f32 %v4773, %v4774
          %v4776 = vsel %vm4482, %v4757, 0.0
          %v4777 = vadd.f32 %v4775, %v4776
          %v4778 = vadd.f32 %v4492, %v4768
          %v4779 = vadd.f32 %v4493, %v4777
          %s4780 = scalar_lea.vmem %s4207, 2 [#allocation2]
          %v4781 = vld [vmem:[%s4780] ss:$2 sm:$0xff]
          %s4782 = scalar_lea.vmem %s4207, 18 [#allocation2]
          %v4783 = vld [vmem:[%s4782] ss:$2 sm:$0x1f]
          %s4784 = scalar_lea.vmem %s4207, 34 [#allocation2]
          %v4785 = vld [vmem:[%s4784] ss:$2 sm:$0xff]
          %s4786 = scalar_lea.vmem %s4207, 50 [#allocation2]
          %v4787 = vld [vmem:[%s4786] ss:$2 sm:$0x1f]
          %s4788 = scalar_lea.vmem %s4207, 66 [#allocation2]
          %v4789 = vld [vmem:[%s4788] ss:$2 sm:$0xff]
          %s4790 = scalar_lea.vmem %s4207, 82 [#allocation2]
          %v4791 = vld [vmem:[%s4790] ss:$2 sm:$0x1f]
          %s4792 = scalar_lea.vmem %s4207, 98 [#allocation2]
          %v4793 = vld [vmem:[%s4792] ss:$2 sm:$0xff]
          %s4794 = scalar_lea.vmem %s4207, 114 [#allocation2]
          %v4795 = vld [vmem:[%s4794] ss:$2 sm:$0x1f]
          %s4796 = scalar_lea.vmem %s4207, 130 [#allocation2]
          %v4797 = vld [vmem:[%s4796] ss:$2 sm:$0xff]
          %s4798 = scalar_lea.vmem %s4207, 146 [#allocation2]
          %v4799 = vld [vmem:[%s4798] ss:$2 sm:$0x1f]
          %v4800 = vpack.c.bf16 %v4783, %v4781
          %v4801 = vpack.c.bf16 %v4787, %v4785
          %v4802 = vpack.c.bf16 %v4791, %v4789
          %v4803 = vpack.c.bf16 %v4795, %v4793
          %v4804 = vpack.c.bf16 %v4799, %v4797
          %s4805 = scalar_lea.vmem %s3, 8
          %v4806 = vld [vmem:[%s4805] sm:$0xf]
          %v4807 = vld [vmem:[%s4805 + $0x14] sm:$0xf]
          %v4808 = vld [vmem:[%s4805 + $0x28] sm:$0xf]
          %v4809 = vld [vmem:[%s4805 + $0x3c] sm:$0xf]
          %v4810 = vld [vmem:[%s4805 + $0x50] sm:$0xf]
          %v4812 = vsel %vm4237, %v4800, 0
          %v4815 = vsel %vm4237, %v4806, 0
          %4817 = vmatprep.subr.bf16.mxu0 0
          %4818 = vmatpush1.bf16.xpose.msra.mxu0 0
          %4819 = vmatprep.subr.bf16.mxu0 0
          %4820 = vmatpush1.bf16.xpose.msra.mxu0 0
          %4821 = vmatprep.subr.bf16.mxu0 0
          %4822 = vmatpush1.bf16.xpose.msra.mxu0 0
          %4823 = vmatprep.subr.bf16.mxu0 0
          %4824 = vmatpush1.bf16.xpose.msra.mxu0 0
          %4825 = vmatprep.subr.bf16.mxu0 0
          %4826 = vmatpush1.bf16.xpose.msra.mxu0 0
          %4827 = vmatprep.subr.bf16.mxu0 0
          %4828 = vmatpush1.bf16.xpose.msra.mxu0 0
          %4829 = vmatprep.subr.bf16.mxu0 0
          %4830 = vmatpush1.bf16.xpose.msra.mxu0 0
          %4831 = vmatprep.subr.bf16.mxu0 0
          %4832 = vmatpush1.bf16.xpose.msra.mxu0 %v4815
          %4833 = vmatprep.subr.bf16.mxu0 0
          %4834 = vmatpush2.bf16.xpose.msra.mxu0 0
          %4835 = vmatprep.subr.bf16.mxu0 0
          %4836 = vmatpush2.bf16.xpose.msra.mxu0 0
          %4837 = vmatprep.subr.bf16.mxu0 0
          %4838 = vmatpush2.bf16.xpose.msra.mxu0 0
          %4839 = vmatprep.subr.bf16.mxu0 0
          %4840 = vmatpush2.bf16.xpose.msra.mxu0 0
          %4841 = vmatprep.subr.bf16.mxu0 0
          %4842 = vmatpush2.bf16.xpose.msra.mxu0 0
          %4843 = vmatprep.subr.bf16.mxu0 0
          %4844 = vmatpush2.bf16.xpose.msra.mxu0 0
          %4845 = vmatprep.subr.bf16.mxu0 0
          %4846 = vmatpush2.bf16.xpose.msra.mxu0 0
          %4847 = vmatprep.subr.bf16.mxu0 0
          %4848 = vmatpush2.bf16.xpose.msra.mxu0 0
          %4849 = vmatprep.mubr.bf16.mxu0 0
          %4850 = vmatmul.mubr.bf16.gmra.mxu0 %v4812
          %v4851 = vpop.f32.mrf.mxu0
          %v4852 = vadd.f32 0.0, %v4851
          %v4853 = vpop.f32.mrf.mxu0
          %v4854 = vpop.f32.mrf.mxu0
          %v4855 = vadd.f32 0.0, %v4854
          %v4856 = vpop.f32.mrf.mxu0
          %4857 = vdwg.mxu0
          %v4859 = vsel %vm4237, %v4801, 0
          %v4862 = vsel %vm4237, %v4807, 0
          %4864 = vmatprep.subr.bf16.mxu0 0
          %4865 = vmatpush1.bf16.xpose.msra.mxu0 0
          %4866 = vmatprep.subr.bf16.mxu0 0
          %4867 = vmatpush1.bf16.xpose.msra.mxu0 0
          %4868 = vmatprep.subr.bf16.mxu0 0
          %4869 = vmatpush1.bf16.xpose.msra.mxu0 0
          %4870 = vmatprep.subr.bf16.mxu0 0
          %4871 = vmatpush1.bf16.xpose.msra.mxu0 0
          %4872 = vmatprep.subr.bf16.mxu0 0
          %4873 = vmatpush1.bf16.xpose.msra.mxu0 0
          %4874 = vmatprep.subr.bf16.mxu0 0
          %4875 = vmatpush1.bf16.xpose.msra.mxu0 0
          %4876 = vmatprep.subr.bf16.mxu0 0
          %4877 = vmatpush1.bf16.xpose.msra.mxu0 0
          %4878 = vmatprep.subr.bf16.mxu0 0
          %4879 = vmatpush1.bf16.xpose.msra.mxu0 %v4862
          %4880 = vmatprep.subr.bf16.mxu0 0
          %4881 = vmatpush2.bf16.xpose.msra.mxu0 0
          %4882 = vmatprep.subr.bf16.mxu0 0
          %4883 = vmatpush2.bf16.xpose.msra.mxu0 0
          %4884 = vmatprep.subr.bf16.mxu0 0
          %4885 = vmatpush2.bf16.xpose.msra.mxu0 0
          %4886 = vmatprep.subr.bf16.mxu0 0
          %4887 = vmatpush2.bf16.xpose.msra.mxu0 0
          %4888 = vmatprep.subr.bf16.mxu0 0
          %4889 = vmatpush2.bf16.xpose.msra.mxu0 0
          %4890 = vmatprep.subr.bf16.mxu0 0
          %4891 = vmatpush2.bf16.xpose.msra.mxu0 0
          %4892 = vmatprep.subr.bf16.mxu0 0
          %4893 = vmatpush2.bf16.xpose.msra.mxu0 0
          %4894 = vmatprep.subr.bf16.mxu0 0
          %4895 = vmatpush2.bf16.xpose.msra.mxu0 0
          %4896 = vmatprep.mubr.bf16.mxu0 0
          %4897 = vmatmul.mubr.bf16.gmra.mxu0 %v4859
          %v4898 = vpop.f32.mrf.mxu0
          %v4899 = vadd.f32 0.0, %v4898
          %v4900 = vpop.f32.mrf.mxu0
          %v4901 = vpop.f32.mrf.mxu0
          %v4902 = vadd.f32 0.0, %v4901
          %v4903 = vpop.f32.mrf.mxu0
          %4904 = vdwg.mxu0
          %v4906 = vsel %vm4237, %v4802, 0
          %v4909 = vsel %vm4237, %v4808, 0
          %4911 = vmatprep.subr.bf16.mxu0 0
          %4912 = vmatpush1.bf16.xpose.msra.mxu0 0
          %4913 = vmatprep.subr.bf16.mxu0 0
          %4914 = vmatpush1.bf16.xpose.msra.mxu0 0
          %4915 = vmatprep.subr.bf16.mxu0 0
          %4916 = vmatpush1.bf16.xpose.msra.mxu0 0
          %4917 = vmatprep.subr.bf16.mxu0 0
          %4918 = vmatpush1.bf16.xpose.msra.mxu0 0
          %4919 = vmatprep.subr.bf16.mxu0 0
          %4920 = vmatpush1.bf16.xpose.msra.mxu0 0
          %4921 = vmatprep.subr.bf16.mxu0 0
          %4922 = vmatpush1.bf16.xpose.msra.mxu0 0
          %4923 = vmatprep.subr.bf16.mxu0 0
          %4924 = vmatpush1.bf16.xpose.msra.mxu0 0
          %4925 = vmatprep.subr.bf16.mxu0 0
          %4926 = vmatpush1.bf16.xpose.msra.mxu0 %v4909
          %4927 = vmatprep.subr.bf16.mxu0 0
          %4928 = vmatpush2.bf16.xpose.msra.mxu0 0
          %4929 = vmatprep.subr.bf16.mxu0 0
          %4930 = vmatpush2.bf16.xpose.msra.mxu0 0
          %4931 = vmatprep.subr.bf16.mxu0 0
          %4932 = vmatpush2.bf16.xpose.msra.mxu0 0
          %4933 = vmatprep.subr.bf16.mxu0 0
          %4934 = vmatpush2.bf16.xpose.msra.mxu0 0
          %4935 = vmatprep.subr.bf16.mxu0 0
          %4936 = vmatpush2.bf16.xpose.msra.mxu0 0
          %4937 = vmatprep.subr.bf16.mxu0 0
          %4938 = vmatpush2.bf16.xpose.msra.mxu0 0
          %4939 = vmatprep.subr.bf16.mxu0 0
          %4940 = vmatpush2.bf16.xpose.msra.mxu0 0
          %4941 = vmatprep.subr.bf16.mxu0 0
          %4942 = vmatpush2.bf16.xpose.msra.mxu0 0
          %4943 = vmatprep.mubr.bf16.mxu0 0
          %4944 = vmatmul.mubr.bf16.gmra.mxu0 %v4906
          %v4945 = vpop.f32.mrf.mxu0
          %v4946 = vadd.f32 0.0, %v4945
          %v4947 = vpop.f32.mrf.mxu0
          %v4948 = vpop.f32.mrf.mxu0
          %v4949 = vadd.f32 0.0, %v4948
          %v4950 = vpop.f32.mrf.mxu0
          %4951 = vdwg.mxu0
          %v4953 = vsel %vm4237, %v4803, 0
          %v4956 = vsel %vm4237, %v4809, 0
          %4958 = vmatprep.subr.bf16.mxu0 0
          %4959 = vmatpush1.bf16.xpose.msra.mxu0 0
          %4960 = vmatprep.subr.bf16.mxu0 0
          %4961 = vmatpush1.bf16.xpose.msra.mxu0 0
          %4962 = vmatprep.subr.bf16.mxu0 0
          %4963 = vmatpush1.bf16.xpose.msra.mxu0 0
          %4964 = vmatprep.subr.bf16.mxu0 0
          %4965 = vmatpush1.bf16.xpose.msra.mxu0 0
          %4966 = vmatprep.subr.bf16.mxu0 0
          %4967 = vmatpush1.bf16.xpose.msra.mxu0 0
          %4968 = vmatprep.subr.bf16.mxu0 0
          %4969 = vmatpush1.bf16.xpose.msra.mxu0 0
          %4970 = vmatprep.subr.bf16.mxu0 0
          %4971 = vmatpush1.bf16.xpose.msra.mxu0 0
          %4972 = vmatprep.subr.bf16.mxu0 0
          %4973 = vmatpush1.bf16.xpose.msra.mxu0 %v4956
          %4974 = vmatprep.subr.bf16.mxu0 0
          %4975 = vmatpush2.bf16.xpose.msra.mxu0 0
          %4976 = vmatprep.subr.bf16.mxu0 0
          %4977 = vmatpush2.bf16.xpose.msra.mxu0 0
          %4978 = vmatprep.subr.bf16.mxu0 0
          %4979 = vmatpush2.bf16.xpose.msra.mxu0 0
          %4980 = vmatprep.subr.bf16.mxu0 0
          %4981 = vmatpush2.bf16.xpose.msra.mxu0 0
          %4982 = vmatprep.subr.bf16.mxu0 0
          %4983 = vmatpush2.bf16.xpose.msra.mxu0 0
          %4984 = vmatprep.subr.bf16.mxu0 0
          %4985 = vmatpush2.bf16.xpose.msra.mxu0 0
          %4986 = vmatprep.subr.bf16.mxu0 0
          %4987 = vmatpush2.bf16.xpose.msra.mxu0 0
          %4988 = vmatprep.subr.bf16.mxu0 0
          %4989 = vmatpush2.bf16.xpose.msra.mxu0 0
          %4990 = vmatprep.mubr.bf16.mxu0 0
          %4991 = vmatmul.mubr.bf16.gmra.mxu0 %v4953
          %v4992 = vpop.f32.mrf.mxu0
          %v4993 = vadd.f32 0.0, %v4992
          %v4994 = vpop.f32.mrf.mxu0
          %v4995 = vpop.f32.mrf.mxu0
          %v4996 = vadd.f32 0.0, %v4995
          %v4997 = vpop.f32.mrf.mxu0
          %4998 = vdwg.mxu0
          %v5000 = vsel %vm4237, %v4804, 0
          %v5003 = vsel %vm4237, %v4810, 0
          %5005 = vmatprep.subr.bf16.mxu0 0
          %5006 = vmatpush1.bf16.xpose.msra.mxu0 0
          %5007 = vmatprep.subr.bf16.mxu0 0
          %5008 = vmatpush1.bf16.xpose.msra.mxu0 0
          %5009 = vmatprep.subr.bf16.mxu0 0
          %5010 = vmatpush1.bf16.xpose.msra.mxu0 0
          %5011 = vmatprep.subr.bf16.mxu0 0
          %5012 = vmatpush1.bf16.xpose.msra.mxu0 0
          %5013 = vmatprep.subr.bf16.mxu0 0
          %5014 = vmatpush1.bf16.xpose.msra.mxu0 0
          %5015 = vmatprep.subr.bf16.mxu0 0
          %5016 = vmatpush1.bf16.xpose.msra.mxu0 0
          %5017 = vmatprep.subr.bf16.mxu0 0
          %5018 = vmatpush1.bf16.xpose.msra.mxu0 0
          %5019 = vmatprep.subr.bf16.mxu0 0
          %5020 = vmatpush1.bf16.xpose.msra.mxu0 %v5003
          %5021 = vmatprep.subr.bf16.mxu0 0
          %5022 = vmatpush2.bf16.xpose.msra.mxu0 0
          %5023 = vmatprep.subr.bf16.mxu0 0
          %5024 = vmatpush2.bf16.xpose.msra.mxu0 0
          %5025 = vmatprep.subr.bf16.mxu0 0
          %5026 = vmatpush2.bf16.xpose.msra.mxu0 0
          %5027 = vmatprep.subr.bf16.mxu0 0
          %5028 = vmatpush2.bf16.xpose.msra.mxu0 0
          %5029 = vmatprep.subr.bf16.mxu0 0
          %5030 = vmatpush2.bf16.xpose.msra.mxu0 0
          %5031 = vmatprep.subr.bf16.mxu0 0
          %5032 = vmatpush2.bf16.xpose.msra.mxu0 0
          %5033 = vmatprep.subr.bf16.mxu0 0
          %5034 = vmatpush2.bf16.xpose.msra.mxu0 0
          %5035 = vmatprep.subr.bf16.mxu0 0
          %5036 = vmatpush2.bf16.xpose.msra.mxu0 0
          %5037 = vmatprep.mubr.bf16.mxu0 0
          %5038 = vmatmul.mubr.bf16.gmra.mxu0 %v5000
          %v5039 = vpop.f32.mrf.mxu0
          %v5040 = vadd.f32 0.0, %v5039
          %v5041 = vpop.f32.mrf.mxu0
          %v5042 = vpop.f32.mrf.mxu0
          %v5043 = vadd.f32 0.0, %v5042
          %v5044 = vpop.f32.mrf.mxu0
          %5045 = vdwg.mxu0
          %v5046 = vsel %vm4237, %v4852, 0.0
          %v5047 = vsel %vm4237, %v4899, 0.0
          %v5048 = vadd.f32 %v5046, %v5047
          %v5049 = vsel %vm4237, %v4946, 0.0
          %v5050 = vadd.f32 %v5048, %v5049
          %v5051 = vsel %vm4237, %v4993, 0.0
          %v5052 = vadd.f32 %v5050, %v5051
          %v5053 = vsel %vm4237, %v5040, 0.0
          %v5054 = vadd.f32 %v5052, %v5053
          %v5055 = vsel %vm4482, %v4855, 0.0
          %v5056 = vsel %vm4482, %v4902, 0.0
          %v5057 = vadd.f32 %v5055, %v5056
          %v5058 = vsel %vm4482, %v4949, 0.0
          %v5059 = vadd.f32 %v5057, %v5058
          %v5060 = vsel %vm4482, %v4996, 0.0
          %v5061 = vadd.f32 %v5059, %v5060
          %v5062 = vsel %vm4482, %v5043, 0.0
          %v5063 = vadd.f32 %v5061, %v5062
          %v5064 = vadd.f32 %v4778, %v5054
          %v5065 = vadd.f32 %v4779, %v5063
          %s5066 = scalar_lea.vmem %s4207, 3 [#allocation2]
          %v5067 = vld [vmem:[%s5066] ss:$2 sm:$0xff]
          %s5068 = scalar_lea.vmem %s4207, 19 [#allocation2]
          %v5069 = vld [vmem:[%s5068] ss:$2 sm:$0x1f]
          %s5070 = scalar_lea.vmem %s4207, 35 [#allocation2]
          %v5071 = vld [vmem:[%s5070] ss:$2 sm:$0xff]
          %s5072 = scalar_lea.vmem %s4207, 51 [#allocation2]
          %v5073 = vld [vmem:[%s5072] ss:$2 sm:$0x1f]
          %s5074 = scalar_lea.vmem %s4207, 67 [#allocation2]
          %v5075 = vld [vmem:[%s5074] ss:$2 sm:$0xff]
          %s5076 = scalar_lea.vmem %s4207, 83 [#allocation2]
          %v5077 = vld [vmem:[%s5076] ss:$2 sm:$0x1f]
          %s5078 = scalar_lea.vmem %s4207, 99 [#allocation2]
          %v5079 = vld [vmem:[%s5078] ss:$2 sm:$0xff]
          %s5080 = scalar_lea.vmem %s4207, 115 [#allocation2]
          %v5081 = vld [vmem:[%s5080] ss:$2 sm:$0x1f]
          %s5082 = scalar_lea.vmem %s4207, 131 [#allocation2]
          %v5083 = vld [vmem:[%s5082] ss:$2 sm:$0xff]
          %s5084 = scalar_lea.vmem %s4207, 147 [#allocation2]
          %v5085 = vld [vmem:[%s5084] ss:$2 sm:$0x1f]
          %v5086 = vpack.c.bf16 %v5069, %v5067
          %v5087 = vpack.c.bf16 %v5073, %v5071
          %v5088 = vpack.c.bf16 %v5077, %v5075
          %v5089 = vpack.c.bf16 %v5081, %v5079
          %v5090 = vpack.c.bf16 %v5085, %v5083
          %s5091 = scalar_lea.vmem %s3, 12
          %v5092 = vld [vmem:[%s5091] sm:$0xf]
          %v5093 = vld [vmem:[%s5091 + $0x14] sm:$0xf]
          %v5094 = vld [vmem:[%s5091 + $0x28] sm:$0xf]
          %v5095 = vld [vmem:[%s5091 + $0x3c] sm:$0xf]
          %v5096 = vld [vmem:[%s5091 + $0x50] sm:$0xf]
          %v5098 = vsel %vm4237, %v5086, 0
          %v5101 = vsel %vm4237, %v5092, 0
          %5103 = vmatprep.subr.bf16.mxu0 0
          %5104 = vmatpush1.bf16.xpose.msra.mxu0 0
          %5105 = vmatprep.subr.bf16.mxu0 0
          %5106 = vmatpush1.bf16.xpose.msra.mxu0 0
          %5107 = vmatprep.subr.bf16.mxu0 0
          %5108 = vmatpush1.bf16.xpose.msra.mxu0 0
          %5109 = vmatprep.subr.bf16.mxu0 0
          %5110 = vmatpush1.bf16.xpose.msra.mxu0 0
          %5111 = vmatprep.subr.bf16.mxu0 0
          %5112 = vmatpush1.bf16.xpose.msra.mxu0 0
          %5113 = vmatprep.subr.bf16.mxu0 0
          %5114 = vmatpush1.bf16.xpose.msra.mxu0 0
          %5115 = vmatprep.subr.bf16.mxu0 0
          %5116 = vmatpush1.bf16.xpose.msra.mxu0 0
          %5117 = vmatprep.subr.bf16.mxu0 0
          %5118 = vmatpush1.bf16.xpose.msra.mxu0 %v5101
          %5119 = vmatprep.subr.bf16.mxu0 0
          %5120 = vmatpush2.bf16.xpose.msra.mxu0 0
          %5121 = vmatprep.subr.bf16.mxu0 0
          %5122 = vmatpush2.bf16.xpose.msra.mxu0 0
          %5123 = vmatprep.subr.bf16.mxu0 0
          %5124 = vmatpush2.bf16.xpose.msra.mxu0 0
          %5125 = vmatprep.subr.bf16.mxu0 0
          %5126 = vmatpush2.bf16.xpose.msra.mxu0 0
          %5127 = vmatprep.subr.bf16.mxu0 0
          %5128 = vmatpush2.bf16.xpose.msra.mxu0 0
          %5129 = vmatprep.subr.bf16.mxu0 0
          %5130 = vmatpush2.bf16.xpose.msra.mxu0 0
          %5131 = vmatprep.subr.bf16.mxu0 0
          %5132 = vmatpush2.bf16.xpose.msra.mxu0 0
          %5133 = vmatprep.subr.bf16.mxu0 0
          %5134 = vmatpush2.bf16.xpose.msra.mxu0 0
          %5135 = vmatprep.mubr.bf16.mxu0 0
          %5136 = vmatmul.mubr.bf16.gmra.mxu0 %v5098
          %v5137 = vpop.f32.mrf.mxu0
          %v5138 = vadd.f32 0.0, %v5137
          %v5139 = vpop.f32.mrf.mxu0
          %v5140 = vpop.f32.mrf.mxu0
          %v5141 = vadd.f32 0.0, %v5140
          %v5142 = vpop.f32.mrf.mxu0
          %5143 = vdwg.mxu0
          %v5145 = vsel %vm4237, %v5087, 0
          %v5148 = vsel %vm4237, %v5093, 0
          %5150 = vmatprep.subr.bf16.mxu0 0
          %5151 = vmatpush1.bf16.xpose.msra.mxu0 0
          %5152 = vmatprep.subr.bf16.mxu0 0
          %5153 = vmatpush1.bf16.xpose.msra.mxu0 0
          %5154 = vmatprep.subr.bf16.mxu0 0
          %5155 = vmatpush1.bf16.xpose.msra.mxu0 0
          %5156 = vmatprep.subr.bf16.mxu0 0
          %5157 = vmatpush1.bf16.xpose.msra.mxu0 0
          %5158 = vmatprep.subr.bf16.mxu0 0
          %5159 = vmatpush1.bf16.xpose.msra.mxu0 0
          %5160 = vmatprep.subr.bf16.mxu0 0
          %5161 = vmatpush1.bf16.xpose.msra.mxu0 0
          %5162 = vmatprep.subr.bf16.mxu0 0
          %5163 = vmatpush1.bf16.xpose.msra.mxu0 0
          %5164 = vmatprep.subr.bf16.mxu0 0
          %5165 = vmatpush1.bf16.xpose.msra.mxu0 %v5148
          %5166 = vmatprep.subr.bf16.mxu0 0
          %5167 = vmatpush2.bf16.xpose.msra.mxu0 0
          %5168 = vmatprep.subr.bf16.mxu0 0
          %5169 = vmatpush2.bf16.xpose.msra.mxu0 0
          %5170 = vmatprep.subr.bf16.mxu0 0
          %5171 = vmatpush2.bf16.xpose.msra.mxu0 0
          %5172 = vmatprep.subr.bf16.mxu0 0
          %5173 = vmatpush2.bf16.xpose.msra.mxu0 0
          %5174 = vmatprep.subr.bf16.mxu0 0
          %5175 = vmatpush2.bf16.xpose.msra.mxu0 0
          %5176 = vmatprep.subr.bf16.mxu0 0
          %5177 = vmatpush2.bf16.xpose.msra.mxu0 0
          %5178 = vmatprep.subr.bf16.mxu0 0
          %5179 = vmatpush2.bf16.xpose.msra.mxu0 0
          %5180 = vmatprep.subr.bf16.mxu0 0
          %5181 = vmatpush2.bf16.xpose.msra.mxu0 0
          %5182 = vmatprep.mubr.bf16.mxu0 0
          %5183 = vmatmul.mubr.bf16.gmra.mxu0 %v5145
          %v5184 = vpop.f32.mrf.mxu0
          %v5185 = vadd.f32 0.0, %v5184
          %v5186 = vpop.f32.mrf.mxu0
          %v5187 = vpop.f32.mrf.mxu0
          %v5188 = vadd.f32 0.0, %v5187
          %v5189 = vpop.f32.mrf.mxu0
          %5190 = vdwg.mxu0
          %v5192 = vsel %vm4237, %v5088, 0
          %v5195 = vsel %vm4237, %v5094, 0
          %5197 = vmatprep.subr.bf16.mxu0 0
          %5198 = vmatpush1.bf16.xpose.msra.mxu0 0
          %5199 = vmatprep.subr.bf16.mxu0 0
          %5200 = vmatpush1.bf16.xpose.msra.mxu0 0
          %5201 = vmatprep.subr.bf16.mxu0 0
          %5202 = vmatpush1.bf16.xpose.msra.mxu0 0
          %5203 = vmatprep.subr.bf16.mxu0 0
          %5204 = vmatpush1.bf16.xpose.msra.mxu0 0
          %5205 = vmatprep.subr.bf16.mxu0 0
          %5206 = vmatpush1.bf16.xpose.msra.mxu0 0
          %5207 = vmatprep.subr.bf16.mxu0 0
          %5208 = vmatpush1.bf16.xpose.msra.mxu0 0
          %5209 = vmatprep.subr.bf16.mxu0 0
          %5210 = vmatpush1.bf16.xpose.msra.mxu0 0
          %5211 = vmatprep.subr.bf16.mxu0 0
          %5212 = vmatpush1.bf16.xpose.msra.mxu0 %v5195
          %5213 = vmatprep.subr.bf16.mxu0 0
          %5214 = vmatpush2.bf16.xpose.msra.mxu0 0
          %5215 = vmatprep.subr.bf16.mxu0 0
          %5216 = vmatpush2.bf16.xpose.msra.mxu0 0
          %5217 = vmatprep.subr.bf16.mxu0 0
          %5218 = vmatpush2.bf16.xpose.msra.mxu0 0
          %5219 = vmatprep.subr.bf16.mxu0 0
          %5220 = vmatpush2.bf16.xpose.msra.mxu0 0
          %5221 = vmatprep.subr.bf16.mxu0 0
          %5222 = vmatpush2.bf16.xpose.msra.mxu0 0
          %5223 = vmatprep.subr.bf16.mxu0 0
          %5224 = vmatpush2.bf16.xpose.msra.mxu0 0
          %5225 = vmatprep.subr.bf16.mxu0 0
          %5226 = vmatpush2.bf16.xpose.msra.mxu0 0
          %5227 = vmatprep.subr.bf16.mxu0 0
          %5228 = vmatpush2.bf16.xpose.msra.mxu0 0
          %5229 = vmatprep.mubr.bf16.mxu0 0
          %5230 = vmatmul.mubr.bf16.gmra.mxu0 %v5192
          %v5231 = vpop.f32.mrf.mxu0
          %v5232 = vadd.f32 0.0, %v5231
          %v5233 = vpop.f32.mrf.mxu0
          %v5234 = vpop.f32.mrf.mxu0
          %v5235 = vadd.f32 0.0, %v5234
          %v5236 = vpop.f32.mrf.mxu0
          %5237 = vdwg.mxu0
          %v5239 = vsel %vm4237, %v5089, 0
          %v5242 = vsel %vm4237, %v5095, 0
          %5244 = vmatprep.subr.bf16.mxu0 0
          %5245 = vmatpush1.bf16.xpose.msra.mxu0 0
          %5246 = vmatprep.subr.bf16.mxu0 0
          %5247 = vmatpush1.bf16.xpose.msra.mxu0 0
          %5248 = vmatprep.subr.bf16.mxu0 0
          %5249 = vmatpush1.bf16.xpose.msra.mxu0 0
          %5250 = vmatprep.subr.bf16.mxu0 0
          %5251 = vmatpush1.bf16.xpose.msra.mxu0 0
          %5252 = vmatprep.subr.bf16.mxu0 0
          %5253 = vmatpush1.bf16.xpose.msra.mxu0 0
          %5254 = vmatprep.subr.bf16.mxu0 0
          %5255 = vmatpush1.bf16.xpose.msra.mxu0 0
          %5256 = vmatprep.subr.bf16.mxu0 0
          %5257 = vmatpush1.bf16.xpose.msra.mxu0 0
          %5258 = vmatprep.subr.bf16.mxu0 0
          %5259 = vmatpush1.bf16.xpose.msra.mxu0 %v5242
          %5260 = vmatprep.subr.bf16.mxu0 0
          %5261 = vmatpush2.bf16.xpose.msra.mxu0 0
          %5262 = vmatprep.subr.bf16.mxu0 0
          %5263 = vmatpush2.bf16.xpose.msra.mxu0 0
          %5264 = vmatprep.subr.bf16.mxu0 0
          %5265 = vmatpush2.bf16.xpose.msra.mxu0 0
          %5266 = vmatprep.subr.bf16.mxu0 0
          %5267 = vmatpush2.bf16.xpose.msra.mxu0 0
          %5268 = vmatprep.subr.bf16.mxu0 0
          %5269 = vmatpush2.bf16.xpose.msra.mxu0 0
          %5270 = vmatprep.subr.bf16.mxu0 0
          %5271 = vmatpush2.bf16.xpose.msra.mxu0 0
          %5272 = vmatprep.subr.bf16.mxu0 0
          %5273 = vmatpush2.bf16.xpose.msra.mxu0 0
          %5274 = vmatprep.subr.bf16.mxu0 0
          %5275 = vmatpush2.bf16.xpose.msra.mxu0 0
          %5276 = vmatprep.mubr.bf16.mxu0 0
          %5277 = vmatmul.mubr.bf16.gmra.mxu0 %v5239
          %v5278 = vpop.f32.mrf.mxu0
          %v5279 = vadd.f32 0.0, %v5278
          %v5280 = vpop.f32.mrf.mxu0
          %v5281 = vpop.f32.mrf.mxu0
          %v5282 = vadd.f32 0.0, %v5281
          %v5283 = vpop.f32.mrf.mxu0
          %5284 = vdwg.mxu0
          %v5286 = vsel %vm4237, %v5090, 0
          %v5289 = vsel %vm4237, %v5096, 0
          %5291 = vmatprep.subr.bf16.mxu0 0
          %5292 = vmatpush1.bf16.xpose.msra.mxu0 0
          %5293 = vmatprep.subr.bf16.mxu0 0
          %5294 = vmatpush1.bf16.xpose.msra.mxu0 0
          %5295 = vmatprep.subr.bf16.mxu0 0
          %5296 = vmatpush1.bf16.xpose.msra.mxu0 0
          %5297 = vmatprep.subr.bf16.mxu0 0
          %5298 = vmatpush1.bf16.xpose.msra.mxu0 0
          %5299 = vmatprep.subr.bf16.mxu0 0
          %5300 = vmatpush1.bf16.xpose.msra.mxu0 0
          %5301 = vmatprep.subr.bf16.mxu0 0
          %5302 = vmatpush1.bf16.xpose.msra.mxu0 0
          %5303 = vmatprep.subr.bf16.mxu0 0
          %5304 = vmatpush1.bf16.xpose.msra.mxu0 0
          %5305 = vmatprep.subr.bf16.mxu0 0
          %5306 = vmatpush1.bf16.xpose.msra.mxu0 %v5289
          %5307 = vmatprep.subr.bf16.mxu0 0
          %5308 = vmatpush2.bf16.xpose.msra.mxu0 0
          %5309 = vmatprep.subr.bf16.mxu0 0
          %5310 = vmatpush2.bf16.xpose.msra.mxu0 0
          %5311 = vmatprep.subr.bf16.mxu0 0
          %5312 = vmatpush2.bf16.xpose.msra.mxu0 0
          %5313 = vmatprep.subr.bf16.mxu0 0
          %5314 = vmatpush2.bf16.xpose.msra.mxu0 0
          %5315 = vmatprep.subr.bf16.mxu0 0
          %5316 = vmatpush2.bf16.xpose.msra.mxu0 0
          %5317 = vmatprep.subr.bf16.mxu0 0
          %5318 = vmatpush2.bf16.xpose.msra.mxu0 0
          %5319 = vmatprep.subr.bf16.mxu0 0
          %5320 = vmatpush2.bf16.xpose.msra.mxu0 0
          %5321 = vmatprep.subr.bf16.mxu0 0
          %5322 = vmatpush2.bf16.xpose.msra.mxu0 0
          %5323 = vmatprep.mubr.bf16.mxu0 0
          %5324 = vmatmul.mubr.bf16.gmra.mxu0 %v5286
          %v5325 = vpop.f32.mrf.mxu0
          %v5326 = vadd.f32 0.0, %v5325
          %v5327 = vpop.f32.mrf.mxu0
          %v5328 = vpop.f32.mrf.mxu0
          %v5329 = vadd.f32 0.0, %v5328
          %v5330 = vpop.f32.mrf.mxu0
          %5331 = vdwg.mxu0
          %v5332 = vsel %vm4237, %v5138, 0.0
          %v5333 = vsel %vm4237, %v5185, 0.0
          %v5334 = vadd.f32 %v5332, %v5333
          %v5335 = vsel %vm4237, %v5232, 0.0
          %v5336 = vadd.f32 %v5334, %v5335
          %v5337 = vsel %vm4237, %v5279, 0.0
          %v5338 = vadd.f32 %v5336, %v5337
          %v5339 = vsel %vm4237, %v5326, 0.0
          %v5340 = vadd.f32 %v5338, %v5339
          %v5341 = vsel %vm4482, %v5141, 0.0
          %v5342 = vsel %vm4482, %v5188, 0.0
          %v5343 = vadd.f32 %v5341, %v5342
          %v5344 = vsel %vm4482, %v5235, 0.0
          %v5345 = vadd.f32 %v5343, %v5344
          %v5346 = vsel %vm4482, %v5282, 0.0
          %v5347 = vadd.f32 %v5345, %v5346
          %v5348 = vsel %vm4482, %v5329, 0.0
          %v5349 = vadd.f32 %v5347, %v5348
          %v5350 = vadd.f32 %v5064, %v5340
          %v5351 = vadd.f32 %v5065, %v5349
          %s5352 = scalar_lea.vmem %s4207, 4 [#allocation2]
          %v5353 = vld [vmem:[%s5352] ss:$2 sm:$0xff]
          %s5354 = scalar_lea.vmem %s4207, 20 [#allocation2]
          %v5355 = vld [vmem:[%s5354] ss:$2 sm:$0x1f]
          %s5356 = scalar_lea.vmem %s4207, 36 [#allocation2]
          %v5357 = vld [vmem:[%s5356] ss:$2 sm:$0xff]
          %s5358 = scalar_lea.vmem %s4207, 52 [#allocation2]
          %v5359 = vld [vmem:[%s5358] ss:$2 sm:$0x1f]
          %s5360 = scalar_lea.vmem %s4207, 68 [#allocation2]
          %v5361 = vld [vmem:[%s5360] ss:$2 sm:$0xff]
          %s5362 = scalar_lea.vmem %s4207, 84 [#allocation2]
          %v5363 = vld [vmem:[%s5362] ss:$2 sm:$0x1f]
          %s5364 = scalar_lea.vmem %s4207, 100 [#allocation2]
          %v5365 = vld [vmem:[%s5364] ss:$2 sm:$0xff]
          %s5366 = scalar_lea.vmem %s4207, 116 [#allocation2]
          %v5367 = vld [vmem:[%s5366] ss:$2 sm:$0x1f]
          %s5368 = scalar_lea.vmem %s4207, 132 [#allocation2]
          %v5369 = vld [vmem:[%s5368] ss:$2 sm:$0xff]
          %s5370 = scalar_lea.vmem %s4207, 148 [#allocation2]
          %v5371 = vld [vmem:[%s5370] ss:$2 sm:$0x1f]
          %v5372 = vpack.c.bf16 %v5355, %v5353
          %v5373 = vpack.c.bf16 %v5359, %v5357
          %v5374 = vpack.c.bf16 %v5363, %v5361
          %v5375 = vpack.c.bf16 %v5367, %v5365
          %v5376 = vpack.c.bf16 %v5371, %v5369
          %s5377 = scalar_lea.vmem %s3, 16
          %v5378 = vld [vmem:[%s5377] sm:$0xf]
          %v5379 = vld [vmem:[%s5377 + $0x14] sm:$0xf]
          %v5380 = vld [vmem:[%s5377 + $0x28] sm:$0xf]
          %v5381 = vld [vmem:[%s5377 + $0x3c] sm:$0xf]
          %v5382 = vld [vmem:[%s5377 + $0x50] sm:$0xf]
          %v5384 = vsel %vm4237, %v5372, 0
          %v5387 = vsel %vm4237, %v5378, 0
          %5389 = vmatprep.subr.bf16.mxu0 0
          %5390 = vmatpush1.bf16.xpose.msra.mxu0 0
          %5391 = vmatprep.subr.bf16.mxu0 0
          %5392 = vmatpush1.bf16.xpose.msra.mxu0 0
          %5393 = vmatprep.subr.bf16.mxu0 0
          %5394 = vmatpush1.bf16.xpose.msra.mxu0 0
          %5395 = vmatprep.subr.bf16.mxu0 0
          %5396 = vmatpush1.bf16.xpose.msra.mxu0 0
          %5397 = vmatprep.subr.bf16.mxu0 0
          %5398 = vmatpush1.bf16.xpose.msra.mxu0 0
          %5399 = vmatprep.subr.bf16.mxu0 0
          %5400 = vmatpush1.bf16.xpose.msra.mxu0 0
          %5401 = vmatprep.subr.bf16.mxu0 0
          %5402 = vmatpush1.bf16.xpose.msra.mxu0 0
          %5403 = vmatprep.subr.bf16.mxu0 0
          %5404 = vmatpush1.bf16.xpose.msra.mxu0 %v5387
          %5405 = vmatprep.subr.bf16.mxu0 0
          %5406 = vmatpush2.bf16.xpose.msra.mxu0 0
          %5407 = vmatprep.subr.bf16.mxu0 0
          %5408 = vmatpush2.bf16.xpose.msra.mxu0 0
          %5409 = vmatprep.subr.bf16.mxu0 0
          %5410 = vmatpush2.bf16.xpose.msra.mxu0 0
          %5411 = vmatprep.subr.bf16.mxu0 0
          %5412 = vmatpush2.bf16.xpose.msra.mxu0 0
          %5413 = vmatprep.subr.bf16.mxu0 0
          %5414 = vmatpush2.bf16.xpose.msra.mxu0 0
          %5415 = vmatprep.subr.bf16.mxu0 0
          %5416 = vmatpush2.bf16.xpose.msra.mxu0 0
          %5417 = vmatprep.subr.bf16.mxu0 0
          %5418 = vmatpush2.bf16.xpose.msra.mxu0 0
          %5419 = vmatprep.subr.bf16.mxu0 0
          %5420 = vmatpush2.bf16.xpose.msra.mxu0 0
          %5421 = vmatprep.mubr.bf16.mxu0 0
          %5422 = vmatmul.mubr.bf16.gmra.mxu0 %v5384
          %v5423 = vpop.f32.mrf.mxu0
          %v5424 = vadd.f32 0.0, %v5423
          %v5425 = vpop.f32.mrf.mxu0
          %v5426 = vpop.f32.mrf.mxu0
          %v5427 = vadd.f32 0.0, %v5426
          %v5428 = vpop.f32.mrf.mxu0
          %5429 = vdwg.mxu0
          %v5431 = vsel %vm4237, %v5373, 0
          %v5434 = vsel %vm4237, %v5379, 0
          %5436 = vmatprep.subr.bf16.mxu0 0
          %5437 = vmatpush1.bf16.xpose.msra.mxu0 0
          %5438 = vmatprep.subr.bf16.mxu0 0
          %5439 = vmatpush1.bf16.xpose.msra.mxu0 0
          %5440 = vmatprep.subr.bf16.mxu0 0
          %5441 = vmatpush1.bf16.xpose.msra.mxu0 0
          %5442 = vmatprep.subr.bf16.mxu0 0
          %5443 = vmatpush1.bf16.xpose.msra.mxu0 0
          %5444 = vmatprep.subr.bf16.mxu0 0
          %5445 = vmatpush1.bf16.xpose.msra.mxu0 0
          %5446 = vmatprep.subr.bf16.mxu0 0
          %5447 = vmatpush1.bf16.xpose.msra.mxu0 0
          %5448 = vmatprep.subr.bf16.mxu0 0
          %5449 = vmatpush1.bf16.xpose.msra.mxu0 0
          %5450 = vmatprep.subr.bf16.mxu0 0
          %5451 = vmatpush1.bf16.xpose.msra.mxu0 %v5434
          %5452 = vmatprep.subr.bf16.mxu0 0
          %5453 = vmatpush2.bf16.xpose.msra.mxu0 0
          %5454 = vmatprep.subr.bf16.mxu0 0
          %5455 = vmatpush2.bf16.xpose.msra.mxu0 0
          %5456 = vmatprep.subr.bf16.mxu0 0
          %5457 = vmatpush2.bf16.xpose.msra.mxu0 0
          %5458 = vmatprep.subr.bf16.mxu0 0
          %5459 = vmatpush2.bf16.xpose.msra.mxu0 0
          %5460 = vmatprep.subr.bf16.mxu0 0
          %5461 = vmatpush2.bf16.xpose.msra.mxu0 0
          %5462 = vmatprep.subr.bf16.mxu0 0
          %5463 = vmatpush2.bf16.xpose.msra.mxu0 0
          %5464 = vmatprep.subr.bf16.mxu0 0
          %5465 = vmatpush2.bf16.xpose.msra.mxu0 0
          %5466 = vmatprep.subr.bf16.mxu0 0
          %5467 = vmatpush2.bf16.xpose.msra.mxu0 0
          %5468 = vmatprep.mubr.bf16.mxu0 0
          %5469 = vmatmul.mubr.bf16.gmra.mxu0 %v5431
          %v5470 = vpop.f32.mrf.mxu0
          %v5471 = vadd.f32 0.0, %v5470
          %v5472 = vpop.f32.mrf.mxu0
          %v5473 = vpop.f32.mrf.mxu0
          %v5474 = vadd.f32 0.0, %v5473
          %v5475 = vpop.f32.mrf.mxu0
          %5476 = vdwg.mxu0
          %v5478 = vsel %vm4237, %v5374, 0
          %v5481 = vsel %vm4237, %v5380, 0
          %5483 = vmatprep.subr.bf16.mxu0 0
          %5484 = vmatpush1.bf16.xpose.msra.mxu0 0
          %5485 = vmatprep.subr.bf16.mxu0 0
          %5486 = vmatpush1.bf16.xpose.msra.mxu0 0
          %5487 = vmatprep.subr.bf16.mxu0 0
          %5488 = vmatpush1.bf16.xpose.msra.mxu0 0
          %5489 = vmatprep.subr.bf16.mxu0 0
          %5490 = vmatpush1.bf16.xpose.msra.mxu0 0
          %5491 = vmatprep.subr.bf16.mxu0 0
          %5492 = vmatpush1.bf16.xpose.msra.mxu0 0
          %5493 = vmatprep.subr.bf16.mxu0 0
          %5494 = vmatpush1.bf16.xpose.msra.mxu0 0
          %5495 = vmatprep.subr.bf16.mxu0 0
          %5496 = vmatpush1.bf16.xpose.msra.mxu0 0
          %5497 = vmatprep.subr.bf16.mxu0 0
          %5498 = vmatpush1.bf16.xpose.msra.mxu0 %v5481
          %5499 = vmatprep.subr.bf16.mxu0 0
          %5500 = vmatpush2.bf16.xpose.msra.mxu0 0
          %5501 = vmatprep.subr.bf16.mxu0 0
          %5502 = vmatpush2.bf16.xpose.msra.mxu0 0
          %5503 = vmatprep.subr.bf16.mxu0 0
          %5504 = vmatpush2.bf16.xpose.msra.mxu0 0
          %5505 = vmatprep.subr.bf16.mxu0 0
          %5506 = vmatpush2.bf16.xpose.msra.mxu0 0
          %5507 = vmatprep.subr.bf16.mxu0 0
          %5508 = vmatpush2.bf16.xpose.msra.mxu0 0
          %5509 = vmatprep.subr.bf16.mxu0 0
          %5510 = vmatpush2.bf16.xpose.msra.mxu0 0
          %5511 = vmatprep.subr.bf16.mxu0 0
          %5512 = vmatpush2.bf16.xpose.msra.mxu0 0
          %5513 = vmatprep.subr.bf16.mxu0 0
          %5514 = vmatpush2.bf16.xpose.msra.mxu0 0
          %5515 = vmatprep.mubr.bf16.mxu0 0
          %5516 = vmatmul.mubr.bf16.gmra.mxu0 %v5478
          %v5517 = vpop.f32.mrf.mxu0
          %v5518 = vadd.f32 0.0, %v5517
          %v5519 = vpop.f32.mrf.mxu0
          %v5520 = vpop.f32.mrf.mxu0
          %v5521 = vadd.f32 0.0, %v5520
          %v5522 = vpop.f32.mrf.mxu0
          %5523 = vdwg.mxu0
          %v5525 = vsel %vm4237, %v5375, 0
          %v5528 = vsel %vm4237, %v5381, 0
          %5530 = vmatprep.subr.bf16.mxu0 0
          %5531 = vmatpush1.bf16.xpose.msra.mxu0 0
          %5532 = vmatprep.subr.bf16.mxu0 0
          %5533 = vmatpush1.bf16.xpose.msra.mxu0 0
          %5534 = vmatprep.subr.bf16.mxu0 0
          %5535 = vmatpush1.bf16.xpose.msra.mxu0 0
          %5536 = vmatprep.subr.bf16.mxu0 0
          %5537 = vmatpush1.bf16.xpose.msra.mxu0 0
          %5538 = vmatprep.subr.bf16.mxu0 0
          %5539 = vmatpush1.bf16.xpose.msra.mxu0 0
          %5540 = vmatprep.subr.bf16.mxu0 0
          %5541 = vmatpush1.bf16.xpose.msra.mxu0 0
          %5542 = vmatprep.subr.bf16.mxu0 0
          %5543 = vmatpush1.bf16.xpose.msra.mxu0 0
          %5544 = vmatprep.subr.bf16.mxu0 0
          %5545 = vmatpush1.bf16.xpose.msra.mxu0 %v5528
          %5546 = vmatprep.subr.bf16.mxu0 0
          %5547 = vmatpush2.bf16.xpose.msra.mxu0 0
          %5548 = vmatprep.subr.bf16.mxu0 0
          %5549 = vmatpush2.bf16.xpose.msra.mxu0 0
          %5550 = vmatprep.subr.bf16.mxu0 0
          %5551 = vmatpush2.bf16.xpose.msra.mxu0 0
          %5552 = vmatprep.subr.bf16.mxu0 0
          %5553 = vmatpush2.bf16.xpose.msra.mxu0 0
          %5554 = vmatprep.subr.bf16.mxu0 0
          %5555 = vmatpush2.bf16.xpose.msra.mxu0 0
          %5556 = vmatprep.subr.bf16.mxu0 0
          %5557 = vmatpush2.bf16.xpose.msra.mxu0 0
          %5558 = vmatprep.subr.bf16.mxu0 0
          %5559 = vmatpush2.bf16.xpose.msra.mxu0 0
          %5560 = vmatprep.subr.bf16.mxu0 0
          %5561 = vmatpush2.bf16.xpose.msra.mxu0 0
          %5562 = vmatprep.mubr.bf16.mxu0 0
          %5563 = vmatmul.mubr.bf16.gmra.mxu0 %v5525
          %v5564 = vpop.f32.mrf.mxu0
          %v5565 = vadd.f32 0.0, %v5564
          %v5566 = vpop.f32.mrf.mxu0
          %v5567 = vpop.f32.mrf.mxu0
          %v5568 = vadd.f32 0.0, %v5567
          %v5569 = vpop.f32.mrf.mxu0
          %5570 = vdwg.mxu0
          %v5572 = vsel %vm4237, %v5376, 0
          %v5575 = vsel %vm4237, %v5382, 0
          %5577 = vmatprep.subr.bf16.mxu0 0
          %5578 = vmatpush1.bf16.xpose.msra.mxu0 0
          %5579 = vmatprep.subr.bf16.mxu0 0
          %5580 = vmatpush1.bf16.xpose.msra.mxu0 0
          %5581 = vmatprep.subr.bf16.mxu0 0
          %5582 = vmatpush1.bf16.xpose.msra.mxu0 0
          %5583 = vmatprep.subr.bf16.mxu0 0
          %5584 = vmatpush1.bf16.xpose.msra.mxu0 0
          %5585 = vmatprep.subr.bf16.mxu0 0
          %5586 = vmatpush1.bf16.xpose.msra.mxu0 0
          %5587 = vmatprep.subr.bf16.mxu0 0
          %5588 = vmatpush1.bf16.xpose.msra.mxu0 0
          %5589 = vmatprep.subr.bf16.mxu0 0
          %5590 = vmatpush1.bf16.xpose.msra.mxu0 0
          %5591 = vmatprep.subr.bf16.mxu0 0
          %5592 = vmatpush1.bf16.xpose.msra.mxu0 %v5575
          %5593 = vmatprep.subr.bf16.mxu0 0
          %5594 = vmatpush2.bf16.xpose.msra.mxu0 0
          %5595 = vmatprep.subr.bf16.mxu0 0
          %5596 = vmatpush2.bf16.xpose.msra.mxu0 0
          %5597 = vmatprep.subr.bf16.mxu0 0
          %5598 = vmatpush2.bf16.xpose.msra.mxu0 0
          %5599 = vmatprep.subr.bf16.mxu0 0
          %5600 = vmatpush2.bf16.xpose.msra.mxu0 0
          %5601 = vmatprep.subr.bf16.mxu0 0
          %5602 = vmatpush2.bf16.xpose.msra.mxu0 0
          %5603 = vmatprep.subr.bf16.mxu0 0
          %5604 = vmatpush2.bf16.xpose.msra.mxu0 0
          %5605 = vmatprep.subr.bf16.mxu0 0
          %5606 = vmatpush2.bf16.xpose.msra.mxu0 0
          %5607 = vmatprep.subr.bf16.mxu0 0
          %5608 = vmatpush2.bf16.xpose.msra.mxu0 0
          %5609 = vmatprep.mubr.bf16.mxu0 0
          %5610 = vmatmul.mubr.bf16.gmra.mxu0 %v5572
          %v5611 = vpop.f32.mrf.mxu0
          %v5612 = vadd.f32 0.0, %v5611
          %v5613 = vpop.f32.mrf.mxu0
          %v5614 = vpop.f32.mrf.mxu0
          %v5615 = vadd.f32 0.0, %v5614
          %v5616 = vpop.f32.mrf.mxu0
          %5617 = vdwg.mxu0
          %v5618 = vsel %vm4237, %v5424, 0.0
          %v5619 = vsel %vm4237, %v5471, 0.0
          %v5620 = vadd.f32 %v5618, %v5619
          %v5621 = vsel %vm4237, %v5518, 0.0
          %v5622 = vadd.f32 %v5620, %v5621
          %v5623 = vsel %vm4237, %v5565, 0.0
          %v5624 = vadd.f32 %v5622, %v5623
          %v5625 = vsel %vm4237, %v5612, 0.0
          %v5626 = vadd.f32 %v5624, %v5625
          %v5627 = vsel %vm4482, %v5427, 0.0
          %v5628 = vsel %vm4482, %v5474, 0.0
          %v5629 = vadd.f32 %v5627, %v5628
          %v5630 = vsel %vm4482, %v5521, 0.0
          %v5631 = vadd.f32 %v5629, %v5630
          %v5632 = vsel %vm4482, %v5568, 0.0
          %v5633 = vadd.f32 %v5631, %v5632
          %v5634 = vsel %vm4482, %v5615, 0.0
          %v5635 = vadd.f32 %v5633, %v5634
          %v5636 = vadd.f32 %v5350, %v5626
          %v5637 = vadd.f32 %v5351, %v5635
          %v5638 = vmax.f32 %v5636, 0.0
          %v5639 = vmax.f32 %v5637, 0.0
          %s5640 = smul.u32 %s4200, 16
          %s5641 = scalar_lea.vmem [#allocation3], %s5640
          %5642 = vst.msk [vmem:[%s5641] sm:$0xff] %vm4237, %v5638
          %5643 = vst.msk [vmem:[%s5641 + $0x8] sm:$0x1f] %vm4482, %v5639
        $region76: #{tpu_custom_call.1} parent=63 // loop_footer
          %s4204 = sadd.s32 1, %s4200
        $region77: #{tpu_custom_call.1} parent=63 // loop_footer_branch
          %4199 = sbr.rel target = $region73
        $region78: #{tpu_custom_call.1} parent=63 // loop_exit
          _
        %v5644 = vld [vmem:[%s6] sm:$0x1]
        %v5646 = vlaneseq
        %v5647 = vshrl.u32 %v5646, 7
        %v5648 = vsub.s32 0, %v5647
        %v5649 = vrot.slane %v5644, %v5648
        loop: start=0, step=1, limit=6
        $region79: #{tpu_custom_call.1} parent=63 // loop_pre_header
          _
        $region80: #{tpu_custom_call.1} parent=63 // loop_header
          %s5652 = sphi 0, %s5656
          %p5653 = scmp.ge.s32.totalorder %s5652, 6
        $region81: #{tpu_custom_call.1} parent=63 // loop_header_branch
          %5655 = sbr.rel (%p5653) target = $region85
        $region82: #{tpu_custom_call.1} parent=63 // loop_body
          %s5657 = smul.u32 %s5652, 2
          %s5658 = smul.u32 %s5657, 16
          %s5659 = scalar_lea.vmem [#allocation3], %s5658
          %v5660 = vld [vmem:[%s5659] ss:$2 sm:$0x3f]
          %s5661 = scalar_lea.vmem %s5659, 16 [#allocation3]
          %v5662 = vld [vmem:[%s5661] ss:$2 sm:$0x3f]
          %s5663 = scalar_lea.vmem %s5659, 32 [#allocation3]
          %v5664 = vld [vmem:[%s5663] ss:$2 sm:$0x3f]
          %v5665 = vpack.c.bf16 %v5660, %v5660
          %v5666 = vpack.c.bf16 %v5662, %v5662
          %v5667 = vpack.c.bf16 %v5664, %v5664
          %v5668 = vld [vmem:[%s5] sm:$0xf]
          %v5669 = vld [vmem:[%s5 + $0xc] sm:$0xf]
          %v5670 = vld [vmem:[%s5 + $0x18] sm:$0xf]
          %vm5671 = vcmask 64512
          %v5673 = vsel %vm5671, %v5665, 0
          %v5676 = vsel %vm5671, %v5668, 0
          %5678 = vmatprep.subr.bf16.mxu0 0
          %5679 = vmatpush1.bf16.xpose.msra.mxu0 0
          %5680 = vmatprep.subr.bf16.mxu0 0
          %5681 = vmatpush1.bf16.xpose.msra.mxu0 0
          %5682 = vmatprep.subr.bf16.mxu0 0
          %5683 = vmatpush1.bf16.xpose.msra.mxu0 0
          %5684 = vmatprep.subr.bf16.mxu0 0
          %5685 = vmatpush1.bf16.xpose.msra.mxu0 0
          %5686 = vmatprep.subr.bf16.mxu0 0
          %5687 = vmatpush1.bf16.xpose.msra.mxu0 0
          %5688 = vmatprep.subr.bf16.mxu0 0
          %5689 = vmatpush1.bf16.xpose.msra.mxu0 0
          %5690 = vmatprep.subr.bf16.mxu0 0
          %5691 = vmatpush1.bf16.xpose.msra.mxu0 0
          %5692 = vmatprep.subr.bf16.mxu0 0
          %5693 = vmatpush1.bf16.xpose.msra.mxu0 %v5676
          %5694 = vmatprep.subr.bf16.mxu0 0
          %5695 = vmatpush2.bf16.xpose.msra.mxu0 0
          %5696 = vmatprep.subr.bf16.mxu0 0
          %5697 = vmatpush2.bf16.xpose.msra.mxu0 0
          %5698 = vmatprep.subr.bf16.mxu0 0
          %5699 = vmatpush2.bf16.xpose.msra.mxu0 0
          %5700 = vmatprep.subr.bf16.mxu0 0
          %5701 = vmatpush2.bf16.xpose.msra.mxu0 0
          %5702 = vmatprep.subr.bf16.mxu0 0
          %5703 = vmatpush2.bf16.xpose.msra.mxu0 0
          %5704 = vmatprep.subr.bf16.mxu0 0
          %5705 = vmatpush2.bf16.xpose.msra.mxu0 0
          %5706 = vmatprep.subr.bf16.mxu0 0
          %5707 = vmatpush2.bf16.xpose.msra.mxu0 0
          %5708 = vmatprep.subr.bf16.mxu0 0
          %5709 = vmatpush2.bf16.xpose.msra.mxu0 0
          %5710 = vmatprep.mubr.bf16.mxu0 0
          %5711 = vmatmul.mubr.bf16.gmra.mxu0 %v5673
          %v5712 = vpop.f32.mrf.mxu0
          %v5713 = vadd.f32 0.0, %v5712
          %v5714 = vpop.f32.mrf.mxu0
          %v5715 = vpop.f32.mrf.mxu0
          %v5716 = vpop.f32.mrf.mxu0
          %5717 = vdwg.mxu0
          %v5719 = vsel %vm5671, %v5666, 0
          %v5722 = vsel %vm5671, %v5669, 0
          %5724 = vmatprep.subr.bf16.mxu0 0
          %5725 = vmatpush1.bf16.xpose.msra.mxu0 0
          %5726 = vmatprep.subr.bf16.mxu0 0
          %5727 = vmatpush1.bf16.xpose.msra.mxu0 0
          %5728 = vmatprep.subr.bf16.mxu0 0
          %5729 = vmatpush1.bf16.xpose.msra.mxu0 0
          %5730 = vmatprep.subr.bf16.mxu0 0
          %5731 = vmatpush1.bf16.xpose.msra.mxu0 0
          %5732 = vmatprep.subr.bf16.mxu0 0
          %5733 = vmatpush1.bf16.xpose.msra.mxu0 0
          %5734 = vmatprep.subr.bf16.mxu0 0
          %5735 = vmatpush1.bf16.xpose.msra.mxu0 0
          %5736 = vmatprep.subr.bf16.mxu0 0
          %5737 = vmatpush1.bf16.xpose.msra.mxu0 0
          %5738 = vmatprep.subr.bf16.mxu0 0
          %5739 = vmatpush1.bf16.xpose.msra.mxu0 %v5722
          %5740 = vmatprep.subr.bf16.mxu0 0
          %5741 = vmatpush2.bf16.xpose.msra.mxu0 0
          %5742 = vmatprep.subr.bf16.mxu0 0
          %5743 = vmatpush2.bf16.xpose.msra.mxu0 0
          %5744 = vmatprep.subr.bf16.mxu0 0
          %5745 = vmatpush2.bf16.xpose.msra.mxu0 0
          %5746 = vmatprep.subr.bf16.mxu0 0
          %5747 = vmatpush2.bf16.xpose.msra.mxu0 0
          %5748 = vmatprep.subr.bf16.mxu0 0
          %5749 = vmatpush2.bf16.xpose.msra.mxu0 0
          %5750 = vmatprep.subr.bf16.mxu0 0
          %5751 = vmatpush2.bf16.xpose.msra.mxu0 0
          %5752 = vmatprep.subr.bf16.mxu0 0
          %5753 = vmatpush2.bf16.xpose.msra.mxu0 0
          %5754 = vmatprep.subr.bf16.mxu0 0
          %5755 = vmatpush2.bf16.xpose.msra.mxu0 0
          %5756 = vmatprep.mubr.bf16.mxu0 0
          %5757 = vmatmul.mubr.bf16.gmra.mxu0 %v5719
          %v5758 = vpop.f32.mrf.mxu0
          %v5759 = vadd.f32 0.0, %v5758
          %v5760 = vpop.f32.mrf.mxu0
          %v5761 = vpop.f32.mrf.mxu0
          %v5762 = vpop.f32.mrf.mxu0
          %5763 = vdwg.mxu0
          %v5765 = vsel %vm5671, %v5667, 0
          %v5768 = vsel %vm5671, %v5670, 0
          %5770 = vmatprep.subr.bf16.mxu0 0
          %5771 = vmatpush1.bf16.xpose.msra.mxu0 0
          %5772 = vmatprep.subr.bf16.mxu0 0
          %5773 = vmatpush1.bf16.xpose.msra.mxu0 0
          %5774 = vmatprep.subr.bf16.mxu0 0
          %5775 = vmatpush1.bf16.xpose.msra.mxu0 0
          %5776 = vmatprep.subr.bf16.mxu0 0
          %5777 = vmatpush1.bf16.xpose.msra.mxu0 0
          %5778 = vmatprep.subr.bf16.mxu0 0
          %5779 = vmatpush1.bf16.xpose.msra.mxu0 0
          %5780 = vmatprep.subr.bf16.mxu0 0
          %5781 = vmatpush1.bf16.xpose.msra.mxu0 0
          %5782 = vmatprep.subr.bf16.mxu0 0
          %5783 = vmatpush1.bf16.xpose.msra.mxu0 0
          %5784 = vmatprep.subr.bf16.mxu0 0
          %5785 = vmatpush1.bf16.xpose.msra.mxu0 %v5768
          %5786 = vmatprep.subr.bf16.mxu0 0
          %5787 = vmatpush2.bf16.xpose.msra.mxu0 0
          %5788 = vmatprep.subr.bf16.mxu0 0
          %5789 = vmatpush2.bf16.xpose.msra.mxu0 0
          %5790 = vmatprep.subr.bf16.mxu0 0
          %5791 = vmatpush2.bf16.xpose.msra.mxu0 0
          %5792 = vmatprep.subr.bf16.mxu0 0
          %5793 = vmatpush2.bf16.xpose.msra.mxu0 0
          %5794 = vmatprep.subr.bf16.mxu0 0
          %5795 = vmatpush2.bf16.xpose.msra.mxu0 0
          %5796 = vmatprep.subr.bf16.mxu0 0
          %5797 = vmatpush2.bf16.xpose.msra.mxu0 0
          %5798 = vmatprep.subr.bf16.mxu0 0
          %5799 = vmatpush2.bf16.xpose.msra.mxu0 0
          %5800 = vmatprep.subr.bf16.mxu0 0
          %5801 = vmatpush2.bf16.xpose.msra.mxu0 0
          %5802 = vmatprep.mubr.bf16.mxu0 0
          %5803 = vmatmul.mubr.bf16.gmra.mxu0 %v5765
          %v5804 = vpop.f32.mrf.mxu0
          %v5805 = vadd.f32 0.0, %v5804
          %v5806 = vpop.f32.mrf.mxu0
          %v5807 = vpop.f32.mrf.mxu0
          %v5808 = vpop.f32.mrf.mxu0
          %5809 = vdwg.mxu0
          %vm5810 = vcmask 62464
          %v5811 = vsel %vm5810, %v5713, 0.0
          %v5812 = vsel %vm5810, %v5759, 0.0
          %v5813 = vadd.f32 %v5811, %v5812
          %v5814 = vsel %vm5810, %v5805, 0.0
          %v5815 = vadd.f32 %v5813, %v5814
          %v5816 = vadd.f32 %v5649, %v5815
          %s5817 = scalar_lea.vmem %s5659, 1 [#allocation3]
          %v5818 = vld [vmem:[%s5817] ss:$2 sm:$0x3f]
          %s5819 = scalar_lea.vmem %s5659, 17 [#allocation3]
          %v5820 = vld [vmem:[%s5819] ss:$2 sm:$0x3f]
          %s5821 = scalar_lea.vmem %s5659, 33 [#allocation3]
          %v5822 = vld [vmem:[%s5821] ss:$2 sm:$0x3f]
          %v5823 = vpack.c.bf16 %v5818, %v5818
          %v5824 = vpack.c.bf16 %v5820, %v5820
          %v5825 = vpack.c.bf16 %v5822, %v5822
          %s5826 = scalar_lea.vmem %s5, 4
          %v5827 = vld [vmem:[%s5826] sm:$0xf]
          %v5828 = vld [vmem:[%s5826 + $0xc] sm:$0xf]
          %v5829 = vld [vmem:[%s5826 + $0x18] sm:$0xf]
          %v5831 = vsel %vm5671, %v5823, 0
          %v5834 = vsel %vm5671, %v5827, 0
          %5836 = vmatprep.subr.bf16.mxu0 0
          %5837 = vmatpush1.bf16.xpose.msra.mxu0 0
          %5838 = vmatprep.subr.bf16.mxu0 0
          %5839 = vmatpush1.bf16.xpose.msra.mxu0 0
          %5840 = vmatprep.subr.bf16.mxu0 0
          %5841 = vmatpush1.bf16.xpose.msra.mxu0 0
          %5842 = vmatprep.subr.bf16.mxu0 0
          %5843 = vmatpush1.bf16.xpose.msra.mxu0 0
          %5844 = vmatprep.subr.bf16.mxu0 0
          %5845 = vmatpush1.bf16.xpose.msra.mxu0 0
          %5846 = vmatprep.subr.bf16.mxu0 0
          %5847 = vmatpush1.bf16.xpose.msra.mxu0 0
          %5848 = vmatprep.subr.bf16.mxu0 0
          %5849 = vmatpush1.bf16.xpose.msra.mxu0 0
          %5850 = vmatprep.subr.bf16.mxu0 0
          %5851 = vmatpush1.bf16.xpose.msra.mxu0 %v5834
          %5852 = vmatprep.subr.bf16.mxu0 0
          %5853 = vmatpush2.bf16.xpose.msra.mxu0 0
          %5854 = vmatprep.subr.bf16.mxu0 0
          %5855 = vmatpush2.bf16.xpose.msra.mxu0 0
          %5856 = vmatprep.subr.bf16.mxu0 0
          %5857 = vmatpush2.bf16.xpose.msra.mxu0 0
          %5858 = vmatprep.subr.bf16.mxu0 0
          %5859 = vmatpush2.bf16.xpose.msra.mxu0 0
          %5860 = vmatprep.subr.bf16.mxu0 0
          %5861 = vmatpush2.bf16.xpose.msra.mxu0 0
          %5862 = vmatprep.subr.bf16.mxu0 0
          %5863 = vmatpush2.bf16.xpose.msra.mxu0 0
          %5864 = vmatprep.subr.bf16.mxu0 0
          %5865 = vmatpush2.bf16.xpose.msra.mxu0 0
          %5866 = vmatprep.subr.bf16.mxu0 0
          %5867 = vmatpush2.bf16.xpose.msra.mxu0 0
          %5868 = vmatprep.mubr.bf16.mxu0 0
          %5869 = vmatmul.mubr.bf16.gmra.mxu0 %v5831
          %v5870 = vpop.f32.mrf.mxu0
          %v5871 = vadd.f32 0.0, %v5870
          %v5872 = vpop.f32.mrf.mxu0
          %v5873 = vpop.f32.mrf.mxu0
          %v5874 = vpop.f32.mrf.mxu0
          %5875 = vdwg.mxu0
          %v5877 = vsel %vm5671, %v5824, 0
          %v5880 = vsel %vm5671, %v5828, 0
          %5882 = vmatprep.subr.bf16.mxu0 0
          %5883 = vmatpush1.bf16.xpose.msra.mxu0 0
          %5884 = vmatprep.subr.bf16.mxu0 0
          %5885 = vmatpush1.bf16.xpose.msra.mxu0 0
          %5886 = vmatprep.subr.bf16.mxu0 0
          %5887 = vmatpush1.bf16.xpose.msra.mxu0 0
          %5888 = vmatprep.subr.bf16.mxu0 0
          %5889 = vmatpush1.bf16.xpose.msra.mxu0 0
          %5890 = vmatprep.subr.bf16.mxu0 0
          %5891 = vmatpush1.bf16.xpose.msra.mxu0 0
          %5892 = vmatprep.subr.bf16.mxu0 0
          %5893 = vmatpush1.bf16.xpose.msra.mxu0 0
          %5894 = vmatprep.subr.bf16.mxu0 0
          %5895 = vmatpush1.bf16.xpose.msra.mxu0 0
          %5896 = vmatprep.subr.bf16.mxu0 0
          %5897 = vmatpush1.bf16.xpose.msra.mxu0 %v5880
          %5898 = vmatprep.subr.bf16.mxu0 0
          %5899 = vmatpush2.bf16.xpose.msra.mxu0 0
          %5900 = vmatprep.subr.bf16.mxu0 0
          %5901 = vmatpush2.bf16.xpose.msra.mxu0 0
          %5902 = vmatprep.subr.bf16.mxu0 0
          %5903 = vmatpush2.bf16.xpose.msra.mxu0 0
          %5904 = vmatprep.subr.bf16.mxu0 0
          %5905 = vmatpush2.bf16.xpose.msra.mxu0 0
          %5906 = vmatprep.subr.bf16.mxu0 0
          %5907 = vmatpush2.bf16.xpose.msra.mxu0 0
          %5908 = vmatprep.subr.bf16.mxu0 0
          %5909 = vmatpush2.bf16.xpose.msra.mxu0 0
          %5910 = vmatprep.subr.bf16.mxu0 0
          %5911 = vmatpush2.bf16.xpose.msra.mxu0 0
          %5912 = vmatprep.subr.bf16.mxu0 0
          %5913 = vmatpush2.bf16.xpose.msra.mxu0 0
          %5914 = vmatprep.mubr.bf16.mxu0 0
          %5915 = vmatmul.mubr.bf16.gmra.mxu0 %v5877
          %v5916 = vpop.f32.mrf.mxu0
          %v5917 = vadd.f32 0.0, %v5916
          %v5918 = vpop.f32.mrf.mxu0
          %v5919 = vpop.f32.mrf.mxu0
          %v5920 = vpop.f32.mrf.mxu0
          %5921 = vdwg.mxu0
          %v5923 = vsel %vm5671, %v5825, 0
          %v5926 = vsel %vm5671, %v5829, 0
          %5928 = vmatprep.subr.bf16.mxu0 0
          %5929 = vmatpush1.bf16.xpose.msra.mxu0 0
          %5930 = vmatprep.subr.bf16.mxu0 0
          %5931 = vmatpush1.bf16.xpose.msra.mxu0 0
          %5932 = vmatprep.subr.bf16.mxu0 0
          %5933 = vmatpush1.bf16.xpose.msra.mxu0 0
          %5934 = vmatprep.subr.bf16.mxu0 0
          %5935 = vmatpush1.bf16.xpose.msra.mxu0 0
          %5936 = vmatprep.subr.bf16.mxu0 0
          %5937 = vmatpush1.bf16.xpose.msra.mxu0 0
          %5938 = vmatprep.subr.bf16.mxu0 0
          %5939 = vmatpush1.bf16.xpose.msra.mxu0 0
          %5940 = vmatprep.subr.bf16.mxu0 0
          %5941 = vmatpush1.bf16.xpose.msra.mxu0 0
          %5942 = vmatprep.subr.bf16.mxu0 0
          %5943 = vmatpush1.bf16.xpose.msra.mxu0 %v5926
          %5944 = vmatprep.subr.bf16.mxu0 0
          %5945 = vmatpush2.bf16.xpose.msra.mxu0 0
          %5946 = vmatprep.subr.bf16.mxu0 0
          %5947 = vmatpush2.bf16.xpose.msra.mxu0 0
          %5948 = vmatprep.subr.bf16.mxu0 0
          %5949 = vmatpush2.bf16.xpose.msra.mxu0 0
          %5950 = vmatprep.subr.bf16.mxu0 0
          %5951 = vmatpush2.bf16.xpose.msra.mxu0 0
          %5952 = vmatprep.subr.bf16.mxu0 0
          %5953 = vmatpush2.bf16.xpose.msra.mxu0 0
          %5954 = vmatprep.subr.bf16.mxu0 0
          %5955 = vmatpush2.bf16.xpose.msra.mxu0 0
          %5956 = vmatprep.subr.bf16.mxu0 0
          %5957 = vmatpush2.bf16.xpose.msra.mxu0 0
          %5958 = vmatprep.subr.bf16.mxu0 0
          %5959 = vmatpush2.bf16.xpose.msra.mxu0 0
          %5960 = vmatprep.mubr.bf16.mxu0 0
          %5961 = vmatmul.mubr.bf16.gmra.mxu0 %v5923
          %v5962 = vpop.f32.mrf.mxu0
          %v5963 = vadd.f32 0.0, %v5962
          %v5964 = vpop.f32.mrf.mxu0
          %v5965 = vpop.f32.mrf.mxu0
          %v5966 = vpop.f32.mrf.mxu0
          %5967 = vdwg.mxu0
          %v5968 = vsel %vm5810, %v5871, 0.0
          %v5969 = vsel %vm5810, %v5917, 0.0
          %v5970 = vadd.f32 %v5968, %v5969
          %v5971 = vsel %vm5810, %v5963, 0.0
          %v5972 = vadd.f32 %v5970, %v5971
          %v5973 = vadd.f32 %v5816, %v5972
          %s5974 = scalar_lea.vmem %s5659, 2 [#allocation3]
          %v5975 = vld [vmem:[%s5974] ss:$2 sm:$0x3f]
          %s5976 = scalar_lea.vmem %s5659, 18 [#allocation3]
          %v5977 = vld [vmem:[%s5976] ss:$2 sm:$0x3f]
          %s5978 = scalar_lea.vmem %s5659, 34 [#allocation3]
          %v5979 = vld [vmem:[%s5978] ss:$2 sm:$0x3f]
          %v5980 = vpack.c.bf16 %v5975, %v5975
          %v5981 = vpack.c.bf16 %v5977, %v5977
          %v5982 = vpack.c.bf16 %v5979, %v5979
          %s5983 = scalar_lea.vmem %s5, 8
          %v5984 = vld [vmem:[%s5983] sm:$0xf]
          %v5985 = vld [vmem:[%s5983 + $0xc] sm:$0xf]
          %v5986 = vld [vmem:[%s5983 + $0x18] sm:$0xf]
          %v5988 = vsel %vm5671, %v5980, 0
          %v5991 = vsel %vm5671, %v5984, 0
          %5993 = vmatprep.subr.bf16.mxu0 0
          %5994 = vmatpush1.bf16.xpose.msra.mxu0 0
          %5995 = vmatprep.subr.bf16.mxu0 0
          %5996 = vmatpush1.bf16.xpose.msra.mxu0 0
          %5997 = vmatprep.subr.bf16.mxu0 0
          %5998 = vmatpush1.bf16.xpose.msra.mxu0 0
          %5999 = vmatprep.subr.bf16.mxu0 0
          %6000 = vmatpush1.bf16.xpose.msra.mxu0 0
          %6001 = vmatprep.subr.bf16.mxu0 0
          %6002 = vmatpush1.bf16.xpose.msra.mxu0 0
          %6003 = vmatprep.subr.bf16.mxu0 0
          %6004 = vmatpush1.bf16.xpose.msra.mxu0 0
          %6005 = vmatprep.subr.bf16.mxu0 0
          %6006 = vmatpush1.bf16.xpose.msra.mxu0 0
          %6007 = vmatprep.subr.bf16.mxu0 0
          %6008 = vmatpush1.bf16.xpose.msra.mxu0 %v5991
          %6009 = vmatprep.subr.bf16.mxu0 0
          %6010 = vmatpush2.bf16.xpose.msra.mxu0 0
          %6011 = vmatprep.subr.bf16.mxu0 0
          %6012 = vmatpush2.bf16.xpose.msra.mxu0 0
          %6013 = vmatprep.subr.bf16.mxu0 0
          %6014 = vmatpush2.bf16.xpose.msra.mxu0 0
          %6015 = vmatprep.subr.bf16.mxu0 0
          %6016 = vmatpush2.bf16.xpose.msra.mxu0 0
          %6017 = vmatprep.subr.bf16.mxu0 0
          %6018 = vmatpush2.bf16.xpose.msra.mxu0 0
          %6019 = vmatprep.subr.bf16.mxu0 0
          %6020 = vmatpush2.bf16.xpose.msra.mxu0 0
          %6021 = vmatprep.subr.bf16.mxu0 0
          %6022 = vmatpush2.bf16.xpose.msra.mxu0 0
          %6023 = vmatprep.subr.bf16.mxu0 0
          %6024 = vmatpush2.bf16.xpose.msra.mxu0 0
          %6025 = vmatprep.mubr.bf16.mxu0 0
          %6026 = vmatmul.mubr.bf16.gmra.mxu0 %v5988
          %v6027 = vpop.f32.mrf.mxu0
          %v6028 = vadd.f32 0.0, %v6027
          %v6029 = vpop.f32.mrf.mxu0
          %v6030 = vpop.f32.mrf.mxu0
          %v6031 = vpop.f32.mrf.mxu0
          %6032 = vdwg.mxu0
          %v6034 = vsel %vm5671, %v5981, 0
          %v6037 = vsel %vm5671, %v5985, 0
          %6039 = vmatprep.subr.bf16.mxu0 0
          %6040 = vmatpush1.bf16.xpose.msra.mxu0 0
          %6041 = vmatprep.subr.bf16.mxu0 0
          %6042 = vmatpush1.bf16.xpose.msra.mxu0 0
          %6043 = vmatprep.subr.bf16.mxu0 0
          %6044 = vmatpush1.bf16.xpose.msra.mxu0 0
          %6045 = vmatprep.subr.bf16.mxu0 0
          %6046 = vmatpush1.bf16.xpose.msra.mxu0 0
          %6047 = vmatprep.subr.bf16.mxu0 0
          %6048 = vmatpush1.bf16.xpose.msra.mxu0 0
          %6049 = vmatprep.subr.bf16.mxu0 0
          %6050 = vmatpush1.bf16.xpose.msra.mxu0 0
          %6051 = vmatprep.subr.bf16.mxu0 0
          %6052 = vmatpush1.bf16.xpose.msra.mxu0 0
          %6053 = vmatprep.subr.bf16.mxu0 0
          %6054 = vmatpush1.bf16.xpose.msra.mxu0 %v6037
          %6055 = vmatprep.subr.bf16.mxu0 0
          %6056 = vmatpush2.bf16.xpose.msra.mxu0 0
          %6057 = vmatprep.subr.bf16.mxu0 0
          %6058 = vmatpush2.bf16.xpose.msra.mxu0 0
          %6059 = vmatprep.subr.bf16.mxu0 0
          %6060 = vmatpush2.bf16.xpose.msra.mxu0 0
          %6061 = vmatprep.subr.bf16.mxu0 0
          %6062 = vmatpush2.bf16.xpose.msra.mxu0 0
          %6063 = vmatprep.subr.bf16.mxu0 0
          %6064 = vmatpush2.bf16.xpose.msra.mxu0 0
          %6065 = vmatprep.subr.bf16.mxu0 0
          %6066 = vmatpush2.bf16.xpose.msra.mxu0 0
          %6067 = vmatprep.subr.bf16.mxu0 0
          %6068 = vmatpush2.bf16.xpose.msra.mxu0 0
          %6069 = vmatprep.subr.bf16.mxu0 0
          %6070 = vmatpush2.bf16.xpose.msra.mxu0 0
          %6071 = vmatprep.mubr.bf16.mxu0 0
          %6072 = vmatmul.mubr.bf16.gmra.mxu0 %v6034
          %v6073 = vpop.f32.mrf.mxu0
          %v6074 = vadd.f32 0.0, %v6073
          %v6075 = vpop.f32.mrf.mxu0
          %v6076 = vpop.f32.mrf.mxu0
          %v6077 = vpop.f32.mrf.mxu0
          %6078 = vdwg.mxu0
          %v6080 = vsel %vm5671, %v5982, 0
          %v6083 = vsel %vm5671, %v5986, 0
          %6085 = vmatprep.subr.bf16.mxu0 0
          %6086 = vmatpush1.bf16.xpose.msra.mxu0 0
          %6087 = vmatprep.subr.bf16.mxu0 0
          %6088 = vmatpush1.bf16.xpose.msra.mxu0 0
          %6089 = vmatprep.subr.bf16.mxu0 0
          %6090 = vmatpush1.bf16.xpose.msra.mxu0 0
          %6091 = vmatprep.subr.bf16.mxu0 0
          %6092 = vmatpush1.bf16.xpose.msra.mxu0 0
          %6093 = vmatprep.subr.bf16.mxu0 0
          %6094 = vmatpush1.bf16.xpose.msra.mxu0 0
          %6095 = vmatprep.subr.bf16.mxu0 0
          %6096 = vmatpush1.bf16.xpose.msra.mxu0 0
          %6097 = vmatprep.subr.bf16.mxu0 0
          %6098 = vmatpush1.bf16.xpose.msra.mxu0 0
          %6099 = vmatprep.subr.bf16.mxu0 0
          %6100 = vmatpush1.bf16.xpose.msra.mxu0 %v6083
          %6101 = vmatprep.subr.bf16.mxu0 0
          %6102 = vmatpush2.bf16.xpose.msra.mxu0 0
          %6103 = vmatprep.subr.bf16.mxu0 0
          %6104 = vmatpush2.bf16.xpose.msra.mxu0 0
          %6105 = vmatprep.subr.bf16.mxu0 0
          %6106 = vmatpush2.bf16.xpose.msra.mxu0 0
          %6107 = vmatprep.subr.bf16.mxu0 0
          %6108 = vmatpush2.bf16.xpose.msra.mxu0 0
          %6109 = vmatprep.subr.bf16.mxu0 0
          %6110 = vmatpush2.bf16.xpose.msra.mxu0 0
          %6111 = vmatprep.subr.bf16.mxu0 0
          %6112 = vmatpush2.bf16.xpose.msra.mxu0 0
          %6113 = vmatprep.subr.bf16.mxu0 0
          %6114 = vmatpush2.bf16.xpose.msra.mxu0 0
          %6115 = vmatprep.subr.bf16.mxu0 0
          %6116 = vmatpush2.bf16.xpose.msra.mxu0 0
          %6117 = vmatprep.mubr.bf16.mxu0 0
          %6118 = vmatmul.mubr.bf16.gmra.mxu0 %v6080
          %v6119 = vpop.f32.mrf.mxu0
          %v6120 = vadd.f32 0.0, %v6119
          %v6121 = vpop.f32.mrf.mxu0
          %v6122 = vpop.f32.mrf.mxu0
          %v6123 = vpop.f32.mrf.mxu0
          %6124 = vdwg.mxu0
          %v6125 = vsel %vm5810, %v6028, 0.0
          %v6126 = vsel %vm5810, %v6074, 0.0
          %v6127 = vadd.f32 %v6125, %v6126
          %v6128 = vsel %vm5810, %v6120, 0.0
          %v6129 = vadd.f32 %v6127, %v6128
          %v6130 = vadd.f32 %v5973, %v6129
          %v6131 = vmax.f32 %v6130, 0.0
          %s6132 = smul.u32 %s5652, 8
          %s6133 = scalar_lea.vmem [#allocation4], %s6132
          %6134 = vst.msk [vmem:[%s6133] sm:$0x3f] %vm5810, %v6131
        $region83: #{tpu_custom_call.1} parent=63 // loop_footer
          %s5656 = sadd.s32 1, %s5652
        $region84: #{tpu_custom_call.1} parent=63 // loop_footer_branch
          %5651 = sbr.rel target = $region80
        $region85: #{tpu_custom_call.1} parent=63 // loop_exit
          _
        %v6135 = vld [vmem:[%s8] sm:$0x1]
        %v6137 = vlaneseq
        %v6138 = vshrl.u32 %v6137, 7
        %v6139 = vsub.s32 0, %v6138
        %v6140 = vrot.slane %v6135, %v6139
        loop: start=0, step=1, limit=2
        $region86: #{tpu_custom_call.1} parent=63 // loop_pre_header
          _
        $region87: #{tpu_custom_call.1} parent=63 // loop_header
          %s6143 = sphi 0, %s6147
          %p6144 = scmp.ge.s32.totalorder %s6143, 2
        $region88: #{tpu_custom_call.1} parent=63 // loop_header_branch
          %6146 = sbr.rel (%p6144) target = $region92
        $region89: #{tpu_custom_call.1} parent=63 // loop_body
          %s6148 = smul.u32 %s6143, 2
          %s6149 = smul.u32 %s6148, 8
          %s6150 = scalar_lea.vmem [#allocation4], %s6149
          %v6151 = vld [vmem:[%s6150] ss:$2 sm:$0x3]
          %s6152 = scalar_lea.vmem %s6150, 8 [#allocation4]
          %v6153 = vld [vmem:[%s6152] ss:$2 sm:$0x3]
          %s6154 = scalar_lea.vmem %s6150, 16 [#allocation4]
          %v6155 = vld [vmem:[%s6154] ss:$2 sm:$0x3]
          %v6156 = vpack.c.bf16 %v6151, %v6151
          %v6157 = vpack.c.bf16 %v6153, %v6153
          %v6158 = vpack.c.bf16 %v6155, %v6155
          %v6159 = vld [vmem:[%s7] sm:$0xf]
          %v6160 = vld [vmem:[%s7 + $0xc] sm:$0xf]
          %v6161 = vld [vmem:[%s7 + $0x18] sm:$0xf]
          %vm6162 = vcmask 64512
          %v6164 = vsel %vm6162, %v6156, 0
          %v6167 = vsel %vm6162, %v6159, 0
          %6169 = vmatprep.subr.bf16.mxu0 0
          %6170 = vmatpush1.bf16.xpose.msra.mxu0 0
          %6171 = vmatprep.subr.bf16.mxu0 0
          %6172 = vmatpush1.bf16.xpose.msra.mxu0 0
          %6173 = vmatprep.subr.bf16.mxu0 0
          %6174 = vmatpush1.bf16.xpose.msra.mxu0 0
          %6175 = vmatprep.subr.bf16.mxu0 0
          %6176 = vmatpush1.bf16.xpose.msra.mxu0 0
          %6177 = vmatprep.subr.bf16.mxu0 0
          %6178 = vmatpush1.bf16.xpose.msra.mxu0 0
          %6179 = vmatprep.subr.bf16.mxu0 0
          %6180 = vmatpush1.bf16.xpose.msra.mxu0 0
          %6181 = vmatprep.subr.bf16.mxu0 0
          %6182 = vmatpush1.bf16.xpose.msra.mxu0 0
          %6183 = vmatprep.subr.bf16.mxu0 0
          %6184 = vmatpush1.bf16.xpose.msra.mxu0 %v6167
          %6185 = vmatprep.subr.bf16.mxu0 0
          %6186 = vmatpush2.bf16.xpose.msra.mxu0 0
          %6187 = vmatprep.subr.bf16.mxu0 0
          %6188 = vmatpush2.bf16.xpose.msra.mxu0 0
          %6189 = vmatprep.subr.bf16.mxu0 0
          %6190 = vmatpush2.bf16.xpose.msra.mxu0 0
          %6191 = vmatprep.subr.bf16.mxu0 0
          %6192 = vmatpush2.bf16.xpose.msra.mxu0 0
          %6193 = vmatprep.subr.bf16.mxu0 0
          %6194 = vmatpush2.bf16.xpose.msra.mxu0 0
          %6195 = vmatprep.subr.bf16.mxu0 0
          %6196 = vmatpush2.bf16.xpose.msra.mxu0 0
          %6197 = vmatprep.subr.bf16.mxu0 0
          %6198 = vmatpush2.bf16.xpose.msra.mxu0 0
          %6199 = vmatprep.subr.bf16.mxu0 0
          %6200 = vmatpush2.bf16.xpose.msra.mxu0 0
          %6201 = vmatprep.mubr.bf16.mxu0 0
          %6202 = vmatmul.mubr.bf16.gmra.mxu0 %v6164
          %v6203 = vpop.f32.mrf.mxu0
          %v6204 = vadd.f32 0.0, %v6203
          %v6205 = vpop.f32.mrf.mxu0
          %v6206 = vpop.f32.mrf.mxu0
          %v6207 = vpop.f32.mrf.mxu0
          %6208 = vdwg.mxu0
          %v6210 = vsel %vm6162, %v6157, 0
          %v6213 = vsel %vm6162, %v6160, 0
          %6215 = vmatprep.subr.bf16.mxu0 0
          %6216 = vmatpush1.bf16.xpose.msra.mxu0 0
          %6217 = vmatprep.subr.bf16.mxu0 0
          %6218 = vmatpush1.bf16.xpose.msra.mxu0 0
          %6219 = vmatprep.subr.bf16.mxu0 0
          %6220 = vmatpush1.bf16.xpose.msra.mxu0 0
          %6221 = vmatprep.subr.bf16.mxu0 0
          %6222 = vmatpush1.bf16.xpose.msra.mxu0 0
          %6223 = vmatprep.subr.bf16.mxu0 0
          %6224 = vmatpush1.bf16.xpose.msra.mxu0 0
          %6225 = vmatprep.subr.bf16.mxu0 0
          %6226 = vmatpush1.bf16.xpose.msra.mxu0 0
          %6227 = vmatprep.subr.bf16.mxu0 0
          %6228 = vmatpush1.bf16.xpose.msra.mxu0 0
          %6229 = vmatprep.subr.bf16.mxu0 0
          %6230 = vmatpush1.bf16.xpose.msra.mxu0 %v6213
          %6231 = vmatprep.subr.bf16.mxu0 0
          %6232 = vmatpush2.bf16.xpose.msra.mxu0 0
          %6233 = vmatprep.subr.bf16.mxu0 0
          %6234 = vmatpush2.bf16.xpose.msra.mxu0 0
          %6235 = vmatprep.subr.bf16.mxu0 0
          %6236 = vmatpush2.bf16.xpose.msra.mxu0 0
          %6237 = vmatprep.subr.bf16.mxu0 0
          %6238 = vmatpush2.bf16.xpose.msra.mxu0 0
          %6239 = vmatprep.subr.bf16.mxu0 0
          %6240 = vmatpush2.bf16.xpose.msra.mxu0 0
          %6241 = vmatprep.subr.bf16.mxu0 0
          %6242 = vmatpush2.bf16.xpose.msra.mxu0 0
          %6243 = vmatprep.subr.bf16.mxu0 0
          %6244 = vmatpush2.bf16.xpose.msra.mxu0 0
          %6245 = vmatprep.subr.bf16.mxu0 0
          %6246 = vmatpush2.bf16.xpose.msra.mxu0 0
          %6247 = vmatprep.mubr.bf16.mxu0 0
          %6248 = vmatmul.mubr.bf16.gmra.mxu0 %v6210
          %v6249 = vpop.f32.mrf.mxu0
          %v6250 = vadd.f32 0.0, %v6249
          %v6251 = vpop.f32.mrf.mxu0
          %v6252 = vpop.f32.mrf.mxu0
          %v6253 = vpop.f32.mrf.mxu0
          %6254 = vdwg.mxu0
          %v6256 = vsel %vm6162, %v6158, 0
          %v6259 = vsel %vm6162, %v6161, 0
          %6261 = vmatprep.subr.bf16.mxu0 0
          %6262 = vmatpush1.bf16.xpose.msra.mxu0 0
          %6263 = vmatprep.subr.bf16.mxu0 0
          %6264 = vmatpush1.bf16.xpose.msra.mxu0 0
          %6265 = vmatprep.subr.bf16.mxu0 0
          %6266 = vmatpush1.bf16.xpose.msra.mxu0 0
          %6267 = vmatprep.subr.bf16.mxu0 0
          %6268 = vmatpush1.bf16.xpose.msra.mxu0 0
          %6269 = vmatprep.subr.bf16.mxu0 0
          %6270 = vmatpush1.bf16.xpose.msra.mxu0 0
          %6271 = vmatprep.subr.bf16.mxu0 0
          %6272 = vmatpush1.bf16.xpose.msra.mxu0 0
          %6273 = vmatprep.subr.bf16.mxu0 0
          %6274 = vmatpush1.bf16.xpose.msra.mxu0 0
          %6275 = vmatprep.subr.bf16.mxu0 0
          %6276 = vmatpush1.bf16.xpose.msra.mxu0 %v6259
          %6277 = vmatprep.subr.bf16.mxu0 0
          %6278 = vmatpush2.bf16.xpose.msra.mxu0 0
          %6279 = vmatprep.subr.bf16.mxu0 0
          %6280 = vmatpush2.bf16.xpose.msra.mxu0 0
          %6281 = vmatprep.subr.bf16.mxu0 0
          %6282 = vmatpush2.bf16.xpose.msra.mxu0 0
          %6283 = vmatprep.subr.bf16.mxu0 0
          %6284 = vmatpush2.bf16.xpose.msra.mxu0 0
          %6285 = vmatprep.subr.bf16.mxu0 0
          %6286 = vmatpush2.bf16.xpose.msra.mxu0 0
          %6287 = vmatprep.subr.bf16.mxu0 0
          %6288 = vmatpush2.bf16.xpose.msra.mxu0 0
          %6289 = vmatprep.subr.bf16.mxu0 0
          %6290 = vmatpush2.bf16.xpose.msra.mxu0 0
          %6291 = vmatprep.subr.bf16.mxu0 0
          %6292 = vmatpush2.bf16.xpose.msra.mxu0 0
          %6293 = vmatprep.mubr.bf16.mxu0 0
          %6294 = vmatmul.mubr.bf16.gmra.mxu0 %v6256
          %v6295 = vpop.f32.mrf.mxu0
          %v6296 = vadd.f32 0.0, %v6295
          %v6297 = vpop.f32.mrf.mxu0
          %v6298 = vpop.f32.mrf.mxu0
          %v6299 = vpop.f32.mrf.mxu0
          %6300 = vdwg.mxu0
          %vm6301 = vcmask 58368
          %v6302 = vsel %vm6301, %v6204, 0.0
          %v6303 = vsel %vm6301, %v6250, 0.0
          %v6304 = vadd.f32 %v6302, %v6303
          %v6305 = vsel %vm6301, %v6296, 0.0
          %v6306 = vadd.f32 %v6304, %v6305
          %v6307 = vadd.f32 %v6140, %v6306
          %s6308 = scalar_lea.vmem %s6150, 1 [#allocation4]
          %v6309 = vld [vmem:[%s6308] ss:$2 sm:$0x3]
          %s6310 = scalar_lea.vmem %s6150, 9 [#allocation4]
          %v6311 = vld [vmem:[%s6310] ss:$2 sm:$0x3]
          %s6312 = scalar_lea.vmem %s6150, 17 [#allocation4]
          %v6313 = vld [vmem:[%s6312] ss:$2 sm:$0x3]
          %v6314 = vpack.c.bf16 %v6309, %v6309
          %v6315 = vpack.c.bf16 %v6311, %v6311
          %v6316 = vpack.c.bf16 %v6313, %v6313
          %s6317 = scalar_lea.vmem %s7, 4
          %v6318 = vld [vmem:[%s6317] sm:$0xf]
          %v6319 = vld [vmem:[%s6317 + $0xc] sm:$0xf]
          %v6320 = vld [vmem:[%s6317 + $0x18] sm:$0xf]
          %v6322 = vsel %vm6162, %v6314, 0
          %v6325 = vsel %vm6162, %v6318, 0
          %6327 = vmatprep.subr.bf16.mxu0 0
          %6328 = vmatpush1.bf16.xpose.msra.mxu0 0
          %6329 = vmatprep.subr.bf16.mxu0 0
          %6330 = vmatpush1.bf16.xpose.msra.mxu0 0
          %6331 = vmatprep.subr.bf16.mxu0 0
          %6332 = vmatpush1.bf16.xpose.msra.mxu0 0
          %6333 = vmatprep.subr.bf16.mxu0 0
          %6334 = vmatpush1.bf16.xpose.msra.mxu0 0
          %6335 = vmatprep.subr.bf16.mxu0 0
          %6336 = vmatpush1.bf16.xpose.msra.mxu0 0
          %6337 = vmatprep.subr.bf16.mxu0 0
          %6338 = vmatpush1.bf16.xpose.msra.mxu0 0
          %6339 = vmatprep.subr.bf16.mxu0 0
          %6340 = vmatpush1.bf16.xpose.msra.mxu0 0
          %6341 = vmatprep.subr.bf16.mxu0 0
          %6342 = vmatpush1.bf16.xpose.msra.mxu0 %v6325
          %6343 = vmatprep.subr.bf16.mxu0 0
          %6344 = vmatpush2.bf16.xpose.msra.mxu0 0
          %6345 = vmatprep.subr.bf16.mxu0 0
          %6346 = vmatpush2.bf16.xpose.msra.mxu0 0
          %6347 = vmatprep.subr.bf16.mxu0 0
          %6348 = vmatpush2.bf16.xpose.msra.mxu0 0
          %6349 = vmatprep.subr.bf16.mxu0 0
          %6350 = vmatpush2.bf16.xpose.msra.mxu0 0
          %6351 = vmatprep.subr.bf16.mxu0 0
          %6352 = vmatpush2.bf16.xpose.msra.mxu0 0
          %6353 = vmatprep.subr.bf16.mxu0 0
          %6354 = vmatpush2.bf16.xpose.msra.mxu0 0
          %6355 = vmatprep.subr.bf16.mxu0 0
          %6356 = vmatpush2.bf16.xpose.msra.mxu0 0
          %6357 = vmatprep.subr.bf16.mxu0 0
          %6358 = vmatpush2.bf16.xpose.msra.mxu0 0
          %6359 = vmatprep.mubr.bf16.mxu0 0
          %6360 = vmatmul.mubr.bf16.gmra.mxu0 %v6322
          %v6361 = vpop.f32.mrf.mxu0
          %v6362 = vadd.f32 0.0, %v6361
          %v6363 = vpop.f32.mrf.mxu0
          %v6364 = vpop.f32.mrf.mxu0
          %v6365 = vpop.f32.mrf.mxu0
          %6366 = vdwg.mxu0
          %v6368 = vsel %vm6162, %v6315, 0
          %v6371 = vsel %vm6162, %v6319, 0
          %6373 = vmatprep.subr.bf16.mxu0 0
          %6374 = vmatpush1.bf16.xpose.msra.mxu0 0
          %6375 = vmatprep.subr.bf16.mxu0 0
          %6376 = vmatpush1.bf16.xpose.msra.mxu0 0
          %6377 = vmatprep.subr.bf16.mxu0 0
          %6378 = vmatpush1.bf16.xpose.msra.mxu0 0
          %6379 = vmatprep.subr.bf16.mxu0 0
          %6380 = vmatpush1.bf16.xpose.msra.mxu0 0
          %6381 = vmatprep.subr.bf16.mxu0 0
          %6382 = vmatpush1.bf16.xpose.msra.mxu0 0
          %6383 = vmatprep.subr.bf16.mxu0 0
          %6384 = vmatpush1.bf16.xpose.msra.mxu0 0
          %6385 = vmatprep.subr.bf16.mxu0 0
          %6386 = vmatpush1.bf16.xpose.msra.mxu0 0
          %6387 = vmatprep.subr.bf16.mxu0 0
          %6388 = vmatpush1.bf16.xpose.msra.mxu0 %v6371
          %6389 = vmatprep.subr.bf16.mxu0 0
          %6390 = vmatpush2.bf16.xpose.msra.mxu0 0
          %6391 = vmatprep.subr.bf16.mxu0 0
          %6392 = vmatpush2.bf16.xpose.msra.mxu0 0
          %6393 = vmatprep.subr.bf16.mxu0 0
          %6394 = vmatpush2.bf16.xpose.msra.mxu0 0
          %6395 = vmatprep.subr.bf16.mxu0 0
          %6396 = vmatpush2.bf16.xpose.msra.mxu0 0
          %6397 = vmatprep.subr.bf16.mxu0 0
          %6398 = vmatpush2.bf16.xpose.msra.mxu0 0
          %6399 = vmatprep.subr.bf16.mxu0 0
          %6400 = vmatpush2.bf16.xpose.msra.mxu0 0
          %6401 = vmatprep.subr.bf16.mxu0 0
          %6402 = vmatpush2.bf16.xpose.msra.mxu0 0
          %6403 = vmatprep.subr.bf16.mxu0 0
          %6404 = vmatpush2.bf16.xpose.msra.mxu0 0
          %6405 = vmatprep.mubr.bf16.mxu0 0
          %6406 = vmatmul.mubr.bf16.gmra.mxu0 %v6368
          %v6407 = vpop.f32.mrf.mxu0
          %v6408 = vadd.f32 0.0, %v6407
          %v6409 = vpop.f32.mrf.mxu0
          %v6410 = vpop.f32.mrf.mxu0
          %v6411 = vpop.f32.mrf.mxu0
          %6412 = vdwg.mxu0
          %v6414 = vsel %vm6162, %v6316, 0
          %v6417 = vsel %vm6162, %v6320, 0
          %6419 = vmatprep.subr.bf16.mxu0 0
          %6420 = vmatpush1.bf16.xpose.msra.mxu0 0
          %6421 = vmatprep.subr.bf16.mxu0 0
          %6422 = vmatpush1.bf16.xpose.msra.mxu0 0
          %6423 = vmatprep.subr.bf16.mxu0 0
          %6424 = vmatpush1.bf16.xpose.msra.mxu0 0
          %6425 = vmatprep.subr.bf16.mxu0 0
          %6426 = vmatpush1.bf16.xpose.msra.mxu0 0
          %6427 = vmatprep.subr.bf16.mxu0 0
          %6428 = vmatpush1.bf16.xpose.msra.mxu0 0
          %6429 = vmatprep.subr.bf16.mxu0 0
          %6430 = vmatpush1.bf16.xpose.msra.mxu0 0
          %6431 = vmatprep.subr.bf16.mxu0 0
          %6432 = vmatpush1.bf16.xpose.msra.mxu0 0
          %6433 = vmatprep.subr.bf16.mxu0 0
          %6434 = vmatpush1.bf16.xpose.msra.mxu0 %v6417
          %6435 = vmatprep.subr.bf16.mxu0 0
          %6436 = vmatpush2.bf16.xpose.msra.mxu0 0
          %6437 = vmatprep.subr.bf16.mxu0 0
          %6438 = vmatpush2.bf16.xpose.msra.mxu0 0
          %6439 = vmatprep.subr.bf16.mxu0 0
          %6440 = vmatpush2.bf16.xpose.msra.mxu0 0
          %6441 = vmatprep.subr.bf16.mxu0 0
          %6442 = vmatpush2.bf16.xpose.msra.mxu0 0
          %6443 = vmatprep.subr.bf16.mxu0 0
          %6444 = vmatpush2.bf16.xpose.msra.mxu0 0
          %6445 = vmatprep.subr.bf16.mxu0 0
          %6446 = vmatpush2.bf16.xpose.msra.mxu0 0
          %6447 = vmatprep.subr.bf16.mxu0 0
          %6448 = vmatpush2.bf16.xpose.msra.mxu0 0
          %6449 = vmatprep.subr.bf16.mxu0 0
          %6450 = vmatpush2.bf16.xpose.msra.mxu0 0
          %6451 = vmatprep.mubr.bf16.mxu0 0
          %6452 = vmatmul.mubr.bf16.gmra.mxu0 %v6414
          %v6453 = vpop.f32.mrf.mxu0
          %v6454 = vadd.f32 0.0, %v6453
          %v6455 = vpop.f32.mrf.mxu0
          %v6456 = vpop.f32.mrf.mxu0
          %v6457 = vpop.f32.mrf.mxu0
          %6458 = vdwg.mxu0
          %v6459 = vsel %vm6301, %v6362, 0.0
          %v6460 = vsel %vm6301, %v6408, 0.0
          %v6461 = vadd.f32 %v6459, %v6460
          %v6462 = vsel %vm6301, %v6454, 0.0
          %v6463 = vadd.f32 %v6461, %v6462
          %v6464 = vadd.f32 %v6307, %v6463
          %s6465 = scalar_lea.vmem %s6150, 2 [#allocation4]
          %v6466 = vld [vmem:[%s6465] ss:$2 sm:$0x3]
          %s6467 = scalar_lea.vmem %s6150, 10 [#allocation4]
          %v6468 = vld [vmem:[%s6467] ss:$2 sm:$0x3]
          %s6469 = scalar_lea.vmem %s6150, 18 [#allocation4]
          %v6470 = vld [vmem:[%s6469] ss:$2 sm:$0x3]
          %v6471 = vpack.c.bf16 %v6466, %v6466
          %v6472 = vpack.c.bf16 %v6468, %v6468
          %v6473 = vpack.c.bf16 %v6470, %v6470
          %s6474 = scalar_lea.vmem %s7, 8
          %v6475 = vld [vmem:[%s6474] sm:$0xf]
          %v6476 = vld [vmem:[%s6474 + $0xc] sm:$0xf]
          %v6477 = vld [vmem:[%s6474 + $0x18] sm:$0xf]
          %v6479 = vsel %vm6162, %v6471, 0
          %v6482 = vsel %vm6162, %v6475, 0
          %6484 = vmatprep.subr.bf16.mxu0 0
          %6485 = vmatpush1.bf16.xpose.msra.mxu0 0
          %6486 = vmatprep.subr.bf16.mxu0 0
          %6487 = vmatpush1.bf16.xpose.msra.mxu0 0
          %6488 = vmatprep.subr.bf16.mxu0 0
          %6489 = vmatpush1.bf16.xpose.msra.mxu0 0
          %6490 = vmatprep.subr.bf16.mxu0 0
          %6491 = vmatpush1.bf16.xpose.msra.mxu0 0
          %6492 = vmatprep.subr.bf16.mxu0 0
          %6493 = vmatpush1.bf16.xpose.msra.mxu0 0
          %6494 = vmatprep.subr.bf16.mxu0 0
          %6495 = vmatpush1.bf16.xpose.msra.mxu0 0
          %6496 = vmatprep.subr.bf16.mxu0 0
          %6497 = vmatpush1.bf16.xpose.msra.mxu0 0
          %6498 = vmatprep.subr.bf16.mxu0 0
          %6499 = vmatpush1.bf16.xpose.msra.mxu0 %v6482
          %6500 = vmatprep.subr.bf16.mxu0 0
          %6501 = vmatpush2.bf16.xpose.msra.mxu0 0
          %6502 = vmatprep.subr.bf16.mxu0 0
          %6503 = vmatpush2.bf16.xpose.msra.mxu0 0
          %6504 = vmatprep.subr.bf16.mxu0 0
          %6505 = vmatpush2.bf16.xpose.msra.mxu0 0
          %6506 = vmatprep.subr.bf16.mxu0 0
          %6507 = vmatpush2.bf16.xpose.msra.mxu0 0
          %6508 = vmatprep.subr.bf16.mxu0 0
          %6509 = vmatpush2.bf16.xpose.msra.mxu0 0
          %6510 = vmatprep.subr.bf16.mxu0 0
          %6511 = vmatpush2.bf16.xpose.msra.mxu0 0
          %6512 = vmatprep.subr.bf16.mxu0 0
          %6513 = vmatpush2.bf16.xpose.msra.mxu0 0
          %6514 = vmatprep.subr.bf16.mxu0 0
          %6515 = vmatpush2.bf16.xpose.msra.mxu0 0
          %6516 = vmatprep.mubr.bf16.mxu0 0
          %6517 = vmatmul.mubr.bf16.gmra.mxu0 %v6479
          %v6518 = vpop.f32.mrf.mxu0
          %v6519 = vadd.f32 0.0, %v6518
          %v6520 = vpop.f32.mrf.mxu0
          %v6521 = vpop.f32.mrf.mxu0
          %v6522 = vpop.f32.mrf.mxu0
          %6523 = vdwg.mxu0
          %v6525 = vsel %vm6162, %v6472, 0
          %v6528 = vsel %vm6162, %v6476, 0
          %6530 = vmatprep.subr.bf16.mxu0 0
          %6531 = vmatpush1.bf16.xpose.msra.mxu0 0
          %6532 = vmatprep.subr.bf16.mxu0 0
          %6533 = vmatpush1.bf16.xpose.msra.mxu0 0
          %6534 = vmatprep.subr.bf16.mxu0 0
          %6535 = vmatpush1.bf16.xpose.msra.mxu0 0
          %6536 = vmatprep.subr.bf16.mxu0 0
          %6537 = vmatpush1.bf16.xpose.msra.mxu0 0
          %6538 = vmatprep.subr.bf16.mxu0 0
          %6539 = vmatpush1.bf16.xpose.msra.mxu0 0
          %6540 = vmatprep.subr.bf16.mxu0 0
          %6541 = vmatpush1.bf16.xpose.msra.mxu0 0
          %6542 = vmatprep.subr.bf16.mxu0 0
          %6543 = vmatpush1.bf16.xpose.msra.mxu0 0
          %6544 = vmatprep.subr.bf16.mxu0 0
          %6545 = vmatpush1.bf16.xpose.msra.mxu0 %v6528
          %6546 = vmatprep.subr.bf16.mxu0 0
          %6547 = vmatpush2.bf16.xpose.msra.mxu0 0
          %6548 = vmatprep.subr.bf16.mxu0 0
          %6549 = vmatpush2.bf16.xpose.msra.mxu0 0
          %6550 = vmatprep.subr.bf16.mxu0 0
          %6551 = vmatpush2.bf16.xpose.msra.mxu0 0
          %6552 = vmatprep.subr.bf16.mxu0 0
          %6553 = vmatpush2.bf16.xpose.msra.mxu0 0
          %6554 = vmatprep.subr.bf16.mxu0 0
          %6555 = vmatpush2.bf16.xpose.msra.mxu0 0
          %6556 = vmatprep.subr.bf16.mxu0 0
          %6557 = vmatpush2.bf16.xpose.msra.mxu0 0
          %6558 = vmatprep.subr.bf16.mxu0 0
          %6559 = vmatpush2.bf16.xpose.msra.mxu0 0
          %6560 = vmatprep.subr.bf16.mxu0 0
          %6561 = vmatpush2.bf16.xpose.msra.mxu0 0
          %6562 = vmatprep.mubr.bf16.mxu0 0
          %6563 = vmatmul.mubr.bf16.gmra.mxu0 %v6525
          %v6564 = vpop.f32.mrf.mxu0
          %v6565 = vadd.f32 0.0, %v6564
          %v6566 = vpop.f32.mrf.mxu0
          %v6567 = vpop.f32.mrf.mxu0
          %v6568 = vpop.f32.mrf.mxu0
          %6569 = vdwg.mxu0
          %v6571 = vsel %vm6162, %v6473, 0
          %v6574 = vsel %vm6162, %v6477, 0
          %6576 = vmatprep.subr.bf16.mxu0 0
          %6577 = vmatpush1.bf16.xpose.msra.mxu0 0
          %6578 = vmatprep.subr.bf16.mxu0 0
          %6579 = vmatpush1.bf16.xpose.msra.mxu0 0
          %6580 = vmatprep.subr.bf16.mxu0 0
          %6581 = vmatpush1.bf16.xpose.msra.mxu0 0
          %6582 = vmatprep.subr.bf16.mxu0 0
          %6583 = vmatpush1.bf16.xpose.msra.mxu0 0
          %6584 = vmatprep.subr.bf16.mxu0 0
          %6585 = vmatpush1.bf16.xpose.msra.mxu0 0
          %6586 = vmatprep.subr.bf16.mxu0 0
          %6587 = vmatpush1.bf16.xpose.msra.mxu0 0
          %6588 = vmatprep.subr.bf16.mxu0 0
          %6589 = vmatpush1.bf16.xpose.msra.mxu0 0
          %6590 = vmatprep.subr.bf16.mxu0 0
          %6591 = vmatpush1.bf16.xpose.msra.mxu0 %v6574
          %6592 = vmatprep.subr.bf16.mxu0 0
          %6593 = vmatpush2.bf16.xpose.msra.mxu0 0
          %6594 = vmatprep.subr.bf16.mxu0 0
          %6595 = vmatpush2.bf16.xpose.msra.mxu0 0
          %6596 = vmatprep.subr.bf16.mxu0 0
          %6597 = vmatpush2.bf16.xpose.msra.mxu0 0
          %6598 = vmatprep.subr.bf16.mxu0 0
          %6599 = vmatpush2.bf16.xpose.msra.mxu0 0
          %6600 = vmatprep.subr.bf16.mxu0 0
          %6601 = vmatpush2.bf16.xpose.msra.mxu0 0
          %6602 = vmatprep.subr.bf16.mxu0 0
          %6603 = vmatpush2.bf16.xpose.msra.mxu0 0
          %6604 = vmatprep.subr.bf16.mxu0 0
          %6605 = vmatpush2.bf16.xpose.msra.mxu0 0
          %6606 = vmatprep.subr.bf16.mxu0 0
          %6607 = vmatpush2.bf16.xpose.msra.mxu0 0
          %6608 = vmatprep.mubr.bf16.mxu0 0
          %6609 = vmatmul.mubr.bf16.gmra.mxu0 %v6571
          %v6610 = vpop.f32.mrf.mxu0
          %v6611 = vadd.f32 0.0, %v6610
          %v6612 = vpop.f32.mrf.mxu0
          %v6613 = vpop.f32.mrf.mxu0
          %v6614 = vpop.f32.mrf.mxu0
          %6615 = vdwg.mxu0
          %v6616 = vsel %vm6301, %v6519, 0.0
          %v6617 = vsel %vm6301, %v6565, 0.0
          %v6618 = vadd.f32 %v6616, %v6617
          %v6619 = vsel %vm6301, %v6611, 0.0
          %v6620 = vadd.f32 %v6618, %v6619
          %v6621 = vadd.f32 %v6464, %v6620
          %v6622 = vmax.f32 %v6621, 0.0
          %s6623 = scalar_lea.vmem [#allocation5], %s6148
          %6624 = vst.msk [vmem:[%s6623] sm:$0x3] %vm6301, %v6622
        $region90: #{tpu_custom_call.1} parent=63 // loop_footer
          %s6147 = sadd.s32 1, %s6143
        $region91: #{tpu_custom_call.1} parent=63 // loop_footer_branch
          %6142 = sbr.rel target = $region87
        $region92: #{tpu_custom_call.1} parent=63 // loop_exit
          _
        %v6625 = vld [vmem:[#allocation5] sm:$0x3]
        %v6626 = vld [vmem:[#allocation5 + $0x2] sm:$0x3]
        %v6627 = vld [vmem:[%s10] sm:$0x1]
        %v6628 = vpack.c.bf16 %v6625, %v6625
        %v6629 = vld [vmem:[%s9] sm:$0xf]
        %vm6630 = vcmask 64512
        %v6632 = vsel %vm6630, %v6628, 0
        %vm6634 = vcmask 1043456
        %v6636 = vsel %vm6634, %v6629, 0
        %6638 = vmatprep.subr.bf16.mxu0 0
        %6639 = vmatpush1.bf16.msra.mxu0 0
        %6640 = vmatprep.subr.bf16.mxu0 0
        %6641 = vmatpush1.bf16.msra.mxu0 0
        %6642 = vmatprep.subr.bf16.mxu0 0
        %6643 = vmatpush1.bf16.msra.mxu0 0
        %6644 = vmatprep.subr.bf16.mxu0 0
        %6645 = vmatpush1.bf16.msra.mxu0 0
        %6646 = vmatprep.subr.bf16.mxu0 0
        %6647 = vmatpush1.bf16.msra.mxu0 0
        %6648 = vmatprep.subr.bf16.mxu0 0
        %6649 = vmatpush1.bf16.msra.mxu0 0
        %6650 = vmatprep.subr.bf16.mxu0 0
        %6651 = vmatpush1.bf16.msra.mxu0 0
        %6652 = vmatprep.subr.bf16.mxu0 0
        %6653 = vmatpush1.bf16.msra.mxu0 %v6636
        %6654 = vmatprep.subr.bf16.mxu0 0
        %6655 = vmatpush2.bf16.msra.mxu0 0
        %6656 = vmatprep.subr.bf16.mxu0 0
        %6657 = vmatpush2.bf16.msra.mxu0 0
        %6658 = vmatprep.subr.bf16.mxu0 0
        %6659 = vmatpush2.bf16.msra.mxu0 0
        %6660 = vmatprep.subr.bf16.mxu0 0
        %6661 = vmatpush2.bf16.msra.mxu0 0
        %6662 = vmatprep.subr.bf16.mxu0 0
        %6663 = vmatpush2.bf16.msra.mxu0 0
        %6664 = vmatprep.subr.bf16.mxu0 0
        %6665 = vmatpush2.bf16.msra.mxu0 0
        %6666 = vmatprep.subr.bf16.mxu0 0
        %6667 = vmatpush2.bf16.msra.mxu0 0
        %6668 = vmatprep.subr.bf16.mxu0 0
        %6669 = vmatpush2.bf16.msra.mxu0 0
        %6670 = vmatprep.mubr.bf16.mxu0 0
        %6671 = vmatmul.mubr.bf16.gmra.mxu0 %v6632
        %v6672 = vpop.f32.mrf.mxu0
        %v6673 = vadd.f32 0.0, %v6672
        %v6674 = vpop.f32.mrf.mxu0
        %v6675 = vpop.f32.mrf.mxu0
        %v6676 = vpop.f32.mrf.mxu0
        %6677 = vdwg.mxu0
        %v6678 = vadd.f32 %v6627, %v6673
        %s6679 = scalar_lea.vmem %s9, 4
        %v6680 = vld [vmem:[%s6679] sm:$0xf]
        %v6681 = vshrl.u32 %v6628, 16
        %v6684 = vsel %vm6630, %v6681, 0
        %v6687 = vsel %vm6634, %v6680, 0
        %6689 = vmatprep.subr.bf16.mxu0 0
        %6690 = vmatpush1.bf16.msra.mxu0 0
        %6691 = vmatprep.subr.bf16.mxu0 0
        %6692 = vmatpush1.bf16.msra.mxu0 0
        %6693 = vmatprep.subr.bf16.mxu0 0
        %6694 = vmatpush1.bf16.msra.mxu0 0
        %6695 = vmatprep.subr.bf16.mxu0 0
        %6696 = vmatpush1.bf16.msra.mxu0 0
        %6697 = vmatprep.subr.bf16.mxu0 0
        %6698 = vmatpush1.bf16.msra.mxu0 0
        %6699 = vmatprep.subr.bf16.mxu0 0
        %6700 = vmatpush1.bf16.msra.mxu0 0
        %6701 = vmatprep.subr.bf16.mxu0 0
        %6702 = vmatpush1.bf16.msra.mxu0 0
        %6703 = vmatprep.subr.bf16.mxu0 0
        %6704 = vmatpush1.bf16.msra.mxu0 %v6687
        %6705 = vmatprep.subr.bf16.mxu0 0
        %6706 = vmatpush2.bf16.msra.mxu0 0
        %6707 = vmatprep.subr.bf16.mxu0 0
        %6708 = vmatpush2.bf16.msra.mxu0 0
        %6709 = vmatprep.subr.bf16.mxu0 0
        %6710 = vmatpush2.bf16.msra.mxu0 0
        %6711 = vmatprep.subr.bf16.mxu0 0
        %6712 = vmatpush2.bf16.msra.mxu0 0
        %6713 = vmatprep.subr.bf16.mxu0 0
        %6714 = vmatpush2.bf16.msra.mxu0 0
        %6715 = vmatprep.subr.bf16.mxu0 0
        %6716 = vmatpush2.bf16.msra.mxu0 0
        %6717 = vmatprep.subr.bf16.mxu0 0
        %6718 = vmatpush2.bf16.msra.mxu0 0
        %6719 = vmatprep.subr.bf16.mxu0 0
        %6720 = vmatpush2.bf16.msra.mxu0 0
        %6721 = vmatprep.mubr.bf16.mxu0 0
        %6722 = vmatmul.mubr.bf16.gmra.mxu0 %v6684
        %v6723 = vpop.f32.mrf.mxu0
        %v6724 = vadd.f32 0.0, %v6723
        %v6725 = vpop.f32.mrf.mxu0
        %v6726 = vpop.f32.mrf.mxu0
        %v6727 = vpop.f32.mrf.mxu0
        %6728 = vdwg.mxu0
        %v6729 = vadd.f32 %v6678, %v6724
        %v6730 = vpack.c.bf16 %v6626, %v6626
        %s6731 = scalar_lea.vmem %s9, 8
        %v6732 = vld [vmem:[%s6731] sm:$0xf]
        %v6734 = vsel %vm6630, %v6730, 0
        %v6737 = vsel %vm6634, %v6732, 0
        %6739 = vmatprep.subr.bf16.mxu0 0
        %6740 = vmatpush1.bf16.msra.mxu0 0
        %6741 = vmatprep.subr.bf16.mxu0 0
        %6742 = vmatpush1.bf16.msra.mxu0 0
        %6743 = vmatprep.subr.bf16.mxu0 0
        %6744 = vmatpush1.bf16.msra.mxu0 0
        %6745 = vmatprep.subr.bf16.mxu0 0
        %6746 = vmatpush1.bf16.msra.mxu0 0
        %6747 = vmatprep.subr.bf16.mxu0 0
        %6748 = vmatpush1.bf16.msra.mxu0 0
        %6749 = vmatprep.subr.bf16.mxu0 0
        %6750 = vmatpush1.bf16.msra.mxu0 0
        %6751 = vmatprep.subr.bf16.mxu0 0
        %6752 = vmatpush1.bf16.msra.mxu0 0
        %6753 = vmatprep.subr.bf16.mxu0 0
        %6754 = vmatpush1.bf16.msra.mxu0 %v6737
        %6755 = vmatprep.subr.bf16.mxu0 0
        %6756 = vmatpush2.bf16.msra.mxu0 0
        %6757 = vmatprep.subr.bf16.mxu0 0
        %6758 = vmatpush2.bf16.msra.mxu0 0
        %6759 = vmatprep.subr.bf16.mxu0 0
        %6760 = vmatpush2.bf16.msra.mxu0 0
        %6761 = vmatprep.subr.bf16.mxu0 0
        %6762 = vmatpush2.bf16.msra.mxu0 0
        %6763 = vmatprep.subr.bf16.mxu0 0
        %6764 = vmatpush2.bf16.msra.mxu0 0
        %6765 = vmatprep.subr.bf16.mxu0 0
        %6766 = vmatpush2.bf16.msra.mxu0 0
        %6767 = vmatprep.subr.bf16.mxu0 0
        %6768 = vmatpush2.bf16.msra.mxu0 0
        %6769 = vmatprep.subr.bf16.mxu0 0
        %6770 = vmatpush2.bf16.msra.mxu0 0
        %6771 = vmatprep.mubr.bf16.mxu0 0
        %6772 = vmatmul.mubr.bf16.gmra.mxu0 %v6734
        %v6773 = vpop.f32.mrf.mxu0
        %v6774 = vadd.f32 0.0, %v6773
        %v6775 = vpop.f32.mrf.mxu0
        %v6776 = vpop.f32.mrf.mxu0
        %v6777 = vpop.f32.mrf.mxu0
        %6778 = vdwg.mxu0
        %v6779 = vadd.f32 %v6729, %v6774
        %s6780 = scalar_lea.vmem %s9, 12
        %v6781 = vld [vmem:[%s6780] sm:$0xf]
        %v6782 = vshrl.u32 %v6730, 16
        %v6785 = vsel %vm6630, %v6782, 0
        %v6788 = vsel %vm6634, %v6781, 0
        %6790 = vmatprep.subr.bf16.mxu0 0
        %6791 = vmatpush1.bf16.msra.mxu0 0
        %6792 = vmatprep.subr.bf16.mxu0 0
        %6793 = vmatpush1.bf16.msra.mxu0 0
        %6794 = vmatprep.subr.bf16.mxu0 0
        %6795 = vmatpush1.bf16.msra.mxu0 0
        %6796 = vmatprep.subr.bf16.mxu0 0
        %6797 = vmatpush1.bf16.msra.mxu0 0
        %6798 = vmatprep.subr.bf16.mxu0 0
        %6799 = vmatpush1.bf16.msra.mxu0 0
        %6800 = vmatprep.subr.bf16.mxu0 0
        %6801 = vmatpush1.bf16.msra.mxu0 0
        %6802 = vmatprep.subr.bf16.mxu0 0
        %6803 = vmatpush1.bf16.msra.mxu0 0
        %6804 = vmatprep.subr.bf16.mxu0 0
        %6805 = vmatpush1.bf16.msra.mxu0 %v6788
        %6806 = vmatprep.subr.bf16.mxu0 0
        %6807 = vmatpush2.bf16.msra.mxu0 0
        %6808 = vmatprep.subr.bf16.mxu0 0
        %6809 = vmatpush2.bf16.msra.mxu0 0
        %6810 = vmatprep.subr.bf16.mxu0 0
        %6811 = vmatpush2.bf16.msra.mxu0 0
        %6812 = vmatprep.subr.bf16.mxu0 0
        %6813 = vmatpush2.bf16.msra.mxu0 0
        %6814 = vmatprep.subr.bf16.mxu0 0
        %6815 = vmatpush2.bf16.msra.mxu0 0
        %6816 = vmatprep.subr.bf16.mxu0 0
        %6817 = vmatpush2.bf16.msra.mxu0 0
        %6818 = vmatprep.subr.bf16.mxu0 0
        %6819 = vmatpush2.bf16.msra.mxu0 0
        %6820 = vmatprep.subr.bf16.mxu0 0
        %6821 = vmatpush2.bf16.msra.mxu0 0
        %6822 = vmatprep.mubr.bf16.mxu0 0
        %6823 = vmatmul.mubr.bf16.gmra.mxu0 %v6785
        %v6824 = vpop.f32.mrf.mxu0
        %v6825 = vadd.f32 0.0, %v6824
        %v6826 = vpop.f32.mrf.mxu0
        %v6827 = vpop.f32.mrf.mxu0
        %v6828 = vpop.f32.mrf.mxu0
        %6829 = vdwg.mxu0
        %v6830 = vadd.f32 %v6779, %v6825
        %vm6831 = vcmask 253952
        %6832 = vst.msk [vmem:[%s378] sm:$0x1] %vm6831, %v6830
        %s6833 = sand.u32 %s269, 1
        %s6834 = scalar_lea.sflag [#allocation7], %s6833
        %s6835 = sand.u32 %s269, 1
        %s6836 = scalar_lea.vmem [#allocation6], %s6835
        // Predicated region
        $region93: #{tpu_custom_call.1} parent=63 // pred_check
          %p6837 = pneg %p279
        $region94: #{tpu_custom_call.1} parent=63 // pred_check_branch
          %6839 = sbr.rel (%p6837) target = $region96
        $region95: #{tpu_custom_call.1} parent=63 // pred_region
          %s6841 = ssub.s32 16, 16
          %6842 = vsyncadd %s6834, %s6841
          %s6843 = smul.addr %s25, 16
          %s6844 = scalar_lea.hbm %s11, %s6843
          %s6846 = sshll.u32 %s6836, 4
          %s6847 = int_to_ptr.vmem [resolvable:$true] %s6846
          %6849 = dma.vmem_to_hbm [thread:$0]  %s6847, 16, %s6844, %s6834
        $region96: #{tpu_custom_call.1} parent=63 // pred_fallthru
          _
      $region64: #{tpu_custom_call.1} parent=5 // pred_fallthru
        _
      %p6850 = scmp.le.s32.totalorder 2, %s20
      // Predicated region
      $region97: #{tpu_custom_call.1} parent=5 // pred_check
        %p6851 = pneg %p6850
      $region98: #{tpu_custom_call.1} parent=5 // pred_check_branch
        %6853 = sbr.rel (%p6851) target = $region100
      $region99: #{tpu_custom_call.1} parent=5 // pred_region
        %s6854 = ssub.s32 %s20, 2
        // Predicated region
        $region101: #{tpu_custom_call.1} parent=99 // pred_check
          %p6855 = pneg %p285
        $region102: #{tpu_custom_call.1} parent=99 // pred_check_branch
          %6857 = sbr.rel (%p6855) target = $region104
        $region103: #{tpu_custom_call.1} parent=99 // pred_region
          %s6858 = sand.u32 %s270, 1
          %s6859 = scalar_lea.sflag [#allocation7], %s6858
          %s6860 = sand.u32 %s270, 1
          %s6861 = scalar_lea.vmem [#allocation6], %s6860
          %6862 = dma.done %s6859, 16
        $region104: #{tpu_custom_call.1} parent=99 // pred_fallthru
          _
      $region100: #{tpu_custom_call.1} parent=5 // pred_fallthru
        _
    $region6: #{tpu_custom_call.1} parent=1 // loop_footer
      %s24 = sadd.s32 1, %s20
    $region7: #{tpu_custom_call.1} parent=1 // loop_footer_branch
      %19 = sbr.rel target = $region3
    $region8: #{tpu_custom_call.1} parent=1 // loop_exit
      _
    %6863 = vsyncpa [#allocation7], 1
    %s6864 = scalar_lea.sflag [#allocation7], 1
    %6865 = vsyncpa %s6864, 1

</llo_original>
